<compile_context>
chip_gen: v5e
topology: v5e:2x2
jax: 0.10.0
libtpu: 0.0.40
codegen_flags: <defaults>
</compile_context>

<pallas_src>
import math

import jax
import jax.numpy as jnp
from jax.experimental import pallas as pl
from jax.experimental.pallas import tpu as pltpu


# bf16 matmul path per the perf review (fp32 accumulation in-kernel).  Set to
# jnp.float32 for closer numerical parity with the PyTorch reference.
MATMUL_DTYPE = jnp.bfloat16


# ---------------------------------------------------------------------------
# Pallas kernels
# ---------------------------------------------------------------------------
def conv_block_kernel(x_ref, w_ref, b_ref, o_ref):
    """Fused conv3x3 + BN-affine + ReLU + maxpool2x2 for one sample.

    x_ref : (1, Hp, Wp, Cin)  zero-padded NHWC input (Hp = H+2, Wp = W+2)
    w_ref : (9, Cin, Cout)    per-tap conv weights, BN scale folded in
    b_ref : (1, Cout)         folded conv-bias + BN shift (fp32)
    o_ref : (1, H//2, W//2, Cout)
    """
    x = x_ref[0]                               # (Hp, Wp, Cin) value in VMEM
    hp, wp, cin = x.shape
    h, w = hp - 2, wp - 2
    ho, wo = h // 2, w // 2
    cout = o_ref.shape[-1]

    # Conv as 9 accumulated matmuls over the taps; in-kernel "im2col" is just
    # cheap VMEM slices/reshapes of the resident tile (no HBM replication).
    acc = jnp.zeros((h * w, cout), jnp.float32)
    for dw in range(3):
        xs = x[:, dw:dw + w, :].reshape(hp * w, cin)
        for dh in range(3):
            slab = xs[dh * w:dh * w + h * w, :]          # rows (oh+dh, ow+dw)
            acc = acc + jnp.dot(slab, w_ref[3 * dh + dw],
                                preferred_element_type=jnp.float32)

    # BN shift + ReLU before pooling (exact: BN scale is already in the
    # weights, so this is the full affine followed by ReLU, as the reference).
    y = jnp.maximum(acc + b_ref[...], 0.0).astype(o_ref.dtype)

    # 2x2 max pool.  Row pairs: (h*w, C) -> (ho, 2w, C), max of the two
    # w-row halves.  Column pairs: (ho*wo, 2, C), max of the two entries.
    y = y.reshape(ho, 2 * w, cout)
    y = jnp.maximum(y[:, :w, :], y[:, w:, :])            # (ho, w, cout)
    y = y.reshape(ho * wo, 2, cout)
    y = jnp.maximum(y[:, 0, :], y[:, 1, :])              # (ho*wo, cout)
    o_ref[0] = y.reshape(ho, wo, cout)


def classifier_kernel(x_ref, w_ref, b_ref, o_ref):
    """Folded classifier: one matmul + bias (W_eff = P(W1) @ W2 @ W3, padded
    to 128 output lanes for a lane-dense store)."""
    o_ref[...] = (jnp.dot(x_ref[...], w_ref[...],
                          preferred_element_type=jnp.float32) + b_ref[...])


# ---------------------------------------------------------------------------
# Wrappers
# ---------------------------------------------------------------------------
def conv_block(x_nhwc, w9, bias):
    """x_nhwc: (N, H, W, C) -> (N, H//2, W//2, Cout)."""
    N, H, W, C = x_nhwc.shape
    assert H % 2 == 0 and W % 2 == 0, "even spatial dims required (see TODO)"
    _, Cw, Cout = w9.shape                      # Cw: channel dim (maybe padded)
    Ho, Wo = H // 2, W // 2
    Hp, Wp = H + 2, W + 2

    # Single cheap pad pass (spatial halo + channel pad for conv1's Cin=3->8),
    # already in the matmul dtype so no fp32 activation is ever materialized.
    xp = jnp.pad(x_nhwc.astype(w9.dtype),
                 ((0, 0), (1, 1), (1, 1), (0, Cw - C)))

    isz = jnp.dtype(w9.dtype).itemsize
    flops = 2 * N * H * W * 9 * Cw * Cout
    bytes_accessed = (N * Hp * Wp * Cw + 9 * Cw * Cout
                      + N * Ho * Wo * Cout) * isz + Cout * 4

    blk_bytes = (Hp * Wp * Cw + 9 * Cw * Cout + Ho * Wo * Cout) * isz + Cout * 4
    acc_bytes = H * W * Cout * 4
    # Double-buffered blocks + fp32 accumulator + headroom; clamp to stay well
    # inside v7x's 64 MiB physical VMEM while never shrinking the default.
    vmem_limit = int(min(48 << 20,
                         max(32 << 20, 2 * blk_bytes + 3 * acc_bytes + (8 << 20))))

    out = pl.pallas_call(
        conv_block_kernel,
        out_shape=jax.ShapeDtypeStruct((N, Ho, Wo, Cout), w9.dtype),
        grid=(N,),
        in_specs=[
            pl.BlockSpec((1, Hp, Wp, Cw), lambda n: (n, 0, 0, 0)),
            pl.BlockSpec((9, Cw, Cout), lambda n: (0, 0, 0)),
            pl.BlockSpec((1, Cout), lambda n: (0, 0)),
        ],
        out_specs=pl.BlockSpec((1, Ho, Wo, Cout), lambda n: (n, 0, 0, 0)),
        compiler_params=pltpu.CompilerParams(
            dimension_semantics=("parallel",),
            vmem_limit_bytes=vmem_limit),
        cost_estimate=pl.CostEstimate(flops=int(flops), transcendentals=0,
                                      bytes_accessed=int(bytes_accessed)),
    )(xp, w9, bias)
    return out


def classifier(x, w_eff, b_eff):
    """x: (N, flat) -> (N, 128) fp32 (lane-padded; caller slices [:, :12])."""
    N, Din = x.shape
    Dpad = w_eff.shape[1]
    tn = min(N, 256)
    isz = jnp.dtype(w_eff.dtype).itemsize
    flops = 2 * N * Din * Dpad + N * Dpad
    bytes_accessed = (N * Din + Din * Dpad) * isz + Dpad * 4 + N * Dpad * 4
    return pl.pallas_call(
        classifier_kernel,
        out_shape=jax.ShapeDtypeStruct((N, Dpad), jnp.float32),
        grid=(pl.cdiv(N, tn),),
        in_specs=[pl.BlockSpec((tn, Din), lambda i: (i, 0)),
                  pl.BlockSpec((Din, Dpad), lambda i: (0, 0)),
                  pl.BlockSpec((1, Dpad), lambda i: (0, 0))],
        out_specs=pl.BlockSpec((tn, Dpad), lambda i: (i, 0)),
        compiler_params=pltpu.CompilerParams(
            dimension_semantics=("parallel",)),
        cost_estimate=pl.CostEstimate(flops=int(flops), transcendentals=0,
                                      bytes_accessed=int(bytes_accessed)),
    )(x.astype(w_eff.dtype), w_eff, b_eff)


def teacher_net14_forward(x_nchw, params):
    x = jnp.transpose(x_nchw, (0, 2, 3, 1)).astype(MATMUL_DTYPE)   # NCHW->NHWC
    for (w9, bias) in params["conv"]:
        x = conv_block(x, w9, bias)
    n = x.shape[0]
    # NHWC flatten is a free HBM reshape; the NCHW-order permutation the
    # reference implies is folded into the classifier weight rows at init.
    x = x.reshape(n, -1)
    w_eff, b_eff = params["fc"]
    return classifier(x, w_eff, b_eff)[:, :12]


# ---------------------------------------------------------------------------
# Deterministic synthetic parameters
# ---------------------------------------------------------------------------
def calc_out_size(s):
    conv_size = (s - 3 + 2 * 1) // 1 + 1
    return math.ceil((conv_size - 2) / 2) + 1


def init_conv_block_params(key, cin, cout):
    k1, k2, k3, k4, k5, k6 = jax.random.split(key, 6)
    w = jax.random.normal(k1, (3, 3, cin, cout), jnp.float32) / math.sqrt(9 * cin)
    b_conv = jax.random.normal(k2, (cout,), jnp.float32) * 0.01
    gamma = jax.random.uniform(k3, (cout,), jnp.float32, minval=0.8, maxval=1.2)
    beta = jax.random.normal(k4, (cout,), jnp.float32) * 0.01
    r_mean = jax.random.normal(k5, (cout,), jnp.float32) * 0.01
    r_var = jax.random.uniform(k6, (cout,), jnp.float32, minval=0.8, maxval=1.2)
    scale = gamma / jnp.sqrt(r_var + 1e-5)
    # Fold the BN scale into the conv weight.  Bias/ReLU/pool happen after the
    # full affine in-kernel, so this is exact for any sign of the scale.
    w9 = (w * scale[None, None, None, :]).reshape(9, cin, cout)
    cin_pad = ((cin + 7) // 8) * 8          # conv1: pad Cin 3 -> 8 with zeros
    if cin_pad != cin:
        w9 = jnp.pad(w9, ((0, 0), (0, cin_pad - cin), (0, 0)))
    bias = ((b_conv - r_mean) * scale + beta).reshape(1, cout)
    return w9.astype(MATMUL_DTYPE), bias.astype(jnp.float32)


def init_fc_params(keys, out_size, channels=256):
    # Classifier: Linear(flat,128) -> Linear(128,12) -> Linear(12,12).
    flat = out_size * out_size * channels
    dims = [(flat, 128), (128, 12), (12, 12)]
    ws, bs = [], []
    for k, (din, dout) in zip(keys, dims):
        k1, k2 = jax.random.split(k)
        ws.append(jax.random.normal(k1, (din, dout), jnp.float32) / math.sqrt(din))
        bs.append(jax.random.normal(k2, (1, dout), jnp.float32) * 0.01)
    # Fold the PyTorch NCHW-flatten permutation into W1's rows (exact static
    # index permutation) so the kernel consumes the NHWC flatten directly.
    w1 = ws[0].reshape(channels, out_size, out_size, 128)
    w1 = jnp.transpose(w1, (1, 2, 0, 3)).reshape(flat, 128)
    # Fold the 3 activation-free Linear layers into one affine map (fp32
    # reassociation only; not bit-exact vs. the reference).
    w_eff = w1 @ ws[1] @ ws[2]
    b_eff = (bs[0] @ ws[1] + bs[1]) @ ws[2] + bs[2]
    # Pad 12 -> 128 output lanes (lane-dense stores); wrapper slices [:, :12].
    w_eff = jnp.pad(w_eff, ((0, 0), (0, 128 - 12)))
    b_eff = jnp.pad(b_eff, ((0, 0), (0, 128 - 12)))
    return w_eff.astype(MATMUL_DTYPE), b_eff.astype(jnp.float32)


def init_params(key, image_size):
    out_size = image_size
    for _ in range(3):
        out_size = calc_out_size(out_size)

    keys = jax.random.split(key, 6)
    conv = [init_conv_block_params(keys[0], 3, 64),
            init_conv_block_params(keys[1], 64, 128),
            init_conv_block_params(keys[2], 128, 256)]
    w_eff, b_eff = init_fc_params(keys[3:6], out_size, channels=256)
    return {"conv": conv, "fc": (w_eff, b_eff)}


# ---------------------------------------------------------------------------
if __name__ == "__main__":
    key = jax.random.PRNGKey(0)
    k_x, k_p = jax.random.split(key)

    batch, image_size = 2, 16
    x = jax.random.normal(k_x, (batch, 3, image_size, image_size), jnp.float32)
    params = init_params(k_p, image_size)

    fwd = jax.jit(teacher_net14_forward)
    out = jax.block_until_ready(fwd(x, params))

    assert out.shape == (batch, 12), out.shape
    assert out.dtype == jnp.float32
    assert bool(jnp.all(jnp.isfinite(out)))
    print("KERNEL_OK")
</pallas_src>

<mosaic_0001>
module attributes {stable_mosaic.version = 11 : i64} {
  func.func @conv_block_kernel(%arg0: i32, %arg1: memref<1x18x18x8xbf16, #tpu.memory_space<vmem>>, %arg2: memref<9x8x64xbf16, #tpu.memory_space<vmem>>, %arg3: memref<1x64xf32, #tpu.memory_space<vmem>>, %arg4: memref<1x8x8x64xbf16, #tpu.memory_space<vmem>>) attributes {dimension_semantics = [#tpu.dimension_semantics<parallel>], iteration_bounds = array<i64: 2>, scalar_prefetch = 0 : i64, scratch_operands = 0 : i64, tpu.core_type = #tpu.core_type<tc>, window_params = [{transform_indices = @transform_0, window_bounds = array<i64: 1, 18, 18, 8>}, {pipeline_mode = #tpu.pipeline_mode<synchronous>, transform_indices = @transform_1, window_bounds = array<i64: 9, 8, 64>}, {pipeline_mode = #tpu.pipeline_mode<synchronous>, transform_indices = @transform_2, window_bounds = array<i64: 1, 64>}, {transform_indices = @transform_3, window_bounds = array<i64: 1, 8, 8, 64>}]} {
    %c0 = arith.constant 0 : index
    %c0_0 = arith.constant 0 : index
    %c0_1 = arith.constant 0 : index
    %c0_2 = arith.constant 0 : index
    %0 = vector.load %arg1[%c0, %c0_0, %c0_1, %c0_2] : memref<1x18x18x8xbf16, #tpu.memory_space<vmem>>, vector<1x18x18x8xbf16>
    %1 = vector.shape_cast %0 : vector<1x18x18x8xbf16> to vector<18x18x8xbf16>
    %cst = arith.constant 0.000000e+00 : f32
    %2 = vector.broadcast %cst : f32 to vector<256x64xf32>
    %3 = vector.extract_strided_slice %1 {offsets = [0, 0, 0], sizes = [18, 16, 8], strides = [1, 1, 1]} : vector<18x18x8xbf16> to vector<18x16x8xbf16>
    %4 = vector.shape_cast %3 : vector<18x16x8xbf16> to vector<288x8xbf16>
    %5 = vector.extract_strided_slice %4 {offsets = [0, 0], sizes = [256, 8], strides = [1, 1]} : vector<288x8xbf16> to vector<256x8xbf16>
    %c0_3 = arith.constant 0 : index
    %c0_4 = arith.constant 0 : index
    %c0_5 = arith.constant 0 : index
    %6 = vector.load %arg2[%c0_3, %c0_4, %c0_5] : memref<9x8x64xbf16, #tpu.memory_space<vmem>>, vector<1x8x64xbf16>
    %7 = vector.shape_cast %6 : vector<1x8x64xbf16> to vector<8x64xbf16>
    %cst_6 = arith.constant dense<0.000000e+00> : vector<256x64xf32>
    %8 = tpu.matmul %5, %7, %cst_6 {dimension_numbers = #tpu.dot_dimension_numbers<[1], [0], [0], [1], [0, 0, 1, 1], [], []>} : vector<256x8xbf16>, vector<8x64xbf16>, vector<256x64xf32> -> vector<256x64xf32>
    %9 = arith.addf %2, %8 : vector<256x64xf32>
    %10 = vector.extract_strided_slice %4 {offsets = [16, 0], sizes = [256, 8], strides = [1, 1]} : vector<288x8xbf16> to vector<256x8xbf16>
    %c3 = arith.constant 3 : index
    %c0_7 = arith.constant 0 : index
    %c0_8 = arith.constant 0 : index
    %11 = vector.load %arg2[%c3, %c0_7, %c0_8] : memref<9x8x64xbf16, #tpu.memory_space<vmem>>, vector<1x8x64xbf16>
    %12 = vector.shape_cast %11 : vector<1x8x64xbf16> to vector<8x64xbf16>
    %cst_9 = arith.constant dense<0.000000e+00> : vector<256x64xf32>
    %13 = tpu.matmul %10, %12, %cst_9 {dimension_numbers = #tpu.dot_dimension_numbers<[1], [0], [0], [1], [0, 0, 1, 1], [], []>} : vector<256x8xbf16>, vector<8x64xbf16>, vector<256x64xf32> -> vector<256x64xf32>
    %14 = arith.addf %9, %13 : vector<256x64xf32>
    %15 = vector.extract_strided_slice %4 {offsets = [32, 0], sizes = [256, 8], strides = [1, 1]} : vector<288x8xbf16> to vector<256x8xbf16>
    %c6 = arith.constant 6 : index
    %c0_10 = arith.constant 0 : index
    %c0_11 = arith.constant 0 : index
    %16 = vector.load %arg2[%c6, %c0_10, %c0_11] : memref<9x8x64xbf16, #tpu.memory_space<vmem>>, vector<1x8x64xbf16>
    %17 = vector.shape_cast %16 : vector<1x8x64xbf16> to vector<8x64xbf16>
    %cst_12 = arith.constant dense<0.000000e+00> : vector<256x64xf32>
    %18 = tpu.matmul %15, %17, %cst_12 {dimension_numbers = #tpu.dot_dimension_numbers<[1], [0], [0], [1], [0, 0, 1, 1], [], []>} : vector<256x8xbf16>, vector<8x64xbf16>, vector<256x64xf32> -> vector<256x64xf32>
    %19 = arith.addf %14, %18 : vector<256x64xf32>
    %20 = vector.extract_strided_slice %1 {offsets = [0, 1, 0], sizes = [18, 16, 8], strides = [1, 1, 1]} : vector<18x18x8xbf16> to vector<18x16x8xbf16>
    %21 = vector.shape_cast %20 : vector<18x16x8xbf16> to vector<288x8xbf16>
    %22 = vector.extract_strided_slice %21 {offsets = [0, 0], sizes = [256, 8], strides = [1, 1]} : vector<288x8xbf16> to vector<256x8xbf16>
    %c1 = arith.constant 1 : index
    %c0_13 = arith.constant 0 : index
    %c0_14 = arith.constant 0 : index
    %23 = vector.load %arg2[%c1, %c0_13, %c0_14] : memref<9x8x64xbf16, #tpu.memory_space<vmem>>, vector<1x8x64xbf16>
    %24 = vector.shape_cast %23 : vector<1x8x64xbf16> to vector<8x64xbf16>
    %cst_15 = arith.constant dense<0.000000e+00> : vector<256x64xf32>
    %25 = tpu.matmul %22, %24, %cst_15 {dimension_numbers = #tpu.dot_dimension_numbers<[1], [0], [0], [1], [0, 0, 1, 1], [], []>} : vector<256x8xbf16>, vector<8x64xbf16>, vector<256x64xf32> -> vector<256x64xf32>
    %26 = arith.addf %19, %25 : vector<256x64xf32>
    %27 = vector.extract_strided_slice %21 {offsets = [16, 0], sizes = [256, 8], strides = [1, 1]} : vector<288x8xbf16> to vector<256x8xbf16>
    %c4 = arith.constant 4 : index
    %c0_16 = arith.constant 0 : index
    %c0_17 = arith.constant 0 : index
    %28 = vector.load %arg2[%c4, %c0_16, %c0_17] : memref<9x8x64xbf16, #tpu.memory_space<vmem>>, vector<1x8x64xbf16>
    %29 = vector.shape_cast %28 : vector<1x8x64xbf16> to vector<8x64xbf16>
    %cst_18 = arith.constant dense<0.000000e+00> : vector<256x64xf32>
    %30 = tpu.matmul %27, %29, %cst_18 {dimension_numbers = #tpu.dot_dimension_numbers<[1], [0], [0], [1], [0, 0, 1, 1], [], []>} : vector<256x8xbf16>, vector<8x64xbf16>, vector<256x64xf32> -> vector<256x64xf32>
    %31 = arith.addf %26, %30 : vector<256x64xf32>
    %32 = vector.extract_strided_slice %21 {offsets = [32, 0], sizes = [256, 8], strides = [1, 1]} : vector<288x8xbf16> to vector<256x8xbf16>
    %c7 = arith.constant 7 : index
    %c0_19 = arith.constant 0 : index
    %c0_20 = arith.constant 0 : index
    %33 = vector.load %arg2[%c7, %c0_19, %c0_20] : memref<9x8x64xbf16, #tpu.memory_space<vmem>>, vector<1x8x64xbf16>
    %34 = vector.shape_cast %33 : vector<1x8x64xbf16> to vector<8x64xbf16>
    %cst_21 = arith.constant dense<0.000000e+00> : vector<256x64xf32>
    %35 = tpu.matmul %32, %34, %cst_21 {dimension_numbers = #tpu.dot_dimension_numbers<[1], [0], [0], [1], [0, 0, 1, 1], [], []>} : vector<256x8xbf16>, vector<8x64xbf16>, vector<256x64xf32> -> vector<256x64xf32>
    %36 = arith.addf %31, %35 : vector<256x64xf32>
    %37 = vector.extract_strided_slice %1 {offsets = [0, 2, 0], sizes = [18, 16, 8], strides = [1, 1, 1]} : vector<18x18x8xbf16> to vector<18x16x8xbf16>
    %38 = vector.shape_cast %37 : vector<18x16x8xbf16> to vector<288x8xbf16>
    %39 = vector.extract_strided_slice %38 {offsets = [0, 0], sizes = [256, 8], strides = [1, 1]} : vector<288x8xbf16> to vector<256x8xbf16>
    %c2 = arith.constant 2 : index
    %c0_22 = arith.constant 0 : index
    %c0_23 = arith.constant 0 : index
    %40 = vector.load %arg2[%c2, %c0_22, %c0_23] : memref<9x8x64xbf16, #tpu.memory_space<vmem>>, vector<1x8x64xbf16>
    %41 = vector.shape_cast %40 : vector<1x8x64xbf16> to vector<8x64xbf16>
    %cst_24 = arith.constant dense<0.000000e+00> : vector<256x64xf32>
    %42 = tpu.matmul %39, %41, %cst_24 {dimension_numbers = #tpu.dot_dimension_numbers<[1], [0], [0], [1], [0, 0, 1, 1], [], []>} : vector<256x8xbf16>, vector<8x64xbf16>, vector<256x64xf32> -> vector<256x64xf32>
    %43 = arith.addf %36, %42 : vector<256x64xf32>
    %44 = vector.extract_strided_slice %38 {offsets = [16, 0], sizes = [256, 8], strides = [1, 1]} : vector<288x8xbf16> to vector<256x8xbf16>
    %c5 = arith.constant 5 : index
    %c0_25 = arith.constant 0 : index
    %c0_26 = arith.constant 0 : index
    %45 = vector.load %arg2[%c5, %c0_25, %c0_26] : memref<9x8x64xbf16, #tpu.memory_space<vmem>>, vector<1x8x64xbf16>
    %46 = vector.shape_cast %45 : vector<1x8x64xbf16> to vector<8x64xbf16>
    %cst_27 = arith.constant dense<0.000000e+00> : vector<256x64xf32>
    %47 = tpu.matmul %44, %46, %cst_27 {dimension_numbers = #tpu.dot_dimension_numbers<[1], [0], [0], [1], [0, 0, 1, 1], [], []>} : vector<256x8xbf16>, vector<8x64xbf16>, vector<256x64xf32> -> vector<256x64xf32>
    %48 = arith.addf %43, %47 : vector<256x64xf32>
    %49 = vector.extract_strided_slice %38 {offsets = [32, 0], sizes = [256, 8], strides = [1, 1]} : vector<288x8xbf16> to vector<256x8xbf16>
    %c8 = arith.constant 8 : index
    %c0_28 = arith.constant 0 : index
    %c0_29 = arith.constant 0 : index
    %50 = vector.load %arg2[%c8, %c0_28, %c0_29] : memref<9x8x64xbf16, #tpu.memory_space<vmem>>, vector<1x8x64xbf16>
    %51 = vector.shape_cast %50 : vector<1x8x64xbf16> to vector<8x64xbf16>
    %cst_30 = arith.constant dense<0.000000e+00> : vector<256x64xf32>
    %52 = tpu.matmul %49, %51, %cst_30 {dimension_numbers = #tpu.dot_dimension_numbers<[1], [0], [0], [1], [0, 0, 1, 1], [], []>} : vector<256x8xbf16>, vector<8x64xbf16>, vector<256x64xf32> -> vector<256x64xf32>
    %53 = arith.addf %48, %52 : vector<256x64xf32>
    %c0_31 = arith.constant 0 : index
    %c0_32 = arith.constant 0 : index
    %54 = vector.load %arg3[%c0_31, %c0_32] : memref<1x64xf32, #tpu.memory_space<vmem>>, vector<1x64xf32>
    %55 = vector.broadcast %54 : vector<1x64xf32> to vector<256x64xf32>
    %56 = arith.addf %53, %55 : vector<256x64xf32>
    %cst_33 = arith.constant 0.000000e+00 : f32
    %57 = vector.broadcast %cst_33 : f32 to vector<256x64xf32>
    %58 = arith.maximumf %56, %57 : vector<256x64xf32>
    %59 = arith.truncf %58 : vector<256x64xf32> to vector<256x64xbf16>
    %60 = vector.shape_cast %59 : vector<256x64xbf16> to vector<8x32x64xbf16>
    %61 = vector.extract_strided_slice %60 {offsets = [0, 0, 0], sizes = [8, 16, 64], strides = [1, 1, 1]} : vector<8x32x64xbf16> to vector<8x16x64xbf16>
    %62 = vector.extract_strided_slice %60 {offsets = [0, 16, 0], sizes = [8, 16, 64], strides = [1, 1, 1]} : vector<8x32x64xbf16> to vector<8x16x64xbf16>
    %63 = arith.maximumf %61, %62 : vector<8x16x64xbf16>
    %64 = vector.shape_cast %63 : vector<8x16x64xbf16> to vector<64x2x64xbf16>
    %65 = vector.extract_strided_slice %64 {offsets = [0, 0, 0], sizes = [64, 1, 64], strides = [1, 1, 1]} : vector<64x2x64xbf16> to vector<64x1x64xbf16>
    %66 = vector.shape_cast %65 : vector<64x1x64xbf16> to vector<64x64xbf16>
    %67 = vector.extract_strided_slice %64 {offsets = [0, 1, 0], sizes = [64, 1, 64], strides = [1, 1, 1]} : vector<64x2x64xbf16> to vector<64x1x64xbf16>
    %68 = vector.shape_cast %67 : vector<64x1x64xbf16> to vector<64x64xbf16>
    %69 = arith.maximumf %66, %68 : vector<64x64xbf16>
    %70 = vector.shape_cast %69 : vector<64x64xbf16> to vector<8x8x64xbf16>
    %c0_34 = arith.constant 0 : index
    %c0_35 = arith.constant 0 : index
    %c0_36 = arith.constant 0 : index
    %c0_37 = arith.constant 0 : index
    %71 = vector.load %arg4[%c0_34, %c0_35, %c0_36, %c0_37] : memref<1x8x8x64xbf16, #tpu.memory_space<vmem>>, vector<1x8x8x64xbf16>
    %72 = vector.shape_cast %71 : vector<1x8x8x64xbf16> to vector<8x8x64xbf16>
    %73 = vector.shape_cast %70 : vector<8x8x64xbf16> to vector<1x8x8x64xbf16>
    tpu.vector_store %arg4[%c0_34, %c0_35, %c0_36, %c0_37], %73 {strides = array<i32>} : memref<1x8x8x64xbf16, #tpu.memory_space<vmem>>, vector<1x8x8x64xbf16>,
    return
  }
  func.func @transform_0(%arg0: i32) -> (i32, i32, i32, i32) {
    %c0_i32 = arith.constant 0 : i32
    %c0_i32_0 = arith.constant 0 : i32
    %c0_i32_1 = arith.constant 0 : i32
    %c0_i32_2 = arith.constant 0 : i32
    return %arg0, %c0_i32, %c0_i32_0, %c0_i32_1 : i32, i32, i32, i32
  }
  func.func @transform_1(%arg0: i32) -> (i32, i32, i32) {
    %c0_i32 = arith.constant 0 : i32
    %c0_i32_0 = arith.constant 0 : i32
    %c0_i32_1 = arith.constant 0 : i32
    %c0_i32_2 = arith.constant 0 : i32
    return %c0_i32, %c0_i32_0, %c0_i32_1 : i32, i32, i32
  }
  func.func @transform_2(%arg0: i32) -> (i32, i32) {
    %c0_i32 = arith.constant 0 : i32
    %c0_i32_0 = arith.constant 0 : i32
    %c0_i32_1 = arith.constant 0 : i32
    return %c0_i32, %c0_i32_0 : i32, i32
  }
  func.func @transform_3(%arg0: i32) -> (i32, i32, i32, i32) {
    %c0_i32 = arith.constant 0 : i32
    %c0_i32_0 = arith.constant 0 : i32
    %c0_i32_1 = arith.constant 0 : i32
    %c0_i32_2 = arith.constant 0 : i32
    return %arg0, %c0_i32, %c0_i32_0, %c0_i32_1 : i32, i32, i32, i32
  }
}

module attributes {stable_mosaic.version = 11 : i64} {
  func.func @conv_block_kernel(%arg0: i32, %arg1: memref<1x6x6x128xbf16, #tpu.memory_space<vmem>>, %arg2: memref<9x128x256xbf16, #tpu.memory_space<vmem>>, %arg3: memref<1x256xf32, #tpu.memory_space<vmem>>, %arg4: memref<1x2x2x256xbf16, #tpu.memory_space<vmem>>) attributes {dimension_semantics = [#tpu.dimension_semantics<parallel>], iteration_bounds = array<i64: 2>, scalar_prefetch = 0 : i64, scratch_operands = 0 : i64, tpu.core_type = #tpu.core_type<tc>, window_params = [{transform_indices = @transform_0, window_bounds = array<i64: 1, 6, 6, 128>}, {pipeline_mode = #tpu.pipeline_mode<synchronous>, transform_indices = @transform_1, window_bounds = array<i64: 9, 128, 256>}, {pipeline_mode = #tpu.pipeline_mode<synchronous>, transform_indices = @transform_2, window_bounds = array<i64: 1, 256>}, {transform_indices = @transform_3, window_bounds = array<i64: 1, 2, 2, 256>}]} {
    %c0 = arith.constant 0 : index
    %c0_0 = arith.constant 0 : index
    %c0_1 = arith.constant 0 : index
    %c0_2 = arith.constant 0 : index
    %0 = vector.load %arg1[%c0, %c0_0, %c0_1, %c0_2] : memref<1x6x6x128xbf16, #tpu.memory_space<vmem>>, vector<1x6x6x128xbf16>
    %1 = vector.shape_cast %0 : vector<1x6x6x128xbf16> to vector<6x6x128xbf16>
    %cst = arith.constant 0.000000e+00 : f32
    %2 = vector.broadcast %cst : f32 to vector<16x256xf32>
    %3 = vector.extract_strided_slice %1 {offsets = [0, 0, 0], sizes = [6, 4, 128], strides = [1, 1, 1]} : vector<6x6x128xbf16> to vector<6x4x128xbf16>
    %4 = vector.shape_cast %3 : vector<6x4x128xbf16> to vector<24x128xbf16>
    %5 = vector.extract_strided_slice %4 {offsets = [0, 0], sizes = [16, 128], strides = [1, 1]} : vector<24x128xbf16> to vector<16x128xbf16>
    %c0_3 = arith.constant 0 : index
    %c0_4 = arith.constant 0 : index
    %c0_5 = arith.constant 0 : index
    %6 = vector.load %arg2[%c0_3, %c0_4, %c0_5] : memref<9x128x256xbf16, #tpu.memory_space<vmem>>, vector<1x128x256xbf16>
    %7 = vector.shape_cast %6 : vector<1x128x256xbf16> to vector<128x256xbf16>
    %cst_6 = arith.constant dense<0.000000e+00> : vector<16x256xf32>
    %8 = tpu.matmul %5, %7, %cst_6 {dimension_numbers = #tpu.dot_dimension_numbers<[1], [0], [0], [1], [0, 0, 1, 1], [], []>} : vector<16x128xbf16>, vector<128x256xbf16>, vector<16x256xf32> -> vector<16x256xf32>
    %9 = arith.addf %2, %8 : vector<16x256xf32>
    %10 = vector.extract_strided_slice %4 {offsets = [4, 0], sizes = [16, 128], strides = [1, 1]} : vector<24x128xbf16> to vector<16x128xbf16>
    %c3 = arith.constant 3 : index
    %c0_7 = arith.constant 0 : index
    %c0_8 = arith.constant 0 : index
    %11 = vector.load %arg2[%c3, %c0_7, %c0_8] : memref<9x128x256xbf16, #tpu.memory_space<vmem>>, vector<1x128x256xbf16>
    %12 = vector.shape_cast %11 : vector<1x128x256xbf16> to vector<128x256xbf16>
    %cst_9 = arith.constant dense<0.000000e+00> : vector<16x256xf32>
    %13 = tpu.matmul %10, %12, %cst_9 {dimension_numbers = #tpu.dot_dimension_numbers<[1], [0], [0], [1], [0, 0, 1, 1], [], []>} : vector<16x128xbf16>, vector<128x256xbf16>, vector<16x256xf32> -> vector<16x256xf32>
    %14 = arith.addf %9, %13 : vector<16x256xf32>
    %15 = vector.extract_strided_slice %4 {offsets = [8, 0], sizes = [16, 128], strides = [1, 1]} : vector<24x128xbf16> to vector<16x128xbf16>
    %c6 = arith.constant 6 : index
    %c0_10 = arith.constant 0 : index
    %c0_11 = arith.constant 0 : index
    %16 = vector.load %arg2[%c6, %c0_10, %c0_11] : memref<9x128x256xbf16, #tpu.memory_space<vmem>>, vector<1x128x256xbf16>
    %17 = vector.shape_cast %16 : vector<1x128x256xbf16> to vector<128x256xbf16>
    %cst_12 = arith.constant dense<0.000000e+00> : vector<16x256xf32>
    %18 = tpu.matmul %15, %17, %cst_12 {dimension_numbers = #tpu.dot_dimension_numbers<[1], [0], [0], [1], [0, 0, 1, 1], [], []>} : vector<16x128xbf16>, vector<128x256xbf16>, vector<16x256xf32> -> vector<16x256xf32>
    %19 = arith.addf %14, %18 : vector<16x256xf32>
    %20 = vector.extract_strided_slice %1 {offsets = [0, 1, 0], sizes = [6, 4, 128], strides = [1, 1, 1]} : vector<6x6x128xbf16> to vector<6x4x128xbf16>
    %21 = vector.shape_cast %20 : vector<6x4x128xbf16> to vector<24x128xbf16>
    %22 = vector.extract_strided_slice %21 {offsets = [0, 0], sizes = [16, 128], strides = [1, 1]} : vector<24x128xbf16> to vector<16x128xbf16>
    %c1 = arith.constant 1 : index
    %c0_13 = arith.constant 0 : index
    %c0_14 = arith.constant 0 : index
    %23 = vector.load %arg2[%c1, %c0_13, %c0_14] : memref<9x128x256xbf16, #tpu.memory_space<vmem>>, vector<1x128x256xbf16>
    %24 = vector.shape_cast %23 : vector<1x128x256xbf16> to vector<128x256xbf16>
    %cst_15 = arith.constant dense<0.000000e+00> : vector<16x256xf32>
    %25 = tpu.matmul %22, %24, %cst_15 {dimension_numbers = #tpu.dot_dimension_numbers<[1], [0], [0], [1], [0, 0, 1, 1], [], []>} : vector<16x128xbf16>, vector<128x256xbf16>, vector<16x256xf32> -> vector<16x256xf32>
    %26 = arith.addf %19, %25 : vector<16x256xf32>
    %27 = vector.extract_strided_slice %21 {offsets = [4, 0], sizes = [16, 128], strides = [1, 1]} : vector<24x128xbf16> to vector<16x128xbf16>
    %c4 = arith.constant 4 : index
    %c0_16 = arith.constant 0 : index
    %c0_17 = arith.constant 0 : index
    %28 = vector.load %arg2[%c4, %c0_16, %c0_17] : memref<9x128x256xbf16, #tpu.memory_space<vmem>>, vector<1x128x256xbf16>
    %29 = vector.shape_cast %28 : vector<1x128x256xbf16> to vector<128x256xbf16>
    %cst_18 = arith.constant dense<0.000000e+00> : vector<16x256xf32>
    %30 = tpu.matmul %27, %29, %cst_18 {dimension_numbers = #tpu.dot_dimension_numbers<[1], [0], [0], [1], [0, 0, 1, 1], [], []>} : vector<16x128xbf16>, vector<128x256xbf16>, vector<16x256xf32> -> vector<16x256xf32>
    %31 = arith.addf %26, %30 : vector<16x256xf32>
    %32 = vector.extract_strided_slice %21 {offsets = [8, 0], sizes = [16, 128], strides = [1, 1]} : vector<24x128xbf16> to vector<16x128xbf16>
    %c7 = arith.constant 7 : index
    %c0_19 = arith.constant 0 : index
    %c0_20 = arith.constant 0 : index
    %33 = vector.load %arg2[%c7, %c0_19, %c0_20] : memref<9x128x256xbf16, #tpu.memory_space<vmem>>, vector<1x128x256xbf16>
    %34 = vector.shape_cast %33 : vector<1x128x256xbf16> to vector<128x256xbf16>
    %cst_21 = arith.constant dense<0.000000e+00> : vector<16x256xf32>
    %35 = tpu.matmul %32, %34, %cst_21 {dimension_numbers = #tpu.dot_dimension_numbers<[1], [0], [0], [1], [0, 0, 1, 1], [], []>} : vector<16x128xbf16>, vector<128x256xbf16>, vector<16x256xf32> -> vector<16x256xf32>
    %36 = arith.addf %31, %35 : vector<16x256xf32>
    %37 = vector.extract_strided_slice %1 {offsets = [0, 2, 0], sizes = [6, 4, 128], strides = [1, 1, 1]} : vector<6x6x128xbf16> to vector<6x4x128xbf16>
    %38 = vector.shape_cast %37 : vector<6x4x128xbf16> to vector<24x128xbf16>
    %39 = vector.extract_strided_slice %38 {offsets = [0, 0], sizes = [16, 128], strides = [1, 1]} : vector<24x128xbf16> to vector<16x128xbf16>
    %c2 = arith.constant 2 : index
    %c0_22 = arith.constant 0 : index
    %c0_23 = arith.constant 0 : index
    %40 = vector.load %arg2[%c2, %c0_22, %c0_23] : memref<9x128x256xbf16, #tpu.memory_space<vmem>>, vector<1x128x256xbf16>
    %41 = vector.shape_cast %40 : vector<1x128x256xbf16> to vector<128x256xbf16>
    %cst_24 = arith.constant dense<0.000000e+00> : vector<16x256xf32>
    %42 = tpu.matmul %39, %41, %cst_24 {dimension_numbers = #tpu.dot_dimension_numbers<[1], [0], [0], [1], [0, 0, 1, 1], [], []>} : vector<16x128xbf16>, vector<128x256xbf16>, vector<16x256xf32> -> vector<16x256xf32>
    %43 = arith.addf %36, %42 : vector<16x256xf32>
    %44 = vector.extract_strided_slice %38 {offsets = [4, 0], sizes = [16, 128], strides = [1, 1]} : vector<24x128xbf16> to vector<16x128xbf16>
    %c5 = arith.constant 5 : index
    %c0_25 = arith.constant 0 : index
    %c0_26 = arith.constant 0 : index
    %45 = vector.load %arg2[%c5, %c0_25, %c0_26] : memref<9x128x256xbf16, #tpu.memory_space<vmem>>, vector<1x128x256xbf16>
    %46 = vector.shape_cast %45 : vector<1x128x256xbf16> to vector<128x256xbf16>
    %cst_27 = arith.constant dense<0.000000e+00> : vector<16x256xf32>
    %47 = tpu.matmul %44, %46, %cst_27 {dimension_numbers = #tpu.dot_dimension_numbers<[1], [0], [0], [1], [0, 0, 1, 1], [], []>} : vector<16x128xbf16>, vector<128x256xbf16>, vector<16x256xf32> -> vector<16x256xf32>
    %48 = arith.addf %43, %47 : vector<16x256xf32>
    %49 = vector.extract_strided_slice %38 {offsets = [8, 0], sizes = [16, 128], strides = [1, 1]} : vector<24x128xbf16> to vector<16x128xbf16>
    %c8 = arith.constant 8 : index
    %c0_28 = arith.constant 0 : index
    %c0_29 = arith.constant 0 : index
    %50 = vector.load %arg2[%c8, %c0_28, %c0_29] : memref<9x128x256xbf16, #tpu.memory_space<vmem>>, vector<1x128x256xbf16>
    %51 = vector.shape_cast %50 : vector<1x128x256xbf16> to vector<128x256xbf16>
    %cst_30 = arith.constant dense<0.000000e+00> : vector<16x256xf32>
    %52 = tpu.matmul %49, %51, %cst_30 {dimension_numbers = #tpu.dot_dimension_numbers<[1], [0], [0], [1], [0, 0, 1, 1], [], []>} : vector<16x128xbf16>, vector<128x256xbf16>, vector<16x256xf32> -> vector<16x256xf32>
    %53 = arith.addf %48, %52 : vector<16x256xf32>
    %c0_31 = arith.constant 0 : index
    %c0_32 = arith.constant 0 : index
    %54 = vector.load %arg3[%c0_31, %c0_32] : memref<1x256xf32, #tpu.memory_space<vmem>>, vector<1x256xf32>
    %55 = vector.broadcast %54 : vector<1x256xf32> to vector<16x256xf32>
    %56 = arith.addf %53, %55 : vector<16x256xf32>
    %cst_33 = arith.constant 0.000000e+00 : f32
    %57 = vector.broadcast %cst_33 : f32 to vector<16x256xf32>
    %58 = arith.maximumf %56, %57 : vector<16x256xf32>
    %59 = arith.truncf %58 : vector<16x256xf32> to vector<16x256xbf16>
    %60 = vector.shape_cast %59 : vector<16x256xbf16> to vector<2x8x256xbf16>
    %61 = vector.extract_strided_slice %60 {offsets = [0, 0, 0], sizes = [2, 4, 256], strides = [1, 1, 1]} : vector<2x8x256xbf16> to vector<2x4x256xbf16>
    %62 = vector.extract_strided_slice %60 {offsets = [0, 4, 0], sizes = [2, 4, 256], strides = [1, 1, 1]} : vector<2x8x256xbf16> to vector<2x4x256xbf16>
    %63 = arith.maximumf %61, %62 : vector<2x4x256xbf16>
    %64 = vector.shape_cast %63 : vector<2x4x256xbf16> to vector<4x2x256xbf16>
    %65 = vector.extract_strided_slice %64 {offsets = [0, 0, 0], sizes = [4, 1, 256], strides = [1, 1, 1]} : vector<4x2x256xbf16> to vector<4x1x256xbf16>
    %66 = vector.shape_cast %65 : vector<4x1x256xbf16> to vector<4x256xbf16>
    %67 = vector.extract_strided_slice %64 {offsets = [0, 1, 0], sizes = [4, 1, 256], strides = [1, 1, 1]} : vector<4x2x256xbf16> to vector<4x1x256xbf16>
    %68 = vector.shape_cast %67 : vector<4x1x256xbf16> to vector<4x256xbf16>
    %69 = arith.maximumf %66, %68 : vector<4x256xbf16>
    %70 = vector.shape_cast %69 : vector<4x256xbf16> to vector<2x2x256xbf16>
    %c0_34 = arith.constant 0 : index
    %c0_35 = arith.constant 0 : index
    %c0_36 = arith.constant 0 : index
    %c0_37 = arith.constant 0 : index
    %71 = vector.load %arg4[%c0_34, %c0_35, %c0_36, %c0_37] : memref<1x2x2x256xbf16, #tpu.memory_space<vmem>>, vector<1x2x2x256xbf16>
    %72 = vector.shape_cast %71 : vector<1x2x2x256xbf16> to vector<2x2x256xbf16>
    %73 = vector.shape_cast %70 : vector<2x2x256xbf16> to vector<1x2x2x256xbf16>
    tpu.vector_store %arg4[%c0_34, %c0_35, %c0_36, %c0_37], %73 {strides = array<i32>} : memref<1x2x2x256xbf16, #tpu.memory_space<vmem>>, vector<1x2x2x256xbf16>,
    return
  }
  func.func @transform_0(%arg0: i32) -> (i32, i32, i32, i32) {
    %c0_i32 = arith.constant 0 : i32
    %c0_i32_0 = arith.constant 0 : i32
    %c0_i32_1 = arith.constant 0 : i32
    %c0_i32_2 = arith.constant 0 : i32
    return %arg0, %c0_i32, %c0_i32_0, %c0_i32_1 : i32, i32, i32, i32
  }
  func.func @transform_1(%arg0: i32) -> (i32, i32, i32) {
    %c0_i32 = arith.constant 0 : i32
    %c0_i32_0 = arith.constant 0 : i32
    %c0_i32_1 = arith.constant 0 : i32
    %c0_i32_2 = arith.constant 0 : i32
    return %c0_i32, %c0_i32_0, %c0_i32_1 : i32, i32, i32
  }
  func.func @transform_2(%arg0: i32) -> (i32, i32) {
    %c0_i32 = arith.constant 0 : i32
    %c0_i32_0 = arith.constant 0 : i32
    %c0_i32_1 = arith.constant 0 : i32
    return %c0_i32, %c0_i32_0 : i32, i32
  }
  func.func @transform_3(%arg0: i32) -> (i32, i32, i32, i32) {
    %c0_i32 = arith.constant 0 : i32
    %c0_i32_0 = arith.constant 0 : i32
    %c0_i32_1 = arith.constant 0 : i32
    %c0_i32_2 = arith.constant 0 : i32
    return %arg0, %c0_i32, %c0_i32_0, %c0_i32_1 : i32, i32, i32, i32
  }
}

module attributes {stable_mosaic.version = 11 : i64} {
  func.func @conv_block_kernel(%arg0: i32, %arg1: memref<1x10x10x64xbf16, #tpu.memory_space<vmem>>, %arg2: memref<9x64x128xbf16, #tpu.memory_space<vmem>>, %arg3: memref<1x128xf32, #tpu.memory_space<vmem>>, %arg4: memref<1x4x4x128xbf16, #tpu.memory_space<vmem>>) attributes {dimension_semantics = [#tpu.dimension_semantics<parallel>], iteration_bounds = array<i64: 2>, scalar_prefetch = 0 : i64, scratch_operands = 0 : i64, tpu.core_type = #tpu.core_type<tc>, window_params = [{transform_indices = @transform_0, window_bounds = array<i64: 1, 10, 10, 64>}, {pipeline_mode = #tpu.pipeline_mode<synchronous>, transform_indices = @transform_1, window_bounds = array<i64: 9, 64, 128>}, {pipeline_mode = #tpu.pipeline_mode<synchronous>, transform_indices = @transform_2, window_bounds = array<i64: 1, 128>}, {transform_indices = @transform_3, window_bounds = array<i64: 1, 4, 4, 128>}]} {
    %c0 = arith.constant 0 : index
    %c0_0 = arith.constant 0 : index
    %c0_1 = arith.constant 0 : index
    %c0_2 = arith.constant 0 : index
    %0 = vector.load %arg1[%c0, %c0_0, %c0_1, %c0_2] : memref<1x10x10x64xbf16, #tpu.memory_space<vmem>>, vector<1x10x10x64xbf16>
    %1 = vector.shape_cast %0 : vector<1x10x10x64xbf16> to vector<10x10x64xbf16>
    %cst = arith.constant 0.000000e+00 : f32
    %2 = vector.broadcast %cst : f32 to vector<64x128xf32>
    %3 = vector.extract_strided_slice %1 {offsets = [0, 0, 0], sizes = [10, 8, 64], strides = [1, 1, 1]} : vector<10x10x64xbf16> to vector<10x8x64xbf16>
    %4 = vector.shape_cast %3 : vector<10x8x64xbf16> to vector<80x64xbf16>
    %5 = vector.extract_strided_slice %4 {offsets = [0, 0], sizes = [64, 64], strides = [1, 1]} : vector<80x64xbf16> to vector<64x64xbf16>
    %c0_3 = arith.constant 0 : index
    %c0_4 = arith.constant 0 : index
    %c0_5 = arith.constant 0 : index
    %6 = vector.load %arg2[%c0_3, %c0_4, %c0_5] : memref<9x64x128xbf16, #tpu.memory_space<vmem>>, vector<1x64x128xbf16>
    %7 = vector.shape_cast %6 : vector<1x64x128xbf16> to vector<64x128xbf16>
    %cst_6 = arith.constant dense<0.000000e+00> : vector<64x128xf32>
    %8 = tpu.matmul %5, %7, %cst_6 {dimension_numbers = #tpu.dot_dimension_numbers<[1], [0], [0], [1], [0, 0, 1, 1], [], []>} : vector<64x64xbf16>, vector<64x128xbf16>, vector<64x128xf32> -> vector<64x128xf32>
    %9 = arith.addf %2, %8 : vector<64x128xf32>
    %10 = vector.extract_strided_slice %4 {offsets = [8, 0], sizes = [64, 64], strides = [1, 1]} : vector<80x64xbf16> to vector<64x64xbf16>
    %c3 = arith.constant 3 : index
    %c0_7 = arith.constant 0 : index
    %c0_8 = arith.constant 0 : index
    %11 = vector.load %arg2[%c3, %c0_7, %c0_8] : memref<9x64x128xbf16, #tpu.memory_space<vmem>>, vector<1x64x128xbf16>
    %12 = vector.shape_cast %11 : vector<1x64x128xbf16> to vector<64x128xbf16>
    %cst_9 = arith.constant dense<0.000000e+00> : vector<64x128xf32>
    %13 = tpu.matmul %10, %12, %cst_9 {dimension_numbers = #tpu.dot_dimension_numbers<[1], [0], [0], [1], [0, 0, 1, 1], [], []>} : vector<64x64xbf16>, vector<64x128xbf16>, vector<64x128xf32> -> vector<64x128xf32>
    %14 = arith.addf %9, %13 : vector<64x128xf32>
    %15 = vector.extract_strided_slice %4 {offsets = [16, 0], sizes = [64, 64], strides = [1, 1]} : vector<80x64xbf16> to vector<64x64xbf16>
    %c6 = arith.constant 6 : index
    %c0_10 = arith.constant 0 : index
    %c0_11 = arith.constant 0 : index
    %16 = vector.load %arg2[%c6, %c0_10, %c0_11] : memref<9x64x128xbf16, #tpu.memory_space<vmem>>, vector<1x64x128xbf16>
    %17 = vector.shape_cast %16 : vector<1x64x128xbf16> to vector<64x128xbf16>
    %cst_12 = arith.constant dense<0.000000e+00> : vector<64x128xf32>
    %18 = tpu.matmul %15, %17, %cst_12 {dimension_numbers = #tpu.dot_dimension_numbers<[1], [0], [0], [1], [0, 0, 1, 1], [], []>} : vector<64x64xbf16>, vector<64x128xbf16>, vector<64x128xf32> -> vector<64x128xf32>
    %19 = arith.addf %14, %18 : vector<64x128xf32>
    %20 = vector.extract_strided_slice %1 {offsets = [0, 1, 0], sizes = [10, 8, 64], strides = [1, 1, 1]} : vector<10x10x64xbf16> to vector<10x8x64xbf16>
    %21 = vector.shape_cast %20 : vector<10x8x64xbf16> to vector<80x64xbf16>
    %22 = vector.extract_strided_slice %21 {offsets = [0, 0], sizes = [64, 64], strides = [1, 1]} : vector<80x64xbf16> to vector<64x64xbf16>
    %c1 = arith.constant 1 : index
    %c0_13 = arith.constant 0 : index
    %c0_14 = arith.constant 0 : index
    %23 = vector.load %arg2[%c1, %c0_13, %c0_14] : memref<9x64x128xbf16, #tpu.memory_space<vmem>>, vector<1x64x128xbf16>
    %24 = vector.shape_cast %23 : vector<1x64x128xbf16> to vector<64x128xbf16>
    %cst_15 = arith.constant dense<0.000000e+00> : vector<64x128xf32>
    %25 = tpu.matmul %22, %24, %cst_15 {dimension_numbers = #tpu.dot_dimension_numbers<[1], [0], [0], [1], [0, 0, 1, 1], [], []>} : vector<64x64xbf16>, vector<64x128xbf16>, vector<64x128xf32> -> vector<64x128xf32>
    %26 = arith.addf %19, %25 : vector<64x128xf32>
    %27 = vector.extract_strided_slice %21 {offsets = [8, 0], sizes = [64, 64], strides = [1, 1]} : vector<80x64xbf16> to vector<64x64xbf16>
    %c4 = arith.constant 4 : index
    %c0_16 = arith.constant 0 : index
    %c0_17 = arith.constant 0 : index
    %28 = vector.load %arg2[%c4, %c0_16, %c0_17] : memref<9x64x128xbf16, #tpu.memory_space<vmem>>, vector<1x64x128xbf16>
    %29 = vector.shape_cast %28 : vector<1x64x128xbf16> to vector<64x128xbf16>
    %cst_18 = arith.constant dense<0.000000e+00> : vector<64x128xf32>
    %30 = tpu.matmul %27, %29, %cst_18 {dimension_numbers = #tpu.dot_dimension_numbers<[1], [0], [0], [1], [0, 0, 1, 1], [], []>} : vector<64x64xbf16>, vector<64x128xbf16>, vector<64x128xf32> -> vector<64x128xf32>
    %31 = arith.addf %26, %30 : vector<64x128xf32>
    %32 = vector.extract_strided_slice %21 {offsets = [16, 0], sizes = [64, 64], strides = [1, 1]} : vector<80x64xbf16> to vector<64x64xbf16>
    %c7 = arith.constant 7 : index
    %c0_19 = arith.constant 0 : index
    %c0_20 = arith.constant 0 : index
    %33 = vector.load %arg2[%c7, %c0_19, %c0_20] : memref<9x64x128xbf16, #tpu.memory_space<vmem>>, vector<1x64x128xbf16>
    %34 = vector.shape_cast %33 : vector<1x64x128xbf16> to vector<64x128xbf16>
    %cst_21 = arith.constant dense<0.000000e+00> : vector<64x128xf32>
    %35 = tpu.matmul %32, %34, %cst_21 {dimension_numbers = #tpu.dot_dimension_numbers<[1], [0], [0], [1], [0, 0, 1, 1], [], []>} : vector<64x64xbf16>, vector<64x128xbf16>, vector<64x128xf32> -> vector<64x128xf32>
    %36 = arith.addf %31, %35 : vector<64x128xf32>
    %37 = vector.extract_strided_slice %1 {offsets = [0, 2, 0], sizes = [10, 8, 64], strides = [1, 1, 1]} : vector<10x10x64xbf16> to vector<10x8x64xbf16>
    %38 = vector.shape_cast %37 : vector<10x8x64xbf16> to vector<80x64xbf16>
    %39 = vector.extract_strided_slice %38 {offsets = [0, 0], sizes = [64, 64], strides = [1, 1]} : vector<80x64xbf16> to vector<64x64xbf16>
    %c2 = arith.constant 2 : index
    %c0_22 = arith.constant 0 : index
    %c0_23 = arith.constant 0 : index
    %40 = vector.load %arg2[%c2, %c0_22, %c0_23] : memref<9x64x128xbf16, #tpu.memory_space<vmem>>, vector<1x64x128xbf16>
    %41 = vector.shape_cast %40 : vector<1x64x128xbf16> to vector<64x128xbf16>
    %cst_24 = arith.constant dense<0.000000e+00> : vector<64x128xf32>
    %42 = tpu.matmul %39, %41, %cst_24 {dimension_numbers = #tpu.dot_dimension_numbers<[1], [0], [0], [1], [0, 0, 1, 1], [], []>} : vector<64x64xbf16>, vector<64x128xbf16>, vector<64x128xf32> -> vector<64x128xf32>
    %43 = arith.addf %36, %42 : vector<64x128xf32>
    %44 = vector.extract_strided_slice %38 {offsets = [8, 0], sizes = [64, 64], strides = [1, 1]} : vector<80x64xbf16> to vector<64x64xbf16>
    %c5 = arith.constant 5 : index
    %c0_25 = arith.constant 0 : index
    %c0_26 = arith.constant 0 : index
    %45 = vector.load %arg2[%c5, %c0_25, %c0_26] : memref<9x64x128xbf16, #tpu.memory_space<vmem>>, vector<1x64x128xbf16>
    %46 = vector.shape_cast %45 : vector<1x64x128xbf16> to vector<64x128xbf16>
    %cst_27 = arith.constant dense<0.000000e+00> : vector<64x128xf32>
    %47 = tpu.matmul %44, %46, %cst_27 {dimension_numbers = #tpu.dot_dimension_numbers<[1], [0], [0], [1], [0, 0, 1, 1], [], []>} : vector<64x64xbf16>, vector<64x128xbf16>, vector<64x128xf32> -> vector<64x128xf32>
    %48 = arith.addf %43, %47 : vector<64x128xf32>
    %49 = vector.extract_strided_slice %38 {offsets = [16, 0], sizes = [64, 64], strides = [1, 1]} : vector<80x64xbf16> to vector<64x64xbf16>
    %c8 = arith.constant 8 : index
    %c0_28 = arith.constant 0 : index
    %c0_29 = arith.constant 0 : index
    %50 = vector.load %arg2[%c8, %c0_28, %c0_29] : memref<9x64x128xbf16, #tpu.memory_space<vmem>>, vector<1x64x128xbf16>
    %51 = vector.shape_cast %50 : vector<1x64x128xbf16> to vector<64x128xbf16>
    %cst_30 = arith.constant dense<0.000000e+00> : vector<64x128xf32>
    %52 = tpu.matmul %49, %51, %cst_30 {dimension_numbers = #tpu.dot_dimension_numbers<[1], [0], [0], [1], [0, 0, 1, 1], [], []>} : vector<64x64xbf16>, vector<64x128xbf16>, vector<64x128xf32> -> vector<64x128xf32>
    %53 = arith.addf %48, %52 : vector<64x128xf32>
    %c0_31 = arith.constant 0 : index
    %c0_32 = arith.constant 0 : index
    %54 = vector.load %arg3[%c0_31, %c0_32] : memref<1x128xf32, #tpu.memory_space<vmem>>, vector<1x128xf32>
    %55 = vector.broadcast %54 : vector<1x128xf32> to vector<64x128xf32>
    %56 = arith.addf %53, %55 : vector<64x128xf32>
    %cst_33 = arith.constant 0.000000e+00 : f32
    %57 = vector.broadcast %cst_33 : f32 to vector<64x128xf32>
    %58 = arith.maximumf %56, %57 : vector<64x128xf32>
    %59 = arith.truncf %58 : vector<64x128xf32> to vector<64x128xbf16>
    %60 = vector.shape_cast %59 : vector<64x128xbf16> to vector<4x16x128xbf16>
    %61 = vector.extract_strided_slice %60 {offsets = [0, 0, 0], sizes = [4, 8, 128], strides = [1, 1, 1]} : vector<4x16x128xbf16> to vector<4x8x128xbf16>
    %62 = vector.extract_strided_slice %60 {offsets = [0, 8, 0], sizes = [4, 8, 128], strides = [1, 1, 1]} : vector<4x16x128xbf16> to vector<4x8x128xbf16>
    %63 = arith.maximumf %61, %62 : vector<4x8x128xbf16>
    %64 = vector.shape_cast %63 : vector<4x8x128xbf16> to vector<16x2x128xbf16>
    %65 = vector.extract_strided_slice %64 {offsets = [0, 0, 0], sizes = [16, 1, 128], strides = [1, 1, 1]} : vector<16x2x128xbf16> to vector<16x1x128xbf16>
    %66 = vector.shape_cast %65 : vector<16x1x128xbf16> to vector<16x128xbf16>
    %67 = vector.extract_strided_slice %64 {offsets = [0, 1, 0], sizes = [16, 1, 128], strides = [1, 1, 1]} : vector<16x2x128xbf16> to vector<16x1x128xbf16>
    %68 = vector.shape_cast %67 : vector<16x1x128xbf16> to vector<16x128xbf16>
    %69 = arith.maximumf %66, %68 : vector<16x128xbf16>
    %70 = vector.shape_cast %69 : vector<16x128xbf16> to vector<4x4x128xbf16>
    %c0_34 = arith.constant 0 : index
    %c0_35 = arith.constant 0 : index
    %c0_36 = arith.constant 0 : index
    %c0_37 = arith.constant 0 : index
    %71 = vector.load %arg4[%c0_34, %c0_35, %c0_36, %c0_37] : memref<1x4x4x128xbf16, #tpu.memory_space<vmem>>, vector<1x4x4x128xbf16>
    %72 = vector.shape_cast %71 : vector<1x4x4x128xbf16> to vector<4x4x128xbf16>
    %73 = vector.shape_cast %70 : vector<4x4x128xbf16> to vector<1x4x4x128xbf16>
    tpu.vector_store %arg4[%c0_34, %c0_35, %c0_36, %c0_37], %73 {strides = array<i32>} : memref<1x4x4x128xbf16, #tpu.memory_space<vmem>>, vector<1x4x4x128xbf16>,
    return
  }
  func.func @transform_0(%arg0: i32) -> (i32, i32, i32, i32) {
    %c0_i32 = arith.constant 0 : i32
    %c0_i32_0 = arith.constant 0 : i32
    %c0_i32_1 = arith.constant 0 : i32
    %c0_i32_2 = arith.constant 0 : i32
    return %arg0, %c0_i32, %c0_i32_0, %c0_i32_1 : i32, i32, i32, i32
  }
  func.func @transform_1(%arg0: i32) -> (i32, i32, i32) {
    %c0_i32 = arith.constant 0 : i32
    %c0_i32_0 = arith.constant 0 : i32
    %c0_i32_1 = arith.constant 0 : i32
    %c0_i32_2 = arith.constant 0 : i32
    return %c0_i32, %c0_i32_0, %c0_i32_1 : i32, i32, i32
  }
  func.func @transform_2(%arg0: i32) -> (i32, i32) {
    %c0_i32 = arith.constant 0 : i32
    %c0_i32_0 = arith.constant 0 : i32
    %c0_i32_1 = arith.constant 0 : i32
    return %c0_i32, %c0_i32_0 : i32, i32
  }
  func.func @transform_3(%arg0: i32) -> (i32, i32, i32, i32) {
    %c0_i32 = arith.constant 0 : i32
    %c0_i32_0 = arith.constant 0 : i32
    %c0_i32_1 = arith.constant 0 : i32
    %c0_i32_2 = arith.constant 0 : i32
    return %arg0, %c0_i32, %c0_i32_0, %c0_i32_1 : i32, i32, i32, i32
  }
}

module attributes {stable_mosaic.version = 11 : i64} {
  func.func @classifier_kernel(%arg0: i32, %arg1: memref<2x1024xbf16, #tpu.memory_space<vmem>>, %arg2: memref<1024x128xbf16, #tpu.memory_space<vmem>>, %arg3: memref<1x128xf32, #tpu.memory_space<vmem>>, %arg4: memref<2x128xf32, #tpu.memory_space<vmem>>) attributes {dimension_semantics = [#tpu.dimension_semantics<parallel>], iteration_bounds = array<i64: 1>, scalar_prefetch = 0 : i64, scratch_operands = 0 : i64, tpu.core_type = #tpu.core_type<tc>, window_params = [{transform_indices = @transform_0, window_bounds = array<i64: 2, 1024>}, {pipeline_mode = #tpu.pipeline_mode<synchronous>, transform_indices = @transform_1, window_bounds = array<i64: 1024, 128>}, {pipeline_mode = #tpu.pipeline_mode<synchronous>, transform_indices = @transform_2, window_bounds = array<i64: 1, 128>}, {transform_indices = @transform_3, window_bounds = array<i64: 2, 128>}]} {
    %c0 = arith.constant 0 : index
    %c0_0 = arith.constant 0 : index
    %0 = vector.load %arg1[%c0, %c0_0] : memref<2x1024xbf16, #tpu.memory_space<vmem>>, vector<2x1024xbf16>
    %c0_1 = arith.constant 0 : index
    %c0_2 = arith.constant 0 : index
    %1 = vector.load %arg2[%c0_1, %c0_2] : memref<1024x128xbf16, #tpu.memory_space<vmem>>, vector<1024x128xbf16>
    %cst = arith.constant dense<0.000000e+00> : vector<2x128xf32>
    %2 = tpu.matmul %0, %1, %cst {dimension_numbers = #tpu.dot_dimension_numbers<[1], [0], [0], [1], [0, 0, 1, 1], [], []>} : vector<2x1024xbf16>, vector<1024x128xbf16>, vector<2x128xf32> -> vector<2x128xf32>
    %c0_3 = arith.constant 0 : index
    %c0_4 = arith.constant 0 : index
    %3 = vector.load %arg3[%c0_3, %c0_4] : memref<1x128xf32, #tpu.memory_space<vmem>>, vector<1x128xf32>
    %4 = vector.broadcast %3 : vector<1x128xf32> to vector<2x128xf32>
    %5 = arith.addf %2, %4 : vector<2x128xf32>
    %c0_5 = arith.constant 0 : index
    %c0_6 = arith.constant 0 : index
    %6 = vector.load %arg4[%c0_5, %c0_6] : memref<2x128xf32, #tpu.memory_space<vmem>>, vector<2x128xf32>
    tpu.vector_store %arg4[%c0_5, %c0_6], %5 {strides = array<i32>} : memref<2x128xf32, #tpu.memory_space<vmem>>, vector<2x128xf32>,
    return
  }
  func.func @transform_0(%arg0: i32) -> (i32, i32) {
    %c0_i32 = arith.constant 0 : i32
    %c0_i32_0 = arith.constant 0 : i32
    return %arg0, %c0_i32 : i32, i32
  }
  func.func @transform_1(%arg0: i32) -> (i32, i32) {
    %c0_i32 = arith.constant 0 : i32
    %c0_i32_0 = arith.constant 0 : i32
    %c0_i32_1 = arith.constant 0 : i32
    return %c0_i32, %c0_i32_0 : i32, i32
  }
  func.func @transform_2(%arg0: i32) -> (i32, i32) {
    %c0_i32 = arith.constant 0 : i32
    %c0_i32_0 = arith.constant 0 : i32
    %c0_i32_1 = arith.constant 0 : i32
    return %c0_i32, %c0_i32_0 : i32, i32
  }
  func.func @transform_3(%arg0: i32) -> (i32, i32) {
    %c0_i32 = arith.constant 0 : i32
    %c0_i32_0 = arith.constant 0 : i32
    return %arg0, %c0_i32 : i32, i32
  }
}

</mosaic_0001>

<llo_original>
// kernel: teacher_net14_forward.7
$region0: #{teacher_net14_forward.7}
  #allocation0 [shape = 'u32[]', space=smem, size = 0x4, offset = 0x4, fixed_abs, tag = 'smem constant byte address 0x4 - core index']
  #allocation1 [shape = 'u32[72,128]{1,0:T(1,128)}', space=vmem, size = 0x9000, scoped, tag = 'internal scratch']
  %s0 = inlined_call_operand.vmem [shape: bf16[2,1024], index: 0, kind: input, shape index: {}]
  %s1 = inlined_call_operand.vmem [shape: bf16[1024,128], index: 1, kind: input, shape index: {}]
  %s2 = inlined_call_operand.vmem [shape: f32[1,128], index: 2, kind: input, shape index: {}]
  %s3 = inlined_call_operand.hbm [shape: f32[2,128], index: 3, kind: output, shape index: {}]
  %s4 = sld [smem:[#allocation0]]
  $region22: #{teacher_net14_forward.7} parent=0
    _
  %s6 = ssub.s32 1, %s4
  %s7 = scalar_select 0, %s6, %s4
  $region1: #{teacher_net14_forward.7} parent=0
    #allocation2 [shape = 'u8[1024]{0}', space=vmem, size = 0x400, scoped, tag = 'output window, operand 0, single buffered']
    #allocation3 [shape = 's32[1]{0}', space=sflag, size = 0x4, scoped, tag = 'scoped memory for teacher_net14_forward.7']
    %8 = vsyncpa [#allocation3], 0
    // Predicated region
    $region2: #{teacher_net14_forward.7} parent=1 // pred_check
      _
    $region3: #{teacher_net14_forward.7} parent=1 // pred_check_branch
      %10 = sbr.rel (0) target = $region5
    $region4: #{teacher_net14_forward.7} parent=1 // pred_region
      _
    $region5: #{teacher_net14_forward.7} parent=1 // pred_fallthru
      _
    // Predicated region
    $region6: #{teacher_net14_forward.7} parent=1 // pred_check
      _
    $region7: #{teacher_net14_forward.7} parent=1 // pred_check_branch
      %12 = sbr.rel (0) target = $region9
    $region8: #{teacher_net14_forward.7} parent=1 // pred_region
      _
    $region9: #{teacher_net14_forward.7} parent=1 // pred_fallthru
      _
    // Predicated region
    $region10: #{teacher_net14_forward.7} parent=1 // pred_check
      _
    $region11: #{teacher_net14_forward.7} parent=1 // pred_check_branch
      %14 = sbr.rel (0) target = $region13
    $region12: #{teacher_net14_forward.7} parent=1 // pred_region
      _
    $region13: #{teacher_net14_forward.7} parent=1 // pred_fallthru
      _
    %v15 = vld [vmem:[%s0] sm:$0xff]
    %v16 = vld [vmem:[%s1] sm:$0xf]
    %v17 = vld [vmem:[%s1 + $0x4] sm:$0xf]
    %v18 = vld [vmem:[%s1 + $0x8] sm:$0xf]
    %v19 = vld [vmem:[%s1 + $0xc] sm:$0xf]
    %v20 = vld [vmem:[%s1 + $0x10] sm:$0xf]
    %v21 = vld [vmem:[%s1 + $0x14] sm:$0xf]
    %v22 = vld [vmem:[%s1 + $0x18] sm:$0xf]
    %v23 = vld [vmem:[%s1 + $0x1c] sm:$0xf]
    %v24 = vld [vmem:[%s1 + $0x20] sm:$0xf]
    %v25 = vld [vmem:[%s1 + $0x24] sm:$0xf]
    %v26 = vld [vmem:[%s1 + $0x28] sm:$0xf]
    %v27 = vld [vmem:[%s1 + $0x2c] sm:$0xf]
    %v28 = vld [vmem:[%s1 + $0x30] sm:$0xf]
    %v29 = vld [vmem:[%s1 + $0x34] sm:$0xf]
    %v30 = vld [vmem:[%s1 + $0x38] sm:$0xf]
    %v31 = vld [vmem:[%s1 + $0x3c] sm:$0xf]
    %v32 = vld [vmem:[%s1 + $0x40] sm:$0xf]
    %v33 = vld [vmem:[%s1 + $0x44] sm:$0xf]
    %v34 = vld [vmem:[%s1 + $0x48] sm:$0xf]
    %v35 = vld [vmem:[%s1 + $0x4c] sm:$0xf]
    %v36 = vld [vmem:[%s1 + $0x50] sm:$0xf]
    %v37 = vld [vmem:[%s1 + $0x54] sm:$0xf]
    %v38 = vld [vmem:[%s1 + $0x58] sm:$0xf]
    %v39 = vld [vmem:[%s1 + $0x5c] sm:$0xf]
    %v40 = vld [vmem:[%s1 + $0x60] sm:$0xf]
    %v41 = vld [vmem:[%s1 + $0x64] sm:$0xf]
    %v42 = vld [vmem:[%s1 + $0x68] sm:$0xf]
    %v43 = vld [vmem:[%s1 + $0x6c] sm:$0xf]
    %v44 = vld [vmem:[%s1 + $0x70] sm:$0xf]
    %v45 = vld [vmem:[%s1 + $0x74] sm:$0xf]
    %v46 = vld [vmem:[%s1 + $0x78] sm:$0xf]
    %v47 = vld [vmem:[%s1 + $0x7c] sm:$0xf]
    %v48 = vld [vmem:[%s1 + $0x80] sm:$0xf]
    %v49 = vld [vmem:[%s1 + $0x84] sm:$0xf]
    %v50 = vld [vmem:[%s1 + $0x88] sm:$0xf]
    %v51 = vld [vmem:[%s1 + $0x8c] sm:$0xf]
    %v52 = vld [vmem:[%s1 + $0x90] sm:$0xf]
    %v53 = vld [vmem:[%s1 + $0x94] sm:$0xf]
    %v54 = vld [vmem:[%s1 + $0x98] sm:$0xf]
    %v55 = vld [vmem:[%s1 + $0x9c] sm:$0xf]
    %v56 = vld [vmem:[%s1 + $0xa0] sm:$0xf]
    %v57 = vld [vmem:[%s1 + $0xa4] sm:$0xf]
    %v58 = vld [vmem:[%s1 + $0xa8] sm:$0xf]
    %v59 = vld [vmem:[%s1 + $0xac] sm:$0xf]
    %v60 = vld [vmem:[%s1 + $0xb0] sm:$0xf]
    %v61 = vld [vmem:[%s1 + $0xb4] sm:$0xf]
    %v62 = vld [vmem:[%s1 + $0xb8] sm:$0xf]
    %v63 = vld [vmem:[%s1 + $0xbc] sm:$0xf]
    %v64 = vld [vmem:[%s1 + $0xc0] sm:$0xf]
    %v65 = vld [vmem:[%s1 + $0xc4] sm:$0xf]
    %v66 = vld [vmem:[%s1 + $0xc8] sm:$0xf]
    %v67 = vld [vmem:[%s1 + $0xcc] sm:$0xf]
    %v68 = vld [vmem:[%s1 + $0xd0] sm:$0xf]
    %v69 = vld [vmem:[%s1 + $0xd4] sm:$0xf]
    %v70 = vld [vmem:[%s1 + $0xd8] sm:$0xf]
    %v71 = vld [vmem:[%s1 + $0xdc] sm:$0xf]
    %v72 = vld [vmem:[%s1 + $0xe0] sm:$0xf]
    %v73 = vld [vmem:[%s1 + $0xe4] sm:$0xf]
    %v74 = vld [vmem:[%s1 + $0xe8] sm:$0xf]
    %v75 = vld [vmem:[%s1 + $0xec] sm:$0xf]
    %v76 = vld [vmem:[%s1 + $0xf0] sm:$0xf]
    %v77 = vld [vmem:[%s1 + $0xf4] sm:$0xf]
    %v78 = vld [vmem:[%s1 + $0xf8] sm:$0xf]
    %v79 = vld [vmem:[%s1 + $0xfc] sm:$0xf]
    %v80 = vld [vmem:[%s1 + $0x100] sm:$0xf]
    %v81 = vld [vmem:[%s1 + $0x104] sm:$0xf]
    %v82 = vld [vmem:[%s1 + $0x108] sm:$0xf]
    %v83 = vld [vmem:[%s1 + $0x10c] sm:$0xf]
    %v84 = vld [vmem:[%s1 + $0x110] sm:$0xf]
    %v85 = vld [vmem:[%s1 + $0x114] sm:$0xf]
    %v86 = vld [vmem:[%s1 + $0x118] sm:$0xf]
    %v87 = vld [vmem:[%s1 + $0x11c] sm:$0xf]
    %v88 = vld [vmem:[%s1 + $0x120] sm:$0xf]
    %v89 = vld [vmem:[%s1 + $0x124] sm:$0xf]
    %v90 = vld [vmem:[%s1 + $0x128] sm:$0xf]
    %v91 = vld [vmem:[%s1 + $0x12c] sm:$0xf]
    %v92 = vld [vmem:[%s1 + $0x130] sm:$0xf]
    %v93 = vld [vmem:[%s1 + $0x134] sm:$0xf]
    %v94 = vld [vmem:[%s1 + $0x138] sm:$0xf]
    %v95 = vld [vmem:[%s1 + $0x13c] sm:$0xf]
    %v96 = vld [vmem:[%s1 + $0x140] sm:$0xf]
    %v97 = vld [vmem:[%s1 + $0x144] sm:$0xf]
    %v98 = vld [vmem:[%s1 + $0x148] sm:$0xf]
    %v99 = vld [vmem:[%s1 + $0x14c] sm:$0xf]
    %v100 = vld [vmem:[%s1 + $0x150] sm:$0xf]
    %v101 = vld [vmem:[%s1 + $0x154] sm:$0xf]
    %v102 = vld [vmem:[%s1 + $0x158] sm:$0xf]
    %v103 = vld [vmem:[%s1 + $0x15c] sm:$0xf]
    %v104 = vld [vmem:[%s1 + $0x160] sm:$0xf]
    %v105 = vld [vmem:[%s1 + $0x164] sm:$0xf]
    %v106 = vld [vmem:[%s1 + $0x168] sm:$0xf]
    %v107 = vld [vmem:[%s1 + $0x16c] sm:$0xf]
    %v108 = vld [vmem:[%s1 + $0x170] sm:$0xf]
    %v109 = vld [vmem:[%s1 + $0x174] sm:$0xf]
    %v110 = vld [vmem:[%s1 + $0x178] sm:$0xf]
    %v111 = vld [vmem:[%s1 + $0x17c] sm:$0xf]
    %v112 = vld [vmem:[%s1 + $0x180] sm:$0xf]
    %v113 = vld [vmem:[%s1 + $0x184] sm:$0xf]
    %v114 = vld [vmem:[%s1 + $0x188] sm:$0xf]
    %v115 = vld [vmem:[%s1 + $0x18c] sm:$0xf]
    %v116 = vld [vmem:[%s1 + $0x190] sm:$0xf]
    %v117 = vld [vmem:[%s1 + $0x194] sm:$0xf]
    %v118 = vld [vmem:[%s1 + $0x198] sm:$0xf]
    %v119 = vld [vmem:[%s1 + $0x19c] sm:$0xf]
    %v120 = vld [vmem:[%s1 + $0x1a0] sm:$0xf]
    %v121 = vld [vmem:[%s1 + $0x1a4] sm:$0xf]
    %v122 = vld [vmem:[%s1 + $0x1a8] sm:$0xf]
    %v123 = vld [vmem:[%s1 + $0x1ac] sm:$0xf]
    %v124 = vld [vmem:[%s1 + $0x1b0] sm:$0xf]
    %v125 = vld [vmem:[%s1 + $0x1b4] sm:$0xf]
    %v126 = vld [vmem:[%s1 + $0x1b8] sm:$0xf]
    %v127 = vld [vmem:[%s1 + $0x1bc] sm:$0xf]
    %v128 = vld [vmem:[%s1 + $0x1c0] sm:$0xf]
    %v129 = vld [vmem:[%s1 + $0x1c4] sm:$0xf]
    %v130 = vld [vmem:[%s1 + $0x1c8] sm:$0xf]
    %v131 = vld [vmem:[%s1 + $0x1cc] sm:$0xf]
    %v132 = vld [vmem:[%s1 + $0x1d0] sm:$0xf]
    %v133 = vld [vmem:[%s1 + $0x1d4] sm:$0xf]
    %v134 = vld [vmem:[%s1 + $0x1d8] sm:$0xf]
    %v135 = vld [vmem:[%s1 + $0x1dc] sm:$0xf]
    %v136 = vld [vmem:[%s1 + $0x1e0] sm:$0xf]
    %v137 = vld [vmem:[%s1 + $0x1e4] sm:$0xf]
    %v138 = vld [vmem:[%s1 + $0x1e8] sm:$0xf]
    %v139 = vld [vmem:[%s1 + $0x1ec] sm:$0xf]
    %v140 = vld [vmem:[%s1 + $0x1f0] sm:$0xf]
    %v141 = vld [vmem:[%s1 + $0x1f4] sm:$0xf]
    %v142 = vld [vmem:[%s1 + $0x1f8] sm:$0xf]
    %v143 = vld [vmem:[%s1 + $0x1fc] sm:$0xf]
    %v144 = vld [vmem:[%s2] sm:$0x1]
    %v146 = vperm.slane %v144, 0
    %149 = vst [vmem:[#allocation1] ss:$9 sm:$0xff] %v15
    %v150 = vld [vmem:[#allocation1] sm:$0xff]
    %v151 = vld [vmem:[#allocation1 + $0x9] sm:$0xff]
    %v152 = vld [vmem:[#allocation1 + $0x12] sm:$0xff]
    %v153 = vld [vmem:[#allocation1 + $0x1b] sm:$0xff]
    %v154 = vld [vmem:[#allocation1 + $0x24] sm:$0xff]
    %v155 = vld [vmem:[#allocation1 + $0x2d] sm:$0xff]
    %v156 = vld [vmem:[#allocation1 + $0x36] sm:$0xff]
    %v157 = vld [vmem:[#allocation1 + $0x3f] sm:$0xff]
    %v294 = vunpack.c.l.b16 %v16
    %v295 = vunpack.c.l.b16 %v17
    %v296 = vunpack.c.l.b16 %v18
    %v297 = vunpack.c.l.b16 %v19
    %v298 = vunpack.c.l.b16 %v20
    %v299 = vunpack.c.l.b16 %v21
    %v300 = vunpack.c.l.b16 %v22
    %v301 = vunpack.c.l.b16 %v23
    %v302 = vunpack.c.l.b16 %v24
    %v303 = vunpack.c.l.b16 %v25
    %v304 = vunpack.c.l.b16 %v26
    %v305 = vunpack.c.l.b16 %v27
    %v306 = vunpack.c.l.b16 %v28
    %v307 = vunpack.c.l.b16 %v29
    %v308 = vunpack.c.l.b16 %v30
    %v309 = vunpack.c.l.b16 %v31
    %v310 = vunpack.c.l.b16 %v32
    %v311 = vunpack.c.l.b16 %v33
    %v312 = vunpack.c.l.b16 %v34
    %v313 = vunpack.c.l.b16 %v35
    %v314 = vunpack.c.l.b16 %v36
    %v315 = vunpack.c.l.b16 %v37
    %v316 = vunpack.c.l.b16 %v38
    %v317 = vunpack.c.l.b16 %v39
    %v318 = vunpack.c.l.b16 %v40
    %v319 = vunpack.c.l.b16 %v41
    %v320 = vunpack.c.l.b16 %v42
    %v321 = vunpack.c.l.b16 %v43
    %v322 = vunpack.c.l.b16 %v44
    %v323 = vunpack.c.l.b16 %v45
    %v324 = vunpack.c.l.b16 %v46
    %v325 = vunpack.c.l.b16 %v47
    %v326 = vunpack.c.l.b16 %v48
    %v327 = vunpack.c.l.b16 %v49
    %v328 = vunpack.c.l.b16 %v50
    %v329 = vunpack.c.l.b16 %v51
    %v330 = vunpack.c.l.b16 %v52
    %v331 = vunpack.c.l.b16 %v53
    %v332 = vunpack.c.l.b16 %v54
    %v333 = vunpack.c.l.b16 %v55
    %v334 = vunpack.c.l.b16 %v56
    %v335 = vunpack.c.l.b16 %v57
    %v336 = vunpack.c.l.b16 %v58
    %v337 = vunpack.c.l.b16 %v59
    %v338 = vunpack.c.l.b16 %v60
    %v339 = vunpack.c.l.b16 %v61
    %v340 = vunpack.c.l.b16 %v62
    %v341 = vunpack.c.l.b16 %v63
    %v342 = vunpack.c.l.b16 %v64
    %v343 = vunpack.c.l.b16 %v65
    %v344 = vunpack.c.l.b16 %v66
    %v345 = vunpack.c.l.b16 %v67
    %v346 = vunpack.c.l.b16 %v68
    %v347 = vunpack.c.l.b16 %v69
    %v348 = vunpack.c.l.b16 %v70
    %v349 = vunpack.c.l.b16 %v71
    %v350 = vunpack.c.l.b16 %v72
    %v351 = vunpack.c.l.b16 %v73
    %v352 = vunpack.c.l.b16 %v74
    %v353 = vunpack.c.l.b16 %v75
    %v354 = vunpack.c.l.b16 %v76
    %v355 = vunpack.c.l.b16 %v77
    %v356 = vunpack.c.l.b16 %v78
    %v357 = vunpack.c.l.b16 %v79
    %v358 = vunpack.c.l.b16 %v80
    %v359 = vunpack.c.l.b16 %v81
    %v360 = vunpack.c.l.b16 %v82
    %v361 = vunpack.c.l.b16 %v83
    %v362 = vunpack.c.l.b16 %v84
    %v363 = vunpack.c.l.b16 %v85
    %v364 = vunpack.c.l.b16 %v86
    %v365 = vunpack.c.l.b16 %v87
    %v366 = vunpack.c.l.b16 %v88
    %v367 = vunpack.c.l.b16 %v89
    %v368 = vunpack.c.l.b16 %v90
    %v369 = vunpack.c.l.b16 %v91
    %v370 = vunpack.c.l.b16 %v92
    %v371 = vunpack.c.l.b16 %v93
    %v372 = vunpack.c.l.b16 %v94
    %v373 = vunpack.c.l.b16 %v95
    %v374 = vunpack.c.l.b16 %v96
    %v375 = vunpack.c.l.b16 %v97
    %v376 = vunpack.c.l.b16 %v98
    %v377 = vunpack.c.l.b16 %v99
    %v378 = vunpack.c.l.b16 %v100
    %v379 = vunpack.c.l.b16 %v101
    %v380 = vunpack.c.l.b16 %v102
    %v381 = vunpack.c.l.b16 %v103
    %v382 = vunpack.c.l.b16 %v104
    %v383 = vunpack.c.l.b16 %v105
    %v384 = vunpack.c.l.b16 %v106
    %v385 = vunpack.c.l.b16 %v107
    %v386 = vunpack.c.l.b16 %v108
    %v387 = vunpack.c.l.b16 %v109
    %v388 = vunpack.c.l.b16 %v110
    %v389 = vunpack.c.l.b16 %v111
    %v390 = vunpack.c.l.b16 %v112
    %v391 = vunpack.c.l.b16 %v113
    %v392 = vunpack.c.l.b16 %v114
    %v393 = vunpack.c.l.b16 %v115
    %v394 = vunpack.c.l.b16 %v116
    %v395 = vunpack.c.l.b16 %v117
    %v396 = vunpack.c.l.b16 %v118
    %v397 = vunpack.c.l.b16 %v119
    %v398 = vunpack.c.l.b16 %v120
    %v399 = vunpack.c.l.b16 %v121
    %v400 = vunpack.c.l.b16 %v122
    %v401 = vunpack.c.l.b16 %v123
    %v402 = vunpack.c.l.b16 %v124
    %v403 = vunpack.c.l.b16 %v125
    %v404 = vunpack.c.l.b16 %v126
    %v405 = vunpack.c.l.b16 %v127
    %v406 = vunpack.c.l.b16 %v128
    %v407 = vunpack.c.l.b16 %v129
    %v408 = vunpack.c.l.b16 %v130
    %v409 = vunpack.c.l.b16 %v131
    %v410 = vunpack.c.l.b16 %v132
    %v411 = vunpack.c.l.b16 %v133
    %v412 = vunpack.c.l.b16 %v134
    %v413 = vunpack.c.l.b16 %v135
    %v414 = vunpack.c.l.b16 %v136
    %v415 = vunpack.c.l.b16 %v137
    %v416 = vunpack.c.l.b16 %v138
    %v417 = vunpack.c.l.b16 %v139
    %v418 = vunpack.c.l.b16 %v140
    %v419 = vunpack.c.l.b16 %v141
    %v420 = vunpack.c.l.b16 %v142
    %v421 = vunpack.c.l.b16 %v143
    %v422 = vpack.c.b16 %v295, %v294
    %v423 = vpack.c.b16 %v297, %v296
    %v424 = vpack.c.b16 %v299, %v298
    %v425 = vpack.c.b16 %v301, %v300
    %v426 = vpack.c.b16 %v303, %v302
    %v427 = vpack.c.b16 %v305, %v304
    %v428 = vpack.c.b16 %v307, %v306
    %v429 = vpack.c.b16 %v309, %v308
    %v430 = vpack.c.b16 %v311, %v310
    %v431 = vpack.c.b16 %v313, %v312
    %v432 = vpack.c.b16 %v315, %v314
    %v433 = vpack.c.b16 %v317, %v316
    %v434 = vpack.c.b16 %v319, %v318
    %v435 = vpack.c.b16 %v321, %v320
    %v436 = vpack.c.b16 %v323, %v322
    %v437 = vpack.c.b16 %v325, %v324
    %v438 = vpack.c.b16 %v327, %v326
    %v439 = vpack.c.b16 %v329, %v328
    %v440 = vpack.c.b16 %v331, %v330
    %v441 = vpack.c.b16 %v333, %v332
    %v442 = vpack.c.b16 %v335, %v334
    %v443 = vpack.c.b16 %v337, %v336
    %v444 = vpack.c.b16 %v339, %v338
    %v445 = vpack.c.b16 %v341, %v340
    %v446 = vpack.c.b16 %v343, %v342
    %v447 = vpack.c.b16 %v345, %v344
    %v448 = vpack.c.b16 %v347, %v346
    %v449 = vpack.c.b16 %v349, %v348
    %v450 = vpack.c.b16 %v351, %v350
    %v451 = vpack.c.b16 %v353, %v352
    %v452 = vpack.c.b16 %v355, %v354
    %v453 = vpack.c.b16 %v357, %v356
    %v454 = vpack.c.b16 %v359, %v358
    %v455 = vpack.c.b16 %v361, %v360
    %v456 = vpack.c.b16 %v363, %v362
    %v457 = vpack.c.b16 %v365, %v364
    %v458 = vpack.c.b16 %v367, %v366
    %v459 = vpack.c.b16 %v369, %v368
    %v460 = vpack.c.b16 %v371, %v370
    %v461 = vpack.c.b16 %v373, %v372
    %v462 = vpack.c.b16 %v375, %v374
    %v463 = vpack.c.b16 %v377, %v376
    %v464 = vpack.c.b16 %v379, %v378
    %v465 = vpack.c.b16 %v381, %v380
    %v466 = vpack.c.b16 %v383, %v382
    %v467 = vpack.c.b16 %v385, %v384
    %v468 = vpack.c.b16 %v387, %v386
    %v469 = vpack.c.b16 %v389, %v388
    %v470 = vpack.c.b16 %v391, %v390
    %v471 = vpack.c.b16 %v393, %v392
    %v472 = vpack.c.b16 %v395, %v394
    %v473 = vpack.c.b16 %v397, %v396
    %v474 = vpack.c.b16 %v399, %v398
    %v475 = vpack.c.b16 %v401, %v400
    %v476 = vpack.c.b16 %v403, %v402
    %v477 = vpack.c.b16 %v405, %v404
    %v478 = vpack.c.b16 %v407, %v406
    %v479 = vpack.c.b16 %v409, %v408
    %v480 = vpack.c.b16 %v411, %v410
    %v481 = vpack.c.b16 %v413, %v412
    %v482 = vpack.c.b16 %v415, %v414
    %v483 = vpack.c.b16 %v417, %v416
    %v484 = vpack.c.b16 %v419, %v418
    %v485 = vpack.c.b16 %v421, %v420
    %550 = vmatpush.bf16.msra.mxu0 %v429
    %551 = vmatpush.bf16.msra.mxu0 %v428
    %552 = vmatpush.bf16.msra.mxu0 %v427
    %553 = vmatpush.bf16.msra.mxu0 %v426
    %554 = vmatpush.bf16.msra.mxu0 %v425
    %555 = vmatpush.bf16.msra.mxu0 %v424
    %556 = vmatpush.bf16.msra.mxu0 %v423
    %557 = vmatpush.bf16.msra.mxu0 %v422
    %558 = vmatmul.bf16.gmra.mxu0 %v150
    %v559 = vpop.f32.mrf.mxu0
    %v560 = vadd.f32 %v146, %v559
    %v561 = vpop.f32.mrf.mxu0
    %562 = vdwg.mxu0
    %563 = vmatpush.bf16.msra.mxu0 %v437
    %564 = vmatpush.bf16.msra.mxu0 %v436
    %565 = vmatpush.bf16.msra.mxu0 %v435
    %566 = vmatpush.bf16.msra.mxu0 %v434
    %567 = vmatpush.bf16.msra.mxu0 %v433
    %568 = vmatpush.bf16.msra.mxu0 %v432
    %569 = vmatpush.bf16.msra.mxu0 %v431
    %570 = vmatpush.bf16.msra.mxu0 %v430
    %571 = vmatmul.bf16.gmra.mxu0 %v151
    %v572 = vpop.f32.mrf.mxu0
    %v573 = vadd.f32 %v560, %v572
    %v574 = vpop.f32.mrf.mxu0
    %575 = vdwg.mxu0
    %576 = vmatpush.bf16.msra.mxu0 %v445
    %577 = vmatpush.bf16.msra.mxu0 %v444
    %578 = vmatpush.bf16.msra.mxu0 %v443
    %579 = vmatpush.bf16.msra.mxu0 %v442
    %580 = vmatpush.bf16.msra.mxu0 %v441
    %581 = vmatpush.bf16.msra.mxu0 %v440
    %582 = vmatpush.bf16.msra.mxu0 %v439
    %583 = vmatpush.bf16.msra.mxu0 %v438
    %584 = vmatmul.bf16.gmra.mxu0 %v152
    %v585 = vpop.f32.mrf.mxu0
    %v586 = vadd.f32 %v573, %v585
    %v587 = vpop.f32.mrf.mxu0
    %588 = vdwg.mxu0
    %589 = vmatpush.bf16.msra.mxu0 %v453
    %590 = vmatpush.bf16.msra.mxu0 %v452
    %591 = vmatpush.bf16.msra.mxu0 %v451
    %592 = vmatpush.bf16.msra.mxu0 %v450
    %593 = vmatpush.bf16.msra.mxu0 %v449
    %594 = vmatpush.bf16.msra.mxu0 %v448
    %595 = vmatpush.bf16.msra.mxu0 %v447
    %596 = vmatpush.bf16.msra.mxu0 %v446
    %597 = vmatmul.bf16.gmra.mxu0 %v153
    %v598 = vpop.f32.mrf.mxu0
    %v599 = vadd.f32 %v586, %v598
    %v600 = vpop.f32.mrf.mxu0
    %601 = vdwg.mxu0
    %602 = vmatpush.bf16.msra.mxu0 %v461
    %603 = vmatpush.bf16.msra.mxu0 %v460
    %604 = vmatpush.bf16.msra.mxu0 %v459
    %605 = vmatpush.bf16.msra.mxu0 %v458
    %606 = vmatpush.bf16.msra.mxu0 %v457
    %607 = vmatpush.bf16.msra.mxu0 %v456
    %608 = vmatpush.bf16.msra.mxu0 %v455
    %609 = vmatpush.bf16.msra.mxu0 %v454
    %610 = vmatmul.bf16.gmra.mxu0 %v154
    %v611 = vpop.f32.mrf.mxu0
    %v612 = vadd.f32 %v599, %v611
    %v613 = vpop.f32.mrf.mxu0
    %614 = vdwg.mxu0
    %615 = vmatpush.bf16.msra.mxu0 %v469
    %616 = vmatpush.bf16.msra.mxu0 %v468
    %617 = vmatpush.bf16.msra.mxu0 %v467
    %618 = vmatpush.bf16.msra.mxu0 %v466
    %619 = vmatpush.bf16.msra.mxu0 %v465
    %620 = vmatpush.bf16.msra.mxu0 %v464
    %621 = vmatpush.bf16.msra.mxu0 %v463
    %622 = vmatpush.bf16.msra.mxu0 %v462
    %623 = vmatmul.bf16.gmra.mxu0 %v155
    %v624 = vpop.f32.mrf.mxu0
    %v625 = vadd.f32 %v612, %v624
    %v626 = vpop.f32.mrf.mxu0
    %627 = vdwg.mxu0
    %628 = vmatpush.bf16.msra.mxu0 %v477
    %629 = vmatpush.bf16.msra.mxu0 %v476
    %630 = vmatpush.bf16.msra.mxu0 %v475
    %631 = vmatpush.bf16.msra.mxu0 %v474
    %632 = vmatpush.bf16.msra.mxu0 %v473
    %633 = vmatpush.bf16.msra.mxu0 %v472
    %634 = vmatpush.bf16.msra.mxu0 %v471
    %635 = vmatpush.bf16.msra.mxu0 %v470
    %636 = vmatmul.bf16.gmra.mxu0 %v156
    %v637 = vpop.f32.mrf.mxu0
    %v638 = vadd.f32 %v625, %v637
    %v639 = vpop.f32.mrf.mxu0
    %640 = vdwg.mxu0
    %641 = vmatpush.bf16.msra.mxu0 %v485
    %642 = vmatpush.bf16.msra.mxu0 %v484
    %643 = vmatpush.bf16.msra.mxu0 %v483
    %644 = vmatpush.bf16.msra.mxu0 %v482
    %645 = vmatpush.bf16.msra.mxu0 %v481
    %646 = vmatpush.bf16.msra.mxu0 %v480
    %647 = vmatpush.bf16.msra.mxu0 %v479
    %648 = vmatpush.bf16.msra.mxu0 %v478
    %649 = vmatmul.bf16.gmra.mxu0 %v157
    %v650 = vpop.f32.mrf.mxu0
    %v651 = vadd.f32 %v638, %v650
    %v652 = vpop.f32.mrf.mxu0
    %653 = vdwg.mxu0
    %654 = vst [vmem:[#allocation2] sm:$0x3] %v651
    // Predicated region
    $region14: #{teacher_net14_forward.7} parent=1 // pred_check
      _
    $region15: #{teacher_net14_forward.7} parent=1 // pred_check_branch
      %656 = sbr.rel (0) target = $region17
    $region16: #{teacher_net14_forward.7} parent=1 // pred_region
      %658 = vsyncadd [#allocation3], 0
      %s660 = sshll.u32 [#allocation2], 4
      %s661 = int_to_ptr.vmem [resolvable:$true] %s660
      %s662 = sshll.u32 %s3, 4
      %s663 = int_to_ptr.hbm [resolvable:$true] %s662
      %665 = dma.vmem_to_hbm [thread:$0]  %s661, 32, %s663, [#allocation3]
    $region17: #{teacher_net14_forward.7} parent=1 // pred_fallthru
      _
    // Predicated region
    $region18: #{teacher_net14_forward.7} parent=1 // pred_check
      _
    $region19: #{teacher_net14_forward.7} parent=1 // pred_check_branch
      %667 = sbr.rel (0) target = $region21
    $region20: #{teacher_net14_forward.7} parent=1 // pred_region
      %669 = dma.done [#allocation3], 32
    $region21: #{teacher_net14_forward.7} parent=1 // pred_fallthru
      _
    %670 = vsyncpa [#allocation3], 1

// kernel: teacher_net14_forward.5
$region0: #{teacher_net14_forward.5}
  #allocation0 [shape = 'u32[]', space=smem, size = 0x4, offset = 0x4, fixed_abs, tag = 'smem constant byte address 0x4 - core index']
  #allocation1 [shape = 'u32[72,128]{1,0:T(1,128)}', space=vmem, size = 0x9000, scoped, tag = 'internal scratch']
  %s0 = inlined_call_operand.vmem [shape: bf16[2,10,10,64], index: 0, kind: input, shape index: {}]
  %s1 = inlined_call_operand.hbm [shape: bf16[9,64,128], index: 1, kind: input, shape index: {}]
  %s2 = inlined_call_operand.vmem [shape: f32[1,128], index: 2, kind: input, shape index: {}]
  %s3 = inlined_call_operand.vmem [shape: bf16[2,4,4,128], index: 3, kind: output, shape index: {}]
  %s4 = sld [smem:[#allocation0]]
  $region49: #{teacher_net14_forward.5} parent=0
    _
  %s6 = ssub.s32 1, %s4
  %s7 = scalar_select 0, %s6, %s4
  $region1: #{teacher_net14_forward.5} parent=0
    #allocation2 [shape = 'u8[147456]{0}', space=vmem, size = 0x24000, scoped, tag = 'input window, operand 1, single buffered']
    #allocation3 [shape = 's32[2]{0}', space=sflag, size = 0x8, scoped, tag = 'scoped memory for teacher_net14_forward.5']
    %8 = vsyncpa [#allocation3], 0
    loop: start=0, step=1, limit=4
    $region2: #{teacher_net14_forward.5} parent=1 // loop_pre_header
      _
    $region3: #{teacher_net14_forward.5} parent=1 // loop_header
      %s10 = sphi 0, %s14
      %p11 = scmp.ge.s32.totalorder %s10, 4
      %s20 = sphi 0, %s22
      %s23 = sphi 0, %s20
      %s24 = sphi 0, %s23
      %s40 = sphi 0, %s24
      %s44 = sphi 0, %s44
      %s46 = sphi 0, %s44
      %s47 = sphi 0, %s46
      %s61 = sphi 0, %s47
      %s65 = sphi 0, %s65
      %s67 = sphi 0, %s65
      %s68 = sphi 0, %s67
      %s82 = sphi 0, %s68
      %s88 = sphi 0, %s90
      %s91 = sphi 0, %s88
      %s92 = sphi 0, %s91
      %s108 = sphi 0, %s92
    $region4: #{teacher_net14_forward.5} parent=1 // loop_header_branch
      %13 = sbr.rel (%p11) target = $region8
    $region5: #{teacher_net14_forward.5} parent=1 // loop_body
      %s15 = ssub.s32 %s10, 1
      %s16 = ssub.s32 %s10, 2
      %s17 = sadd.s32 %s10, 1
      %s18 = ssub.s32 %s10, %s17
      %p19 = scmp.eq.s32.totalorder %s18, 0
      %s21 = sadd.s32 %s20, 1
      %s22 = scalar_select %p19, %s20, %s21
      %p25 = pneg %p19
      %p26 = scmp.eq.s32.totalorder %s10, 1
      %p27 = por %p25, %p26
      %p28 = scmp.ne.s32.totalorder %s20, %s23
      %p29 = scmp.eq.s32.totalorder %s10, 0
      %p30 = por %p28, %p29
      %p31 = scmp.ne.s32.totalorder %s20, %s23
      %p32 = scmp.eq.s32.totalorder %s15, 1
      %p33 = por %p31, %p32
      %p34 = scmp.ne.s32.totalorder %s23, %s24
      %p35 = scmp.eq.s32.totalorder %s15, 0
      %p36 = por %p34, %p35
      %p37 = scmp.ne.s32.totalorder %s23, %s24
      %p38 = scmp.eq.s32.totalorder %s16, 1
      %p39 = por %p37, %p38
      %p41 = scmp.ne.s32.totalorder %s24, %s40
      %p42 = scmp.eq.s32.totalorder %s16, 0
      %p43 = por %p41, %p42
      %s45 = sadd.s32 %s44, 1
      %p48 = scmp.eq.s32.totalorder %s10, 1
      %p49 = scmp.ne.s32.totalorder %s44, %s46
      %p50 = scmp.eq.s32.totalorder %s10, 0
      %p51 = por %p49, %p50
      %p52 = scmp.ne.s32.totalorder %s44, %s46
      %p53 = scmp.eq.s32.totalorder %s15, 1
      %p54 = por %p52, %p53
      %p55 = scmp.ne.s32.totalorder %s46, %s47
      %p56 = scmp.eq.s32.totalorder %s15, 0
      %p57 = por %p55, %p56
      %p58 = scmp.ne.s32.totalorder %s46, %s47
      %p59 = scmp.eq.s32.totalorder %s16, 1
      %p60 = por %p58, %p59
      %p62 = scmp.ne.s32.totalorder %s47, %s61
      %p63 = scmp.eq.s32.totalorder %s16, 0
      %p64 = por %p62, %p63
      %s66 = sadd.s32 %s65, 1
      %p69 = scmp.eq.s32.totalorder %s10, 1
      %p70 = scmp.ne.s32.totalorder %s65, %s67
      %p71 = scmp.eq.s32.totalorder %s10, 0
      %p72 = por %p70, %p71
      %p73 = scmp.ne.s32.totalorder %s65, %s67
      %p74 = scmp.eq.s32.totalorder %s15, 1
      %p75 = por %p73, %p74
      %p76 = scmp.ne.s32.totalorder %s67, %s68
      %p77 = scmp.eq.s32.totalorder %s15, 0
      %p78 = por %p76, %p77
      %p79 = scmp.ne.s32.totalorder %s67, %s68
      %p80 = scmp.eq.s32.totalorder %s16, 1
      %p81 = por %p79, %p80
      %p83 = scmp.ne.s32.totalorder %s68, %s82
      %p84 = scmp.eq.s32.totalorder %s16, 0
      %p85 = por %p83, %p84
      %s86 = ssub.s32 %s10, %s17
      %p87 = scmp.eq.s32.totalorder %s86, 0
      %s89 = sadd.s32 %s88, 1
      %s90 = scalar_select %p87, %s88, %s89
      %p93 = pneg %p87
      %p94 = scmp.eq.s32.totalorder %s10, 1
      %p95 = por %p93, %p94
      %p96 = scmp.ne.s32.totalorder %s88, %s91
      %p97 = scmp.eq.s32.totalorder %s10, 0
      %p98 = por %p96, %p97
      %p99 = scmp.ne.s32.totalorder %s88, %s91
      %p100 = scmp.eq.s32.totalorder %s15, 1
      %p101 = por %p99, %p100
      %p102 = scmp.ne.s32.totalorder %s91, %s92
      %p103 = scmp.eq.s32.totalorder %s15, 0
      %p104 = por %p102, %p103
      %p105 = scmp.ne.s32.totalorder %s91, %s92
      %p106 = scmp.eq.s32.totalorder %s16, 1
      %p107 = por %p105, %p106
      %p109 = scmp.ne.s32.totalorder %s92, %s108
      %p110 = scmp.eq.s32.totalorder %s16, 0
      %p111 = por %p109, %p110
      %p112 = scmp.le.s32.totalorder 1, %s10
      %p113 = scmp.lt.s32.totalorder %s10, 3
      %p114 = pnand %p112, %p113
      %p115 = pneg %p114
      // Predicated region
      $region9: #{teacher_net14_forward.5} parent=5 // pred_check
        _
      $region10: #{teacher_net14_forward.5} parent=5 // pred_check_branch
        %117 = sbr.rel (%p114) target = $region12
      $region11: #{teacher_net14_forward.5} parent=5 // pred_region
        %s118 = ssub.s32 %s10, 1
        // Predicated region
        $region13: #{teacher_net14_forward.5} parent=11 // pred_check
          %p119 = pneg %p57
        $region14: #{teacher_net14_forward.5} parent=11 // pred_check_branch
          %121 = sbr.rel (%p119) target = $region16
        $region15: #{teacher_net14_forward.5} parent=11 // pred_region
          %123 = vsyncadd [#allocation3], 0
          %s124 = sshll.u32 %s1, 4
          %s125 = int_to_ptr.hbm [resolvable:$true] %s124
          %s126 = sshll.u32 [#allocation2], 4
          %s127 = int_to_ptr.vmem [resolvable:$true] %s126
          %132 = dma.hbm_to_vmem [thread:$0]  %s125, 4608, %s127, [#allocation3], 64, 64, 4
        $region16: #{teacher_net14_forward.5} parent=11 // pred_fallthru
          _
        // Predicated region
        $region17: #{teacher_net14_forward.5} parent=11 // pred_check
          %p133 = pneg %p78
        $region18: #{teacher_net14_forward.5} parent=11 // pred_check_branch
          %135 = sbr.rel (%p133) target = $region20
        $region19: #{teacher_net14_forward.5} parent=11 // pred_region
          _
        $region20: #{teacher_net14_forward.5} parent=11 // pred_fallthru
          _
      $region12: #{teacher_net14_forward.5} parent=5 // pred_fallthru
        _
      %p136 = scmp.lt.s32.totalorder %s10, 2
      // Predicated region
      $region21: #{teacher_net14_forward.5} parent=5 // pred_check
        %p137 = pneg %p136
      $region22: #{teacher_net14_forward.5} parent=5 // pred_check_branch
        %139 = sbr.rel (%p137) target = $region24
      $region23: #{teacher_net14_forward.5} parent=5 // pred_region
        // Predicated region
        $region25: #{teacher_net14_forward.5} parent=23 // pred_check
          %p140 = pneg %p30
        $region26: #{teacher_net14_forward.5} parent=23 // pred_check_branch
          %142 = sbr.rel (%p140) target = $region28
        $region27: #{teacher_net14_forward.5} parent=23 // pred_region
          %p143 = scmp.lt.s32.totalorder %s10, 1
          %s144 = scalar_select %p143, %s10, 1
          %s145 = smul.addr %s144, 20
          %s146 = smul.addr %s145, 4
          %s147 = scalar_lea.vmem %s0, %s146
        $region28: #{teacher_net14_forward.5} parent=23 // pred_fallthru
          _
      $region24: #{teacher_net14_forward.5} parent=5 // pred_fallthru
        _
      %p148 = scmp.le.s32.totalorder 1, %s10
      %p149 = scmp.lt.s32.totalorder %s10, 3
      %p150 = pnand %p148, %p149
      %p151 = pneg %p150
      // Predicated region
      $region29: #{teacher_net14_forward.5} parent=5 // pred_check
        _
      $region30: #{teacher_net14_forward.5} parent=5 // pred_check_branch
        %153 = sbr.rel (%p150) target = $region32
      $region31: #{teacher_net14_forward.5} parent=5 // pred_region
        %s154 = ssub.s32 %s10, 1
        // Predicated region
        $region33: #{teacher_net14_forward.5} parent=31 // pred_check
          %p155 = pneg %p57
        $region34: #{teacher_net14_forward.5} parent=31 // pred_check_branch
          %157 = sbr.rel (%p155) target = $region36
        $region35: #{teacher_net14_forward.5} parent=31 // pred_region
          %159 = dma.done [#allocation3], 4608
        $region36: #{teacher_net14_forward.5} parent=31 // pred_fallthru
          _
        %p160 = scmp.lt.s32.totalorder %s15, 1
        %s161 = scalar_select %p160, %s15, 1
        %s162 = smul.addr %s161, 20
        %s163 = smul.addr %s162, 4
        %s164 = scalar_lea.vmem %s0, %s163
        %p165 = pneg %p36
        %p166 = pneg %p33
        %p167 = pneg %p57
        %p168 = pneg %p54
        %p169 = pneg %p78
        %p170 = pneg %p75
        %p171 = pneg %p104
        %p172 = pneg %p101
        %p173 = scmp.lt.s32.totalorder %s15, 1
        %s174 = scalar_select %p173, %s15, 1
        %s175 = smul.addr %s174, 4
        %s176 = smul.addr %s175, 2
        %s177 = scalar_lea.vmem %s3, %s176
        %p178 = scmp.lt.s32.totalorder %s15, 1
        %s179 = scalar_select %p178, %s15, 1
        %s180 = smul.addr %s179, 20
        %s181 = smul.addr %s180, 4
        %s182 = scalar_lea.vmem %s0, %s181
        %p183 = scmp.lt.s32.totalorder %s15, 1
        %s184 = scalar_select %p183, %s15, 1
        %s185 = smul.addr %s184, 4
        %s186 = smul.addr %s185, 2
        %s187 = scalar_lea.vmem %s3, %s186
        %v189 = vld [vmem:[%s182] sm:$0xf]
        %v190 = vld [vmem:[%s182 + $0x4] sm:$0x1]
        %v191 = vld [vmem:[%s182 + $0x8] sm:$0xf]
        %v192 = vld [vmem:[%s182 + $0xc] sm:$0x1]
        %v193 = vld [vmem:[%s182 + $0x10] sm:$0xf]
        %v194 = vld [vmem:[%s182 + $0x14] sm:$0x1]
        %v195 = vld [vmem:[%s182 + $0x18] sm:$0xf]
        %v196 = vld [vmem:[%s182 + $0x1c] sm:$0x1]
        %v197 = vld [vmem:[%s182 + $0x20] sm:$0xf]
        %v198 = vld [vmem:[%s182 + $0x24] sm:$0x1]
        %v199 = vld [vmem:[%s182 + $0x28] sm:$0xf]
        %v200 = vld [vmem:[%s182 + $0x2c] sm:$0x1]
        %v201 = vld [vmem:[%s182 + $0x30] sm:$0xf]
        %v202 = vld [vmem:[%s182 + $0x34] sm:$0x1]
        %v203 = vld [vmem:[%s182 + $0x38] sm:$0xf]
        %v204 = vld [vmem:[%s182 + $0x3c] sm:$0x1]
        %v205 = vld [vmem:[%s182 + $0x40] sm:$0xf]
        %v206 = vld [vmem:[%s182 + $0x44] sm:$0x1]
        %v207 = vld [vmem:[%s182 + $0x48] sm:$0xf]
        %v208 = vld [vmem:[%s182 + $0x4c] sm:$0x1]
        %v209 = vld [vmem:[#allocation2] sm:$0xf]
        %v210 = vld [vmem:[#allocation2 + $0x4] sm:$0xf]
        %v211 = vld [vmem:[#allocation2 + $0x8] sm:$0xf]
        %v212 = vld [vmem:[#allocation2 + $0xc] sm:$0xf]
        %v213 = vld [vmem:[#allocation2 + $0x10] sm:$0xf]
        %v214 = vld [vmem:[#allocation2 + $0x14] sm:$0xf]
        %v215 = vld [vmem:[#allocation2 + $0x18] sm:$0xf]
        %v216 = vld [vmem:[#allocation2 + $0x1c] sm:$0xf]
        %s217 = scalar_lea.vmem [#allocation2], 96
        %v218 = vld [vmem:[%s217] sm:$0xf]
        %v219 = vld [vmem:[%s217 + $0x4] sm:$0xf]
        %v220 = vld [vmem:[%s217 + $0x8] sm:$0xf]
        %v221 = vld [vmem:[%s217 + $0xc] sm:$0xf]
        %v222 = vld [vmem:[%s217 + $0x10] sm:$0xf]
        %v223 = vld [vmem:[%s217 + $0x14] sm:$0xf]
        %v224 = vld [vmem:[%s217 + $0x18] sm:$0xf]
        %v225 = vld [vmem:[%s217 + $0x1c] sm:$0xf]
        %v234 = vunpack.c.l.b16 %v191
        %v235 = vunpack.c.l.b16 %v193
        %v236 = vunpack.c.l.b16 %v195
        %v237 = vunpack.c.l.b16 %v197
        %v238 = vunpack.c.l.b16 %v199
        %v239 = vunpack.c.l.b16 %v201
        %v240 = vunpack.c.l.b16 %v203
        %v241 = vunpack.c.l.b16 %v205
        %v242 = vpack.c.b16 %v235, %v234
        %v243 = vpack.c.b16 %v237, %v236
        %v244 = vpack.c.b16 %v239, %v238
        %v245 = vpack.c.b16 %v241, %v240
        %v254 = vunpack.c.l.b16 %v218
        %v255 = vunpack.c.l.b16 %v219
        %v256 = vunpack.c.l.b16 %v220
        %v257 = vunpack.c.l.b16 %v221
        %v258 = vunpack.c.l.b16 %v222
        %v259 = vunpack.c.l.b16 %v223
        %v260 = vunpack.c.l.b16 %v224
        %v261 = vunpack.c.l.b16 %v225
        %v262 = vpack.c.b16 %v255, %v254
        %v263 = vpack.c.b16 %v257, %v256
        %v264 = vpack.c.b16 %v259, %v258
        %v265 = vpack.c.b16 %v261, %v260
        %vm270 = vcmask 523264
        %v272 = vsel %vm270, %v242, 0
        %v275 = vsel %vm270, %v243, 0
        %v278 = vsel %vm270, %v244, 0
        %v281 = vsel %vm270, %v245, 0
        %283 = vmatpush.bf16.msra.mxu0 0
        %284 = vmatpush.bf16.msra.mxu0 0
        %285 = vmatpush.bf16.msra.mxu0 0
        %286 = vmatpush.bf16.msra.mxu0 0
        %287 = vmatpush.bf16.msra.mxu0 %v265
        %288 = vmatpush.bf16.msra.mxu0 %v264
        %289 = vmatpush.bf16.msra.mxu0 %v263
        %290 = vmatpush.bf16.msra.mxu0 %v262
        %291 = vmatmul.bf16.gmra.mxu0 %v272
        %v292 = vpop.f32.mrf.mxu0
        %v293 = vadd.f32 0.0, %v292
        %v294 = vpop.f32.mrf.mxu0
        %v295 = vadd.f32 0.0, %v294
        %296 = vmatmul.bf16.gmra.mxu0 %v275
        %v297 = vpop.f32.mrf.mxu0
        %v298 = vadd.f32 0.0, %v297
        %v299 = vpop.f32.mrf.mxu0
        %v300 = vadd.f32 0.0, %v299
        %301 = vmatmul.bf16.gmra.mxu0 %v278
        %v302 = vpop.f32.mrf.mxu0
        %v303 = vadd.f32 0.0, %v302
        %v304 = vpop.f32.mrf.mxu0
        %v305 = vadd.f32 0.0, %v304
        %306 = vmatmul.bf16.gmra.mxu0 %v281
        %v307 = vpop.f32.mrf.mxu0
        %v308 = vadd.f32 0.0, %v307
        %v309 = vpop.f32.mrf.mxu0
        %v310 = vadd.f32 0.0, %v309
        %311 = vdwg.mxu0
        %v313 = vunpack.c.l.b16 %v189
        %v314 = vpack.c.b16 %v234, %v313
        %v315 = vpack.c.b16 %v236, %v235
        %v316 = vpack.c.b16 %v238, %v237
        %v317 = vpack.c.b16 %v240, %v239
        %v326 = vunpack.c.l.b16 %v209
        %v327 = vunpack.c.l.b16 %v210
        %v328 = vunpack.c.l.b16 %v211
        %v329 = vunpack.c.l.b16 %v212
        %v330 = vunpack.c.l.b16 %v213
        %v331 = vunpack.c.l.b16 %v214
        %v332 = vunpack.c.l.b16 %v215
        %v333 = vunpack.c.l.b16 %v216
        %v334 = vpack.c.b16 %v327, %v326
        %v335 = vpack.c.b16 %v329, %v328
        %v336 = vpack.c.b16 %v331, %v330
        %v337 = vpack.c.b16 %v333, %v332
        %v343 = vsel %vm270, %v314, 0
        %v346 = vsel %vm270, %v315, 0
        %v349 = vsel %vm270, %v316, 0
        %v352 = vsel %vm270, %v317, 0
        %354 = vmatpush.bf16.msra.mxu0 0
        %355 = vmatpush.bf16.msra.mxu0 0
        %356 = vmatpush.bf16.msra.mxu0 0
        %357 = vmatpush.bf16.msra.mxu0 0
        %358 = vmatpush.bf16.msra.mxu0 %v337
        %359 = vmatpush.bf16.msra.mxu0 %v336
        %360 = vmatpush.bf16.msra.mxu0 %v335
        %361 = vmatpush.bf16.msra.mxu0 %v334
        %362 = vmatmul.bf16.gmra.mxu0 %v343
        %v363 = vpop.f32.mrf.mxu0
        %v364 = vadd.f32 %v293, %v363
        %v365 = vpop.f32.mrf.mxu0
        %v366 = vadd.f32 %v295, %v365
        %367 = vmatmul.bf16.gmra.mxu0 %v346
        %v368 = vpop.f32.mrf.mxu0
        %v369 = vadd.f32 %v298, %v368
        %v370 = vpop.f32.mrf.mxu0
        %v371 = vadd.f32 %v300, %v370
        %372 = vmatmul.bf16.gmra.mxu0 %v349
        %v373 = vpop.f32.mrf.mxu0
        %v374 = vadd.f32 %v303, %v373
        %v375 = vpop.f32.mrf.mxu0
        %v376 = vadd.f32 %v305, %v375
        %377 = vmatmul.bf16.gmra.mxu0 %v352
        %v378 = vpop.f32.mrf.mxu0
        %v379 = vadd.f32 %v308, %v378
        %v380 = vpop.f32.mrf.mxu0
        %v381 = vadd.f32 %v310, %v380
        %382 = vdwg.mxu0
        %s383 = scalar_lea.vmem [#allocation2], 192
        %v384 = vld [vmem:[%s383] sm:$0xf]
        %v385 = vld [vmem:[%s383 + $0x4] sm:$0xf]
        %v386 = vld [vmem:[%s383 + $0x8] sm:$0xf]
        %v387 = vld [vmem:[%s383 + $0xc] sm:$0xf]
        %v388 = vld [vmem:[%s383 + $0x10] sm:$0xf]
        %v389 = vld [vmem:[%s383 + $0x14] sm:$0xf]
        %v390 = vld [vmem:[%s383 + $0x18] sm:$0xf]
        %v391 = vld [vmem:[%s383 + $0x1c] sm:$0xf]
        %v393 = vunpack.c.l.b16 %v207
        %v394 = vpack.c.b16 %v393, %v241
        %v403 = vunpack.c.l.b16 %v384
        %v404 = vunpack.c.l.b16 %v385
        %v405 = vunpack.c.l.b16 %v386
        %v406 = vunpack.c.l.b16 %v387
        %v407 = vunpack.c.l.b16 %v388
        %v408 = vunpack.c.l.b16 %v389
        %v409 = vunpack.c.l.b16 %v390
        %v410 = vunpack.c.l.b16 %v391
        %v411 = vpack.c.b16 %v404, %v403
        %v412 = vpack.c.b16 %v406, %v405
        %v413 = vpack.c.b16 %v408, %v407
        %v414 = vpack.c.b16 %v410, %v409
        %v420 = vsel %vm270, %v394, 0
        %422 = vmatpush.bf16.msra.mxu0 0
        %423 = vmatpush.bf16.msra.mxu0 0
        %424 = vmatpush.bf16.msra.mxu0 0
        %425 = vmatpush.bf16.msra.mxu0 0
        %426 = vmatpush.bf16.msra.mxu0 %v414
        %427 = vmatpush.bf16.msra.mxu0 %v413
        %428 = vmatpush.bf16.msra.mxu0 %v412
        %429 = vmatpush.bf16.msra.mxu0 %v411
        %430 = vmatmul.bf16.gmra.mxu0 %v346
        %v431 = vpop.f32.mrf.mxu0
        %v432 = vadd.f32 0.0, %v431
        %v433 = vpop.f32.mrf.mxu0
        %v434 = vadd.f32 0.0, %v433
        %435 = vmatmul.bf16.gmra.mxu0 %v349
        %v436 = vpop.f32.mrf.mxu0
        %v437 = vadd.f32 0.0, %v436
        %v438 = vpop.f32.mrf.mxu0
        %v439 = vadd.f32 0.0, %v438
        %440 = vmatmul.bf16.gmra.mxu0 %v352
        %v441 = vpop.f32.mrf.mxu0
        %v442 = vadd.f32 0.0, %v441
        %v443 = vpop.f32.mrf.mxu0
        %v444 = vadd.f32 0.0, %v443
        %445 = vmatmul.bf16.gmra.mxu0 %v420
        %v446 = vpop.f32.mrf.mxu0
        %v447 = vadd.f32 0.0, %v446
        %v448 = vpop.f32.mrf.mxu0
        %v449 = vadd.f32 0.0, %v448
        %450 = vdwg.mxu0
        %v451 = vadd.f32 %v364, %v432
        %v452 = vadd.f32 %v366, %v434
        %v453 = vadd.f32 %v369, %v437
        %v454 = vadd.f32 %v371, %v439
        %v455 = vadd.f32 %v374, %v442
        %v456 = vadd.f32 %v376, %v444
        %v457 = vadd.f32 %v379, %v447
        %v458 = vadd.f32 %v381, %v449
        %vm459 = vsmask.f32 3328
        %vm460 = vsmask.f32 7440
        %vm461 = vmor %vm459, %vm460
        %v463 = vshrl.u32 %v189, 16
        %v465 = vrot.slane %v463, 4
        %v466 = vshll.u32 %v189, 16
        %v468 = vrot.slane %v466, 5
        %v469 = vor.u32 %v465, %v468
        %v470 = vrot.slane %v469, 4
        %v472 = vshll.u32 %v190, 16
        %v474 = vrot.slane %v472, 5
        %v475 = vsel %vm461, %v470, %v474
        %v477 = vshrl.u32 %v191, 16
        %v479 = vrot.slane %v477, 4
        %v480 = vshll.u32 %v191, 16
        %v482 = vrot.slane %v480, 5
        %v483 = vor.u32 %v479, %v482
        %v484 = vrot.slane %v483, 4
        %v486 = vshll.u32 %v192, 16
        %v488 = vrot.slane %v486, 5
        %v489 = vsel %vm461, %v484, %v488
        %v491 = vshrl.u32 %v193, 16
        %v493 = vrot.slane %v491, 4
        %v494 = vshll.u32 %v193, 16
        %v496 = vrot.slane %v494, 5
        %v497 = vor.u32 %v493, %v496
        %v498 = vrot.slane %v497, 4
        %v500 = vshll.u32 %v194, 16
        %v502 = vrot.slane %v500, 5
        %v503 = vsel %vm461, %v498, %v502
        %v505 = vshrl.u32 %v195, 16
        %v507 = vrot.slane %v505, 4
        %v508 = vshll.u32 %v195, 16
        %v510 = vrot.slane %v508, 5
        %v511 = vor.u32 %v507, %v510
        %v512 = vrot.slane %v511, 4
        %v514 = vshll.u32 %v196, 16
        %v516 = vrot.slane %v514, 5
        %v517 = vsel %vm461, %v512, %v516
        %v519 = vshrl.u32 %v197, 16
        %v521 = vrot.slane %v519, 4
        %v522 = vshll.u32 %v197, 16
        %v524 = vrot.slane %v522, 5
        %v525 = vor.u32 %v521, %v524
        %v526 = vrot.slane %v525, 4
        %v528 = vshll.u32 %v198, 16
        %v530 = vrot.slane %v528, 5
        %v531 = vsel %vm461, %v526, %v530
        %v533 = vshrl.u32 %v199, 16
        %v535 = vrot.slane %v533, 4
        %v536 = vshll.u32 %v199, 16
        %v538 = vrot.slane %v536, 5
        %v539 = vor.u32 %v535, %v538
        %v540 = vrot.slane %v539, 4
        %v542 = vshll.u32 %v200, 16
        %v544 = vrot.slane %v542, 5
        %v545 = vsel %vm461, %v540, %v544
        %v547 = vshrl.u32 %v201, 16
        %v549 = vrot.slane %v547, 4
        %v550 = vshll.u32 %v201, 16
        %v552 = vrot.slane %v550, 5
        %v553 = vor.u32 %v549, %v552
        %v554 = vrot.slane %v553, 4
        %v556 = vshll.u32 %v202, 16
        %v558 = vrot.slane %v556, 5
        %v559 = vsel %vm461, %v554, %v558
        %v561 = vshrl.u32 %v203, 16
        %v563 = vrot.slane %v561, 4
        %v564 = vshll.u32 %v203, 16
        %v566 = vrot.slane %v564, 5
        %v567 = vor.u32 %v563, %v566
        %v568 = vrot.slane %v567, 4
        %v570 = vshll.u32 %v204, 16
        %v572 = vrot.slane %v570, 5
        %v573 = vsel %vm461, %v568, %v572
        %v575 = vshrl.u32 %v205, 16
        %v577 = vrot.slane %v575, 4
        %v578 = vshll.u32 %v205, 16
        %v580 = vrot.slane %v578, 5
        %v581 = vor.u32 %v577, %v580
        %v582 = vrot.slane %v581, 4
        %v584 = vshll.u32 %v206, 16
        %v586 = vrot.slane %v584, 5
        %v587 = vsel %vm461, %v582, %v586
        %v589 = vshrl.u32 %v207, 16
        %v591 = vrot.slane %v589, 4
        %v592 = vshll.u32 %v207, 16
        %v594 = vrot.slane %v592, 5
        %v595 = vor.u32 %v591, %v594
        %v596 = vrot.slane %v595, 4
        %v598 = vshll.u32 %v208, 16
        %v600 = vrot.slane %v598, 5
        %v601 = vsel %vm461, %v596, %v600
        %s602 = scalar_lea.vmem [#allocation2], 32
        %v603 = vld [vmem:[%s602] sm:$0xf]
        %v604 = vld [vmem:[%s602 + $0x4] sm:$0xf]
        %v605 = vld [vmem:[%s602 + $0x8] sm:$0xf]
        %v606 = vld [vmem:[%s602 + $0xc] sm:$0xf]
        %v607 = vld [vmem:[%s602 + $0x10] sm:$0xf]
        %v608 = vld [vmem:[%s602 + $0x14] sm:$0xf]
        %v609 = vld [vmem:[%s602 + $0x18] sm:$0xf]
        %v610 = vld [vmem:[%s602 + $0x1c] sm:$0xf]
        %v611 = vunpack.c.l.b16 %v475
        %v612 = vunpack.c.l.b16 %v489
        %v613 = vunpack.c.l.b16 %v503
        %v614 = vunpack.c.l.b16 %v517
        %v615 = vunpack.c.l.b16 %v531
        %v616 = vunpack.c.l.b16 %v545
        %v617 = vunpack.c.l.b16 %v559
        %v618 = vunpack.c.l.b16 %v573
        %v619 = vpack.c.b16 %v612, %v611
        %v620 = vpack.c.b16 %v614, %v613
        %v621 = vpack.c.b16 %v616, %v615
        %v622 = vpack.c.b16 %v618, %v617
        %v631 = vunpack.c.l.b16 %v603
        %v632 = vunpack.c.l.b16 %v604
        %v633 = vunpack.c.l.b16 %v605
        %v634 = vunpack.c.l.b16 %v606
        %v635 = vunpack.c.l.b16 %v607
        %v636 = vunpack.c.l.b16 %v608
        %v637 = vunpack.c.l.b16 %v609
        %v638 = vunpack.c.l.b16 %v610
        %v639 = vpack.c.b16 %v632, %v631
        %v640 = vpack.c.b16 %v634, %v633
        %v641 = vpack.c.b16 %v636, %v635
        %v642 = vpack.c.b16 %v638, %v637
        %v648 = vsel %vm270, %v619, 0
        %v651 = vsel %vm270, %v620, 0
        %v654 = vsel %vm270, %v621, 0
        %v657 = vsel %vm270, %v622, 0
        %659 = vmatpush.bf16.msra.mxu0 0
        %660 = vmatpush.bf16.msra.mxu0 0
        %661 = vmatpush.bf16.msra.mxu0 0
        %662 = vmatpush.bf16.msra.mxu0 0
        %663 = vmatpush.bf16.msra.mxu0 %v642
        %664 = vmatpush.bf16.msra.mxu0 %v641
        %665 = vmatpush.bf16.msra.mxu0 %v640
        %666 = vmatpush.bf16.msra.mxu0 %v639
        %667 = vmatmul.bf16.gmra.mxu0 %v648
        %v668 = vpop.f32.mrf.mxu0
        %v669 = vadd.f32 0.0, %v668
        %v670 = vpop.f32.mrf.mxu0
        %v671 = vadd.f32 0.0, %v670
        %672 = vmatmul.bf16.gmra.mxu0 %v651
        %v673 = vpop.f32.mrf.mxu0
        %v674 = vadd.f32 0.0, %v673
        %v675 = vpop.f32.mrf.mxu0
        %v676 = vadd.f32 0.0, %v675
        %677 = vmatmul.bf16.gmra.mxu0 %v654
        %v678 = vpop.f32.mrf.mxu0
        %v679 = vadd.f32 0.0, %v678
        %v680 = vpop.f32.mrf.mxu0
        %v681 = vadd.f32 0.0, %v680
        %682 = vmatmul.bf16.gmra.mxu0 %v657
        %v683 = vpop.f32.mrf.mxu0
        %v684 = vadd.f32 0.0, %v683
        %v685 = vpop.f32.mrf.mxu0
        %v686 = vadd.f32 0.0, %v685
        %687 = vdwg.mxu0
        %v688 = vadd.f32 %v451, %v669
        %v689 = vadd.f32 %v452, %v671
        %v690 = vadd.f32 %v453, %v674
        %v691 = vadd.f32 %v454, %v676
        %v692 = vadd.f32 %v455, %v679
        %v693 = vadd.f32 %v456, %v681
        %v694 = vadd.f32 %v457, %v684
        %v695 = vadd.f32 %v458, %v686
        %s696 = scalar_lea.vmem [#allocation2], 128
        %v697 = vld [vmem:[%s696] sm:$0xf]
        %v698 = vld [vmem:[%s696 + $0x4] sm:$0xf]
        %v699 = vld [vmem:[%s696 + $0x8] sm:$0xf]
        %v700 = vld [vmem:[%s696 + $0xc] sm:$0xf]
        %v701 = vld [vmem:[%s696 + $0x10] sm:$0xf]
        %v702 = vld [vmem:[%s696 + $0x14] sm:$0xf]
        %v703 = vld [vmem:[%s696 + $0x18] sm:$0xf]
        %v704 = vld [vmem:[%s696 + $0x1c] sm:$0xf]
        %v705 = vunpack.c.l.b16 %v587
        %v706 = vpack.c.b16 %v613, %v612
        %v707 = vpack.c.b16 %v615, %v614
        %v708 = vpack.c.b16 %v617, %v616
        %v709 = vpack.c.b16 %v705, %v618
        %v718 = vunpack.c.l.b16 %v697
        %v719 = vunpack.c.l.b16 %v698
        %v720 = vunpack.c.l.b16 %v699
        %v721 = vunpack.c.l.b16 %v700
        %v722 = vunpack.c.l.b16 %v701
        %v723 = vunpack.c.l.b16 %v702
        %v724 = vunpack.c.l.b16 %v703
        %v725 = vunpack.c.l.b16 %v704
        %v726 = vpack.c.b16 %v719, %v718
        %v727 = vpack.c.b16 %v721, %v720
        %v728 = vpack.c.b16 %v723, %v722
        %v729 = vpack.c.b16 %v725, %v724
        %v735 = vsel %vm270, %v706, 0
        %v738 = vsel %vm270, %v707, 0
        %v741 = vsel %vm270, %v708, 0
        %v744 = vsel %vm270, %v709, 0
        %746 = vmatpush.bf16.msra.mxu0 0
        %747 = vmatpush.bf16.msra.mxu0 0
        %748 = vmatpush.bf16.msra.mxu0 0
        %749 = vmatpush.bf16.msra.mxu0 0
        %750 = vmatpush.bf16.msra.mxu0 %v729
        %751 = vmatpush.bf16.msra.mxu0 %v728
        %752 = vmatpush.bf16.msra.mxu0 %v727
        %753 = vmatpush.bf16.msra.mxu0 %v726
        %754 = vmatmul.bf16.gmra.mxu0 %v735
        %v755 = vpop.f32.mrf.mxu0
        %v756 = vadd.f32 0.0, %v755
        %v757 = vpop.f32.mrf.mxu0
        %v758 = vadd.f32 0.0, %v757
        %759 = vmatmul.bf16.gmra.mxu0 %v738
        %v760 = vpop.f32.mrf.mxu0
        %v761 = vadd.f32 0.0, %v760
        %v762 = vpop.f32.mrf.mxu0
        %v763 = vadd.f32 0.0, %v762
        %764 = vmatmul.bf16.gmra.mxu0 %v741
        %v765 = vpop.f32.mrf.mxu0
        %v766 = vadd.f32 0.0, %v765
        %v767 = vpop.f32.mrf.mxu0
        %v768 = vadd.f32 0.0, %v767
        %769 = vmatmul.bf16.gmra.mxu0 %v744
        %v770 = vpop.f32.mrf.mxu0
        %v771 = vadd.f32 0.0, %v770
        %v772 = vpop.f32.mrf.mxu0
        %v773 = vadd.f32 0.0, %v772
        %774 = vdwg.mxu0
        %v775 = vadd.f32 %v688, %v756
        %v776 = vadd.f32 %v689, %v758
        %v777 = vadd.f32 %v690, %v761
        %v778 = vadd.f32 %v691, %v763
        %v779 = vadd.f32 %v692, %v766
        %v780 = vadd.f32 %v693, %v768
        %v781 = vadd.f32 %v694, %v771
        %v782 = vadd.f32 %v695, %v773
        %s783 = scalar_lea.vmem [#allocation2], 224
        %v784 = vld [vmem:[%s783] sm:$0xf]
        %v785 = vld [vmem:[%s783 + $0x4] sm:$0xf]
        %v786 = vld [vmem:[%s783 + $0x8] sm:$0xf]
        %v787 = vld [vmem:[%s783 + $0xc] sm:$0xf]
        %v788 = vld [vmem:[%s783 + $0x10] sm:$0xf]
        %v789 = vld [vmem:[%s783 + $0x14] sm:$0xf]
        %v790 = vld [vmem:[%s783 + $0x18] sm:$0xf]
        %v791 = vld [vmem:[%s783 + $0x1c] sm:$0xf]
        %v792 = vunpack.c.l.b16 %v601
        %v793 = vpack.c.b16 %v792, %v705
        %v802 = vunpack.c.l.b16 %v784
        %v803 = vunpack.c.l.b16 %v785
        %v804 = vunpack.c.l.b16 %v786
        %v805 = vunpack.c.l.b16 %v787
        %v806 = vunpack.c.l.b16 %v788
        %v807 = vunpack.c.l.b16 %v789
        %v808 = vunpack.c.l.b16 %v790
        %v809 = vunpack.c.l.b16 %v791
        %v810 = vpack.c.b16 %v803, %v802
        %v811 = vpack.c.b16 %v805, %v804
        %v812 = vpack.c.b16 %v807, %v806
        %v813 = vpack.c.b16 %v809, %v808
        %v819 = vsel %vm270, %v793, 0
        %821 = vmatpush.bf16.msra.mxu0 0
        %822 = vmatpush.bf16.msra.mxu0 0
        %823 = vmatpush.bf16.msra.mxu0 0
        %824 = vmatpush.bf16.msra.mxu0 0
        %825 = vmatpush.bf16.msra.mxu0 %v813
        %826 = vmatpush.bf16.msra.mxu0 %v812
        %827 = vmatpush.bf16.msra.mxu0 %v811
        %828 = vmatpush.bf16.msra.mxu0 %v810
        %829 = vmatmul.bf16.gmra.mxu0 %v651
        %v830 = vpop.f32.mrf.mxu0
        %v831 = vadd.f32 0.0, %v830
        %v832 = vpop.f32.mrf.mxu0
        %v833 = vadd.f32 0.0, %v832
        %834 = vmatmul.bf16.gmra.mxu0 %v654
        %v835 = vpop.f32.mrf.mxu0
        %v836 = vadd.f32 0.0, %v835
        %v837 = vpop.f32.mrf.mxu0
        %v838 = vadd.f32 0.0, %v837
        %839 = vmatmul.bf16.gmra.mxu0 %v657
        %v840 = vpop.f32.mrf.mxu0
        %v841 = vadd.f32 0.0, %v840
        %v842 = vpop.f32.mrf.mxu0
        %v843 = vadd.f32 0.0, %v842
        %844 = vmatmul.bf16.gmra.mxu0 %v819
        %v845 = vpop.f32.mrf.mxu0
        %v846 = vadd.f32 0.0, %v845
        %v847 = vpop.f32.mrf.mxu0
        %v848 = vadd.f32 0.0, %v847
        %849 = vdwg.mxu0
        %v850 = vadd.f32 %v775, %v831
        %v851 = vadd.f32 %v776, %v833
        %v852 = vadd.f32 %v777, %v836
        %v853 = vadd.f32 %v778, %v838
        %v854 = vadd.f32 %v779, %v841
        %v855 = vadd.f32 %v780, %v843
        %v856 = vadd.f32 %v781, %v846
        %v857 = vadd.f32 %v782, %v848
        %vm868 = vcmask 1042432
        %vm869 = vcmask 1046532
        %vm870 = vmor %vm868, %vm869
        %v871 = vrot.slane %v189, 5
        %v872 = vrot.slane %v871, 4
        %v873 = vrot.slane %v190, 5
        %v874 = vsel %vm870, %v872, %v873
        %v875 = vrot.slane %v191, 5
        %v876 = vrot.slane %v875, 4
        %v877 = vrot.slane %v192, 5
        %v878 = vsel %vm870, %v876, %v877
        %v879 = vrot.slane %v193, 5
        %v880 = vrot.slane %v879, 4
        %v881 = vrot.slane %v194, 5
        %v882 = vsel %vm870, %v880, %v881
        %v883 = vrot.slane %v195, 5
        %v884 = vrot.slane %v883, 4
        %v885 = vrot.slane %v196, 5
        %v886 = vsel %vm870, %v884, %v885
        %v887 = vrot.slane %v197, 5
        %v888 = vrot.slane %v887, 4
        %v889 = vrot.slane %v198, 5
        %v890 = vsel %vm870, %v888, %v889
        %v891 = vrot.slane %v199, 5
        %v892 = vrot.slane %v891, 4
        %v893 = vrot.slane %v200, 5
        %v894 = vsel %vm870, %v892, %v893
        %v895 = vrot.slane %v201, 5
        %v896 = vrot.slane %v895, 4
        %v897 = vrot.slane %v202, 5
        %v898 = vsel %vm870, %v896, %v897
        %v899 = vrot.slane %v203, 5
        %v900 = vrot.slane %v899, 4
        %v901 = vrot.slane %v204, 5
        %v902 = vsel %vm870, %v900, %v901
        %v903 = vrot.slane %v205, 5
        %v904 = vrot.slane %v903, 4
        %v905 = vrot.slane %v206, 5
        %v906 = vsel %vm870, %v904, %v905
        %v907 = vrot.slane %v207, 5
        %v908 = vrot.slane %v907, 4
        %v909 = vrot.slane %v208, 5
        %v910 = vsel %vm870, %v908, %v909
        %s911 = scalar_lea.vmem [#allocation2], 64
        %v912 = vld [vmem:[%s911] sm:$0xf]
        %v913 = vld [vmem:[%s911 + $0x4] sm:$0xf]
        %v914 = vld [vmem:[%s911 + $0x8] sm:$0xf]
        %v915 = vld [vmem:[%s911 + $0xc] sm:$0xf]
        %v916 = vld [vmem:[%s911 + $0x10] sm:$0xf]
        %v917 = vld [vmem:[%s911 + $0x14] sm:$0xf]
        %v918 = vld [vmem:[%s911 + $0x18] sm:$0xf]
        %v919 = vld [vmem:[%s911 + $0x1c] sm:$0xf]
        %v920 = vunpack.c.l.b16 %v874
        %v921 = vunpack.c.l.b16 %v878
        %v922 = vunpack.c.l.b16 %v882
        %v923 = vunpack.c.l.b16 %v886
        %v924 = vunpack.c.l.b16 %v890
        %v925 = vunpack.c.l.b16 %v894
        %v926 = vunpack.c.l.b16 %v898
        %v927 = vunpack.c.l.b16 %v902
        %v928 = vpack.c.b16 %v921, %v920
        %v929 = vpack.c.b16 %v923, %v922
        %v930 = vpack.c.b16 %v925, %v924
        %v931 = vpack.c.b16 %v927, %v926
        %v940 = vunpack.c.l.b16 %v912
        %v941 = vunpack.c.l.b16 %v913
        %v942 = vunpack.c.l.b16 %v914
        %v943 = vunpack.c.l.b16 %v915
        %v944 = vunpack.c.l.b16 %v916
        %v945 = vunpack.c.l.b16 %v917
        %v946 = vunpack.c.l.b16 %v918
        %v947 = vunpack.c.l.b16 %v919
        %v948 = vpack.c.b16 %v941, %v940
        %v949 = vpack.c.b16 %v943, %v942
        %v950 = vpack.c.b16 %v945, %v944
        %v951 = vpack.c.b16 %v947, %v946
        %v957 = vsel %vm270, %v928, 0
        %v960 = vsel %vm270, %v929, 0
        %v963 = vsel %vm270, %v930, 0
        %v966 = vsel %vm270, %v931, 0
        %968 = vmatpush.bf16.msra.mxu0 0
        %969 = vmatpush.bf16.msra.mxu0 0
        %970 = vmatpush.bf16.msra.mxu0 0
        %971 = vmatpush.bf16.msra.mxu0 0
        %972 = vmatpush.bf16.msra.mxu0 %v951
        %973 = vmatpush.bf16.msra.mxu0 %v950
        %974 = vmatpush.bf16.msra.mxu0 %v949
        %975 = vmatpush.bf16.msra.mxu0 %v948
        %976 = vmatmul.bf16.gmra.mxu0 %v957
        %v977 = vpop.f32.mrf.mxu0
        %v978 = vadd.f32 0.0, %v977
        %v979 = vpop.f32.mrf.mxu0
        %v980 = vadd.f32 0.0, %v979
        %981 = vmatmul.bf16.gmra.mxu0 %v960
        %v982 = vpop.f32.mrf.mxu0
        %v983 = vadd.f32 0.0, %v982
        %v984 = vpop.f32.mrf.mxu0
        %v985 = vadd.f32 0.0, %v984
        %986 = vmatmul.bf16.gmra.mxu0 %v963
        %v987 = vpop.f32.mrf.mxu0
        %v988 = vadd.f32 0.0, %v987
        %v989 = vpop.f32.mrf.mxu0
        %v990 = vadd.f32 0.0, %v989
        %991 = vmatmul.bf16.gmra.mxu0 %v966
        %v992 = vpop.f32.mrf.mxu0
        %v993 = vadd.f32 0.0, %v992
        %v994 = vpop.f32.mrf.mxu0
        %v995 = vadd.f32 0.0, %v994
        %996 = vdwg.mxu0
        %v997 = vadd.f32 %v850, %v978
        %v998 = vadd.f32 %v851, %v980
        %v999 = vadd.f32 %v852, %v983
        %v1000 = vadd.f32 %v853, %v985
        %v1001 = vadd.f32 %v854, %v988
        %v1002 = vadd.f32 %v855, %v990
        %v1003 = vadd.f32 %v856, %v993
        %v1004 = vadd.f32 %v857, %v995
        %s1005 = scalar_lea.vmem [#allocation2], 160
        %v1006 = vld [vmem:[%s1005] sm:$0xf]
        %v1007 = vld [vmem:[%s1005 + $0x4] sm:$0xf]
        %v1008 = vld [vmem:[%s1005 + $0x8] sm:$0xf]
        %v1009 = vld [vmem:[%s1005 + $0xc] sm:$0xf]
        %v1010 = vld [vmem:[%s1005 + $0x10] sm:$0xf]
        %v1011 = vld [vmem:[%s1005 + $0x14] sm:$0xf]
        %v1012 = vld [vmem:[%s1005 + $0x18] sm:$0xf]
        %v1013 = vld [vmem:[%s1005 + $0x1c] sm:$0xf]
        %v1014 = vunpack.c.l.b16 %v906
        %v1015 = vpack.c.b16 %v922, %v921
        %v1016 = vpack.c.b16 %v924, %v923
        %v1017 = vpack.c.b16 %v926, %v925
        %v1018 = vpack.c.b16 %v1014, %v927
        %v1027 = vunpack.c.l.b16 %v1006
        %v1028 = vunpack.c.l.b16 %v1007
        %v1029 = vunpack.c.l.b16 %v1008
        %v1030 = vunpack.c.l.b16 %v1009
        %v1031 = vunpack.c.l.b16 %v1010
        %v1032 = vunpack.c.l.b16 %v1011
        %v1033 = vunpack.c.l.b16 %v1012
        %v1034 = vunpack.c.l.b16 %v1013
        %v1035 = vpack.c.b16 %v1028, %v1027
        %v1036 = vpack.c.b16 %v1030, %v1029
        %v1037 = vpack.c.b16 %v1032, %v1031
        %v1038 = vpack.c.b16 %v1034, %v1033
        %v1044 = vsel %vm270, %v1015, 0
        %v1047 = vsel %vm270, %v1016, 0
        %v1050 = vsel %vm270, %v1017, 0
        %v1053 = vsel %vm270, %v1018, 0
        %1055 = vmatpush.bf16.msra.mxu0 0
        %1056 = vmatpush.bf16.msra.mxu0 0
        %1057 = vmatpush.bf16.msra.mxu0 0
        %1058 = vmatpush.bf16.msra.mxu0 0
        %1059 = vmatpush.bf16.msra.mxu0 %v1038
        %1060 = vmatpush.bf16.msra.mxu0 %v1037
        %1061 = vmatpush.bf16.msra.mxu0 %v1036
        %1062 = vmatpush.bf16.msra.mxu0 %v1035
        %1063 = vmatmul.bf16.gmra.mxu0 %v1044
        %v1064 = vpop.f32.mrf.mxu0
        %v1065 = vadd.f32 0.0, %v1064
        %v1066 = vpop.f32.mrf.mxu0
        %v1067 = vadd.f32 0.0, %v1066
        %1068 = vmatmul.bf16.gmra.mxu0 %v1047
        %v1069 = vpop.f32.mrf.mxu0
        %v1070 = vadd.f32 0.0, %v1069
        %v1071 = vpop.f32.mrf.mxu0
        %v1072 = vadd.f32 0.0, %v1071
        %1073 = vmatmul.bf16.gmra.mxu0 %v1050
        %v1074 = vpop.f32.mrf.mxu0
        %v1075 = vadd.f32 0.0, %v1074
        %v1076 = vpop.f32.mrf.mxu0
        %v1077 = vadd.f32 0.0, %v1076
        %1078 = vmatmul.bf16.gmra.mxu0 %v1053
        %v1079 = vpop.f32.mrf.mxu0
        %v1080 = vadd.f32 0.0, %v1079
        %v1081 = vpop.f32.mrf.mxu0
        %v1082 = vadd.f32 0.0, %v1081
        %1083 = vdwg.mxu0
        %v1084 = vadd.f32 %v997, %v1065
        %v1085 = vadd.f32 %v998, %v1067
        %v1086 = vadd.f32 %v999, %v1070
        %v1087 = vadd.f32 %v1000, %v1072
        %v1088 = vadd.f32 %v1001, %v1075
        %v1089 = vadd.f32 %v1002, %v1077
        %v1090 = vadd.f32 %v1003, %v1080
        %v1091 = vadd.f32 %v1004, %v1082
        %s1092 = scalar_lea.vmem [#allocation2], 256
        %v1093 = vld [vmem:[%s1092] sm:$0xf]
        %v1094 = vld [vmem:[%s1092 + $0x4] sm:$0xf]
        %v1095 = vld [vmem:[%s1092 + $0x8] sm:$0xf]
        %v1096 = vld [vmem:[%s1092 + $0xc] sm:$0xf]
        %v1097 = vld [vmem:[%s1092 + $0x10] sm:$0xf]
        %v1098 = vld [vmem:[%s1092 + $0x14] sm:$0xf]
        %v1099 = vld [vmem:[%s1092 + $0x18] sm:$0xf]
        %v1100 = vld [vmem:[%s1092 + $0x1c] sm:$0xf]
        %v1101 = vunpack.c.l.b16 %v910
        %v1102 = vpack.c.b16 %v1101, %v1014
        %v1111 = vunpack.c.l.b16 %v1093
        %v1112 = vunpack.c.l.b16 %v1094
        %v1113 = vunpack.c.l.b16 %v1095
        %v1114 = vunpack.c.l.b16 %v1096
        %v1115 = vunpack.c.l.b16 %v1097
        %v1116 = vunpack.c.l.b16 %v1098
        %v1117 = vunpack.c.l.b16 %v1099
        %v1118 = vunpack.c.l.b16 %v1100
        %v1119 = vpack.c.b16 %v1112, %v1111
        %v1120 = vpack.c.b16 %v1114, %v1113
        %v1121 = vpack.c.b16 %v1116, %v1115
        %v1122 = vpack.c.b16 %v1118, %v1117
        %v1128 = vsel %vm270, %v1102, 0
        %1130 = vmatpush.bf16.msra.mxu0 0
        %1131 = vmatpush.bf16.msra.mxu0 0
        %1132 = vmatpush.bf16.msra.mxu0 0
        %1133 = vmatpush.bf16.msra.mxu0 0
        %1134 = vmatpush.bf16.msra.mxu0 %v1122
        %1135 = vmatpush.bf16.msra.mxu0 %v1121
        %1136 = vmatpush.bf16.msra.mxu0 %v1120
        %1137 = vmatpush.bf16.msra.mxu0 %v1119
        %1138 = vmatmul.bf16.gmra.mxu0 %v960
        %v1139 = vpop.f32.mrf.mxu0
        %v1140 = vadd.f32 0.0, %v1139
        %v1141 = vpop.f32.mrf.mxu0
        %v1142 = vadd.f32 0.0, %v1141
        %1143 = vmatmul.bf16.gmra.mxu0 %v963
        %v1144 = vpop.f32.mrf.mxu0
        %v1145 = vadd.f32 0.0, %v1144
        %v1146 = vpop.f32.mrf.mxu0
        %v1147 = vadd.f32 0.0, %v1146
        %1148 = vmatmul.bf16.gmra.mxu0 %v966
        %v1149 = vpop.f32.mrf.mxu0
        %v1150 = vadd.f32 0.0, %v1149
        %v1151 = vpop.f32.mrf.mxu0
        %v1152 = vadd.f32 0.0, %v1151
        %1153 = vmatmul.bf16.gmra.mxu0 %v1128
        %v1154 = vpop.f32.mrf.mxu0
        %v1155 = vadd.f32 0.0, %v1154
        %v1156 = vpop.f32.mrf.mxu0
        %v1157 = vadd.f32 0.0, %v1156
        %1158 = vdwg.mxu0
        %v1159 = vadd.f32 %v1084, %v1140
        %v1160 = vadd.f32 %v1085, %v1142
        %v1161 = vadd.f32 %v1086, %v1145
        %v1162 = vadd.f32 %v1087, %v1147
        %v1163 = vadd.f32 %v1088, %v1150
        %v1164 = vadd.f32 %v1089, %v1152
        %v1165 = vadd.f32 %v1090, %v1155
        %v1166 = vadd.f32 %v1091, %v1157
        %v1167 = vld [vmem:[%s2] sm:$0x1]
        %v1169 = vperm.slane %v1167, 0
        %v1171 = vadd.f32 %v1159, %v1169
        %v1172 = vadd.f32 %v1160, %v1169
        %v1173 = vadd.f32 %v1161, %v1169
        %v1174 = vadd.f32 %v1162, %v1169
        %v1175 = vadd.f32 %v1163, %v1169
        %v1176 = vadd.f32 %v1164, %v1169
        %v1177 = vadd.f32 %v1165, %v1169
        %v1178 = vadd.f32 %v1166, %v1169
        %v1179 = vmax.f32 %v1171, 0.0
        %v1180 = vmax.f32 %v1172, 0.0
        %v1181 = vmax.f32 %v1173, 0.0
        %v1182 = vmax.f32 %v1174, 0.0
        %v1183 = vmax.f32 %v1175, 0.0
        %v1184 = vmax.f32 %v1176, 0.0
        %v1185 = vmax.f32 %v1177, 0.0
        %v1186 = vmax.f32 %v1178, 0.0
        %v1187 = vpack.c.bf16 %v1179, %v1179
        %v1188 = vpack.c.bf16 %v1180, %v1180
        %v1189 = vpack.c.bf16 %v1181, %v1181
        %v1190 = vpack.c.bf16 %v1182, %v1182
        %v1191 = vpack.c.bf16 %v1183, %v1183
        %v1192 = vpack.c.bf16 %v1184, %v1184
        %v1193 = vpack.c.bf16 %v1185, %v1185
        %v1194 = vpack.c.bf16 %v1186, %v1186
        %v1195 = vunpack.c.l.bf16 %v1187
        %v1196 = vunpack.c.l.bf16 %v1189
        %v1197 = vunpack.c.l.bf16 %v1191
        %v1198 = vunpack.c.l.bf16 %v1193
        %v1199 = vunpack.c.l.bf16 %v1188
        %v1200 = vunpack.c.l.bf16 %v1190
        %v1201 = vunpack.c.l.bf16 %v1192
        %v1202 = vunpack.c.l.bf16 %v1194
        %v1203 = vmax.f32 %v1195, %v1199
        %v1204 = vmax.f32 %v1196, %v1200
        %v1205 = vmax.f32 %v1197, %v1201
        %v1206 = vmax.f32 %v1198, %v1202
        %v1207 = vpack.c.bf16 %v1203, %v1203
        %v1208 = vpack.c.bf16 %v1204, %v1204
        %v1209 = vpack.c.bf16 %v1205, %v1205
        %v1210 = vpack.c.bf16 %v1206, %v1206
        %v1215 = vrot.slane %v1207, 3
        %v1216 = vrot.slane %v1208, 3
        %v1217 = vrot.slane %v1209, 3
        %v1218 = vrot.slane %v1210, 3
        %vm1219 = vcmask 1040384
        %v1222 = vsel %vm1219, %v1207, %v1215
        %vm1223 = vcmask 1041409
        %v1224 = vsel %vm1223, %v1207, %v1215
        %v1226 = vrot.slane %v1224, 1
        %vm1227 = vcmask 1042434
        %v1228 = vsel %vm1227, %v1207, %v1215
        %v1230 = vrot.slane %v1228, 2
        %vm1231 = vcmask 1043459
        %v1232 = vsel %vm1231, %v1207, %v1215
        %v1234 = vrot.slane %v1232, 3
        %v1237 = vsel %vm1219, %v1208, %v1216
        %v1238 = vsel %vm1223, %v1208, %v1216
        %v1240 = vrot.slane %v1238, 1
        %v1241 = vsel %vm1227, %v1208, %v1216
        %v1243 = vrot.slane %v1241, 2
        %v1244 = vsel %vm1231, %v1208, %v1216
        %v1246 = vrot.slane %v1244, 3
        %v1249 = vsel %vm1219, %v1209, %v1217
        %v1250 = vsel %vm1223, %v1209, %v1217
        %v1252 = vrot.slane %v1250, 1
        %v1253 = vsel %vm1227, %v1209, %v1217
        %v1255 = vrot.slane %v1253, 2
        %v1256 = vsel %vm1231, %v1209, %v1217
        %v1258 = vrot.slane %v1256, 3
        %v1261 = vsel %vm1219, %v1210, %v1218
        %v1262 = vsel %vm1223, %v1210, %v1218
        %v1264 = vrot.slane %v1262, 1
        %v1265 = vsel %vm1227, %v1210, %v1218
        %v1267 = vrot.slane %v1265, 2
        %v1268 = vsel %vm1231, %v1210, %v1218
        %v1270 = vrot.slane %v1268, 3
        %v1287 = vunpack.c.l.bf16 %v1222
        %v1288 = vunpack.c.l.bf16 %v1226
        %v1289 = vunpack.c.l.bf16 %v1230
        %v1290 = vunpack.c.l.bf16 %v1234
        %v1291 = vunpack.c.l.bf16 %v1237
        %v1292 = vunpack.c.l.bf16 %v1240
        %v1293 = vunpack.c.l.bf16 %v1243
        %v1294 = vunpack.c.l.bf16 %v1246
        %v1295 = vunpack.c.l.bf16 %v1249
        %v1296 = vunpack.c.l.bf16 %v1252
        %v1297 = vunpack.c.l.bf16 %v1255
        %v1298 = vunpack.c.l.bf16 %v1258
        %v1299 = vunpack.c.l.bf16 %v1261
        %v1300 = vunpack.c.l.bf16 %v1264
        %v1301 = vunpack.c.l.bf16 %v1267
        %v1302 = vunpack.c.l.bf16 %v1270
        %v1319 = vrot.slane %v1287, 7
        %v1320 = vrot.slane %v1319, 2
        %v1321 = vrot.slane %v1288, 7
        %v1322 = vrot.slane %v1321, 2
        %v1323 = vrot.slane %v1289, 7
        %v1324 = vrot.slane %v1323, 2
        %v1325 = vrot.slane %v1290, 7
        %v1326 = vrot.slane %v1325, 2
        %v1327 = vrot.slane %v1291, 7
        %v1328 = vrot.slane %v1327, 2
        %v1329 = vrot.slane %v1292, 7
        %v1330 = vrot.slane %v1329, 2
        %v1331 = vrot.slane %v1293, 7
        %v1332 = vrot.slane %v1331, 2
        %v1333 = vrot.slane %v1294, 7
        %v1334 = vrot.slane %v1333, 2
        %v1335 = vrot.slane %v1295, 7
        %v1336 = vrot.slane %v1335, 2
        %v1337 = vrot.slane %v1296, 7
        %v1338 = vrot.slane %v1337, 2
        %v1339 = vrot.slane %v1297, 7
        %v1340 = vrot.slane %v1339, 2
        %v1341 = vrot.slane %v1298, 7
        %v1342 = vrot.slane %v1341, 2
        %v1343 = vrot.slane %v1299, 7
        %v1344 = vrot.slane %v1343, 2
        %v1345 = vrot.slane %v1300, 7
        %v1346 = vrot.slane %v1345, 2
        %v1347 = vrot.slane %v1301, 7
        %v1348 = vrot.slane %v1347, 2
        %v1349 = vrot.slane %v1302, 7
        %v1350 = vrot.slane %v1349, 2
        %v1367 = vmax.f32 %v1287, %v1320
        %v1368 = vmax.f32 %v1288, %v1322
        %v1369 = vmax.f32 %v1289, %v1324
        %v1370 = vmax.f32 %v1290, %v1326
        %v1371 = vmax.f32 %v1291, %v1328
        %v1372 = vmax.f32 %v1292, %v1330
        %v1373 = vmax.f32 %v1293, %v1332
        %v1374 = vmax.f32 %v1294, %v1334
        %v1375 = vmax.f32 %v1295, %v1336
        %v1376 = vmax.f32 %v1296, %v1338
        %v1377 = vmax.f32 %v1297, %v1340
        %v1378 = vmax.f32 %v1298, %v1342
        %v1379 = vmax.f32 %v1299, %v1344
        %v1380 = vmax.f32 %v1300, %v1346
        %v1381 = vmax.f32 %v1301, %v1348
        %v1382 = vmax.f32 %v1302, %v1350
        %v1383 = vpack.c.bf16 %v1367, %v1367
        %v1384 = vpack.c.bf16 %v1368, %v1368
        %v1385 = vpack.c.bf16 %v1369, %v1369
        %v1386 = vpack.c.bf16 %v1370, %v1370
        %v1387 = vpack.c.bf16 %v1371, %v1371
        %v1388 = vpack.c.bf16 %v1372, %v1372
        %v1389 = vpack.c.bf16 %v1373, %v1373
        %v1390 = vpack.c.bf16 %v1374, %v1374
        %v1391 = vpack.c.bf16 %v1375, %v1375
        %v1392 = vpack.c.bf16 %v1376, %v1376
        %v1393 = vpack.c.bf16 %v1377, %v1377
        %v1394 = vpack.c.bf16 %v1378, %v1378
        %v1395 = vpack.c.bf16 %v1379, %v1379
        %v1396 = vpack.c.bf16 %v1380, %v1380
        %v1397 = vpack.c.bf16 %v1381, %v1381
        %v1398 = vpack.c.bf16 %v1382, %v1382
        %v1415 = vrot.slane %v1383, 2
        %v1416 = vrot.slane %v1384, 2
        %v1417 = vrot.slane %v1385, 2
        %v1418 = vrot.slane %v1386, 2
        %v1419 = vrot.slane %v1387, 2
        %v1420 = vrot.slane %v1388, 2
        %v1421 = vrot.slane %v1389, 2
        %v1422 = vrot.slane %v1390, 2
        %v1423 = vrot.slane %v1391, 2
        %v1424 = vrot.slane %v1392, 2
        %v1425 = vrot.slane %v1393, 2
        %v1426 = vrot.slane %v1394, 2
        %v1427 = vrot.slane %v1395, 2
        %v1428 = vrot.slane %v1396, 2
        %v1429 = vrot.slane %v1397, 2
        %v1430 = vrot.slane %v1398, 2
        %vm1431 = vcmask 1041408
        %v1434 = vsel %vm1431, %v1383, %v1415
        %v1437 = vsel %vm1431, %v1384, %v1416
        %v1440 = vsel %vm1431, %v1385, %v1417
        %v1443 = vsel %vm1431, %v1386, %v1418
        %v1446 = vsel %vm1431, %v1387, %v1419
        %v1449 = vsel %vm1431, %v1388, %v1420
        %v1452 = vsel %vm1431, %v1389, %v1421
        %v1455 = vsel %vm1431, %v1390, %v1422
        %v1458 = vsel %vm1431, %v1391, %v1423
        %v1461 = vsel %vm1431, %v1392, %v1424
        %v1464 = vsel %vm1431, %v1393, %v1425
        %v1467 = vsel %vm1431, %v1394, %v1426
        %v1470 = vsel %vm1431, %v1395, %v1427
        %v1473 = vsel %vm1431, %v1396, %v1428
        %v1476 = vsel %vm1431, %v1397, %v1429
        %v1479 = vsel %vm1431, %v1398, %v1430
        %1480 = vst [vmem:[#allocation1] ss:$2 sm:$0xff] %v1434
        %v1481 = vld.sshfl [vmem:[#allocation1] sm:$0xff pattern:$0x75643120]
        %s1483 = scalar_lea.vmem [#allocation1], 16
        %1484 = vst [vmem:[%s1483] ss:$2 sm:$0xff] %v1437
        %v1485 = vld.sshfl [vmem:[#allocation1 + $0x10] sm:$0xff pattern:$0x75643120]
        %s1487 = scalar_lea.vmem [#allocation1], 32
        %1488 = vst [vmem:[%s1487] ss:$2 sm:$0xff] %v1440
        %v1489 = vld.sshfl [vmem:[#allocation1 + $0x20] sm:$0xff pattern:$0x75643120]
        %s1491 = scalar_lea.vmem [#allocation1], 48
        %1492 = vst [vmem:[%s1491] ss:$2 sm:$0xff] %v1443
        %v1493 = vld.sshfl [vmem:[#allocation1 + $0x30] sm:$0xff pattern:$0x75643120]
        %1495 = vst [vmem:[#allocation1] ss:$2 sm:$0xff] %v1446
        %v1496 = vld.sshfl [vmem:[#allocation1] sm:$0xff pattern:$0x75643120]
        %1498 = vst [vmem:[%s1483] ss:$2 sm:$0xff] %v1449
        %v1499 = vld.sshfl [vmem:[#allocation1 + $0x10] sm:$0xff pattern:$0x75643120]
        %1501 = vst [vmem:[%s1487] ss:$2 sm:$0xff] %v1452
        %v1502 = vld.sshfl [vmem:[#allocation1 + $0x20] sm:$0xff pattern:$0x75643120]
        %1504 = vst [vmem:[%s1491] ss:$2 sm:$0xff] %v1455
        %v1505 = vld.sshfl [vmem:[#allocation1 + $0x30] sm:$0xff pattern:$0x75643120]
        %1507 = vst [vmem:[#allocation1] ss:$2 sm:$0xff] %v1458
        %v1508 = vld.sshfl [vmem:[#allocation1] sm:$0xff pattern:$0x75643120]
        %1510 = vst [vmem:[%s1483] ss:$2 sm:$0xff] %v1461
        %v1511 = vld.sshfl [vmem:[#allocation1 + $0x10] sm:$0xff pattern:$0x75643120]
        %1513 = vst [vmem:[%s1487] ss:$2 sm:$0xff] %v1464
        %v1514 = vld.sshfl [vmem:[#allocation1 + $0x20] sm:$0xff pattern:$0x75643120]
        %1516 = vst [vmem:[%s1491] ss:$2 sm:$0xff] %v1467
        %v1517 = vld.sshfl [vmem:[#allocation1 + $0x30] sm:$0xff pattern:$0x75643120]
        %1519 = vst [vmem:[#allocation1] ss:$2 sm:$0xff] %v1470
        %v1520 = vld.sshfl [vmem:[#allocation1] sm:$0xff pattern:$0x75643120]
        %1522 = vst [vmem:[%s1483] ss:$2 sm:$0xff] %v1473
        %v1523 = vld.sshfl [vmem:[#allocation1 + $0x10] sm:$0xff pattern:$0x75643120]
        %1525 = vst [vmem:[%s1487] ss:$2 sm:$0xff] %v1476
        %v1526 = vld.sshfl [vmem:[#allocation1 + $0x20] sm:$0xff pattern:$0x75643120]
        %1528 = vst [vmem:[%s1491] ss:$2 sm:$0xff] %v1479
        %v1529 = vld.sshfl [vmem:[#allocation1 + $0x30] sm:$0xff pattern:$0x75643120]
        %v1531 = vunpack.c.l.b16 %v1481
        %v1532 = vunpack.c.l.b16 %v1485
        %v1533 = vunpack.c.l.b16 %v1489
        %v1534 = vunpack.c.l.b16 %v1493
        %v1535 = vunpack.c.l.b16 %v1496
        %v1536 = vunpack.c.l.b16 %v1499
        %v1537 = vunpack.c.l.b16 %v1502
        %v1538 = vunpack.c.l.b16 %v1505
        %v1539 = vunpack.c.l.b16 %v1508
        %v1540 = vunpack.c.l.b16 %v1511
        %v1541 = vunpack.c.l.b16 %v1514
        %v1542 = vunpack.c.l.b16 %v1517
        %v1543 = vunpack.c.l.b16 %v1520
        %v1544 = vunpack.c.l.b16 %v1523
        %v1545 = vunpack.c.l.b16 %v1526
        %v1546 = vunpack.c.l.b16 %v1529
        %v1547 = vrot.slane %v1532, 7
        %v1548 = vsel %vm1223, %v1547, %v1531
        %v1549 = vrot.slane %v1533, 6
        %v1550 = vsel %vm1227, %v1549, %v1548
        %v1551 = vrot.slane %v1534, 5
        %v1552 = vsel %vm1231, %v1551, %v1550
        %v1553 = vrot.slane %v1536, 7
        %v1554 = vsel %vm1223, %v1553, %v1535
        %v1555 = vrot.slane %v1537, 6
        %v1556 = vsel %vm1227, %v1555, %v1554
        %v1557 = vrot.slane %v1538, 5
        %v1558 = vsel %vm1231, %v1557, %v1556
        %v1559 = vrot.slane %v1540, 7
        %v1560 = vsel %vm1223, %v1559, %v1539
        %v1561 = vrot.slane %v1541, 6
        %v1562 = vsel %vm1227, %v1561, %v1560
        %v1563 = vrot.slane %v1542, 5
        %v1564 = vsel %vm1231, %v1563, %v1562
        %v1565 = vrot.slane %v1544, 7
        %v1566 = vsel %vm1223, %v1565, %v1543
        %v1567 = vrot.slane %v1545, 6
        %v1568 = vsel %vm1227, %v1567, %v1566
        %v1569 = vrot.slane %v1546, 5
        %v1570 = vsel %vm1231, %v1569, %v1568
        %v1571 = vpack.c.b16 %v1552, %v1552
        %v1572 = vpack.c.b16 %v1558, %v1558
        %v1573 = vpack.c.b16 %v1564, %v1564
        %v1574 = vpack.c.b16 %v1570, %v1570
        %v1575 = vrot.slane %v1571, 2
        %v1576 = vrot.slane %v1572, 2
        %v1577 = vrot.slane %v1573, 2
        %v1578 = vrot.slane %v1574, 2
        %v1581 = vsel %vm1431, %v1571, %v1575
        %v1584 = vsel %vm1431, %v1572, %v1576
        %v1587 = vsel %vm1431, %v1573, %v1577
        %v1590 = vsel %vm1431, %v1574, %v1578
        %1595 = vst [vmem:[%s187] sm:$0x3] %v1581
        %1596 = vst [vmem:[%s187 + $0x2] sm:$0x3] %v1584
        %1597 = vst [vmem:[%s187 + $0x4] sm:$0x3] %v1587
        %1598 = vst [vmem:[%s187 + $0x6] sm:$0x3] %v1590
        %p1599 = scmp.lt.s32.totalorder %s15, 1
        %s1600 = scalar_select %p1599, %s15, 1
        %s1601 = smul.addr %s1600, 4
        %s1602 = smul.addr %s1601, 2
        %s1603 = scalar_lea.vmem %s3, %s1602
        // Predicated region
        $region37: #{teacher_net14_forward.5} parent=31 // pred_check
          %p1604 = pneg %p101
        $region38: #{teacher_net14_forward.5} parent=31 // pred_check_branch
          %1606 = sbr.rel (%p1604) target = $region40
        $region39: #{teacher_net14_forward.5} parent=31 // pred_region
          _
        $region40: #{teacher_net14_forward.5} parent=31 // pred_fallthru
          _
      $region32: #{teacher_net14_forward.5} parent=5 // pred_fallthru
        _
      %p1607 = scmp.le.s32.totalorder 2, %s10
      // Predicated region
      $region41: #{teacher_net14_forward.5} parent=5 // pred_check
        %p1608 = pneg %p1607
      $region42: #{teacher_net14_forward.5} parent=5 // pred_check_branch
        %1610 = sbr.rel (%p1608) target = $region44
      $region43: #{teacher_net14_forward.5} parent=5 // pred_region
        %s1611 = ssub.s32 %s10, 2
        // Predicated region
        $region45: #{teacher_net14_forward.5} parent=43 // pred_check
          %p1612 = pneg %p107
        $region46: #{teacher_net14_forward.5} parent=43 // pred_check_branch
          %1614 = sbr.rel (%p1612) target = $region48
        $region47: #{teacher_net14_forward.5} parent=43 // pred_region
          %p1615 = scmp.lt.s32.totalorder %s16, 1
          %s1616 = scalar_select %p1615, %s16, 1
          %s1617 = smul.addr %s1616, 4
          %s1618 = smul.addr %s1617, 2
          %s1619 = scalar_lea.vmem %s3, %s1618
        $region48: #{teacher_net14_forward.5} parent=43 // pred_fallthru
          _
      $region44: #{teacher_net14_forward.5} parent=5 // pred_fallthru
        _
    $region6: #{teacher_net14_forward.5} parent=1 // loop_footer
      %s14 = sadd.s32 1, %s10
    $region7: #{teacher_net14_forward.5} parent=1 // loop_footer_branch
      %9 = sbr.rel target = $region3
    $region8: #{teacher_net14_forward.5} parent=1 // loop_exit
      _
    %1620 = vsyncpa [#allocation3], 1
    %s1621 = scalar_lea.sflag [#allocation3], 1
    %1622 = vsyncpa %s1621, 1

// kernel: teacher_net14_forward.6
$region0: #{teacher_net14_forward.6}
  #allocation0 [shape = 'u32[]', space=smem, size = 0x4, offset = 0x4, fixed_abs, tag = 'smem constant byte address 0x4 - core index']
  #allocation1 [shape = 'u32[72,128]{1,0:T(1,128)}', space=vmem, size = 0x9000, scoped, tag = 'internal scratch']
  %s0 = inlined_call_operand.vmem [shape: bf16[2,6,6,128], index: 0, kind: input, shape index: {}]
  %s1 = inlined_call_operand.vmem [shape: bf16[9,128,256], index: 1, kind: input, shape index: {}]
  %s2 = inlined_call_operand.vmem [shape: f32[1,256], index: 2, kind: input, shape index: {}]
  %s3 = inlined_call_operand.vmem [shape: bf16[2,2,2,256], index: 3, kind: output, shape index: {}]
  %s4 = sld [smem:[#allocation0]]
  $region45: #{teacher_net14_forward.6} parent=0
    _
  %s6 = ssub.s32 1, %s4
  %s7 = scalar_select 0, %s6, %s4
  loop: start=0, step=1, limit=4
  $region2: #{teacher_net14_forward.6} parent=0 // loop_pre_header
    _
  $region3: #{teacher_net14_forward.6} parent=0 // loop_header
    %s9 = sphi 0, %s13
    %p10 = scmp.ge.s32.totalorder %s9, 4
    %s19 = sphi 0, %s21
    %s22 = sphi 0, %s19
    %s23 = sphi 0, %s22
    %s39 = sphi 0, %s23
    %s43 = sphi 0, %s43
    %s45 = sphi 0, %s43
    %s46 = sphi 0, %s45
    %s60 = sphi 0, %s46
    %s64 = sphi 0, %s64
    %s66 = sphi 0, %s64
    %s67 = sphi 0, %s66
    %s81 = sphi 0, %s67
    %s87 = sphi 0, %s89
    %s90 = sphi 0, %s87
    %s91 = sphi 0, %s90
    %s107 = sphi 0, %s91
  $region4: #{teacher_net14_forward.6} parent=0 // loop_header_branch
    %12 = sbr.rel (%p10) target = $region8
  $region5: #{teacher_net14_forward.6} parent=0 // loop_body
    %s14 = ssub.s32 %s9, 1
    %s15 = ssub.s32 %s9, 2
    %s16 = sadd.s32 %s9, 1
    %s17 = ssub.s32 %s9, %s16
    %p18 = scmp.eq.s32.totalorder %s17, 0
    %s20 = sadd.s32 %s19, 1
    %s21 = scalar_select %p18, %s19, %s20
    %p24 = pneg %p18
    %p25 = scmp.eq.s32.totalorder %s9, 1
    %p26 = por %p24, %p25
    %p27 = scmp.ne.s32.totalorder %s19, %s22
    %p28 = scmp.eq.s32.totalorder %s9, 0
    %p29 = por %p27, %p28
    %p30 = scmp.ne.s32.totalorder %s19, %s22
    %p31 = scmp.eq.s32.totalorder %s14, 1
    %p32 = por %p30, %p31
    %p33 = scmp.ne.s32.totalorder %s22, %s23
    %p34 = scmp.eq.s32.totalorder %s14, 0
    %p35 = por %p33, %p34
    %p36 = scmp.ne.s32.totalorder %s22, %s23
    %p37 = scmp.eq.s32.totalorder %s15, 1
    %p38 = por %p36, %p37
    %p40 = scmp.ne.s32.totalorder %s23, %s39
    %p41 = scmp.eq.s32.totalorder %s15, 0
    %p42 = por %p40, %p41
    %s44 = sadd.s32 %s43, 1
    %p47 = scmp.eq.s32.totalorder %s9, 1
    %p48 = scmp.ne.s32.totalorder %s43, %s45
    %p49 = scmp.eq.s32.totalorder %s9, 0
    %p50 = por %p48, %p49
    %p51 = scmp.ne.s32.totalorder %s43, %s45
    %p52 = scmp.eq.s32.totalorder %s14, 1
    %p53 = por %p51, %p52
    %p54 = scmp.ne.s32.totalorder %s45, %s46
    %p55 = scmp.eq.s32.totalorder %s14, 0
    %p56 = por %p54, %p55
    %p57 = scmp.ne.s32.totalorder %s45, %s46
    %p58 = scmp.eq.s32.totalorder %s15, 1
    %p59 = por %p57, %p58
    %p61 = scmp.ne.s32.totalorder %s46, %s60
    %p62 = scmp.eq.s32.totalorder %s15, 0
    %p63 = por %p61, %p62
    %s65 = sadd.s32 %s64, 1
    %p68 = scmp.eq.s32.totalorder %s9, 1
    %p69 = scmp.ne.s32.totalorder %s64, %s66
    %p70 = scmp.eq.s32.totalorder %s9, 0
    %p71 = por %p69, %p70
    %p72 = scmp.ne.s32.totalorder %s64, %s66
    %p73 = scmp.eq.s32.totalorder %s14, 1
    %p74 = por %p72, %p73
    %p75 = scmp.ne.s32.totalorder %s66, %s67
    %p76 = scmp.eq.s32.totalorder %s14, 0
    %p77 = por %p75, %p76
    %p78 = scmp.ne.s32.totalorder %s66, %s67
    %p79 = scmp.eq.s32.totalorder %s15, 1
    %p80 = por %p78, %p79
    %p82 = scmp.ne.s32.totalorder %s67, %s81
    %p83 = scmp.eq.s32.totalorder %s15, 0
    %p84 = por %p82, %p83
    %s85 = ssub.s32 %s9, %s16
    %p86 = scmp.eq.s32.totalorder %s85, 0
    %s88 = sadd.s32 %s87, 1
    %s89 = scalar_select %p86, %s87, %s88
    %p92 = pneg %p86
    %p93 = scmp.eq.s32.totalorder %s9, 1
    %p94 = por %p92, %p93
    %p95 = scmp.ne.s32.totalorder %s87, %s90
    %p96 = scmp.eq.s32.totalorder %s9, 0
    %p97 = por %p95, %p96
    %p98 = scmp.ne.s32.totalorder %s87, %s90
    %p99 = scmp.eq.s32.totalorder %s14, 1
    %p100 = por %p98, %p99
    %p101 = scmp.ne.s32.totalorder %s90, %s91
    %p102 = scmp.eq.s32.totalorder %s14, 0
    %p103 = por %p101, %p102
    %p104 = scmp.ne.s32.totalorder %s90, %s91
    %p105 = scmp.eq.s32.totalorder %s15, 1
    %p106 = por %p104, %p105
    %p108 = scmp.ne.s32.totalorder %s91, %s107
    %p109 = scmp.eq.s32.totalorder %s15, 0
    %p110 = por %p108, %p109
    %p111 = scmp.le.s32.totalorder 1, %s9
    %p112 = scmp.lt.s32.totalorder %s9, 3
    %p113 = pnand %p111, %p112
    %p114 = pneg %p113
    // Predicated region
    $region9: #{teacher_net14_forward.6} parent=5 // pred_check
      _
    $region10: #{teacher_net14_forward.6} parent=5 // pred_check_branch
      %116 = sbr.rel (%p113) target = $region12
    $region11: #{teacher_net14_forward.6} parent=5 // pred_region
      %s117 = ssub.s32 %s9, 1
      // Predicated region
      $region13: #{teacher_net14_forward.6} parent=11 // pred_check
        %p118 = pneg %p56
      $region14: #{teacher_net14_forward.6} parent=11 // pred_check_branch
        %120 = sbr.rel (%p118) target = $region16
      $region15: #{teacher_net14_forward.6} parent=11 // pred_region
        _
      $region16: #{teacher_net14_forward.6} parent=11 // pred_fallthru
        _
      // Predicated region
      $region17: #{teacher_net14_forward.6} parent=11 // pred_check
        %p121 = pneg %p77
      $region18: #{teacher_net14_forward.6} parent=11 // pred_check_branch
        %123 = sbr.rel (%p121) target = $region20
      $region19: #{teacher_net14_forward.6} parent=11 // pred_region
        _
      $region20: #{teacher_net14_forward.6} parent=11 // pred_fallthru
        _
    $region12: #{teacher_net14_forward.6} parent=5 // pred_fallthru
      _
    %p124 = scmp.lt.s32.totalorder %s9, 2
    // Predicated region
    $region21: #{teacher_net14_forward.6} parent=5 // pred_check
      %p125 = pneg %p124
    $region22: #{teacher_net14_forward.6} parent=5 // pred_check_branch
      %127 = sbr.rel (%p125) target = $region24
    $region23: #{teacher_net14_forward.6} parent=5 // pred_region
      // Predicated region
      $region25: #{teacher_net14_forward.6} parent=23 // pred_check
        %p128 = pneg %p29
      $region26: #{teacher_net14_forward.6} parent=23 // pred_check_branch
        %130 = sbr.rel (%p128) target = $region28
      $region27: #{teacher_net14_forward.6} parent=23 // pred_region
        %p131 = scmp.lt.s32.totalorder %s9, 1
        %s132 = scalar_select %p131, %s9, 1
        %s133 = smul.addr %s132, 6
        %s134 = smul.addr %s133, 4
        %s135 = scalar_lea.vmem %s0, %s134
      $region28: #{teacher_net14_forward.6} parent=23 // pred_fallthru
        _
    $region24: #{teacher_net14_forward.6} parent=5 // pred_fallthru
      _
    %p136 = scmp.le.s32.totalorder 1, %s9
    %p137 = scmp.lt.s32.totalorder %s9, 3
    %p138 = pnand %p136, %p137
    %p139 = pneg %p138
    // Predicated region
    $region29: #{teacher_net14_forward.6} parent=5 // pred_check
      _
    $region30: #{teacher_net14_forward.6} parent=5 // pred_check_branch
      %141 = sbr.rel (%p138) target = $region32
    $region31: #{teacher_net14_forward.6} parent=5 // pred_region
      %s142 = ssub.s32 %s9, 1
      %p143 = scmp.lt.s32.totalorder %s14, 1
      %s144 = scalar_select %p143, %s14, 1
      %s145 = smul.addr %s144, 6
      %s146 = smul.addr %s145, 4
      %s147 = scalar_lea.vmem %s0, %s146
      %p148 = pneg %p35
      %p149 = pneg %p32
      %p150 = pneg %p56
      %p151 = pneg %p53
      %p152 = pneg %p77
      %p153 = pneg %p74
      %p154 = pneg %p103
      %p155 = pneg %p100
      %p156 = scmp.lt.s32.totalorder %s14, 1
      %s157 = scalar_select %p156, %s14, 1
      %s158 = smul.addr %s157, 4
      %s159 = scalar_lea.vmem %s3, %s158
      %p160 = scmp.lt.s32.totalorder %s14, 1
      %s161 = scalar_select %p160, %s14, 1
      %s162 = smul.addr %s161, 6
      %s163 = smul.addr %s162, 4
      %s164 = scalar_lea.vmem %s0, %s163
      %p165 = scmp.lt.s32.totalorder %s14, 1
      %s166 = scalar_select %p165, %s14, 1
      %s167 = smul.addr %s166, 4
      %s168 = scalar_lea.vmem %s3, %s167
      %v169 = vld [vmem:[%s164] sm:$0x7]
      %v170 = vld [vmem:[%s164 + $0x4] sm:$0x7]
      %v171 = vld [vmem:[%s164 + $0x8] sm:$0x7]
      %v172 = vld [vmem:[%s164 + $0xc] sm:$0x7]
      %v173 = vld [vmem:[%s164 + $0x10] sm:$0x7]
      %v174 = vld [vmem:[%s164 + $0x14] sm:$0x7]
      %v175 = vld [vmem:[%s1] sm:$0xff]
      %v176 = vld [vmem:[%s1 + $0x8] sm:$0xff]
      %v177 = vld [vmem:[%s1 + $0x10] sm:$0xff]
      %v178 = vld [vmem:[%s1 + $0x18] sm:$0xff]
      %v179 = vld [vmem:[%s1 + $0x20] sm:$0xff]
      %v180 = vld [vmem:[%s1 + $0x28] sm:$0xff]
      %v181 = vld [vmem:[%s1 + $0x30] sm:$0xff]
      %v182 = vld [vmem:[%s1 + $0x38] sm:$0xff]
      %v183 = vld [vmem:[%s1 + $0x40] sm:$0xff]
      %v184 = vld [vmem:[%s1 + $0x48] sm:$0xff]
      %v185 = vld [vmem:[%s1 + $0x50] sm:$0xff]
      %v186 = vld [vmem:[%s1 + $0x58] sm:$0xff]
      %v187 = vld [vmem:[%s1 + $0x60] sm:$0xff]
      %v188 = vld [vmem:[%s1 + $0x68] sm:$0xff]
      %v189 = vld [vmem:[%s1 + $0x70] sm:$0xff]
      %v190 = vld [vmem:[%s1 + $0x78] sm:$0xff]
      %s191 = scalar_lea.vmem %s1, 384
      %v192 = vld [vmem:[%s191] sm:$0xff]
      %v193 = vld [vmem:[%s191 + $0x8] sm:$0xff]
      %v194 = vld [vmem:[%s191 + $0x10] sm:$0xff]
      %v195 = vld [vmem:[%s191 + $0x18] sm:$0xff]
      %v196 = vld [vmem:[%s191 + $0x20] sm:$0xff]
      %v197 = vld [vmem:[%s191 + $0x28] sm:$0xff]
      %v198 = vld [vmem:[%s191 + $0x30] sm:$0xff]
      %v199 = vld [vmem:[%s191 + $0x38] sm:$0xff]
      %v200 = vld [vmem:[%s191 + $0x40] sm:$0xff]
      %v201 = vld [vmem:[%s191 + $0x48] sm:$0xff]
      %v202 = vld [vmem:[%s191 + $0x50] sm:$0xff]
      %v203 = vld [vmem:[%s191 + $0x58] sm:$0xff]
      %v204 = vld [vmem:[%s191 + $0x60] sm:$0xff]
      %v205 = vld [vmem:[%s191 + $0x68] sm:$0xff]
      %v206 = vld [vmem:[%s191 + $0x70] sm:$0xff]
      %v207 = vld [vmem:[%s191 + $0x78] sm:$0xff]
      %209 = vst [vmem:[#allocation1] ss:$4 sm:$0xff] %v170
      %s211 = scalar_lea.vmem [#allocation1], 1
      %212 = vst [vmem:[%s211] ss:$4 sm:$0xff] %v171
      %s214 = scalar_lea.vmem [#allocation1], 2
      %215 = vst [vmem:[%s214] ss:$4 sm:$0xff] %v172
      %s217 = scalar_lea.vmem [#allocation1], 3
      %218 = vst [vmem:[%s217] ss:$4 sm:$0xff] %v173
      %v219 = vld.sshfl [vmem:[#allocation1] sm:$0xff pattern:$0x73625140]
      %v237 = vunpack.c.l.b16 %v192
      %v238 = vunpack.c.h.b16 %v192
      %v239 = vunpack.c.l.b16 %v193
      %v240 = vunpack.c.h.b16 %v193
      %v241 = vunpack.c.l.b16 %v194
      %v242 = vunpack.c.h.b16 %v194
      %v243 = vunpack.c.l.b16 %v195
      %v244 = vunpack.c.h.b16 %v195
      %v245 = vunpack.c.l.b16 %v196
      %v246 = vunpack.c.h.b16 %v196
      %v247 = vunpack.c.l.b16 %v197
      %v248 = vunpack.c.h.b16 %v197
      %v249 = vunpack.c.l.b16 %v198
      %v250 = vunpack.c.h.b16 %v198
      %v251 = vunpack.c.l.b16 %v199
      %v252 = vunpack.c.h.b16 %v199
      %v253 = vunpack.c.l.b16 %v200
      %v254 = vunpack.c.h.b16 %v200
      %v255 = vunpack.c.l.b16 %v201
      %v256 = vunpack.c.h.b16 %v201
      %v257 = vunpack.c.l.b16 %v202
      %v258 = vunpack.c.h.b16 %v202
      %v259 = vunpack.c.l.b16 %v203
      %v260 = vunpack.c.h.b16 %v203
      %v261 = vunpack.c.l.b16 %v204
      %v262 = vunpack.c.h.b16 %v204
      %v263 = vunpack.c.l.b16 %v205
      %v264 = vunpack.c.h.b16 %v205
      %v265 = vunpack.c.l.b16 %v206
      %v266 = vunpack.c.h.b16 %v206
      %v267 = vunpack.c.l.b16 %v207
      %v268 = vunpack.c.h.b16 %v207
      %v269 = vpack.c.b16 %v239, %v237
      %v270 = vpack.c.b16 %v240, %v238
      %v271 = vpack.c.b16 %v243, %v241
      %v272 = vpack.c.b16 %v244, %v242
      %v273 = vpack.c.b16 %v247, %v245
      %v274 = vpack.c.b16 %v248, %v246
      %v275 = vpack.c.b16 %v251, %v249
      %v276 = vpack.c.b16 %v252, %v250
      %v277 = vpack.c.b16 %v255, %v253
      %v278 = vpack.c.b16 %v256, %v254
      %v279 = vpack.c.b16 %v259, %v257
      %v280 = vpack.c.b16 %v260, %v258
      %v281 = vpack.c.b16 %v263, %v261
      %v282 = vpack.c.b16 %v264, %v262
      %v283 = vpack.c.b16 %v267, %v265
      %v284 = vpack.c.b16 %v268, %v266
      %301 = vmatpush.bf16.msra.mxu0 %v283
      %302 = vmatpush.bf16.msra.mxu0 %v281
      %303 = vmatpush.bf16.msra.mxu0 %v279
      %304 = vmatpush.bf16.msra.mxu0 %v277
      %305 = vmatpush.bf16.msra.mxu0 %v275
      %306 = vmatpush.bf16.msra.mxu0 %v273
      %307 = vmatpush.bf16.msra.mxu0 %v271
      %308 = vmatpush.bf16.msra.mxu0 %v269
      %309 = vmatmul.bf16.gmra.mxu0 %v219
      %v310 = vpop.f32.mrf.mxu0
      %v311 = vadd.f32 0.0, %v310
      %v312 = vpop.f32.mrf.mxu0
      %v313 = vadd.f32 0.0, %v312
      %314 = vdwg.mxu0
      %315 = vmatpush.bf16.msra.mxu0 %v284
      %316 = vmatpush.bf16.msra.mxu0 %v282
      %317 = vmatpush.bf16.msra.mxu0 %v280
      %318 = vmatpush.bf16.msra.mxu0 %v278
      %319 = vmatpush.bf16.msra.mxu0 %v276
      %320 = vmatpush.bf16.msra.mxu0 %v274
      %321 = vmatpush.bf16.msra.mxu0 %v272
      %322 = vmatpush.bf16.msra.mxu0 %v270
      %323 = vmatmul.bf16.gmra.mxu0 %v219
      %v324 = vpop.f32.mrf.mxu0
      %v325 = vadd.f32 0.0, %v324
      %v326 = vpop.f32.mrf.mxu0
      %v327 = vadd.f32 0.0, %v326
      %328 = vdwg.mxu0
      %330 = vst [vmem:[#allocation1] ss:$4 sm:$0xff] %v169
      %s331 = scalar_lea.vmem [#allocation1], 1
      %332 = vst [vmem:[%s331] ss:$4 sm:$0xff] %v170
      %s333 = scalar_lea.vmem [#allocation1], 2
      %334 = vst [vmem:[%s333] ss:$4 sm:$0xff] %v171
      %s335 = scalar_lea.vmem [#allocation1], 3
      %336 = vst [vmem:[%s335] ss:$4 sm:$0xff] %v172
      %v337 = vld.sshfl [vmem:[#allocation1] sm:$0xff pattern:$0x73625140]
      %v355 = vunpack.c.l.b16 %v175
      %v356 = vunpack.c.h.b16 %v175
      %v357 = vunpack.c.l.b16 %v176
      %v358 = vunpack.c.h.b16 %v176
      %v359 = vunpack.c.l.b16 %v177
      %v360 = vunpack.c.h.b16 %v177
      %v361 = vunpack.c.l.b16 %v178
      %v362 = vunpack.c.h.b16 %v178
      %v363 = vunpack.c.l.b16 %v179
      %v364 = vunpack.c.h.b16 %v179
      %v365 = vunpack.c.l.b16 %v180
      %v366 = vunpack.c.h.b16 %v180
      %v367 = vunpack.c.l.b16 %v181
      %v368 = vunpack.c.h.b16 %v181
      %v369 = vunpack.c.l.b16 %v182
      %v370 = vunpack.c.h.b16 %v182
      %v371 = vunpack.c.l.b16 %v183
      %v372 = vunpack.c.h.b16 %v183
      %v373 = vunpack.c.l.b16 %v184
      %v374 = vunpack.c.h.b16 %v184
      %v375 = vunpack.c.l.b16 %v185
      %v376 = vunpack.c.h.b16 %v185
      %v377 = vunpack.c.l.b16 %v186
      %v378 = vunpack.c.h.b16 %v186
      %v379 = vunpack.c.l.b16 %v187
      %v380 = vunpack.c.h.b16 %v187
      %v381 = vunpack.c.l.b16 %v188
      %v382 = vunpack.c.h.b16 %v188
      %v383 = vunpack.c.l.b16 %v189
      %v384 = vunpack.c.h.b16 %v189
      %v385 = vunpack.c.l.b16 %v190
      %v386 = vunpack.c.h.b16 %v190
      %v387 = vpack.c.b16 %v357, %v355
      %v388 = vpack.c.b16 %v358, %v356
      %v389 = vpack.c.b16 %v361, %v359
      %v390 = vpack.c.b16 %v362, %v360
      %v391 = vpack.c.b16 %v365, %v363
      %v392 = vpack.c.b16 %v366, %v364
      %v393 = vpack.c.b16 %v369, %v367
      %v394 = vpack.c.b16 %v370, %v368
      %v395 = vpack.c.b16 %v373, %v371
      %v396 = vpack.c.b16 %v374, %v372
      %v397 = vpack.c.b16 %v377, %v375
      %v398 = vpack.c.b16 %v378, %v376
      %v399 = vpack.c.b16 %v381, %v379
      %v400 = vpack.c.b16 %v382, %v380
      %v401 = vpack.c.b16 %v385, %v383
      %v402 = vpack.c.b16 %v386, %v384
      %419 = vmatpush.bf16.msra.mxu0 %v401
      %420 = vmatpush.bf16.msra.mxu0 %v399
      %421 = vmatpush.bf16.msra.mxu0 %v397
      %422 = vmatpush.bf16.msra.mxu0 %v395
      %423 = vmatpush.bf16.msra.mxu0 %v393
      %424 = vmatpush.bf16.msra.mxu0 %v391
      %425 = vmatpush.bf16.msra.mxu0 %v389
      %426 = vmatpush.bf16.msra.mxu0 %v387
      %427 = vmatmul.bf16.gmra.mxu0 %v337
      %v428 = vpop.f32.mrf.mxu0
      %v429 = vadd.f32 %v311, %v428
      %v430 = vpop.f32.mrf.mxu0
      %v431 = vadd.f32 %v313, %v430
      %432 = vdwg.mxu0
      %433 = vmatpush.bf16.msra.mxu0 %v402
      %434 = vmatpush.bf16.msra.mxu0 %v400
      %435 = vmatpush.bf16.msra.mxu0 %v398
      %436 = vmatpush.bf16.msra.mxu0 %v396
      %437 = vmatpush.bf16.msra.mxu0 %v394
      %438 = vmatpush.bf16.msra.mxu0 %v392
      %439 = vmatpush.bf16.msra.mxu0 %v390
      %440 = vmatpush.bf16.msra.mxu0 %v388
      %441 = vmatmul.bf16.gmra.mxu0 %v337
      %v442 = vpop.f32.mrf.mxu0
      %v443 = vadd.f32 %v325, %v442
      %v444 = vpop.f32.mrf.mxu0
      %v445 = vadd.f32 %v327, %v444
      %446 = vdwg.mxu0
      %s447 = scalar_lea.vmem %s1, 768
      %v448 = vld [vmem:[%s447] sm:$0xff]
      %v449 = vld [vmem:[%s447 + $0x8] sm:$0xff]
      %v450 = vld [vmem:[%s447 + $0x10] sm:$0xff]
      %v451 = vld [vmem:[%s447 + $0x18] sm:$0xff]
      %v452 = vld [vmem:[%s447 + $0x20] sm:$0xff]
      %v453 = vld [vmem:[%s447 + $0x28] sm:$0xff]
      %v454 = vld [vmem:[%s447 + $0x30] sm:$0xff]
      %v455 = vld [vmem:[%s447 + $0x38] sm:$0xff]
      %v456 = vld [vmem:[%s447 + $0x40] sm:$0xff]
      %v457 = vld [vmem:[%s447 + $0x48] sm:$0xff]
      %v458 = vld [vmem:[%s447 + $0x50] sm:$0xff]
      %v459 = vld [vmem:[%s447 + $0x58] sm:$0xff]
      %v460 = vld [vmem:[%s447 + $0x60] sm:$0xff]
      %v461 = vld [vmem:[%s447 + $0x68] sm:$0xff]
      %v462 = vld [vmem:[%s447 + $0x70] sm:$0xff]
      %v463 = vld [vmem:[%s447 + $0x78] sm:$0xff]
      %464 = vst [vmem:[#allocation1] ss:$4 sm:$0xff] %v171
      %s465 = scalar_lea.vmem [#allocation1], 1
      %466 = vst [vmem:[%s465] ss:$4 sm:$0xff] %v172
      %s467 = scalar_lea.vmem [#allocation1], 2
      %468 = vst [vmem:[%s467] ss:$4 sm:$0xff] %v173
      %s470 = scalar_lea.vmem [#allocation1], 3
      %471 = vst [vmem:[%s470] ss:$4 sm:$0xff] %v174
      %v472 = vld.sshfl [vmem:[#allocation1] sm:$0xff pattern:$0x73625140]
      %v490 = vunpack.c.l.b16 %v448
      %v491 = vunpack.c.h.b16 %v448
      %v492 = vunpack.c.l.b16 %v449
      %v493 = vunpack.c.h.b16 %v449
      %v494 = vunpack.c.l.b16 %v450
      %v495 = vunpack.c.h.b16 %v450
      %v496 = vunpack.c.l.b16 %v451
      %v497 = vunpack.c.h.b16 %v451
      %v498 = vunpack.c.l.b16 %v452
      %v499 = vunpack.c.h.b16 %v452
      %v500 = vunpack.c.l.b16 %v453
      %v501 = vunpack.c.h.b16 %v453
      %v502 = vunpack.c.l.b16 %v454
      %v503 = vunpack.c.h.b16 %v454
      %v504 = vunpack.c.l.b16 %v455
      %v505 = vunpack.c.h.b16 %v455
      %v506 = vunpack.c.l.b16 %v456
      %v507 = vunpack.c.h.b16 %v456
      %v508 = vunpack.c.l.b16 %v457
      %v509 = vunpack.c.h.b16 %v457
      %v510 = vunpack.c.l.b16 %v458
      %v511 = vunpack.c.h.b16 %v458
      %v512 = vunpack.c.l.b16 %v459
      %v513 = vunpack.c.h.b16 %v459
      %v514 = vunpack.c.l.b16 %v460
      %v515 = vunpack.c.h.b16 %v460
      %v516 = vunpack.c.l.b16 %v461
      %v517 = vunpack.c.h.b16 %v461
      %v518 = vunpack.c.l.b16 %v462
      %v519 = vunpack.c.h.b16 %v462
      %v520 = vunpack.c.l.b16 %v463
      %v521 = vunpack.c.h.b16 %v463
      %v522 = vpack.c.b16 %v492, %v490
      %v523 = vpack.c.b16 %v493, %v491
      %v524 = vpack.c.b16 %v496, %v494
      %v525 = vpack.c.b16 %v497, %v495
      %v526 = vpack.c.b16 %v500, %v498
      %v527 = vpack.c.b16 %v501, %v499
      %v528 = vpack.c.b16 %v504, %v502
      %v529 = vpack.c.b16 %v505, %v503
      %v530 = vpack.c.b16 %v508, %v506
      %v531 = vpack.c.b16 %v509, %v507
      %v532 = vpack.c.b16 %v512, %v510
      %v533 = vpack.c.b16 %v513, %v511
      %v534 = vpack.c.b16 %v516, %v514
      %v535 = vpack.c.b16 %v517, %v515
      %v536 = vpack.c.b16 %v520, %v518
      %v537 = vpack.c.b16 %v521, %v519
      %554 = vmatpush.bf16.msra.mxu0 %v536
      %555 = vmatpush.bf16.msra.mxu0 %v534
      %556 = vmatpush.bf16.msra.mxu0 %v532
      %557 = vmatpush.bf16.msra.mxu0 %v530
      %558 = vmatpush.bf16.msra.mxu0 %v528
      %559 = vmatpush.bf16.msra.mxu0 %v526
      %560 = vmatpush.bf16.msra.mxu0 %v524
      %561 = vmatpush.bf16.msra.mxu0 %v522
      %562 = vmatmul.bf16.gmra.mxu0 %v472
      %v563 = vpop.f32.mrf.mxu0
      %v564 = vadd.f32 0.0, %v563
      %v565 = vpop.f32.mrf.mxu0
      %v566 = vadd.f32 0.0, %v565
      %567 = vdwg.mxu0
      %568 = vmatpush.bf16.msra.mxu0 %v537
      %569 = vmatpush.bf16.msra.mxu0 %v535
      %570 = vmatpush.bf16.msra.mxu0 %v533
      %571 = vmatpush.bf16.msra.mxu0 %v531
      %572 = vmatpush.bf16.msra.mxu0 %v529
      %573 = vmatpush.bf16.msra.mxu0 %v527
      %574 = vmatpush.bf16.msra.mxu0 %v525
      %575 = vmatpush.bf16.msra.mxu0 %v523
      %576 = vmatmul.bf16.gmra.mxu0 %v472
      %v577 = vpop.f32.mrf.mxu0
      %v578 = vadd.f32 0.0, %v577
      %v579 = vpop.f32.mrf.mxu0
      %v580 = vadd.f32 0.0, %v579
      %581 = vdwg.mxu0
      %v582 = vadd.f32 %v429, %v564
      %v583 = vadd.f32 %v443, %v578
      %v584 = vadd.f32 %v431, %v566
      %v585 = vadd.f32 %v445, %v580
      %v592 = vrot.slane %v169, 2
      %v593 = vrot.slane %v170, 2
      %v594 = vrot.slane %v171, 2
      %v595 = vrot.slane %v172, 2
      %v596 = vrot.slane %v173, 2
      %v597 = vrot.slane %v174, 2
      %vm598 = vcmask 1041408
      %v600 = vsel %vm598, %v169, %v592
      %vm601 = vcmask 1043458
      %v602 = vsel %vm601, %v169, %v592
      %v604 = vrot.slane %v602, 2
      %v606 = vsel %vm598, %v170, %v593
      %v607 = vsel %vm601, %v170, %v593
      %v609 = vrot.slane %v607, 2
      %v611 = vsel %vm598, %v171, %v594
      %v612 = vsel %vm601, %v171, %v594
      %v614 = vrot.slane %v612, 2
      %v616 = vsel %vm598, %v172, %v595
      %v617 = vsel %vm601, %v172, %v595
      %v619 = vrot.slane %v617, 2
      %v621 = vsel %vm598, %v173, %v596
      %v622 = vsel %vm601, %v173, %v596
      %v624 = vrot.slane %v622, 2
      %v626 = vsel %vm598, %v174, %v597
      %v627 = vsel %vm601, %v174, %v597
      %v629 = vrot.slane %v627, 2
      %vm630 = vsmask.f32 1280
      %vm631 = vsmask.f32 3336
      %vm632 = vmor %vm630, %vm631
      %vm633 = vsmask.f32 5392
      %vm634 = vmor %vm632, %vm633
      %vm635 = vsmask.f32 7448
      %vm636 = vmor %vm634, %vm635
      %v637 = vshrl.u32 %v600, 16
      %v639 = vrot.slane %v637, 6
      %v640 = vshll.u32 %v600, 16
      %v642 = vrot.slane %v640, 7
      %v643 = vor.u32 %v639, %v642
      %v644 = vrot.slane %v643, 2
      %v646 = vshll.u32 %v604, 16
      %v648 = vrot.slane %v646, 7
      %v649 = vsel %vm636, %v644, %v648
      %v650 = vshrl.u32 %v606, 16
      %v652 = vrot.slane %v650, 6
      %v653 = vshll.u32 %v606, 16
      %v655 = vrot.slane %v653, 7
      %v656 = vor.u32 %v652, %v655
      %v657 = vrot.slane %v656, 2
      %v659 = vshll.u32 %v609, 16
      %v661 = vrot.slane %v659, 7
      %v662 = vsel %vm636, %v657, %v661
      %v663 = vshrl.u32 %v611, 16
      %v665 = vrot.slane %v663, 6
      %v666 = vshll.u32 %v611, 16
      %v668 = vrot.slane %v666, 7
      %v669 = vor.u32 %v665, %v668
      %v670 = vrot.slane %v669, 2
      %v672 = vshll.u32 %v614, 16
      %v674 = vrot.slane %v672, 7
      %v675 = vsel %vm636, %v670, %v674
      %v676 = vshrl.u32 %v616, 16
      %v678 = vrot.slane %v676, 6
      %v679 = vshll.u32 %v616, 16
      %v681 = vrot.slane %v679, 7
      %v682 = vor.u32 %v678, %v681
      %v683 = vrot.slane %v682, 2
      %v685 = vshll.u32 %v619, 16
      %v687 = vrot.slane %v685, 7
      %v688 = vsel %vm636, %v683, %v687
      %v689 = vshrl.u32 %v621, 16
      %v691 = vrot.slane %v689, 6
      %v692 = vshll.u32 %v621, 16
      %v694 = vrot.slane %v692, 7
      %v695 = vor.u32 %v691, %v694
      %v696 = vrot.slane %v695, 2
      %v698 = vshll.u32 %v624, 16
      %v700 = vrot.slane %v698, 7
      %v701 = vsel %vm636, %v696, %v700
      %v702 = vshrl.u32 %v626, 16
      %v704 = vrot.slane %v702, 6
      %v705 = vshll.u32 %v626, 16
      %v707 = vrot.slane %v705, 7
      %v708 = vor.u32 %v704, %v707
      %v709 = vrot.slane %v708, 2
      %v711 = vshll.u32 %v629, 16
      %v713 = vrot.slane %v711, 7
      %v714 = vsel %vm636, %v709, %v713
      %s715 = scalar_lea.vmem %s1, 128
      %v716 = vld [vmem:[%s715] sm:$0xff]
      %v717 = vld [vmem:[%s715 + $0x8] sm:$0xff]
      %v718 = vld [vmem:[%s715 + $0x10] sm:$0xff]
      %v719 = vld [vmem:[%s715 + $0x18] sm:$0xff]
      %v720 = vld [vmem:[%s715 + $0x20] sm:$0xff]
      %v721 = vld [vmem:[%s715 + $0x28] sm:$0xff]
      %v722 = vld [vmem:[%s715 + $0x30] sm:$0xff]
      %v723 = vld [vmem:[%s715 + $0x38] sm:$0xff]
      %v724 = vld [vmem:[%s715 + $0x40] sm:$0xff]
      %v725 = vld [vmem:[%s715 + $0x48] sm:$0xff]
      %v726 = vld [vmem:[%s715 + $0x50] sm:$0xff]
      %v727 = vld [vmem:[%s715 + $0x58] sm:$0xff]
      %v728 = vld [vmem:[%s715 + $0x60] sm:$0xff]
      %v729 = vld [vmem:[%s715 + $0x68] sm:$0xff]
      %v730 = vld [vmem:[%s715 + $0x70] sm:$0xff]
      %v731 = vld [vmem:[%s715 + $0x78] sm:$0xff]
      %733 = vst [vmem:[#allocation1] ss:$4 sm:$0xff] %v649
      %s735 = scalar_lea.vmem [#allocation1], 1
      %736 = vst [vmem:[%s735] ss:$4 sm:$0xff] %v662
      %s738 = scalar_lea.vmem [#allocation1], 2
      %739 = vst [vmem:[%s738] ss:$4 sm:$0xff] %v675
      %s741 = scalar_lea.vmem [#allocation1], 3
      %742 = vst [vmem:[%s741] ss:$4 sm:$0xff] %v688
      %v743 = vld.sshfl [vmem:[#allocation1] sm:$0xff pattern:$0x73625140]
      %v761 = vunpack.c.l.b16 %v716
      %v762 = vunpack.c.h.b16 %v716
      %v763 = vunpack.c.l.b16 %v717
      %v764 = vunpack.c.h.b16 %v717
      %v765 = vunpack.c.l.b16 %v718
      %v766 = vunpack.c.h.b16 %v718
      %v767 = vunpack.c.l.b16 %v719
      %v768 = vunpack.c.h.b16 %v719
      %v769 = vunpack.c.l.b16 %v720
      %v770 = vunpack.c.h.b16 %v720
      %v771 = vunpack.c.l.b16 %v721
      %v772 = vunpack.c.h.b16 %v721
      %v773 = vunpack.c.l.b16 %v722
      %v774 = vunpack.c.h.b16 %v722
      %v775 = vunpack.c.l.b16 %v723
      %v776 = vunpack.c.h.b16 %v723
      %v777 = vunpack.c.l.b16 %v724
      %v778 = vunpack.c.h.b16 %v724
      %v779 = vunpack.c.l.b16 %v725
      %v780 = vunpack.c.h.b16 %v725
      %v781 = vunpack.c.l.b16 %v726
      %v782 = vunpack.c.h.b16 %v726
      %v783 = vunpack.c.l.b16 %v727
      %v784 = vunpack.c.h.b16 %v727
      %v785 = vunpack.c.l.b16 %v728
      %v786 = vunpack.c.h.b16 %v728
      %v787 = vunpack.c.l.b16 %v729
      %v788 = vunpack.c.h.b16 %v729
      %v789 = vunpack.c.l.b16 %v730
      %v790 = vunpack.c.h.b16 %v730
      %v791 = vunpack.c.l.b16 %v731
      %v792 = vunpack.c.h.b16 %v731
      %v793 = vpack.c.b16 %v763, %v761
      %v794 = vpack.c.b16 %v764, %v762
      %v795 = vpack.c.b16 %v767, %v765
      %v796 = vpack.c.b16 %v768, %v766
      %v797 = vpack.c.b16 %v771, %v769
      %v798 = vpack.c.b16 %v772, %v770
      %v799 = vpack.c.b16 %v775, %v773
      %v800 = vpack.c.b16 %v776, %v774
      %v801 = vpack.c.b16 %v779, %v777
      %v802 = vpack.c.b16 %v780, %v778
      %v803 = vpack.c.b16 %v783, %v781
      %v804 = vpack.c.b16 %v784, %v782
      %v805 = vpack.c.b16 %v787, %v785
      %v806 = vpack.c.b16 %v788, %v786
      %v807 = vpack.c.b16 %v791, %v789
      %v808 = vpack.c.b16 %v792, %v790
      %825 = vmatpush.bf16.msra.mxu0 %v807
      %826 = vmatpush.bf16.msra.mxu0 %v805
      %827 = vmatpush.bf16.msra.mxu0 %v803
      %828 = vmatpush.bf16.msra.mxu0 %v801
      %829 = vmatpush.bf16.msra.mxu0 %v799
      %830 = vmatpush.bf16.msra.mxu0 %v797
      %831 = vmatpush.bf16.msra.mxu0 %v795
      %832 = vmatpush.bf16.msra.mxu0 %v793
      %833 = vmatmul.bf16.gmra.mxu0 %v743
      %v834 = vpop.f32.mrf.mxu0
      %v835 = vadd.f32 0.0, %v834
      %v836 = vpop.f32.mrf.mxu0
      %v837 = vadd.f32 0.0, %v836
      %838 = vdwg.mxu0
      %839 = vmatpush.bf16.msra.mxu0 %v808
      %840 = vmatpush.bf16.msra.mxu0 %v806
      %841 = vmatpush.bf16.msra.mxu0 %v804
      %842 = vmatpush.bf16.msra.mxu0 %v802
      %843 = vmatpush.bf16.msra.mxu0 %v800
      %844 = vmatpush.bf16.msra.mxu0 %v798
      %845 = vmatpush.bf16.msra.mxu0 %v796
      %846 = vmatpush.bf16.msra.mxu0 %v794
      %847 = vmatmul.bf16.gmra.mxu0 %v743
      %v848 = vpop.f32.mrf.mxu0
      %v849 = vadd.f32 0.0, %v848
      %v850 = vpop.f32.mrf.mxu0
      %v851 = vadd.f32 0.0, %v850
      %852 = vdwg.mxu0
      %v853 = vadd.f32 %v582, %v835
      %v854 = vadd.f32 %v583, %v849
      %v855 = vadd.f32 %v584, %v837
      %v856 = vadd.f32 %v585, %v851
      %s857 = scalar_lea.vmem %s1, 512
      %v858 = vld [vmem:[%s857] sm:$0xff]
      %v859 = vld [vmem:[%s857 + $0x8] sm:$0xff]
      %v860 = vld [vmem:[%s857 + $0x10] sm:$0xff]
      %v861 = vld [vmem:[%s857 + $0x18] sm:$0xff]
      %v862 = vld [vmem:[%s857 + $0x20] sm:$0xff]
      %v863 = vld [vmem:[%s857 + $0x28] sm:$0xff]
      %v864 = vld [vmem:[%s857 + $0x30] sm:$0xff]
      %v865 = vld [vmem:[%s857 + $0x38] sm:$0xff]
      %v866 = vld [vmem:[%s857 + $0x40] sm:$0xff]
      %v867 = vld [vmem:[%s857 + $0x48] sm:$0xff]
      %v868 = vld [vmem:[%s857 + $0x50] sm:$0xff]
      %v869 = vld [vmem:[%s857 + $0x58] sm:$0xff]
      %v870 = vld [vmem:[%s857 + $0x60] sm:$0xff]
      %v871 = vld [vmem:[%s857 + $0x68] sm:$0xff]
      %v872 = vld [vmem:[%s857 + $0x70] sm:$0xff]
      %v873 = vld [vmem:[%s857 + $0x78] sm:$0xff]
      %874 = vst [vmem:[#allocation1] ss:$4 sm:$0xff] %v662
      %s875 = scalar_lea.vmem [#allocation1], 1
      %876 = vst [vmem:[%s875] ss:$4 sm:$0xff] %v675
      %s877 = scalar_lea.vmem [#allocation1], 2
      %878 = vst [vmem:[%s877] ss:$4 sm:$0xff] %v688
      %s880 = scalar_lea.vmem [#allocation1], 3
      %881 = vst [vmem:[%s880] ss:$4 sm:$0xff] %v701
      %v882 = vld.sshfl [vmem:[#allocation1] sm:$0xff pattern:$0x73625140]
      %v900 = vunpack.c.l.b16 %v858
      %v901 = vunpack.c.h.b16 %v858
      %v902 = vunpack.c.l.b16 %v859
      %v903 = vunpack.c.h.b16 %v859
      %v904 = vunpack.c.l.b16 %v860
      %v905 = vunpack.c.h.b16 %v860
      %v906 = vunpack.c.l.b16 %v861
      %v907 = vunpack.c.h.b16 %v861
      %v908 = vunpack.c.l.b16 %v862
      %v909 = vunpack.c.h.b16 %v862
      %v910 = vunpack.c.l.b16 %v863
      %v911 = vunpack.c.h.b16 %v863
      %v912 = vunpack.c.l.b16 %v864
      %v913 = vunpack.c.h.b16 %v864
      %v914 = vunpack.c.l.b16 %v865
      %v915 = vunpack.c.h.b16 %v865
      %v916 = vunpack.c.l.b16 %v866
      %v917 = vunpack.c.h.b16 %v866
      %v918 = vunpack.c.l.b16 %v867
      %v919 = vunpack.c.h.b16 %v867
      %v920 = vunpack.c.l.b16 %v868
      %v921 = vunpack.c.h.b16 %v868
      %v922 = vunpack.c.l.b16 %v869
      %v923 = vunpack.c.h.b16 %v869
      %v924 = vunpack.c.l.b16 %v870
      %v925 = vunpack.c.h.b16 %v870
      %v926 = vunpack.c.l.b16 %v871
      %v927 = vunpack.c.h.b16 %v871
      %v928 = vunpack.c.l.b16 %v872
      %v929 = vunpack.c.h.b16 %v872
      %v930 = vunpack.c.l.b16 %v873
      %v931 = vunpack.c.h.b16 %v873
      %v932 = vpack.c.b16 %v902, %v900
      %v933 = vpack.c.b16 %v903, %v901
      %v934 = vpack.c.b16 %v906, %v904
      %v935 = vpack.c.b16 %v907, %v905
      %v936 = vpack.c.b16 %v910, %v908
      %v937 = vpack.c.b16 %v911, %v909
      %v938 = vpack.c.b16 %v914, %v912
      %v939 = vpack.c.b16 %v915, %v913
      %v940 = vpack.c.b16 %v918, %v916
      %v941 = vpack.c.b16 %v919, %v917
      %v942 = vpack.c.b16 %v922, %v920
      %v943 = vpack.c.b16 %v923, %v921
      %v944 = vpack.c.b16 %v926, %v924
      %v945 = vpack.c.b16 %v927, %v925
      %v946 = vpack.c.b16 %v930, %v928
      %v947 = vpack.c.b16 %v931, %v929
      %964 = vmatpush.bf16.msra.mxu0 %v946
      %965 = vmatpush.bf16.msra.mxu0 %v944
      %966 = vmatpush.bf16.msra.mxu0 %v942
      %967 = vmatpush.bf16.msra.mxu0 %v940
      %968 = vmatpush.bf16.msra.mxu0 %v938
      %969 = vmatpush.bf16.msra.mxu0 %v936
      %970 = vmatpush.bf16.msra.mxu0 %v934
      %971 = vmatpush.bf16.msra.mxu0 %v932
      %972 = vmatmul.bf16.gmra.mxu0 %v882
      %v973 = vpop.f32.mrf.mxu0
      %v974 = vadd.f32 0.0, %v973
      %v975 = vpop.f32.mrf.mxu0
      %v976 = vadd.f32 0.0, %v975
      %977 = vdwg.mxu0
      %978 = vmatpush.bf16.msra.mxu0 %v947
      %979 = vmatpush.bf16.msra.mxu0 %v945
      %980 = vmatpush.bf16.msra.mxu0 %v943
      %981 = vmatpush.bf16.msra.mxu0 %v941
      %982 = vmatpush.bf16.msra.mxu0 %v939
      %983 = vmatpush.bf16.msra.mxu0 %v937
      %984 = vmatpush.bf16.msra.mxu0 %v935
      %985 = vmatpush.bf16.msra.mxu0 %v933
      %986 = vmatmul.bf16.gmra.mxu0 %v882
      %v987 = vpop.f32.mrf.mxu0
      %v988 = vadd.f32 0.0, %v987
      %v989 = vpop.f32.mrf.mxu0
      %v990 = vadd.f32 0.0, %v989
      %991 = vdwg.mxu0
      %v992 = vadd.f32 %v853, %v974
      %v993 = vadd.f32 %v854, %v988
      %v994 = vadd.f32 %v855, %v976
      %v995 = vadd.f32 %v856, %v990
      %s996 = scalar_lea.vmem %s1, 896
      %v997 = vld [vmem:[%s996] sm:$0xff]
      %v998 = vld [vmem:[%s996 + $0x8] sm:$0xff]
      %v999 = vld [vmem:[%s996 + $0x10] sm:$0xff]
      %v1000 = vld [vmem:[%s996 + $0x18] sm:$0xff]
      %v1001 = vld [vmem:[%s996 + $0x20] sm:$0xff]
      %v1002 = vld [vmem:[%s996 + $0x28] sm:$0xff]
      %v1003 = vld [vmem:[%s996 + $0x30] sm:$0xff]
      %v1004 = vld [vmem:[%s996 + $0x38] sm:$0xff]
      %v1005 = vld [vmem:[%s996 + $0x40] sm:$0xff]
      %v1006 = vld [vmem:[%s996 + $0x48] sm:$0xff]
      %v1007 = vld [vmem:[%s996 + $0x50] sm:$0xff]
      %v1008 = vld [vmem:[%s996 + $0x58] sm:$0xff]
      %v1009 = vld [vmem:[%s996 + $0x60] sm:$0xff]
      %v1010 = vld [vmem:[%s996 + $0x68] sm:$0xff]
      %v1011 = vld [vmem:[%s996 + $0x70] sm:$0xff]
      %v1012 = vld [vmem:[%s996 + $0x78] sm:$0xff]
      %1013 = vst [vmem:[#allocation1] ss:$4 sm:$0xff] %v675
      %s1014 = scalar_lea.vmem [#allocation1], 1
      %1015 = vst [vmem:[%s1014] ss:$4 sm:$0xff] %v688
      %s1016 = scalar_lea.vmem [#allocation1], 2
      %1017 = vst [vmem:[%s1016] ss:$4 sm:$0xff] %v701
      %s1019 = scalar_lea.vmem [#allocation1], 3
      %1020 = vst [vmem:[%s1019] ss:$4 sm:$0xff] %v714
      %v1021 = vld.sshfl [vmem:[#allocation1] sm:$0xff pattern:$0x73625140]
      %v1039 = vunpack.c.l.b16 %v997
      %v1040 = vunpack.c.h.b16 %v997
      %v1041 = vunpack.c.l.b16 %v998
      %v1042 = vunpack.c.h.b16 %v998
      %v1043 = vunpack.c.l.b16 %v999
      %v1044 = vunpack.c.h.b16 %v999
      %v1045 = vunpack.c.l.b16 %v1000
      %v1046 = vunpack.c.h.b16 %v1000
      %v1047 = vunpack.c.l.b16 %v1001
      %v1048 = vunpack.c.h.b16 %v1001
      %v1049 = vunpack.c.l.b16 %v1002
      %v1050 = vunpack.c.h.b16 %v1002
      %v1051 = vunpack.c.l.b16 %v1003
      %v1052 = vunpack.c.h.b16 %v1003
      %v1053 = vunpack.c.l.b16 %v1004
      %v1054 = vunpack.c.h.b16 %v1004
      %v1055 = vunpack.c.l.b16 %v1005
      %v1056 = vunpack.c.h.b16 %v1005
      %v1057 = vunpack.c.l.b16 %v1006
      %v1058 = vunpack.c.h.b16 %v1006
      %v1059 = vunpack.c.l.b16 %v1007
      %v1060 = vunpack.c.h.b16 %v1007
      %v1061 = vunpack.c.l.b16 %v1008
      %v1062 = vunpack.c.h.b16 %v1008
      %v1063 = vunpack.c.l.b16 %v1009
      %v1064 = vunpack.c.h.b16 %v1009
      %v1065 = vunpack.c.l.b16 %v1010
      %v1066 = vunpack.c.h.b16 %v1010
      %v1067 = vunpack.c.l.b16 %v1011
      %v1068 = vunpack.c.h.b16 %v1011
      %v1069 = vunpack.c.l.b16 %v1012
      %v1070 = vunpack.c.h.b16 %v1012
      %v1071 = vpack.c.b16 %v1041, %v1039
      %v1072 = vpack.c.b16 %v1042, %v1040
      %v1073 = vpack.c.b16 %v1045, %v1043
      %v1074 = vpack.c.b16 %v1046, %v1044
      %v1075 = vpack.c.b16 %v1049, %v1047
      %v1076 = vpack.c.b16 %v1050, %v1048
      %v1077 = vpack.c.b16 %v1053, %v1051
      %v1078 = vpack.c.b16 %v1054, %v1052
      %v1079 = vpack.c.b16 %v1057, %v1055
      %v1080 = vpack.c.b16 %v1058, %v1056
      %v1081 = vpack.c.b16 %v1061, %v1059
      %v1082 = vpack.c.b16 %v1062, %v1060
      %v1083 = vpack.c.b16 %v1065, %v1063
      %v1084 = vpack.c.b16 %v1066, %v1064
      %v1085 = vpack.c.b16 %v1069, %v1067
      %v1086 = vpack.c.b16 %v1070, %v1068
      %1103 = vmatpush.bf16.msra.mxu0 %v1085
      %1104 = vmatpush.bf16.msra.mxu0 %v1083
      %1105 = vmatpush.bf16.msra.mxu0 %v1081
      %1106 = vmatpush.bf16.msra.mxu0 %v1079
      %1107 = vmatpush.bf16.msra.mxu0 %v1077
      %1108 = vmatpush.bf16.msra.mxu0 %v1075
      %1109 = vmatpush.bf16.msra.mxu0 %v1073
      %1110 = vmatpush.bf16.msra.mxu0 %v1071
      %1111 = vmatmul.bf16.gmra.mxu0 %v1021
      %v1112 = vpop.f32.mrf.mxu0
      %v1113 = vadd.f32 0.0, %v1112
      %v1114 = vpop.f32.mrf.mxu0
      %v1115 = vadd.f32 0.0, %v1114
      %1116 = vdwg.mxu0
      %1117 = vmatpush.bf16.msra.mxu0 %v1086
      %1118 = vmatpush.bf16.msra.mxu0 %v1084
      %1119 = vmatpush.bf16.msra.mxu0 %v1082
      %1120 = vmatpush.bf16.msra.mxu0 %v1080
      %1121 = vmatpush.bf16.msra.mxu0 %v1078
      %1122 = vmatpush.bf16.msra.mxu0 %v1076
      %1123 = vmatpush.bf16.msra.mxu0 %v1074
      %1124 = vmatpush.bf16.msra.mxu0 %v1072
      %1125 = vmatmul.bf16.gmra.mxu0 %v1021
      %v1126 = vpop.f32.mrf.mxu0
      %v1127 = vadd.f32 0.0, %v1126
      %v1128 = vpop.f32.mrf.mxu0
      %v1129 = vadd.f32 0.0, %v1128
      %1130 = vdwg.mxu0
      %v1131 = vadd.f32 %v992, %v1113
      %v1132 = vadd.f32 %v993, %v1127
      %v1133 = vadd.f32 %v994, %v1115
      %v1134 = vadd.f32 %v995, %v1129
      %vm1141 = vcmask 1040384
      %vm1142 = vcmask 1042434
      %vm1143 = vmor %vm1141, %vm1142
      %vm1144 = vcmask 1044484
      %vm1145 = vmor %vm1143, %vm1144
      %vm1146 = vcmask 1046534
      %vm1147 = vmor %vm1145, %vm1146
      %v1148 = vrot.slane %v600, 7
      %v1149 = vrot.slane %v1148, 2
      %v1150 = vrot.slane %v604, 7
      %v1151 = vsel %vm1147, %v1149, %v1150
      %v1152 = vrot.slane %v606, 7
      %v1153 = vrot.slane %v1152, 2
      %v1154 = vrot.slane %v609, 7
      %v1155 = vsel %vm1147, %v1153, %v1154
      %v1156 = vrot.slane %v611, 7
      %v1157 = vrot.slane %v1156, 2
      %v1158 = vrot.slane %v614, 7
      %v1159 = vsel %vm1147, %v1157, %v1158
      %v1160 = vrot.slane %v616, 7
      %v1161 = vrot.slane %v1160, 2
      %v1162 = vrot.slane %v619, 7
      %v1163 = vsel %vm1147, %v1161, %v1162
      %v1164 = vrot.slane %v621, 7
      %v1165 = vrot.slane %v1164, 2
      %v1166 = vrot.slane %v624, 7
      %v1167 = vsel %vm1147, %v1165, %v1166
      %v1168 = vrot.slane %v626, 7
      %v1169 = vrot.slane %v1168, 2
      %v1170 = vrot.slane %v629, 7
      %v1171 = vsel %vm1147, %v1169, %v1170
      %s1172 = scalar_lea.vmem %s1, 256
      %v1173 = vld [vmem:[%s1172] sm:$0xff]
      %v1174 = vld [vmem:[%s1172 + $0x8] sm:$0xff]
      %v1175 = vld [vmem:[%s1172 + $0x10] sm:$0xff]
      %v1176 = vld [vmem:[%s1172 + $0x18] sm:$0xff]
      %v1177 = vld [vmem:[%s1172 + $0x20] sm:$0xff]
      %v1178 = vld [vmem:[%s1172 + $0x28] sm:$0xff]
      %v1179 = vld [vmem:[%s1172 + $0x30] sm:$0xff]
      %v1180 = vld [vmem:[%s1172 + $0x38] sm:$0xff]
      %v1181 = vld [vmem:[%s1172 + $0x40] sm:$0xff]
      %v1182 = vld [vmem:[%s1172 + $0x48] sm:$0xff]
      %v1183 = vld [vmem:[%s1172 + $0x50] sm:$0xff]
      %v1184 = vld [vmem:[%s1172 + $0x58] sm:$0xff]
      %v1185 = vld [vmem:[%s1172 + $0x60] sm:$0xff]
      %v1186 = vld [vmem:[%s1172 + $0x68] sm:$0xff]
      %v1187 = vld [vmem:[%s1172 + $0x70] sm:$0xff]
      %v1188 = vld [vmem:[%s1172 + $0x78] sm:$0xff]
      %1190 = vst [vmem:[#allocation1] ss:$4 sm:$0xff] %v1151
      %s1192 = scalar_lea.vmem [#allocation1], 1
      %1193 = vst [vmem:[%s1192] ss:$4 sm:$0xff] %v1155
      %s1195 = scalar_lea.vmem [#allocation1], 2
      %1196 = vst [vmem:[%s1195] ss:$4 sm:$0xff] %v1159
      %s1198 = scalar_lea.vmem [#allocation1], 3
      %1199 = vst [vmem:[%s1198] ss:$4 sm:$0xff] %v1163
      %v1200 = vld.sshfl [vmem:[#allocation1] sm:$0xff pattern:$0x73625140]
      %v1218 = vunpack.c.l.b16 %v1173
      %v1219 = vunpack.c.h.b16 %v1173
      %v1220 = vunpack.c.l.b16 %v1174
      %v1221 = vunpack.c.h.b16 %v1174
      %v1222 = vunpack.c.l.b16 %v1175
      %v1223 = vunpack.c.h.b16 %v1175
      %v1224 = vunpack.c.l.b16 %v1176
      %v1225 = vunpack.c.h.b16 %v1176
      %v1226 = vunpack.c.l.b16 %v1177
      %v1227 = vunpack.c.h.b16 %v1177
      %v1228 = vunpack.c.l.b16 %v1178
      %v1229 = vunpack.c.h.b16 %v1178
      %v1230 = vunpack.c.l.b16 %v1179
      %v1231 = vunpack.c.h.b16 %v1179
      %v1232 = vunpack.c.l.b16 %v1180
      %v1233 = vunpack.c.h.b16 %v1180
      %v1234 = vunpack.c.l.b16 %v1181
      %v1235 = vunpack.c.h.b16 %v1181
      %v1236 = vunpack.c.l.b16 %v1182
      %v1237 = vunpack.c.h.b16 %v1182
      %v1238 = vunpack.c.l.b16 %v1183
      %v1239 = vunpack.c.h.b16 %v1183
      %v1240 = vunpack.c.l.b16 %v1184
      %v1241 = vunpack.c.h.b16 %v1184
      %v1242 = vunpack.c.l.b16 %v1185
      %v1243 = vunpack.c.h.b16 %v1185
      %v1244 = vunpack.c.l.b16 %v1186
      %v1245 = vunpack.c.h.b16 %v1186
      %v1246 = vunpack.c.l.b16 %v1187
      %v1247 = vunpack.c.h.b16 %v1187
      %v1248 = vunpack.c.l.b16 %v1188
      %v1249 = vunpack.c.h.b16 %v1188
      %v1250 = vpack.c.b16 %v1220, %v1218
      %v1251 = vpack.c.b16 %v1221, %v1219
      %v1252 = vpack.c.b16 %v1224, %v1222
      %v1253 = vpack.c.b16 %v1225, %v1223
      %v1254 = vpack.c.b16 %v1228, %v1226
      %v1255 = vpack.c.b16 %v1229, %v1227
      %v1256 = vpack.c.b16 %v1232, %v1230
      %v1257 = vpack.c.b16 %v1233, %v1231
      %v1258 = vpack.c.b16 %v1236, %v1234
      %v1259 = vpack.c.b16 %v1237, %v1235
      %v1260 = vpack.c.b16 %v1240, %v1238
      %v1261 = vpack.c.b16 %v1241, %v1239
      %v1262 = vpack.c.b16 %v1244, %v1242
      %v1263 = vpack.c.b16 %v1245, %v1243
      %v1264 = vpack.c.b16 %v1248, %v1246
      %v1265 = vpack.c.b16 %v1249, %v1247
      %1282 = vmatpush.bf16.msra.mxu0 %v1264
      %1283 = vmatpush.bf16.msra.mxu0 %v1262
      %1284 = vmatpush.bf16.msra.mxu0 %v1260
      %1285 = vmatpush.bf16.msra.mxu0 %v1258
      %1286 = vmatpush.bf16.msra.mxu0 %v1256
      %1287 = vmatpush.bf16.msra.mxu0 %v1254
      %1288 = vmatpush.bf16.msra.mxu0 %v1252
      %1289 = vmatpush.bf16.msra.mxu0 %v1250
      %1290 = vmatmul.bf16.gmra.mxu0 %v1200
      %v1291 = vpop.f32.mrf.mxu0
      %v1292 = vadd.f32 0.0, %v1291
      %v1293 = vpop.f32.mrf.mxu0
      %v1294 = vadd.f32 0.0, %v1293
      %1295 = vdwg.mxu0
      %1296 = vmatpush.bf16.msra.mxu0 %v1265
      %1297 = vmatpush.bf16.msra.mxu0 %v1263
      %1298 = vmatpush.bf16.msra.mxu0 %v1261
      %1299 = vmatpush.bf16.msra.mxu0 %v1259
      %1300 = vmatpush.bf16.msra.mxu0 %v1257
      %1301 = vmatpush.bf16.msra.mxu0 %v1255
      %1302 = vmatpush.bf16.msra.mxu0 %v1253
      %1303 = vmatpush.bf16.msra.mxu0 %v1251
      %1304 = vmatmul.bf16.gmra.mxu0 %v1200
      %v1305 = vpop.f32.mrf.mxu0
      %v1306 = vadd.f32 0.0, %v1305
      %v1307 = vpop.f32.mrf.mxu0
      %v1308 = vadd.f32 0.0, %v1307
      %1309 = vdwg.mxu0
      %v1310 = vadd.f32 %v1131, %v1292
      %v1311 = vadd.f32 %v1132, %v1306
      %v1312 = vadd.f32 %v1133, %v1294
      %v1313 = vadd.f32 %v1134, %v1308
      %s1314 = scalar_lea.vmem %s1, 640
      %v1315 = vld [vmem:[%s1314] sm:$0xff]
      %v1316 = vld [vmem:[%s1314 + $0x8] sm:$0xff]
      %v1317 = vld [vmem:[%s1314 + $0x10] sm:$0xff]
      %v1318 = vld [vmem:[%s1314 + $0x18] sm:$0xff]
      %v1319 = vld [vmem:[%s1314 + $0x20] sm:$0xff]
      %v1320 = vld [vmem:[%s1314 + $0x28] sm:$0xff]
      %v1321 = vld [vmem:[%s1314 + $0x30] sm:$0xff]
      %v1322 = vld [vmem:[%s1314 + $0x38] sm:$0xff]
      %v1323 = vld [vmem:[%s1314 + $0x40] sm:$0xff]
      %v1324 = vld [vmem:[%s1314 + $0x48] sm:$0xff]
      %v1325 = vld [vmem:[%s1314 + $0x50] sm:$0xff]
      %v1326 = vld [vmem:[%s1314 + $0x58] sm:$0xff]
      %v1327 = vld [vmem:[%s1314 + $0x60] sm:$0xff]
      %v1328 = vld [vmem:[%s1314 + $0x68] sm:$0xff]
      %v1329 = vld [vmem:[%s1314 + $0x70] sm:$0xff]
      %v1330 = vld [vmem:[%s1314 + $0x78] sm:$0xff]
      %1331 = vst [vmem:[#allocation1] ss:$4 sm:$0xff] %v1155
      %s1332 = scalar_lea.vmem [#allocation1], 1
      %1333 = vst [vmem:[%s1332] ss:$4 sm:$0xff] %v1159
      %s1334 = scalar_lea.vmem [#allocation1], 2
      %1335 = vst [vmem:[%s1334] ss:$4 sm:$0xff] %v1163
      %s1337 = scalar_lea.vmem [#allocation1], 3
      %1338 = vst [vmem:[%s1337] ss:$4 sm:$0xff] %v1167
      %v1339 = vld.sshfl [vmem:[#allocation1] sm:$0xff pattern:$0x73625140]
      %v1357 = vunpack.c.l.b16 %v1315
      %v1358 = vunpack.c.h.b16 %v1315
      %v1359 = vunpack.c.l.b16 %v1316
      %v1360 = vunpack.c.h.b16 %v1316
      %v1361 = vunpack.c.l.b16 %v1317
      %v1362 = vunpack.c.h.b16 %v1317
      %v1363 = vunpack.c.l.b16 %v1318
      %v1364 = vunpack.c.h.b16 %v1318
      %v1365 = vunpack.c.l.b16 %v1319
      %v1366 = vunpack.c.h.b16 %v1319
      %v1367 = vunpack.c.l.b16 %v1320
      %v1368 = vunpack.c.h.b16 %v1320
      %v1369 = vunpack.c.l.b16 %v1321
      %v1370 = vunpack.c.h.b16 %v1321
      %v1371 = vunpack.c.l.b16 %v1322
      %v1372 = vunpack.c.h.b16 %v1322
      %v1373 = vunpack.c.l.b16 %v1323
      %v1374 = vunpack.c.h.b16 %v1323
      %v1375 = vunpack.c.l.b16 %v1324
      %v1376 = vunpack.c.h.b16 %v1324
      %v1377 = vunpack.c.l.b16 %v1325
      %v1378 = vunpack.c.h.b16 %v1325
      %v1379 = vunpack.c.l.b16 %v1326
      %v1380 = vunpack.c.h.b16 %v1326
      %v1381 = vunpack.c.l.b16 %v1327
      %v1382 = vunpack.c.h.b16 %v1327
      %v1383 = vunpack.c.l.b16 %v1328
      %v1384 = vunpack.c.h.b16 %v1328
      %v1385 = vunpack.c.l.b16 %v1329
      %v1386 = vunpack.c.h.b16 %v1329
      %v1387 = vunpack.c.l.b16 %v1330
      %v1388 = vunpack.c.h.b16 %v1330
      %v1389 = vpack.c.b16 %v1359, %v1357
      %v1390 = vpack.c.b16 %v1360, %v1358
      %v1391 = vpack.c.b16 %v1363, %v1361
      %v1392 = vpack.c.b16 %v1364, %v1362
      %v1393 = vpack.c.b16 %v1367, %v1365
      %v1394 = vpack.c.b16 %v1368, %v1366
      %v1395 = vpack.c.b16 %v1371, %v1369
      %v1396 = vpack.c.b16 %v1372, %v1370
      %v1397 = vpack.c.b16 %v1375, %v1373
      %v1398 = vpack.c.b16 %v1376, %v1374
      %v1399 = vpack.c.b16 %v1379, %v1377
      %v1400 = vpack.c.b16 %v1380, %v1378
      %v1401 = vpack.c.b16 %v1383, %v1381
      %v1402 = vpack.c.b16 %v1384, %v1382
      %v1403 = vpack.c.b16 %v1387, %v1385
      %v1404 = vpack.c.b16 %v1388, %v1386
      %1421 = vmatpush.bf16.msra.mxu0 %v1403
      %1422 = vmatpush.bf16.msra.mxu0 %v1401
      %1423 = vmatpush.bf16.msra.mxu0 %v1399
      %1424 = vmatpush.bf16.msra.mxu0 %v1397
      %1425 = vmatpush.bf16.msra.mxu0 %v1395
      %1426 = vmatpush.bf16.msra.mxu0 %v1393
      %1427 = vmatpush.bf16.msra.mxu0 %v1391
      %1428 = vmatpush.bf16.msra.mxu0 %v1389
      %1429 = vmatmul.bf16.gmra.mxu0 %v1339
      %v1430 = vpop.f32.mrf.mxu0
      %v1431 = vadd.f32 0.0, %v1430
      %v1432 = vpop.f32.mrf.mxu0
      %v1433 = vadd.f32 0.0, %v1432
      %1434 = vdwg.mxu0
      %1435 = vmatpush.bf16.msra.mxu0 %v1404
      %1436 = vmatpush.bf16.msra.mxu0 %v1402
      %1437 = vmatpush.bf16.msra.mxu0 %v1400
      %1438 = vmatpush.bf16.msra.mxu0 %v1398
      %1439 = vmatpush.bf16.msra.mxu0 %v1396
      %1440 = vmatpush.bf16.msra.mxu0 %v1394
      %1441 = vmatpush.bf16.msra.mxu0 %v1392
      %1442 = vmatpush.bf16.msra.mxu0 %v1390
      %1443 = vmatmul.bf16.gmra.mxu0 %v1339
      %v1444 = vpop.f32.mrf.mxu0
      %v1445 = vadd.f32 0.0, %v1444
      %v1446 = vpop.f32.mrf.mxu0
      %v1447 = vadd.f32 0.0, %v1446
      %1448 = vdwg.mxu0
      %v1449 = vadd.f32 %v1310, %v1431
      %v1450 = vadd.f32 %v1311, %v1445
      %v1451 = vadd.f32 %v1312, %v1433
      %v1452 = vadd.f32 %v1313, %v1447
      %s1453 = scalar_lea.vmem %s1, 1024
      %v1454 = vld [vmem:[%s1453] sm:$0xff]
      %v1455 = vld [vmem:[%s1453 + $0x8] sm:$0xff]
      %v1456 = vld [vmem:[%s1453 + $0x10] sm:$0xff]
      %v1457 = vld [vmem:[%s1453 + $0x18] sm:$0xff]
      %v1458 = vld [vmem:[%s1453 + $0x20] sm:$0xff]
      %v1459 = vld [vmem:[%s1453 + $0x28] sm:$0xff]
      %v1460 = vld [vmem:[%s1453 + $0x30] sm:$0xff]
      %v1461 = vld [vmem:[%s1453 + $0x38] sm:$0xff]
      %v1462 = vld [vmem:[%s1453 + $0x40] sm:$0xff]
      %v1463 = vld [vmem:[%s1453 + $0x48] sm:$0xff]
      %v1464 = vld [vmem:[%s1453 + $0x50] sm:$0xff]
      %v1465 = vld [vmem:[%s1453 + $0x58] sm:$0xff]
      %v1466 = vld [vmem:[%s1453 + $0x60] sm:$0xff]
      %v1467 = vld [vmem:[%s1453 + $0x68] sm:$0xff]
      %v1468 = vld [vmem:[%s1453 + $0x70] sm:$0xff]
      %v1469 = vld [vmem:[%s1453 + $0x78] sm:$0xff]
      %1470 = vst [vmem:[#allocation1] ss:$4 sm:$0xff] %v1159
      %s1471 = scalar_lea.vmem [#allocation1], 1
      %1472 = vst [vmem:[%s1471] ss:$4 sm:$0xff] %v1163
      %s1473 = scalar_lea.vmem [#allocation1], 2
      %1474 = vst [vmem:[%s1473] ss:$4 sm:$0xff] %v1167
      %s1476 = scalar_lea.vmem [#allocation1], 3
      %1477 = vst [vmem:[%s1476] ss:$4 sm:$0xff] %v1171
      %v1478 = vld.sshfl [vmem:[#allocation1] sm:$0xff pattern:$0x73625140]
      %v1496 = vunpack.c.l.b16 %v1454
      %v1497 = vunpack.c.h.b16 %v1454
      %v1498 = vunpack.c.l.b16 %v1455
      %v1499 = vunpack.c.h.b16 %v1455
      %v1500 = vunpack.c.l.b16 %v1456
      %v1501 = vunpack.c.h.b16 %v1456
      %v1502 = vunpack.c.l.b16 %v1457
      %v1503 = vunpack.c.h.b16 %v1457
      %v1504 = vunpack.c.l.b16 %v1458
      %v1505 = vunpack.c.h.b16 %v1458
      %v1506 = vunpack.c.l.b16 %v1459
      %v1507 = vunpack.c.h.b16 %v1459
      %v1508 = vunpack.c.l.b16 %v1460
      %v1509 = vunpack.c.h.b16 %v1460
      %v1510 = vunpack.c.l.b16 %v1461
      %v1511 = vunpack.c.h.b16 %v1461
      %v1512 = vunpack.c.l.b16 %v1462
      %v1513 = vunpack.c.h.b16 %v1462
      %v1514 = vunpack.c.l.b16 %v1463
      %v1515 = vunpack.c.h.b16 %v1463
      %v1516 = vunpack.c.l.b16 %v1464
      %v1517 = vunpack.c.h.b16 %v1464
      %v1518 = vunpack.c.l.b16 %v1465
      %v1519 = vunpack.c.h.b16 %v1465
      %v1520 = vunpack.c.l.b16 %v1466
      %v1521 = vunpack.c.h.b16 %v1466
      %v1522 = vunpack.c.l.b16 %v1467
      %v1523 = vunpack.c.h.b16 %v1467
      %v1524 = vunpack.c.l.b16 %v1468
      %v1525 = vunpack.c.h.b16 %v1468
      %v1526 = vunpack.c.l.b16 %v1469
      %v1527 = vunpack.c.h.b16 %v1469
      %v1528 = vpack.c.b16 %v1498, %v1496
      %v1529 = vpack.c.b16 %v1499, %v1497
      %v1530 = vpack.c.b16 %v1502, %v1500
      %v1531 = vpack.c.b16 %v1503, %v1501
      %v1532 = vpack.c.b16 %v1506, %v1504
      %v1533 = vpack.c.b16 %v1507, %v1505
      %v1534 = vpack.c.b16 %v1510, %v1508
      %v1535 = vpack.c.b16 %v1511, %v1509
      %v1536 = vpack.c.b16 %v1514, %v1512
      %v1537 = vpack.c.b16 %v1515, %v1513
      %v1538 = vpack.c.b16 %v1518, %v1516
      %v1539 = vpack.c.b16 %v1519, %v1517
      %v1540 = vpack.c.b16 %v1522, %v1520
      %v1541 = vpack.c.b16 %v1523, %v1521
      %v1542 = vpack.c.b16 %v1526, %v1524
      %v1543 = vpack.c.b16 %v1527, %v1525
      %1560 = vmatpush.bf16.msra.mxu0 %v1542
      %1561 = vmatpush.bf16.msra.mxu0 %v1540
      %1562 = vmatpush.bf16.msra.mxu0 %v1538
      %1563 = vmatpush.bf16.msra.mxu0 %v1536
      %1564 = vmatpush.bf16.msra.mxu0 %v1534
      %1565 = vmatpush.bf16.msra.mxu0 %v1532
      %1566 = vmatpush.bf16.msra.mxu0 %v1530
      %1567 = vmatpush.bf16.msra.mxu0 %v1528
      %1568 = vmatmul.bf16.gmra.mxu0 %v1478
      %v1569 = vpop.f32.mrf.mxu0
      %v1570 = vadd.f32 0.0, %v1569
      %v1571 = vpop.f32.mrf.mxu0
      %v1572 = vadd.f32 0.0, %v1571
      %1573 = vdwg.mxu0
      %1574 = vmatpush.bf16.msra.mxu0 %v1543
      %1575 = vmatpush.bf16.msra.mxu0 %v1541
      %1576 = vmatpush.bf16.msra.mxu0 %v1539
      %1577 = vmatpush.bf16.msra.mxu0 %v1537
      %1578 = vmatpush.bf16.msra.mxu0 %v1535
      %1579 = vmatpush.bf16.msra.mxu0 %v1533
      %1580 = vmatpush.bf16.msra.mxu0 %v1531
      %1581 = vmatpush.bf16.msra.mxu0 %v1529
      %1582 = vmatmul.bf16.gmra.mxu0 %v1478
      %v1583 = vpop.f32.mrf.mxu0
      %v1584 = vadd.f32 0.0, %v1583
      %v1585 = vpop.f32.mrf.mxu0
      %v1586 = vadd.f32 0.0, %v1585
      %1587 = vdwg.mxu0
      %v1588 = vadd.f32 %v1449, %v1570
      %v1589 = vadd.f32 %v1450, %v1584
      %v1590 = vadd.f32 %v1451, %v1572
      %v1591 = vadd.f32 %v1452, %v1586
      %v1592 = vld [vmem:[%s2] sm:$0x3]
      %v1594 = vperm.slane %v1592, 0
      %v1595 = vperm.slane %v1592, 1
      %v1598 = vadd.f32 %v1588, %v1594
      %v1599 = vadd.f32 %v1589, %v1595
      %v1600 = vadd.f32 %v1590, %v1594
      %v1601 = vadd.f32 %v1591, %v1595
      %v1602 = vmax.f32 %v1598, 0.0
      %v1603 = vmax.f32 %v1599, 0.0
      %v1604 = vmax.f32 %v1600, 0.0
      %v1605 = vmax.f32 %v1601, 0.0
      %v1606 = vpack.c.bf16 %v1603, %v1602
      %v1607 = vpack.c.bf16 %v1605, %v1604
      %v1608 = vunpack.c.l.bf16 %v1606
      %v1609 = vunpack.c.h.bf16 %v1606
      %v1610 = vunpack.c.l.bf16 %v1607
      %v1611 = vunpack.c.h.bf16 %v1607
      %v1616 = vrot.slane %v1608, 4
      %v1617 = vrot.slane %v1609, 4
      %v1618 = vrot.slane %v1610, 4
      %v1619 = vrot.slane %v1611, 4
      %v1624 = vmax.f32 %v1608, %v1616
      %v1625 = vmax.f32 %v1609, %v1617
      %v1626 = vmax.f32 %v1610, %v1618
      %v1627 = vmax.f32 %v1611, %v1619
      %v1628 = vpack.c.bf16 %v1625, %v1624
      %v1629 = vpack.c.bf16 %v1627, %v1626
      %v1632 = vrot.slane %v1628, 3
      %v1633 = vrot.slane %v1629, 3
      %vm1634 = vcmask 1040384
      %v1637 = vsel %vm1634, %v1628, %v1632
      %vm1638 = vcmask 1041409
      %v1639 = vsel %vm1638, %v1628, %v1632
      %v1641 = vrot.slane %v1639, 1
      %v1644 = vsel %vm1634, %v1629, %v1633
      %v1645 = vsel %vm1638, %v1629, %v1633
      %v1647 = vrot.slane %v1645, 1
      %v1652 = vunpack.c.l.bf16 %v1637
      %v1653 = vunpack.c.l.bf16 %v1641
      %v1654 = vunpack.c.l.bf16 %v1644
      %v1655 = vunpack.c.l.bf16 %v1647
      %v1660 = vrot.slane %v1652, 7
      %v1661 = vrot.slane %v1660, 2
      %v1662 = vrot.slane %v1653, 7
      %v1663 = vrot.slane %v1662, 2
      %v1664 = vrot.slane %v1654, 7
      %v1665 = vrot.slane %v1664, 2
      %v1666 = vrot.slane %v1655, 7
      %v1667 = vrot.slane %v1666, 2
      %v1672 = vmax.f32 %v1652, %v1661
      %v1673 = vmax.f32 %v1653, %v1663
      %v1674 = vmax.f32 %v1654, %v1665
      %v1675 = vmax.f32 %v1655, %v1667
      %v1680 = vperm.slane %v1672, 0
      %v1681 = vperm.slane %v1672, 2
      %v1682 = vperm.slane %v1673, 0
      %v1683 = vperm.slane %v1673, 2
      %v1684 = vperm.slane %v1674, 0
      %v1685 = vperm.slane %v1674, 2
      %v1686 = vperm.slane %v1675, 0
      %v1687 = vperm.slane %v1675, 2
      %v1696 = vpack.c.bf16 %v1681, %v1680
      %v1697 = vpack.c.bf16 %v1683, %v1682
      %v1698 = vpack.c.bf16 %v1685, %v1684
      %v1699 = vpack.c.bf16 %v1687, %v1686
      %v1704 = vrot.slane %v1696, 3
      %v1705 = vrot.slane %v1697, 3
      %v1706 = vrot.slane %v1698, 3
      %v1707 = vrot.slane %v1699, 3
      %v1710 = vsel %vm1634, %v1696, %v1704
      %v1713 = vsel %vm1634, %v1697, %v1705
      %v1716 = vsel %vm1634, %v1698, %v1706
      %v1719 = vsel %vm1634, %v1699, %v1707
      %1720 = vst [vmem:[#allocation1] ss:$4 sm:$0xff] %v1710
      %v1721 = vld [vmem:[#allocation1] sm:$0xff]
      %s1723 = scalar_lea.vmem [#allocation1], 32
      %1724 = vst [vmem:[%s1723] ss:$4 sm:$0xff] %v1713
      %v1725 = vld [vmem:[#allocation1 + $0x20] sm:$0xff]
      %1727 = vst [vmem:[#allocation1] ss:$4 sm:$0xff] %v1716
      %v1728 = vld [vmem:[#allocation1] sm:$0xff]
      %1730 = vst [vmem:[%s1723] ss:$4 sm:$0xff] %v1719
      %v1731 = vld [vmem:[#allocation1 + $0x20] sm:$0xff]
      %v1733 = vunpack.c.l.b16 %v1721
      %v1734 = vunpack.c.h.b16 %v1721
      %v1735 = vunpack.c.l.b16 %v1725
      %v1736 = vunpack.c.h.b16 %v1725
      %v1737 = vunpack.c.l.b16 %v1728
      %v1738 = vunpack.c.h.b16 %v1728
      %v1739 = vunpack.c.l.b16 %v1731
      %v1740 = vunpack.c.h.b16 %v1731
      %v1741 = vrot.slane %v1735, 7
      %v1742 = vsel %vm1638, %v1741, %v1733
      %v1743 = vrot.slane %v1736, 7
      %v1744 = vsel %vm1638, %v1743, %v1734
      %v1745 = vrot.slane %v1739, 7
      %v1746 = vsel %vm1638, %v1745, %v1737
      %v1747 = vrot.slane %v1740, 7
      %v1748 = vsel %vm1638, %v1747, %v1738
      %v1749 = vpack.c.b16 %v1744, %v1742
      %v1750 = vpack.c.b16 %v1748, %v1746
      %v1751 = vrot.slane %v1749, 3
      %v1752 = vrot.slane %v1750, 3
      %v1755 = vsel %vm1634, %v1749, %v1751
      %v1758 = vsel %vm1634, %v1750, %v1752
      %1761 = vst [vmem:[%s168] sm:$0x3] %v1755
      %1762 = vst [vmem:[%s168 + $0x2] sm:$0x3] %v1758
      %p1763 = scmp.lt.s32.totalorder %s14, 1
      %s1764 = scalar_select %p1763, %s14, 1
      %s1765 = smul.addr %s1764, 4
      %s1766 = scalar_lea.vmem %s3, %s1765
      // Predicated region
      $region33: #{teacher_net14_forward.6} parent=31 // pred_check
        %p1767 = pneg %p100
      $region34: #{teacher_net14_forward.6} parent=31 // pred_check_branch
        %1769 = sbr.rel (%p1767) target = $region36
      $region35: #{teacher_net14_forward.6} parent=31 // pred_region
        _
      $region36: #{teacher_net14_forward.6} parent=31 // pred_fallthru
        _
    $region32: #{teacher_net14_forward.6} parent=5 // pred_fallthru
      _
    %p1770 = scmp.le.s32.totalorder 2, %s9
    // Predicated region
    $region37: #{teacher_net14_forward.6} parent=5 // pred_check
      %p1771 = pneg %p1770
    $region38: #{teacher_net14_forward.6} parent=5 // pred_check_branch
      %1773 = sbr.rel (%p1771) target = $region40
    $region39: #{teacher_net14_forward.6} parent=5 // pred_region
      %s1774 = ssub.s32 %s9, 2
      // Predicated region
      $region41: #{teacher_net14_forward.6} parent=39 // pred_check
        %p1775 = pneg %p106
      $region42: #{teacher_net14_forward.6} parent=39 // pred_check_branch
        %1777 = sbr.rel (%p1775) target = $region44
      $region43: #{teacher_net14_forward.6} parent=39 // pred_region
        %p1778 = scmp.lt.s32.totalorder %s15, 1
        %s1779 = scalar_select %p1778, %s15, 1
        %s1780 = smul.addr %s1779, 4
        %s1781 = scalar_lea.vmem %s3, %s1780
      $region44: #{teacher_net14_forward.6} parent=39 // pred_fallthru
        _
    $region40: #{teacher_net14_forward.6} parent=5 // pred_fallthru
      _
  $region6: #{teacher_net14_forward.6} parent=0 // loop_footer
    %s13 = sadd.s32 1, %s9
  $region7: #{teacher_net14_forward.6} parent=0 // loop_footer_branch
    %8 = sbr.rel target = $region3
  $region8: #{teacher_net14_forward.6} parent=0 // loop_exit
    _

// kernel: teacher_net14_forward.4
$region0: #{teacher_net14_forward.4}
  #allocation0 [shape = 'u32[]', space=smem, size = 0x4, offset = 0x4, fixed_abs, tag = 'smem constant byte address 0x4 - core index']
  #allocation1 [shape = 'u32[72,128]{1,0:T(1,128)}', space=vmem, size = 0x9000, scoped, tag = 'internal scratch']
  %s0 = inlined_call_operand.vmem [shape: bf16[2,18,18,8], index: 0, kind: input, shape index: {}]
  %s1 = inlined_call_operand.hbm [shape: bf16[9,8,64], index: 1, kind: input, shape index: {}]
  %s2 = inlined_call_operand.hbm [shape: f32[1,64], index: 2, kind: input, shape index: {}]
  %s3 = inlined_call_operand.vmem [shape: bf16[2,8,8,64], index: 3, kind: output, shape index: {}]
  %s4 = sld [smem:[#allocation0]]
  $region53: #{teacher_net14_forward.4} parent=0
    _
  %s6 = ssub.s32 1, %s4
  %s7 = scalar_select 0, %s6, %s4
  $region1: #{teacher_net14_forward.4} parent=0
    #allocation2 [shape = 'u8[18432]{0}', space=vmem, size = 0x4800, scoped, tag = 'input window, operand 1, single buffered']
    #allocation3 [shape = 's32[2]{0}', space=sflag, size = 0x8, scoped, tag = 'scoped memory for teacher_net14_forward.4']
    #allocation4 [shape = 'u8[512]{0}', space=vmem, size = 0x400, scoped, tag = 'input window, operand 2, single buffered']
    #allocation5 [shape = 's32[1]{0}', space=sflag, size = 0x4, scoped, tag = 'scoped memory for teacher_net14_forward.4']
    %8 = vsyncpa [#allocation3], 0
    %9 = vsyncpa [#allocation5], 0
    loop: start=0, step=1, limit=4
    $region2: #{teacher_net14_forward.4} parent=1 // loop_pre_header
      _
    $region3: #{teacher_net14_forward.4} parent=1 // loop_header
      %s11 = sphi 0, %s15
      %p12 = scmp.ge.s32.totalorder %s11, 4
      %s21 = sphi 0, %s23
      %s24 = sphi 0, %s21
      %s25 = sphi 0, %s24
      %s41 = sphi 0, %s25
      %s45 = sphi 0, %s45
      %s47 = sphi 0, %s45
      %s48 = sphi 0, %s47
      %s62 = sphi 0, %s48
      %s66 = sphi 0, %s66
      %s68 = sphi 0, %s66
      %s69 = sphi 0, %s68
      %s83 = sphi 0, %s69
      %s89 = sphi 0, %s91
      %s92 = sphi 0, %s89
      %s93 = sphi 0, %s92
      %s109 = sphi 0, %s93
    $region4: #{teacher_net14_forward.4} parent=1 // loop_header_branch
      %14 = sbr.rel (%p12) target = $region8
    $region5: #{teacher_net14_forward.4} parent=1 // loop_body
      %s16 = ssub.s32 %s11, 1
      %s17 = ssub.s32 %s11, 2
      %s18 = sadd.s32 %s11, 1
      %s19 = ssub.s32 %s11, %s18
      %p20 = scmp.eq.s32.totalorder %s19, 0
      %s22 = sadd.s32 %s21, 1
      %s23 = scalar_select %p20, %s21, %s22
      %p26 = pneg %p20
      %p27 = scmp.eq.s32.totalorder %s11, 1
      %p28 = por %p26, %p27
      %p29 = scmp.ne.s32.totalorder %s21, %s24
      %p30 = scmp.eq.s32.totalorder %s11, 0
      %p31 = por %p29, %p30
      %p32 = scmp.ne.s32.totalorder %s21, %s24
      %p33 = scmp.eq.s32.totalorder %s16, 1
      %p34 = por %p32, %p33
      %p35 = scmp.ne.s32.totalorder %s24, %s25
      %p36 = scmp.eq.s32.totalorder %s16, 0
      %p37 = por %p35, %p36
      %p38 = scmp.ne.s32.totalorder %s24, %s25
      %p39 = scmp.eq.s32.totalorder %s17, 1
      %p40 = por %p38, %p39
      %p42 = scmp.ne.s32.totalorder %s25, %s41
      %p43 = scmp.eq.s32.totalorder %s17, 0
      %p44 = por %p42, %p43
      %s46 = sadd.s32 %s45, 1
      %p49 = scmp.eq.s32.totalorder %s11, 1
      %p50 = scmp.ne.s32.totalorder %s45, %s47
      %p51 = scmp.eq.s32.totalorder %s11, 0
      %p52 = por %p50, %p51
      %p53 = scmp.ne.s32.totalorder %s45, %s47
      %p54 = scmp.eq.s32.totalorder %s16, 1
      %p55 = por %p53, %p54
      %p56 = scmp.ne.s32.totalorder %s47, %s48
      %p57 = scmp.eq.s32.totalorder %s16, 0
      %p58 = por %p56, %p57
      %p59 = scmp.ne.s32.totalorder %s47, %s48
      %p60 = scmp.eq.s32.totalorder %s17, 1
      %p61 = por %p59, %p60
      %p63 = scmp.ne.s32.totalorder %s48, %s62
      %p64 = scmp.eq.s32.totalorder %s17, 0
      %p65 = por %p63, %p64
      %s67 = sadd.s32 %s66, 1
      %p70 = scmp.eq.s32.totalorder %s11, 1
      %p71 = scmp.ne.s32.totalorder %s66, %s68
      %p72 = scmp.eq.s32.totalorder %s11, 0
      %p73 = por %p71, %p72
      %p74 = scmp.ne.s32.totalorder %s66, %s68
      %p75 = scmp.eq.s32.totalorder %s16, 1
      %p76 = por %p74, %p75
      %p77 = scmp.ne.s32.totalorder %s68, %s69
      %p78 = scmp.eq.s32.totalorder %s16, 0
      %p79 = por %p77, %p78
      %p80 = scmp.ne.s32.totalorder %s68, %s69
      %p81 = scmp.eq.s32.totalorder %s17, 1
      %p82 = por %p80, %p81
      %p84 = scmp.ne.s32.totalorder %s69, %s83
      %p85 = scmp.eq.s32.totalorder %s17, 0
      %p86 = por %p84, %p85
      %s87 = ssub.s32 %s11, %s18
      %p88 = scmp.eq.s32.totalorder %s87, 0
      %s90 = sadd.s32 %s89, 1
      %s91 = scalar_select %p88, %s89, %s90
      %p94 = pneg %p88
      %p95 = scmp.eq.s32.totalorder %s11, 1
      %p96 = por %p94, %p95
      %p97 = scmp.ne.s32.totalorder %s89, %s92
      %p98 = scmp.eq.s32.totalorder %s11, 0
      %p99 = por %p97, %p98
      %p100 = scmp.ne.s32.totalorder %s89, %s92
      %p101 = scmp.eq.s32.totalorder %s16, 1
      %p102 = por %p100, %p101
      %p103 = scmp.ne.s32.totalorder %s92, %s93
      %p104 = scmp.eq.s32.totalorder %s16, 0
      %p105 = por %p103, %p104
      %p106 = scmp.ne.s32.totalorder %s92, %s93
      %p107 = scmp.eq.s32.totalorder %s17, 1
      %p108 = por %p106, %p107
      %p110 = scmp.ne.s32.totalorder %s93, %s109
      %p111 = scmp.eq.s32.totalorder %s17, 0
      %p112 = por %p110, %p111
      %p113 = scmp.le.s32.totalorder 1, %s11
      %p114 = scmp.lt.s32.totalorder %s11, 3
      %p115 = pnand %p113, %p114
      %p116 = pneg %p115
      // Predicated region
      $region9: #{teacher_net14_forward.4} parent=5 // pred_check
        _
      $region10: #{teacher_net14_forward.4} parent=5 // pred_check_branch
        %118 = sbr.rel (%p115) target = $region12
      $region11: #{teacher_net14_forward.4} parent=5 // pred_region
        %s119 = ssub.s32 %s11, 1
        // Predicated region
        $region13: #{teacher_net14_forward.4} parent=11 // pred_check
          %p120 = pneg %p58
        $region14: #{teacher_net14_forward.4} parent=11 // pred_check_branch
          %122 = sbr.rel (%p120) target = $region16
        $region15: #{teacher_net14_forward.4} parent=11 // pred_region
          %124 = vsyncadd [#allocation3], 0
          %s125 = sshll.u32 %s1, 4
          %s126 = int_to_ptr.hbm [resolvable:$true] %s125
          %s127 = sshll.u32 [#allocation2], 4
          %s128 = int_to_ptr.vmem [resolvable:$true] %s127
          %133 = dma.hbm_to_vmem [thread:$0]  %s126, 576, %s128, [#allocation3], 64, 64, 4
        $region16: #{teacher_net14_forward.4} parent=11 // pred_fallthru
          _
        // Predicated region
        $region17: #{teacher_net14_forward.4} parent=11 // pred_check
          %p134 = pneg %p79
        $region18: #{teacher_net14_forward.4} parent=11 // pred_check_branch
          %136 = sbr.rel (%p134) target = $region20
        $region19: #{teacher_net14_forward.4} parent=11 // pred_region
          %138 = vsyncadd [#allocation5], 0
          %s140 = sshll.u32 %s2, 4
          %s141 = int_to_ptr.hbm [resolvable:$true] %s140
          %s142 = sshll.u32 [#allocation4], 4
          %s143 = int_to_ptr.vmem [resolvable:$true] %s142
          %145 = dma.hbm_to_vmem [thread:$0]  %s141, 16, %s143, [#allocation5]
        $region20: #{teacher_net14_forward.4} parent=11 // pred_fallthru
          _
      $region12: #{teacher_net14_forward.4} parent=5 // pred_fallthru
        _
      %p146 = scmp.lt.s32.totalorder %s11, 2
      // Predicated region
      $region21: #{teacher_net14_forward.4} parent=5 // pred_check
        %p147 = pneg %p146
      $region22: #{teacher_net14_forward.4} parent=5 // pred_check_branch
        %149 = sbr.rel (%p147) target = $region24
      $region23: #{teacher_net14_forward.4} parent=5 // pred_region
        // Predicated region
        $region25: #{teacher_net14_forward.4} parent=23 // pred_check
          %p150 = pneg %p31
        $region26: #{teacher_net14_forward.4} parent=23 // pred_check_branch
          %152 = sbr.rel (%p150) target = $region28
        $region27: #{teacher_net14_forward.4} parent=23 // pred_region
          %p153 = scmp.lt.s32.totalorder %s11, 1
          %s154 = scalar_select %p153, %s11, 1
          %s155 = smul.addr %s154, 54
          %s156 = smul.addr %s155, 4
          %s157 = scalar_lea.vmem %s0, %s156
        $region28: #{teacher_net14_forward.4} parent=23 // pred_fallthru
          _
      $region24: #{teacher_net14_forward.4} parent=5 // pred_fallthru
        _
      %p158 = scmp.le.s32.totalorder 1, %s11
      %p159 = scmp.lt.s32.totalorder %s11, 3
      %p160 = pnand %p158, %p159
      %p161 = pneg %p160
      // Predicated region
      $region29: #{teacher_net14_forward.4} parent=5 // pred_check
        _
      $region30: #{teacher_net14_forward.4} parent=5 // pred_check_branch
        %163 = sbr.rel (%p160) target = $region32
      $region31: #{teacher_net14_forward.4} parent=5 // pred_region
        %s164 = ssub.s32 %s11, 1
        // Predicated region
        $region33: #{teacher_net14_forward.4} parent=31 // pred_check
          %p165 = pneg %p58
        $region34: #{teacher_net14_forward.4} parent=31 // pred_check_branch
          %167 = sbr.rel (%p165) target = $region36
        $region35: #{teacher_net14_forward.4} parent=31 // pred_region
          %169 = dma.done [#allocation3], 576
        $region36: #{teacher_net14_forward.4} parent=31 // pred_fallthru
          _
        // Predicated region
        $region37: #{teacher_net14_forward.4} parent=31 // pred_check
          %p170 = pneg %p79
        $region38: #{teacher_net14_forward.4} parent=31 // pred_check_branch
          %172 = sbr.rel (%p170) target = $region40
        $region39: #{teacher_net14_forward.4} parent=31 // pred_region
          %174 = dma.done [#allocation5], 16
        $region40: #{teacher_net14_forward.4} parent=31 // pred_fallthru
          _
        %p175 = scmp.lt.s32.totalorder %s16, 1
        %s176 = scalar_select %p175, %s16, 1
        %s177 = smul.addr %s176, 54
        %s178 = smul.addr %s177, 4
        %s179 = scalar_lea.vmem %s0, %s178
        %p180 = pneg %p37
        %p181 = pneg %p34
        %p182 = pneg %p58
        %p183 = pneg %p55
        %p184 = pneg %p79
        %p185 = pneg %p76
        %p186 = pneg %p105
        %p187 = pneg %p102
        %p188 = scmp.lt.s32.totalorder %s16, 1
        %s189 = scalar_select %p188, %s16, 1
        %s190 = smul.addr %s189, 8
        %s191 = smul.addr %s190, 4
        %s192 = scalar_lea.vmem %s3, %s191
        %p193 = scmp.lt.s32.totalorder %s16, 1
        %s194 = scalar_select %p193, %s16, 1
        %s195 = smul.addr %s194, 54
        %s196 = smul.addr %s195, 4
        %s197 = scalar_lea.vmem %s0, %s196
        %p198 = scmp.lt.s32.totalorder %s16, 1
        %s199 = scalar_select %p198, %s16, 1
        %s200 = smul.addr %s199, 8
        %s201 = smul.addr %s200, 4
        %s202 = scalar_lea.vmem %s3, %s201
        %v204 = vld [vmem:[%s197] sm:$0xf]
        %v205 = vld [vmem:[%s197 + $0x4] sm:$0xf]
        %v206 = vld [vmem:[%s197 + $0x8] sm:$0x1]
        %v207 = vld [vmem:[%s197 + $0xc] sm:$0xf]
        %v208 = vld [vmem:[%s197 + $0x10] sm:$0xf]
        %v209 = vld [vmem:[%s197 + $0x14] sm:$0x1]
        %v210 = vld [vmem:[%s197 + $0x18] sm:$0xf]
        %v211 = vld [vmem:[%s197 + $0x1c] sm:$0xf]
        %v212 = vld [vmem:[%s197 + $0x20] sm:$0x1]
        %v213 = vld [vmem:[%s197 + $0x24] sm:$0xf]
        %v214 = vld [vmem:[%s197 + $0x28] sm:$0xf]
        %v215 = vld [vmem:[%s197 + $0x2c] sm:$0x1]
        %v216 = vld [vmem:[%s197 + $0x30] sm:$0xf]
        %v217 = vld [vmem:[%s197 + $0x34] sm:$0xf]
        %v218 = vld [vmem:[%s197 + $0x38] sm:$0x1]
        %v219 = vld [vmem:[%s197 + $0x3c] sm:$0xf]
        %v220 = vld [vmem:[%s197 + $0x40] sm:$0xf]
        %v221 = vld [vmem:[%s197 + $0x44] sm:$0x1]
        %v222 = vld [vmem:[%s197 + $0x48] sm:$0xf]
        %v223 = vld [vmem:[%s197 + $0x4c] sm:$0xf]
        %v224 = vld [vmem:[%s197 + $0x50] sm:$0x1]
        %v225 = vld [vmem:[%s197 + $0x54] sm:$0xf]
        %v226 = vld [vmem:[%s197 + $0x58] sm:$0xf]
        %v227 = vld [vmem:[%s197 + $0x5c] sm:$0x1]
        %v228 = vld [vmem:[%s197 + $0x60] sm:$0xf]
        %v229 = vld [vmem:[%s197 + $0x64] sm:$0xf]
        %v230 = vld [vmem:[%s197 + $0x68] sm:$0x1]
        %v231 = vld [vmem:[%s197 + $0x6c] sm:$0xf]
        %v232 = vld [vmem:[%s197 + $0x70] sm:$0xf]
        %v233 = vld [vmem:[%s197 + $0x74] sm:$0x1]
        %v234 = vld [vmem:[%s197 + $0x78] sm:$0xf]
        %v235 = vld [vmem:[%s197 + $0x7c] sm:$0xf]
        %v236 = vld [vmem:[%s197 + $0x80] sm:$0x1]
        %v237 = vld [vmem:[%s197 + $0x84] sm:$0xf]
        %v238 = vld [vmem:[%s197 + $0x88] sm:$0xf]
        %v239 = vld [vmem:[%s197 + $0x8c] sm:$0x1]
        %v240 = vld [vmem:[%s197 + $0x90] sm:$0xf]
        %v241 = vld [vmem:[%s197 + $0x94] sm:$0xf]
        %v242 = vld [vmem:[%s197 + $0x98] sm:$0x1]
        %v243 = vld [vmem:[%s197 + $0x9c] sm:$0xf]
        %v244 = vld [vmem:[%s197 + $0xa0] sm:$0xf]
        %v245 = vld [vmem:[%s197 + $0xa4] sm:$0x1]
        %v246 = vld [vmem:[%s197 + $0xa8] sm:$0xf]
        %v247 = vld [vmem:[%s197 + $0xac] sm:$0xf]
        %v248 = vld [vmem:[%s197 + $0xb0] sm:$0x1]
        %v249 = vld [vmem:[%s197 + $0xb4] sm:$0xf]
        %v250 = vld [vmem:[%s197 + $0xb8] sm:$0xf]
        %v251 = vld [vmem:[%s197 + $0xbc] sm:$0x1]
        %v252 = vld [vmem:[%s197 + $0xc0] sm:$0xf]
        %v253 = vld [vmem:[%s197 + $0xc4] sm:$0xf]
        %v254 = vld [vmem:[%s197 + $0xc8] sm:$0x1]
        %v255 = vld [vmem:[%s197 + $0xcc] sm:$0xf]
        %v256 = vld [vmem:[%s197 + $0xd0] sm:$0xf]
        %v257 = vld [vmem:[%s197 + $0xd4] sm:$0x1]
        %v258 = vld [vmem:[#allocation2] sm:$0xf]
        %s259 = scalar_lea.vmem [#allocation2], 12
        %v260 = vld [vmem:[%s259] sm:$0xf]
        %v293 = vunpack.c.l.b16 %v207
        %v294 = vunpack.c.l.b16 %v208
        %v295 = vunpack.c.l.b16 %v210
        %v296 = vunpack.c.l.b16 %v211
        %v297 = vunpack.c.l.b16 %v213
        %v298 = vunpack.c.l.b16 %v214
        %v299 = vunpack.c.l.b16 %v216
        %v300 = vunpack.c.l.b16 %v217
        %v301 = vunpack.c.l.b16 %v219
        %v302 = vunpack.c.l.b16 %v220
        %v303 = vunpack.c.l.b16 %v222
        %v304 = vunpack.c.l.b16 %v223
        %v305 = vunpack.c.l.b16 %v225
        %v306 = vunpack.c.l.b16 %v226
        %v307 = vunpack.c.l.b16 %v228
        %v308 = vunpack.c.l.b16 %v229
        %v309 = vunpack.c.l.b16 %v231
        %v310 = vunpack.c.l.b16 %v232
        %v311 = vunpack.c.l.b16 %v234
        %v312 = vunpack.c.l.b16 %v235
        %v313 = vunpack.c.l.b16 %v237
        %v314 = vunpack.c.l.b16 %v238
        %v315 = vunpack.c.l.b16 %v240
        %v316 = vunpack.c.l.b16 %v241
        %v317 = vunpack.c.l.b16 %v243
        %v318 = vunpack.c.l.b16 %v244
        %v319 = vunpack.c.l.b16 %v246
        %v320 = vunpack.c.l.b16 %v247
        %v321 = vunpack.c.l.b16 %v249
        %v322 = vunpack.c.l.b16 %v250
        %v323 = vunpack.c.l.b16 %v252
        %v324 = vunpack.c.l.b16 %v253
        %v325 = vpack.c.b16 %v294, %v293
        %v326 = vpack.c.b16 %v296, %v295
        %v327 = vpack.c.b16 %v298, %v297
        %v328 = vpack.c.b16 %v300, %v299
        %v329 = vpack.c.b16 %v302, %v301
        %v330 = vpack.c.b16 %v304, %v303
        %v331 = vpack.c.b16 %v306, %v305
        %v332 = vpack.c.b16 %v308, %v307
        %v333 = vpack.c.b16 %v310, %v309
        %v334 = vpack.c.b16 %v312, %v311
        %v335 = vpack.c.b16 %v314, %v313
        %v336 = vpack.c.b16 %v316, %v315
        %v337 = vpack.c.b16 %v318, %v317
        %v338 = vpack.c.b16 %v320, %v319
        %v339 = vpack.c.b16 %v322, %v321
        %v340 = vpack.c.b16 %v324, %v323
        %vm341 = vcmask 64512
        %v343 = vsel %vm341, %v325, 0
        %v346 = vsel %vm341, %v326, 0
        %v349 = vsel %vm341, %v327, 0
        %v352 = vsel %vm341, %v328, 0
        %v355 = vsel %vm341, %v329, 0
        %v358 = vsel %vm341, %v330, 0
        %v361 = vsel %vm341, %v331, 0
        %v364 = vsel %vm341, %v332, 0
        %v367 = vsel %vm341, %v333, 0
        %v370 = vsel %vm341, %v334, 0
        %v373 = vsel %vm341, %v335, 0
        %v376 = vsel %vm341, %v336, 0
        %v379 = vsel %vm341, %v337, 0
        %v382 = vsel %vm341, %v338, 0
        %v385 = vsel %vm341, %v339, 0
        %v388 = vsel %vm341, %v340, 0
        %vm390 = vcmask 1043456
        %v392 = vsel %vm390, %v260, 0
        %394 = vmatpush.bf16.msra.mxu0 0
        %395 = vmatpush.bf16.msra.mxu0 0
        %396 = vmatpush.bf16.msra.mxu0 0
        %397 = vmatpush.bf16.msra.mxu0 0
        %398 = vmatpush.bf16.msra.mxu0 0
        %399 = vmatpush.bf16.msra.mxu0 0
        %400 = vmatpush.bf16.msra.mxu0 0
        %401 = vmatpush.bf16.msra.mxu0 %v392
        %402 = vmatmul.bf16.gmra.mxu0 %v343
        %v403 = vpop.f32.mrf.mxu0
        %v404 = vadd.f32 0.0, %v403
        %v405 = vpop.f32.mrf.mxu0
        %v406 = vadd.f32 0.0, %v405
        %407 = vmatmul.bf16.gmra.mxu0 %v346
        %v408 = vpop.f32.mrf.mxu0
        %v409 = vadd.f32 0.0, %v408
        %v410 = vpop.f32.mrf.mxu0
        %v411 = vadd.f32 0.0, %v410
        %412 = vmatmul.bf16.gmra.mxu0 %v349
        %v413 = vpop.f32.mrf.mxu0
        %v414 = vadd.f32 0.0, %v413
        %v415 = vpop.f32.mrf.mxu0
        %v416 = vadd.f32 0.0, %v415
        %417 = vmatmul.bf16.gmra.mxu0 %v352
        %v418 = vpop.f32.mrf.mxu0
        %v419 = vadd.f32 0.0, %v418
        %v420 = vpop.f32.mrf.mxu0
        %v421 = vadd.f32 0.0, %v420
        %422 = vmatmul.bf16.gmra.mxu0 %v355
        %v423 = vpop.f32.mrf.mxu0
        %v424 = vadd.f32 0.0, %v423
        %v425 = vpop.f32.mrf.mxu0
        %v426 = vadd.f32 0.0, %v425
        %427 = vmatmul.bf16.gmra.mxu0 %v358
        %v428 = vpop.f32.mrf.mxu0
        %v429 = vadd.f32 0.0, %v428
        %v430 = vpop.f32.mrf.mxu0
        %v431 = vadd.f32 0.0, %v430
        %432 = vmatmul.bf16.gmra.mxu0 %v361
        %v433 = vpop.f32.mrf.mxu0
        %v434 = vadd.f32 0.0, %v433
        %v435 = vpop.f32.mrf.mxu0
        %v436 = vadd.f32 0.0, %v435
        %437 = vmatmul.bf16.gmra.mxu0 %v364
        %v438 = vpop.f32.mrf.mxu0
        %v439 = vadd.f32 0.0, %v438
        %v440 = vpop.f32.mrf.mxu0
        %v441 = vadd.f32 0.0, %v440
        %442 = vmatmul.bf16.gmra.mxu0 %v367
        %v443 = vpop.f32.mrf.mxu0
        %v444 = vadd.f32 0.0, %v443
        %v445 = vpop.f32.mrf.mxu0
        %v446 = vadd.f32 0.0, %v445
        %447 = vmatmul.bf16.gmra.mxu0 %v370
        %v448 = vpop.f32.mrf.mxu0
        %v449 = vadd.f32 0.0, %v448
        %v450 = vpop.f32.mrf.mxu0
        %v451 = vadd.f32 0.0, %v450
        %452 = vmatmul.bf16.gmra.mxu0 %v373
        %v453 = vpop.f32.mrf.mxu0
        %v454 = vadd.f32 0.0, %v453
        %v455 = vpop.f32.mrf.mxu0
        %v456 = vadd.f32 0.0, %v455
        %457 = vmatmul.bf16.gmra.mxu0 %v376
        %v458 = vpop.f32.mrf.mxu0
        %v459 = vadd.f32 0.0, %v458
        %v460 = vpop.f32.mrf.mxu0
        %v461 = vadd.f32 0.0, %v460
        %462 = vmatmul.bf16.gmra.mxu0 %v379
        %v463 = vpop.f32.mrf.mxu0
        %v464 = vadd.f32 0.0, %v463
        %v465 = vpop.f32.mrf.mxu0
        %v466 = vadd.f32 0.0, %v465
        %467 = vmatmul.bf16.gmra.mxu0 %v382
        %v468 = vpop.f32.mrf.mxu0
        %v469 = vadd.f32 0.0, %v468
        %v470 = vpop.f32.mrf.mxu0
        %v471 = vadd.f32 0.0, %v470
        %472 = vmatmul.bf16.gmra.mxu0 %v385
        %v473 = vpop.f32.mrf.mxu0
        %v474 = vadd.f32 0.0, %v473
        %v475 = vpop.f32.mrf.mxu0
        %v476 = vadd.f32 0.0, %v475
        %477 = vmatmul.bf16.gmra.mxu0 %v388
        %v478 = vpop.f32.mrf.mxu0
        %v479 = vadd.f32 0.0, %v478
        %v480 = vpop.f32.mrf.mxu0
        %v481 = vadd.f32 0.0, %v480
        %482 = vdwg.mxu0
        %v485 = vunpack.c.l.b16 %v204
        %v486 = vunpack.c.l.b16 %v205
        %v487 = vpack.c.b16 %v486, %v485
        %v489 = vsel %vm341, %v487, 0
        %v492 = vsel %vm390, %v258, 0
        %494 = vmatpush.bf16.msra.mxu0 0
        %495 = vmatpush.bf16.msra.mxu0 0
        %496 = vmatpush.bf16.msra.mxu0 0
        %497 = vmatpush.bf16.msra.mxu0 0
        %498 = vmatpush.bf16.msra.mxu0 0
        %499 = vmatpush.bf16.msra.mxu0 0
        %500 = vmatpush.bf16.msra.mxu0 0
        %501 = vmatpush.bf16.msra.mxu0 %v492
        %502 = vmatmul.bf16.gmra.mxu0 %v489
        %v503 = vpop.f32.mrf.mxu0
        %v504 = vadd.f32 %v404, %v503
        %v505 = vpop.f32.mrf.mxu0
        %v506 = vadd.f32 %v406, %v505
        %507 = vmatmul.bf16.gmra.mxu0 %v343
        %v508 = vpop.f32.mrf.mxu0
        %v509 = vadd.f32 %v409, %v508
        %v510 = vpop.f32.mrf.mxu0
        %v511 = vadd.f32 %v411, %v510
        %512 = vmatmul.bf16.gmra.mxu0 %v346
        %v513 = vpop.f32.mrf.mxu0
        %v514 = vadd.f32 %v414, %v513
        %v515 = vpop.f32.mrf.mxu0
        %v516 = vadd.f32 %v416, %v515
        %517 = vmatmul.bf16.gmra.mxu0 %v349
        %v518 = vpop.f32.mrf.mxu0
        %v519 = vadd.f32 %v419, %v518
        %v520 = vpop.f32.mrf.mxu0
        %v521 = vadd.f32 %v421, %v520
        %522 = vmatmul.bf16.gmra.mxu0 %v352
        %v523 = vpop.f32.mrf.mxu0
        %v524 = vadd.f32 %v424, %v523
        %v525 = vpop.f32.mrf.mxu0
        %v526 = vadd.f32 %v426, %v525
        %527 = vmatmul.bf16.gmra.mxu0 %v355
        %v528 = vpop.f32.mrf.mxu0
        %v529 = vadd.f32 %v429, %v528
        %v530 = vpop.f32.mrf.mxu0
        %v531 = vadd.f32 %v431, %v530
        %532 = vmatmul.bf16.gmra.mxu0 %v358
        %v533 = vpop.f32.mrf.mxu0
        %v534 = vadd.f32 %v434, %v533
        %v535 = vpop.f32.mrf.mxu0
        %v536 = vadd.f32 %v436, %v535
        %537 = vmatmul.bf16.gmra.mxu0 %v361
        %v538 = vpop.f32.mrf.mxu0
        %v539 = vadd.f32 %v439, %v538
        %v540 = vpop.f32.mrf.mxu0
        %v541 = vadd.f32 %v441, %v540
        %542 = vmatmul.bf16.gmra.mxu0 %v364
        %v543 = vpop.f32.mrf.mxu0
        %v544 = vadd.f32 %v444, %v543
        %v545 = vpop.f32.mrf.mxu0
        %v546 = vadd.f32 %v446, %v545
        %547 = vmatmul.bf16.gmra.mxu0 %v367
        %v548 = vpop.f32.mrf.mxu0
        %v549 = vadd.f32 %v449, %v548
        %v550 = vpop.f32.mrf.mxu0
        %v551 = vadd.f32 %v451, %v550
        %552 = vmatmul.bf16.gmra.mxu0 %v370
        %v553 = vpop.f32.mrf.mxu0
        %v554 = vadd.f32 %v454, %v553
        %v555 = vpop.f32.mrf.mxu0
        %v556 = vadd.f32 %v456, %v555
        %557 = vmatmul.bf16.gmra.mxu0 %v373
        %v558 = vpop.f32.mrf.mxu0
        %v559 = vadd.f32 %v459, %v558
        %v560 = vpop.f32.mrf.mxu0
        %v561 = vadd.f32 %v461, %v560
        %562 = vmatmul.bf16.gmra.mxu0 %v376
        %v563 = vpop.f32.mrf.mxu0
        %v564 = vadd.f32 %v464, %v563
        %v565 = vpop.f32.mrf.mxu0
        %v566 = vadd.f32 %v466, %v565
        %567 = vmatmul.bf16.gmra.mxu0 %v379
        %v568 = vpop.f32.mrf.mxu0
        %v569 = vadd.f32 %v469, %v568
        %v570 = vpop.f32.mrf.mxu0
        %v571 = vadd.f32 %v471, %v570
        %572 = vmatmul.bf16.gmra.mxu0 %v382
        %v573 = vpop.f32.mrf.mxu0
        %v574 = vadd.f32 %v474, %v573
        %v575 = vpop.f32.mrf.mxu0
        %v576 = vadd.f32 %v476, %v575
        %577 = vmatmul.bf16.gmra.mxu0 %v385
        %v578 = vpop.f32.mrf.mxu0
        %v579 = vadd.f32 %v479, %v578
        %v580 = vpop.f32.mrf.mxu0
        %v581 = vadd.f32 %v481, %v580
        %582 = vdwg.mxu0
        %s583 = scalar_lea.vmem [#allocation2], 24
        %v584 = vld [vmem:[%s583] sm:$0xf]
        %v587 = vunpack.c.l.b16 %v255
        %v588 = vunpack.c.l.b16 %v256
        %v589 = vpack.c.b16 %v588, %v587
        %v591 = vsel %vm341, %v589, 0
        %v594 = vsel %vm390, %v584, 0
        %596 = vmatpush.bf16.msra.mxu0 0
        %597 = vmatpush.bf16.msra.mxu0 0
        %598 = vmatpush.bf16.msra.mxu0 0
        %599 = vmatpush.bf16.msra.mxu0 0
        %600 = vmatpush.bf16.msra.mxu0 0
        %601 = vmatpush.bf16.msra.mxu0 0
        %602 = vmatpush.bf16.msra.mxu0 0
        %603 = vmatpush.bf16.msra.mxu0 %v594
        %604 = vmatmul.bf16.gmra.mxu0 %v346
        %v605 = vpop.f32.mrf.mxu0
        %v606 = vadd.f32 0.0, %v605
        %v607 = vpop.f32.mrf.mxu0
        %v608 = vadd.f32 0.0, %v607
        %609 = vmatmul.bf16.gmra.mxu0 %v349
        %v610 = vpop.f32.mrf.mxu0
        %v611 = vadd.f32 0.0, %v610
        %v612 = vpop.f32.mrf.mxu0
        %v613 = vadd.f32 0.0, %v612
        %614 = vmatmul.bf16.gmra.mxu0 %v352
        %v615 = vpop.f32.mrf.mxu0
        %v616 = vadd.f32 0.0, %v615
        %v617 = vpop.f32.mrf.mxu0
        %v618 = vadd.f32 0.0, %v617
        %619 = vmatmul.bf16.gmra.mxu0 %v355
        %v620 = vpop.f32.mrf.mxu0
        %v621 = vadd.f32 0.0, %v620
        %v622 = vpop.f32.mrf.mxu0
        %v623 = vadd.f32 0.0, %v622
        %624 = vmatmul.bf16.gmra.mxu0 %v358
        %v625 = vpop.f32.mrf.mxu0
        %v626 = vadd.f32 0.0, %v625
        %v627 = vpop.f32.mrf.mxu0
        %v628 = vadd.f32 0.0, %v627
        %629 = vmatmul.bf16.gmra.mxu0 %v361
        %v630 = vpop.f32.mrf.mxu0
        %v631 = vadd.f32 0.0, %v630
        %v632 = vpop.f32.mrf.mxu0
        %v633 = vadd.f32 0.0, %v632
        %634 = vmatmul.bf16.gmra.mxu0 %v364
        %v635 = vpop.f32.mrf.mxu0
        %v636 = vadd.f32 0.0, %v635
        %v637 = vpop.f32.mrf.mxu0
        %v638 = vadd.f32 0.0, %v637
        %639 = vmatmul.bf16.gmra.mxu0 %v367
        %v640 = vpop.f32.mrf.mxu0
        %v641 = vadd.f32 0.0, %v640
        %v642 = vpop.f32.mrf.mxu0
        %v643 = vadd.f32 0.0, %v642
        %644 = vmatmul.bf16.gmra.mxu0 %v370
        %v645 = vpop.f32.mrf.mxu0
        %v646 = vadd.f32 0.0, %v645
        %v647 = vpop.f32.mrf.mxu0
        %v648 = vadd.f32 0.0, %v647
        %649 = vmatmul.bf16.gmra.mxu0 %v373
        %v650 = vpop.f32.mrf.mxu0
        %v651 = vadd.f32 0.0, %v650
        %v652 = vpop.f32.mrf.mxu0
        %v653 = vadd.f32 0.0, %v652
        %654 = vmatmul.bf16.gmra.mxu0 %v376
        %v655 = vpop.f32.mrf.mxu0
        %v656 = vadd.f32 0.0, %v655
        %v657 = vpop.f32.mrf.mxu0
        %v658 = vadd.f32 0.0, %v657
        %659 = vmatmul.bf16.gmra.mxu0 %v379
        %v660 = vpop.f32.mrf.mxu0
        %v661 = vadd.f32 0.0, %v660
        %v662 = vpop.f32.mrf.mxu0
        %v663 = vadd.f32 0.0, %v662
        %664 = vmatmul.bf16.gmra.mxu0 %v382
        %v665 = vpop.f32.mrf.mxu0
        %v666 = vadd.f32 0.0, %v665
        %v667 = vpop.f32.mrf.mxu0
        %v668 = vadd.f32 0.0, %v667
        %669 = vmatmul.bf16.gmra.mxu0 %v385
        %v670 = vpop.f32.mrf.mxu0
        %v671 = vadd.f32 0.0, %v670
        %v672 = vpop.f32.mrf.mxu0
        %v673 = vadd.f32 0.0, %v672
        %674 = vmatmul.bf16.gmra.mxu0 %v388
        %v675 = vpop.f32.mrf.mxu0
        %v676 = vadd.f32 0.0, %v675
        %v677 = vpop.f32.mrf.mxu0
        %v678 = vadd.f32 0.0, %v677
        %679 = vmatmul.bf16.gmra.mxu0 %v591
        %v680 = vpop.f32.mrf.mxu0
        %v681 = vadd.f32 0.0, %v680
        %v682 = vpop.f32.mrf.mxu0
        %v683 = vadd.f32 0.0, %v682
        %684 = vdwg.mxu0
        %v685 = vadd.f32 %v504, %v606
        %v686 = vadd.f32 %v506, %v608
        %v687 = vadd.f32 %v509, %v611
        %v688 = vadd.f32 %v511, %v613
        %v689 = vadd.f32 %v514, %v616
        %v690 = vadd.f32 %v516, %v618
        %v691 = vadd.f32 %v519, %v621
        %v692 = vadd.f32 %v521, %v623
        %v693 = vadd.f32 %v524, %v626
        %v694 = vadd.f32 %v526, %v628
        %v695 = vadd.f32 %v529, %v631
        %v696 = vadd.f32 %v531, %v633
        %v697 = vadd.f32 %v534, %v636
        %v698 = vadd.f32 %v536, %v638
        %v699 = vadd.f32 %v539, %v641
        %v700 = vadd.f32 %v541, %v643
        %v701 = vadd.f32 %v544, %v646
        %v702 = vadd.f32 %v546, %v648
        %v703 = vadd.f32 %v549, %v651
        %v704 = vadd.f32 %v551, %v653
        %v705 = vadd.f32 %v554, %v656
        %v706 = vadd.f32 %v556, %v658
        %v707 = vadd.f32 %v559, %v661
        %v708 = vadd.f32 %v561, %v663
        %v709 = vadd.f32 %v564, %v666
        %v710 = vadd.f32 %v566, %v668
        %v711 = vadd.f32 %v569, %v671
        %v712 = vadd.f32 %v571, %v673
        %v713 = vadd.f32 %v574, %v676
        %v714 = vadd.f32 %v576, %v678
        %v715 = vadd.f32 %v579, %v681
        %v716 = vadd.f32 %v581, %v683
        %vm717 = vsmask.f32 3328
        %vm718 = vsmask.f32 7440
        %vm719 = vmor %vm717, %vm718
        %v721 = vshrl.u32 %v204, 16
        %v723 = vrot.slane %v721, 4
        %v724 = vshll.u32 %v204, 16
        %v726 = vrot.slane %v724, 5
        %v727 = vor.u32 %v723, %v726
        %v728 = vrot.slane %v727, 4
        %v730 = vshll.u32 %v205, 16
        %v732 = vrot.slane %v730, 5
        %v733 = vsel %vm719, %v728, %v732
        %v734 = vshrl.u32 %v205, 16
        %v736 = vrot.slane %v734, 4
        %v737 = vor.u32 %v736, %v732
        %v738 = vrot.slane %v737, 4
        %v740 = vshll.u32 %v206, 16
        %v742 = vrot.slane %v740, 5
        %v743 = vsel %vm719, %v738, %v742
        %v745 = vshrl.u32 %v207, 16
        %v747 = vrot.slane %v745, 4
        %v748 = vshll.u32 %v207, 16
        %v750 = vrot.slane %v748, 5
        %v751 = vor.u32 %v747, %v750
        %v752 = vrot.slane %v751, 4
        %v754 = vshll.u32 %v208, 16
        %v756 = vrot.slane %v754, 5
        %v757 = vsel %vm719, %v752, %v756
        %v758 = vshrl.u32 %v208, 16
        %v760 = vrot.slane %v758, 4
        %v761 = vor.u32 %v760, %v756
        %v762 = vrot.slane %v761, 4
        %v764 = vshll.u32 %v209, 16
        %v766 = vrot.slane %v764, 5
        %v767 = vsel %vm719, %v762, %v766
        %v769 = vshrl.u32 %v210, 16
        %v771 = vrot.slane %v769, 4
        %v772 = vshll.u32 %v210, 16
        %v774 = vrot.slane %v772, 5
        %v775 = vor.u32 %v771, %v774
        %v776 = vrot.slane %v775, 4
        %v778 = vshll.u32 %v211, 16
        %v780 = vrot.slane %v778, 5
        %v781 = vsel %vm719, %v776, %v780
        %v782 = vshrl.u32 %v211, 16
        %v784 = vrot.slane %v782, 4
        %v785 = vor.u32 %v784, %v780
        %v786 = vrot.slane %v785, 4
        %v788 = vshll.u32 %v212, 16
        %v790 = vrot.slane %v788, 5
        %v791 = vsel %vm719, %v786, %v790
        %v793 = vshrl.u32 %v213, 16
        %v795 = vrot.slane %v793, 4
        %v796 = vshll.u32 %v213, 16
        %v798 = vrot.slane %v796, 5
        %v799 = vor.u32 %v795, %v798
        %v800 = vrot.slane %v799, 4
        %v802 = vshll.u32 %v214, 16
        %v804 = vrot.slane %v802, 5
        %v805 = vsel %vm719, %v800, %v804
        %v806 = vshrl.u32 %v214, 16
        %v808 = vrot.slane %v806, 4
        %v809 = vor.u32 %v808, %v804
        %v810 = vrot.slane %v809, 4
        %v812 = vshll.u32 %v215, 16
        %v814 = vrot.slane %v812, 5
        %v815 = vsel %vm719, %v810, %v814
        %v817 = vshrl.u32 %v216, 16
        %v819 = vrot.slane %v817, 4
        %v820 = vshll.u32 %v216, 16
        %v822 = vrot.slane %v820, 5
        %v823 = vor.u32 %v819, %v822
        %v824 = vrot.slane %v823, 4
        %v826 = vshll.u32 %v217, 16
        %v828 = vrot.slane %v826, 5
        %v829 = vsel %vm719, %v824, %v828
        %v830 = vshrl.u32 %v217, 16
        %v832 = vrot.slane %v830, 4
        %v833 = vor.u32 %v832, %v828
        %v834 = vrot.slane %v833, 4
        %v836 = vshll.u32 %v218, 16
        %v838 = vrot.slane %v836, 5
        %v839 = vsel %vm719, %v834, %v838
        %v841 = vshrl.u32 %v219, 16
        %v843 = vrot.slane %v841, 4
        %v844 = vshll.u32 %v219, 16
        %v846 = vrot.slane %v844, 5
        %v847 = vor.u32 %v843, %v846
        %v848 = vrot.slane %v847, 4
        %v850 = vshll.u32 %v220, 16
        %v852 = vrot.slane %v850, 5
        %v853 = vsel %vm719, %v848, %v852
        %v854 = vshrl.u32 %v220, 16
        %v856 = vrot.slane %v854, 4
        %v857 = vor.u32 %v856, %v852
        %v858 = vrot.slane %v857, 4
        %v860 = vshll.u32 %v221, 16
        %v862 = vrot.slane %v860, 5
        %v863 = vsel %vm719, %v858, %v862
        %v865 = vshrl.u32 %v222, 16
        %v867 = vrot.slane %v865, 4
        %v868 = vshll.u32 %v222, 16
        %v870 = vrot.slane %v868, 5
        %v871 = vor.u32 %v867, %v870
        %v872 = vrot.slane %v871, 4
        %v874 = vshll.u32 %v223, 16
        %v876 = vrot.slane %v874, 5
        %v877 = vsel %vm719, %v872, %v876
        %v878 = vshrl.u32 %v223, 16
        %v880 = vrot.slane %v878, 4
        %v881 = vor.u32 %v880, %v876
        %v882 = vrot.slane %v881, 4
        %v884 = vshll.u32 %v224, 16
        %v886 = vrot.slane %v884, 5
        %v887 = vsel %vm719, %v882, %v886
        %v889 = vshrl.u32 %v225, 16
        %v891 = vrot.slane %v889, 4
        %v892 = vshll.u32 %v225, 16
        %v894 = vrot.slane %v892, 5
        %v895 = vor.u32 %v891, %v894
        %v896 = vrot.slane %v895, 4
        %v898 = vshll.u32 %v226, 16
        %v900 = vrot.slane %v898, 5
        %v901 = vsel %vm719, %v896, %v900
        %v902 = vshrl.u32 %v226, 16
        %v904 = vrot.slane %v902, 4
        %v905 = vor.u32 %v904, %v900
        %v906 = vrot.slane %v905, 4
        %v908 = vshll.u32 %v227, 16
        %v910 = vrot.slane %v908, 5
        %v911 = vsel %vm719, %v906, %v910
        %v913 = vshrl.u32 %v228, 16
        %v915 = vrot.slane %v913, 4
        %v916 = vshll.u32 %v228, 16
        %v918 = vrot.slane %v916, 5
        %v919 = vor.u32 %v915, %v918
        %v920 = vrot.slane %v919, 4
        %v922 = vshll.u32 %v229, 16
        %v924 = vrot.slane %v922, 5
        %v925 = vsel %vm719, %v920, %v924
        %v926 = vshrl.u32 %v229, 16
        %v928 = vrot.slane %v926, 4
        %v929 = vor.u32 %v928, %v924
        %v930 = vrot.slane %v929, 4
        %v932 = vshll.u32 %v230, 16
        %v934 = vrot.slane %v932, 5
        %v935 = vsel %vm719, %v930, %v934
        %v937 = vshrl.u32 %v231, 16
        %v939 = vrot.slane %v937, 4
        %v940 = vshll.u32 %v231, 16
        %v942 = vrot.slane %v940, 5
        %v943 = vor.u32 %v939, %v942
        %v944 = vrot.slane %v943, 4
        %v946 = vshll.u32 %v232, 16
        %v948 = vrot.slane %v946, 5
        %v949 = vsel %vm719, %v944, %v948
        %v950 = vshrl.u32 %v232, 16
        %v952 = vrot.slane %v950, 4
        %v953 = vor.u32 %v952, %v948
        %v954 = vrot.slane %v953, 4
        %v956 = vshll.u32 %v233, 16
        %v958 = vrot.slane %v956, 5
        %v959 = vsel %vm719, %v954, %v958
        %v961 = vshrl.u32 %v234, 16
        %v963 = vrot.slane %v961, 4
        %v964 = vshll.u32 %v234, 16
        %v966 = vrot.slane %v964, 5
        %v967 = vor.u32 %v963, %v966
        %v968 = vrot.slane %v967, 4
        %v970 = vshll.u32 %v235, 16
        %v972 = vrot.slane %v970, 5
        %v973 = vsel %vm719, %v968, %v972
        %v974 = vshrl.u32 %v235, 16
        %v976 = vrot.slane %v974, 4
        %v977 = vor.u32 %v976, %v972
        %v978 = vrot.slane %v977, 4
        %v980 = vshll.u32 %v236, 16
        %v982 = vrot.slane %v980, 5
        %v983 = vsel %vm719, %v978, %v982
        %v985 = vshrl.u32 %v237, 16
        %v987 = vrot.slane %v985, 4
        %v988 = vshll.u32 %v237, 16
        %v990 = vrot.slane %v988, 5
        %v991 = vor.u32 %v987, %v990
        %v992 = vrot.slane %v991, 4
        %v994 = vshll.u32 %v238, 16
        %v996 = vrot.slane %v994, 5
        %v997 = vsel %vm719, %v992, %v996
        %v998 = vshrl.u32 %v238, 16
        %v1000 = vrot.slane %v998, 4
        %v1001 = vor.u32 %v1000, %v996
        %v1002 = vrot.slane %v1001, 4
        %v1004 = vshll.u32 %v239, 16
        %v1006 = vrot.slane %v1004, 5
        %v1007 = vsel %vm719, %v1002, %v1006
        %v1009 = vshrl.u32 %v240, 16
        %v1011 = vrot.slane %v1009, 4
        %v1012 = vshll.u32 %v240, 16
        %v1014 = vrot.slane %v1012, 5
        %v1015 = vor.u32 %v1011, %v1014
        %v1016 = vrot.slane %v1015, 4
        %v1018 = vshll.u32 %v241, 16
        %v1020 = vrot.slane %v1018, 5
        %v1021 = vsel %vm719, %v1016, %v1020
        %v1022 = vshrl.u32 %v241, 16
        %v1024 = vrot.slane %v1022, 4
        %v1025 = vor.u32 %v1024, %v1020
        %v1026 = vrot.slane %v1025, 4
        %v1028 = vshll.u32 %v242, 16
        %v1030 = vrot.slane %v1028, 5
        %v1031 = vsel %vm719, %v1026, %v1030
        %v1033 = vshrl.u32 %v243, 16
        %v1035 = vrot.slane %v1033, 4
        %v1036 = vshll.u32 %v243, 16
        %v1038 = vrot.slane %v1036, 5
        %v1039 = vor.u32 %v1035, %v1038
        %v1040 = vrot.slane %v1039, 4
        %v1042 = vshll.u32 %v244, 16
        %v1044 = vrot.slane %v1042, 5
        %v1045 = vsel %vm719, %v1040, %v1044
        %v1046 = vshrl.u32 %v244, 16
        %v1048 = vrot.slane %v1046, 4
        %v1049 = vor.u32 %v1048, %v1044
        %v1050 = vrot.slane %v1049, 4
        %v1052 = vshll.u32 %v245, 16
        %v1054 = vrot.slane %v1052, 5
        %v1055 = vsel %vm719, %v1050, %v1054
        %v1057 = vshrl.u32 %v246, 16
        %v1059 = vrot.slane %v1057, 4
        %v1060 = vshll.u32 %v246, 16
        %v1062 = vrot.slane %v1060, 5
        %v1063 = vor.u32 %v1059, %v1062
        %v1064 = vrot.slane %v1063, 4
        %v1066 = vshll.u32 %v247, 16
        %v1068 = vrot.slane %v1066, 5
        %v1069 = vsel %vm719, %v1064, %v1068
        %v1070 = vshrl.u32 %v247, 16
        %v1072 = vrot.slane %v1070, 4
        %v1073 = vor.u32 %v1072, %v1068
        %v1074 = vrot.slane %v1073, 4
        %v1076 = vshll.u32 %v248, 16
        %v1078 = vrot.slane %v1076, 5
        %v1079 = vsel %vm719, %v1074, %v1078
        %v1081 = vshrl.u32 %v249, 16
        %v1083 = vrot.slane %v1081, 4
        %v1084 = vshll.u32 %v249, 16
        %v1086 = vrot.slane %v1084, 5
        %v1087 = vor.u32 %v1083, %v1086
        %v1088 = vrot.slane %v1087, 4
        %v1090 = vshll.u32 %v250, 16
        %v1092 = vrot.slane %v1090, 5
        %v1093 = vsel %vm719, %v1088, %v1092
        %v1094 = vshrl.u32 %v250, 16
        %v1096 = vrot.slane %v1094, 4
        %v1097 = vor.u32 %v1096, %v1092
        %v1098 = vrot.slane %v1097, 4
        %v1100 = vshll.u32 %v251, 16
        %v1102 = vrot.slane %v1100, 5
        %v1103 = vsel %vm719, %v1098, %v1102
        %v1105 = vshrl.u32 %v252, 16
        %v1107 = vrot.slane %v1105, 4
        %v1108 = vshll.u32 %v252, 16
        %v1110 = vrot.slane %v1108, 5
        %v1111 = vor.u32 %v1107, %v1110
        %v1112 = vrot.slane %v1111, 4
        %v1114 = vshll.u32 %v253, 16
        %v1116 = vrot.slane %v1114, 5
        %v1117 = vsel %vm719, %v1112, %v1116
        %v1118 = vshrl.u32 %v253, 16
        %v1120 = vrot.slane %v1118, 4
        %v1121 = vor.u32 %v1120, %v1116
        %v1122 = vrot.slane %v1121, 4
        %v1124 = vshll.u32 %v254, 16
        %v1126 = vrot.slane %v1124, 5
        %v1127 = vsel %vm719, %v1122, %v1126
        %v1129 = vshrl.u32 %v255, 16
        %v1131 = vrot.slane %v1129, 4
        %v1132 = vshll.u32 %v255, 16
        %v1134 = vrot.slane %v1132, 5
        %v1135 = vor.u32 %v1131, %v1134
        %v1136 = vrot.slane %v1135, 4
        %v1138 = vshll.u32 %v256, 16
        %v1140 = vrot.slane %v1138, 5
        %v1141 = vsel %vm719, %v1136, %v1140
        %v1142 = vshrl.u32 %v256, 16
        %v1144 = vrot.slane %v1142, 4
        %v1145 = vor.u32 %v1144, %v1140
        %v1146 = vrot.slane %v1145, 4
        %v1148 = vshll.u32 %v257, 16
        %v1150 = vrot.slane %v1148, 5
        %v1151 = vsel %vm719, %v1146, %v1150
        %s1152 = scalar_lea.vmem [#allocation2], 4
        %v1153 = vld [vmem:[%s1152] sm:$0xf]
        %v1154 = vunpack.c.l.b16 %v733
        %v1155 = vunpack.c.l.b16 %v743
        %v1156 = vunpack.c.l.b16 %v757
        %v1157 = vunpack.c.l.b16 %v767
        %v1158 = vunpack.c.l.b16 %v781
        %v1159 = vunpack.c.l.b16 %v791
        %v1160 = vunpack.c.l.b16 %v805
        %v1161 = vunpack.c.l.b16 %v815
        %v1162 = vunpack.c.l.b16 %v829
        %v1163 = vunpack.c.l.b16 %v839
        %v1164 = vunpack.c.l.b16 %v853
        %v1165 = vunpack.c.l.b16 %v863
        %v1166 = vunpack.c.l.b16 %v877
        %v1167 = vunpack.c.l.b16 %v887
        %v1168 = vunpack.c.l.b16 %v901
        %v1169 = vunpack.c.l.b16 %v911
        %v1170 = vunpack.c.l.b16 %v925
        %v1171 = vunpack.c.l.b16 %v935
        %v1172 = vunpack.c.l.b16 %v949
        %v1173 = vunpack.c.l.b16 %v959
        %v1174 = vunpack.c.l.b16 %v973
        %v1175 = vunpack.c.l.b16 %v983
        %v1176 = vunpack.c.l.b16 %v997
        %v1177 = vunpack.c.l.b16 %v1007
        %v1178 = vunpack.c.l.b16 %v1021
        %v1179 = vunpack.c.l.b16 %v1031
        %v1180 = vunpack.c.l.b16 %v1045
        %v1181 = vunpack.c.l.b16 %v1055
        %v1182 = vunpack.c.l.b16 %v1069
        %v1183 = vunpack.c.l.b16 %v1079
        %v1184 = vunpack.c.l.b16 %v1093
        %v1185 = vunpack.c.l.b16 %v1103
        %v1186 = vpack.c.b16 %v1155, %v1154
        %v1187 = vpack.c.b16 %v1157, %v1156
        %v1188 = vpack.c.b16 %v1159, %v1158
        %v1189 = vpack.c.b16 %v1161, %v1160
        %v1190 = vpack.c.b16 %v1163, %v1162
        %v1191 = vpack.c.b16 %v1165, %v1164
        %v1192 = vpack.c.b16 %v1167, %v1166
        %v1193 = vpack.c.b16 %v1169, %v1168
        %v1194 = vpack.c.b16 %v1171, %v1170
        %v1195 = vpack.c.b16 %v1173, %v1172
        %v1196 = vpack.c.b16 %v1175, %v1174
        %v1197 = vpack.c.b16 %v1177, %v1176
        %v1198 = vpack.c.b16 %v1179, %v1178
        %v1199 = vpack.c.b16 %v1181, %v1180
        %v1200 = vpack.c.b16 %v1183, %v1182
        %v1201 = vpack.c.b16 %v1185, %v1184
        %v1203 = vsel %vm341, %v1186, 0
        %v1206 = vsel %vm341, %v1187, 0
        %v1209 = vsel %vm341, %v1188, 0
        %v1212 = vsel %vm341, %v1189, 0
        %v1215 = vsel %vm341, %v1190, 0
        %v1218 = vsel %vm341, %v1191, 0
        %v1221 = vsel %vm341, %v1192, 0
        %v1224 = vsel %vm341, %v1193, 0
        %v1227 = vsel %vm341, %v1194, 0
        %v1230 = vsel %vm341, %v1195, 0
        %v1233 = vsel %vm341, %v1196, 0
        %v1236 = vsel %vm341, %v1197, 0
        %v1239 = vsel %vm341, %v1198, 0
        %v1242 = vsel %vm341, %v1199, 0
        %v1245 = vsel %vm341, %v1200, 0
        %v1248 = vsel %vm341, %v1201, 0
        %v1251 = vsel %vm390, %v1153, 0
        %1253 = vmatpush.bf16.msra.mxu0 0
        %1254 = vmatpush.bf16.msra.mxu0 0
        %1255 = vmatpush.bf16.msra.mxu0 0
        %1256 = vmatpush.bf16.msra.mxu0 0
        %1257 = vmatpush.bf16.msra.mxu0 0
        %1258 = vmatpush.bf16.msra.mxu0 0
        %1259 = vmatpush.bf16.msra.mxu0 0
        %1260 = vmatpush.bf16.msra.mxu0 %v1251
        %1261 = vmatmul.bf16.gmra.mxu0 %v1203
        %v1262 = vpop.f32.mrf.mxu0
        %v1263 = vadd.f32 0.0, %v1262
        %v1264 = vpop.f32.mrf.mxu0
        %v1265 = vadd.f32 0.0, %v1264
        %1266 = vmatmul.bf16.gmra.mxu0 %v1206
        %v1267 = vpop.f32.mrf.mxu0
        %v1268 = vadd.f32 0.0, %v1267
        %v1269 = vpop.f32.mrf.mxu0
        %v1270 = vadd.f32 0.0, %v1269
        %1271 = vmatmul.bf16.gmra.mxu0 %v1209
        %v1272 = vpop.f32.mrf.mxu0
        %v1273 = vadd.f32 0.0, %v1272
        %v1274 = vpop.f32.mrf.mxu0
        %v1275 = vadd.f32 0.0, %v1274
        %1276 = vmatmul.bf16.gmra.mxu0 %v1212
        %v1277 = vpop.f32.mrf.mxu0
        %v1278 = vadd.f32 0.0, %v1277
        %v1279 = vpop.f32.mrf.mxu0
        %v1280 = vadd.f32 0.0, %v1279
        %1281 = vmatmul.bf16.gmra.mxu0 %v1215
        %v1282 = vpop.f32.mrf.mxu0
        %v1283 = vadd.f32 0.0, %v1282
        %v1284 = vpop.f32.mrf.mxu0
        %v1285 = vadd.f32 0.0, %v1284
        %1286 = vmatmul.bf16.gmra.mxu0 %v1218
        %v1287 = vpop.f32.mrf.mxu0
        %v1288 = vadd.f32 0.0, %v1287
        %v1289 = vpop.f32.mrf.mxu0
        %v1290 = vadd.f32 0.0, %v1289
        %1291 = vmatmul.bf16.gmra.mxu0 %v1221
        %v1292 = vpop.f32.mrf.mxu0
        %v1293 = vadd.f32 0.0, %v1292
        %v1294 = vpop.f32.mrf.mxu0
        %v1295 = vadd.f32 0.0, %v1294
        %1296 = vmatmul.bf16.gmra.mxu0 %v1224
        %v1297 = vpop.f32.mrf.mxu0
        %v1298 = vadd.f32 0.0, %v1297
        %v1299 = vpop.f32.mrf.mxu0
        %v1300 = vadd.f32 0.0, %v1299
        %1301 = vmatmul.bf16.gmra.mxu0 %v1227
        %v1302 = vpop.f32.mrf.mxu0
        %v1303 = vadd.f32 0.0, %v1302
        %v1304 = vpop.f32.mrf.mxu0
        %v1305 = vadd.f32 0.0, %v1304
        %1306 = vmatmul.bf16.gmra.mxu0 %v1230
        %v1307 = vpop.f32.mrf.mxu0
        %v1308 = vadd.f32 0.0, %v1307
        %v1309 = vpop.f32.mrf.mxu0
        %v1310 = vadd.f32 0.0, %v1309
        %1311 = vmatmul.bf16.gmra.mxu0 %v1233
        %v1312 = vpop.f32.mrf.mxu0
        %v1313 = vadd.f32 0.0, %v1312
        %v1314 = vpop.f32.mrf.mxu0
        %v1315 = vadd.f32 0.0, %v1314
        %1316 = vmatmul.bf16.gmra.mxu0 %v1236
        %v1317 = vpop.f32.mrf.mxu0
        %v1318 = vadd.f32 0.0, %v1317
        %v1319 = vpop.f32.mrf.mxu0
        %v1320 = vadd.f32 0.0, %v1319
        %1321 = vmatmul.bf16.gmra.mxu0 %v1239
        %v1322 = vpop.f32.mrf.mxu0
        %v1323 = vadd.f32 0.0, %v1322
        %v1324 = vpop.f32.mrf.mxu0
        %v1325 = vadd.f32 0.0, %v1324
        %1326 = vmatmul.bf16.gmra.mxu0 %v1242
        %v1327 = vpop.f32.mrf.mxu0
        %v1328 = vadd.f32 0.0, %v1327
        %v1329 = vpop.f32.mrf.mxu0
        %v1330 = vadd.f32 0.0, %v1329
        %1331 = vmatmul.bf16.gmra.mxu0 %v1245
        %v1332 = vpop.f32.mrf.mxu0
        %v1333 = vadd.f32 0.0, %v1332
        %v1334 = vpop.f32.mrf.mxu0
        %v1335 = vadd.f32 0.0, %v1334
        %1336 = vmatmul.bf16.gmra.mxu0 %v1248
        %v1337 = vpop.f32.mrf.mxu0
        %v1338 = vadd.f32 0.0, %v1337
        %v1339 = vpop.f32.mrf.mxu0
        %v1340 = vadd.f32 0.0, %v1339
        %1341 = vdwg.mxu0
        %v1342 = vadd.f32 %v685, %v1263
        %v1343 = vadd.f32 %v686, %v1265
        %v1344 = vadd.f32 %v687, %v1268
        %v1345 = vadd.f32 %v688, %v1270
        %v1346 = vadd.f32 %v689, %v1273
        %v1347 = vadd.f32 %v690, %v1275
        %v1348 = vadd.f32 %v691, %v1278
        %v1349 = vadd.f32 %v692, %v1280
        %v1350 = vadd.f32 %v693, %v1283
        %v1351 = vadd.f32 %v694, %v1285
        %v1352 = vadd.f32 %v695, %v1288
        %v1353 = vadd.f32 %v696, %v1290
        %v1354 = vadd.f32 %v697, %v1293
        %v1355 = vadd.f32 %v698, %v1295
        %v1356 = vadd.f32 %v699, %v1298
        %v1357 = vadd.f32 %v700, %v1300
        %v1358 = vadd.f32 %v701, %v1303
        %v1359 = vadd.f32 %v702, %v1305
        %v1360 = vadd.f32 %v703, %v1308
        %v1361 = vadd.f32 %v704, %v1310
        %v1362 = vadd.f32 %v705, %v1313
        %v1363 = vadd.f32 %v706, %v1315
        %v1364 = vadd.f32 %v707, %v1318
        %v1365 = vadd.f32 %v708, %v1320
        %v1366 = vadd.f32 %v709, %v1323
        %v1367 = vadd.f32 %v710, %v1325
        %v1368 = vadd.f32 %v711, %v1328
        %v1369 = vadd.f32 %v712, %v1330
        %v1370 = vadd.f32 %v713, %v1333
        %v1371 = vadd.f32 %v714, %v1335
        %v1372 = vadd.f32 %v715, %v1338
        %v1373 = vadd.f32 %v716, %v1340
        %s1374 = scalar_lea.vmem [#allocation2], 16
        %v1375 = vld [vmem:[%s1374] sm:$0xf]
        %v1376 = vunpack.c.l.b16 %v1117
        %v1377 = vunpack.c.l.b16 %v1127
        %v1378 = vpack.c.b16 %v1377, %v1376
        %v1380 = vsel %vm341, %v1378, 0
        %v1383 = vsel %vm390, %v1375, 0
        %1385 = vmatpush.bf16.msra.mxu0 0
        %1386 = vmatpush.bf16.msra.mxu0 0
        %1387 = vmatpush.bf16.msra.mxu0 0
        %1388 = vmatpush.bf16.msra.mxu0 0
        %1389 = vmatpush.bf16.msra.mxu0 0
        %1390 = vmatpush.bf16.msra.mxu0 0
        %1391 = vmatpush.bf16.msra.mxu0 0
        %1392 = vmatpush.bf16.msra.mxu0 %v1383
        %1393 = vmatmul.bf16.gmra.mxu0 %v1206
        %v1394 = vpop.f32.mrf.mxu0
        %v1395 = vadd.f32 0.0, %v1394
        %v1396 = vpop.f32.mrf.mxu0
        %v1397 = vadd.f32 0.0, %v1396
        %1398 = vmatmul.bf16.gmra.mxu0 %v1209
        %v1399 = vpop.f32.mrf.mxu0
        %v1400 = vadd.f32 0.0, %v1399
        %v1401 = vpop.f32.mrf.mxu0
        %v1402 = vadd.f32 0.0, %v1401
        %1403 = vmatmul.bf16.gmra.mxu0 %v1212
        %v1404 = vpop.f32.mrf.mxu0
        %v1405 = vadd.f32 0.0, %v1404
        %v1406 = vpop.f32.mrf.mxu0
        %v1407 = vadd.f32 0.0, %v1406
        %1408 = vmatmul.bf16.gmra.mxu0 %v1215
        %v1409 = vpop.f32.mrf.mxu0
        %v1410 = vadd.f32 0.0, %v1409
        %v1411 = vpop.f32.mrf.mxu0
        %v1412 = vadd.f32 0.0, %v1411
        %1413 = vmatmul.bf16.gmra.mxu0 %v1218
        %v1414 = vpop.f32.mrf.mxu0
        %v1415 = vadd.f32 0.0, %v1414
        %v1416 = vpop.f32.mrf.mxu0
        %v1417 = vadd.f32 0.0, %v1416
        %1418 = vmatmul.bf16.gmra.mxu0 %v1221
        %v1419 = vpop.f32.mrf.mxu0
        %v1420 = vadd.f32 0.0, %v1419
        %v1421 = vpop.f32.mrf.mxu0
        %v1422 = vadd.f32 0.0, %v1421
        %1423 = vmatmul.bf16.gmra.mxu0 %v1224
        %v1424 = vpop.f32.mrf.mxu0
        %v1425 = vadd.f32 0.0, %v1424
        %v1426 = vpop.f32.mrf.mxu0
        %v1427 = vadd.f32 0.0, %v1426
        %1428 = vmatmul.bf16.gmra.mxu0 %v1227
        %v1429 = vpop.f32.mrf.mxu0
        %v1430 = vadd.f32 0.0, %v1429
        %v1431 = vpop.f32.mrf.mxu0
        %v1432 = vadd.f32 0.0, %v1431
        %1433 = vmatmul.bf16.gmra.mxu0 %v1230
        %v1434 = vpop.f32.mrf.mxu0
        %v1435 = vadd.f32 0.0, %v1434
        %v1436 = vpop.f32.mrf.mxu0
        %v1437 = vadd.f32 0.0, %v1436
        %1438 = vmatmul.bf16.gmra.mxu0 %v1233
        %v1439 = vpop.f32.mrf.mxu0
        %v1440 = vadd.f32 0.0, %v1439
        %v1441 = vpop.f32.mrf.mxu0
        %v1442 = vadd.f32 0.0, %v1441
        %1443 = vmatmul.bf16.gmra.mxu0 %v1236
        %v1444 = vpop.f32.mrf.mxu0
        %v1445 = vadd.f32 0.0, %v1444
        %v1446 = vpop.f32.mrf.mxu0
        %v1447 = vadd.f32 0.0, %v1446
        %1448 = vmatmul.bf16.gmra.mxu0 %v1239
        %v1449 = vpop.f32.mrf.mxu0
        %v1450 = vadd.f32 0.0, %v1449
        %v1451 = vpop.f32.mrf.mxu0
        %v1452 = vadd.f32 0.0, %v1451
        %1453 = vmatmul.bf16.gmra.mxu0 %v1242
        %v1454 = vpop.f32.mrf.mxu0
        %v1455 = vadd.f32 0.0, %v1454
        %v1456 = vpop.f32.mrf.mxu0
        %v1457 = vadd.f32 0.0, %v1456
        %1458 = vmatmul.bf16.gmra.mxu0 %v1245
        %v1459 = vpop.f32.mrf.mxu0
        %v1460 = vadd.f32 0.0, %v1459
        %v1461 = vpop.f32.mrf.mxu0
        %v1462 = vadd.f32 0.0, %v1461
        %1463 = vmatmul.bf16.gmra.mxu0 %v1248
        %v1464 = vpop.f32.mrf.mxu0
        %v1465 = vadd.f32 0.0, %v1464
        %v1466 = vpop.f32.mrf.mxu0
        %v1467 = vadd.f32 0.0, %v1466
        %1468 = vmatmul.bf16.gmra.mxu0 %v1380
        %v1469 = vpop.f32.mrf.mxu0
        %v1470 = vadd.f32 0.0, %v1469
        %v1471 = vpop.f32.mrf.mxu0
        %v1472 = vadd.f32 0.0, %v1471
        %1473 = vdwg.mxu0
        %v1474 = vadd.f32 %v1342, %v1395
        %v1475 = vadd.f32 %v1343, %v1397
        %v1476 = vadd.f32 %v1344, %v1400
        %v1477 = vadd.f32 %v1345, %v1402
        %v1478 = vadd.f32 %v1346, %v1405
        %v1479 = vadd.f32 %v1347, %v1407
        %v1480 = vadd.f32 %v1348, %v1410
        %v1481 = vadd.f32 %v1349, %v1412
        %v1482 = vadd.f32 %v1350, %v1415
        %v1483 = vadd.f32 %v1351, %v1417
        %v1484 = vadd.f32 %v1352, %v1420
        %v1485 = vadd.f32 %v1353, %v1422
        %v1486 = vadd.f32 %v1354, %v1425
        %v1487 = vadd.f32 %v1355, %v1427
        %v1488 = vadd.f32 %v1356, %v1430
        %v1489 = vadd.f32 %v1357, %v1432
        %v1490 = vadd.f32 %v1358, %v1435
        %v1491 = vadd.f32 %v1359, %v1437
        %v1492 = vadd.f32 %v1360, %v1440
        %v1493 = vadd.f32 %v1361, %v1442
        %v1494 = vadd.f32 %v1362, %v1445
        %v1495 = vadd.f32 %v1363, %v1447
        %v1496 = vadd.f32 %v1364, %v1450
        %v1497 = vadd.f32 %v1365, %v1452
        %v1498 = vadd.f32 %v1366, %v1455
        %v1499 = vadd.f32 %v1367, %v1457
        %v1500 = vadd.f32 %v1368, %v1460
        %v1501 = vadd.f32 %v1369, %v1462
        %v1502 = vadd.f32 %v1370, %v1465
        %v1503 = vadd.f32 %v1371, %v1467
        %v1504 = vadd.f32 %v1372, %v1470
        %v1505 = vadd.f32 %v1373, %v1472
        %s1506 = scalar_lea.vmem [#allocation2], 28
        %v1507 = vld [vmem:[%s1506] sm:$0xf]
        %v1508 = vunpack.c.l.b16 %v1141
        %v1509 = vunpack.c.l.b16 %v1151
        %v1510 = vpack.c.b16 %v1509, %v1508
        %v1512 = vsel %vm341, %v1510, 0
        %v1515 = vsel %vm390, %v1507, 0
        %1517 = vmatpush.bf16.msra.mxu0 0
        %1518 = vmatpush.bf16.msra.mxu0 0
        %1519 = vmatpush.bf16.msra.mxu0 0
        %1520 = vmatpush.bf16.msra.mxu0 0
        %1521 = vmatpush.bf16.msra.mxu0 0
        %1522 = vmatpush.bf16.msra.mxu0 0
        %1523 = vmatpush.bf16.msra.mxu0 0
        %1524 = vmatpush.bf16.msra.mxu0 %v1515
        %1525 = vmatmul.bf16.gmra.mxu0 %v1209
        %v1526 = vpop.f32.mrf.mxu0
        %v1527 = vadd.f32 0.0, %v1526
        %v1528 = vpop.f32.mrf.mxu0
        %v1529 = vadd.f32 0.0, %v1528
        %1530 = vmatmul.bf16.gmra.mxu0 %v1212
        %v1531 = vpop.f32.mrf.mxu0
        %v1532 = vadd.f32 0.0, %v1531
        %v1533 = vpop.f32.mrf.mxu0
        %v1534 = vadd.f32 0.0, %v1533
        %1535 = vmatmul.bf16.gmra.mxu0 %v1215
        %v1536 = vpop.f32.mrf.mxu0
        %v1537 = vadd.f32 0.0, %v1536
        %v1538 = vpop.f32.mrf.mxu0
        %v1539 = vadd.f32 0.0, %v1538
        %1540 = vmatmul.bf16.gmra.mxu0 %v1218
        %v1541 = vpop.f32.mrf.mxu0
        %v1542 = vadd.f32 0.0, %v1541
        %v1543 = vpop.f32.mrf.mxu0
        %v1544 = vadd.f32 0.0, %v1543
        %1545 = vmatmul.bf16.gmra.mxu0 %v1221
        %v1546 = vpop.f32.mrf.mxu0
        %v1547 = vadd.f32 0.0, %v1546
        %v1548 = vpop.f32.mrf.mxu0
        %v1549 = vadd.f32 0.0, %v1548
        %1550 = vmatmul.bf16.gmra.mxu0 %v1224
        %v1551 = vpop.f32.mrf.mxu0
        %v1552 = vadd.f32 0.0, %v1551
        %v1553 = vpop.f32.mrf.mxu0
        %v1554 = vadd.f32 0.0, %v1553
        %1555 = vmatmul.bf16.gmra.mxu0 %v1227
        %v1556 = vpop.f32.mrf.mxu0
        %v1557 = vadd.f32 0.0, %v1556
        %v1558 = vpop.f32.mrf.mxu0
        %v1559 = vadd.f32 0.0, %v1558
        %1560 = vmatmul.bf16.gmra.mxu0 %v1230
        %v1561 = vpop.f32.mrf.mxu0
        %v1562 = vadd.f32 0.0, %v1561
        %v1563 = vpop.f32.mrf.mxu0
        %v1564 = vadd.f32 0.0, %v1563
        %1565 = vmatmul.bf16.gmra.mxu0 %v1233
        %v1566 = vpop.f32.mrf.mxu0
        %v1567 = vadd.f32 0.0, %v1566
        %v1568 = vpop.f32.mrf.mxu0
        %v1569 = vadd.f32 0.0, %v1568
        %1570 = vmatmul.bf16.gmra.mxu0 %v1236
        %v1571 = vpop.f32.mrf.mxu0
        %v1572 = vadd.f32 0.0, %v1571
        %v1573 = vpop.f32.mrf.mxu0
        %v1574 = vadd.f32 0.0, %v1573
        %1575 = vmatmul.bf16.gmra.mxu0 %v1239
        %v1576 = vpop.f32.mrf.mxu0
        %v1577 = vadd.f32 0.0, %v1576
        %v1578 = vpop.f32.mrf.mxu0
        %v1579 = vadd.f32 0.0, %v1578
        %1580 = vmatmul.bf16.gmra.mxu0 %v1242
        %v1581 = vpop.f32.mrf.mxu0
        %v1582 = vadd.f32 0.0, %v1581
        %v1583 = vpop.f32.mrf.mxu0
        %v1584 = vadd.f32 0.0, %v1583
        %1585 = vmatmul.bf16.gmra.mxu0 %v1245
        %v1586 = vpop.f32.mrf.mxu0
        %v1587 = vadd.f32 0.0, %v1586
        %v1588 = vpop.f32.mrf.mxu0
        %v1589 = vadd.f32 0.0, %v1588
        %1590 = vmatmul.bf16.gmra.mxu0 %v1248
        %v1591 = vpop.f32.mrf.mxu0
        %v1592 = vadd.f32 0.0, %v1591
        %v1593 = vpop.f32.mrf.mxu0
        %v1594 = vadd.f32 0.0, %v1593
        %1595 = vmatmul.bf16.gmra.mxu0 %v1380
        %v1596 = vpop.f32.mrf.mxu0
        %v1597 = vadd.f32 0.0, %v1596
        %v1598 = vpop.f32.mrf.mxu0
        %v1599 = vadd.f32 0.0, %v1598
        %1600 = vmatmul.bf16.gmra.mxu0 %v1512
        %v1601 = vpop.f32.mrf.mxu0
        %v1602 = vadd.f32 0.0, %v1601
        %v1603 = vpop.f32.mrf.mxu0
        %v1604 = vadd.f32 0.0, %v1603
        %1605 = vdwg.mxu0
        %v1606 = vadd.f32 %v1474, %v1527
        %v1607 = vadd.f32 %v1475, %v1529
        %v1608 = vadd.f32 %v1476, %v1532
        %v1609 = vadd.f32 %v1477, %v1534
        %v1610 = vadd.f32 %v1478, %v1537
        %v1611 = vadd.f32 %v1479, %v1539
        %v1612 = vadd.f32 %v1480, %v1542
        %v1613 = vadd.f32 %v1481, %v1544
        %v1614 = vadd.f32 %v1482, %v1547
        %v1615 = vadd.f32 %v1483, %v1549
        %v1616 = vadd.f32 %v1484, %v1552
        %v1617 = vadd.f32 %v1485, %v1554
        %v1618 = vadd.f32 %v1486, %v1557
        %v1619 = vadd.f32 %v1487, %v1559
        %v1620 = vadd.f32 %v1488, %v1562
        %v1621 = vadd.f32 %v1489, %v1564
        %v1622 = vadd.f32 %v1490, %v1567
        %v1623 = vadd.f32 %v1491, %v1569
        %v1624 = vadd.f32 %v1492, %v1572
        %v1625 = vadd.f32 %v1493, %v1574
        %v1626 = vadd.f32 %v1494, %v1577
        %v1627 = vadd.f32 %v1495, %v1579
        %v1628 = vadd.f32 %v1496, %v1582
        %v1629 = vadd.f32 %v1497, %v1584
        %v1630 = vadd.f32 %v1498, %v1587
        %v1631 = vadd.f32 %v1499, %v1589
        %v1632 = vadd.f32 %v1500, %v1592
        %v1633 = vadd.f32 %v1501, %v1594
        %v1634 = vadd.f32 %v1502, %v1597
        %v1635 = vadd.f32 %v1503, %v1599
        %v1636 = vadd.f32 %v1504, %v1602
        %v1637 = vadd.f32 %v1505, %v1604
        %vm1656 = vcmask 1042432
        %vm1657 = vcmask 1046532
        %vm1658 = vmor %vm1656, %vm1657
        %v1659 = vrot.slane %v204, 5
        %v1660 = vrot.slane %v1659, 4
        %v1661 = vrot.slane %v205, 5
        %v1662 = vsel %vm1658, %v1660, %v1661
        %v1663 = vrot.slane %v1661, 4
        %v1664 = vrot.slane %v206, 5
        %v1665 = vsel %vm1658, %v1663, %v1664
        %v1666 = vrot.slane %v207, 5
        %v1667 = vrot.slane %v1666, 4
        %v1668 = vrot.slane %v208, 5
        %v1669 = vsel %vm1658, %v1667, %v1668
        %v1670 = vrot.slane %v1668, 4
        %v1671 = vrot.slane %v209, 5
        %v1672 = vsel %vm1658, %v1670, %v1671
        %v1673 = vrot.slane %v210, 5
        %v1674 = vrot.slane %v1673, 4
        %v1675 = vrot.slane %v211, 5
        %v1676 = vsel %vm1658, %v1674, %v1675
        %v1677 = vrot.slane %v1675, 4
        %v1678 = vrot.slane %v212, 5
        %v1679 = vsel %vm1658, %v1677, %v1678
        %v1680 = vrot.slane %v213, 5
        %v1681 = vrot.slane %v1680, 4
        %v1682 = vrot.slane %v214, 5
        %v1683 = vsel %vm1658, %v1681, %v1682
        %v1684 = vrot.slane %v1682, 4
        %v1685 = vrot.slane %v215, 5
        %v1686 = vsel %vm1658, %v1684, %v1685
        %v1687 = vrot.slane %v216, 5
        %v1688 = vrot.slane %v1687, 4
        %v1689 = vrot.slane %v217, 5
        %v1690 = vsel %vm1658, %v1688, %v1689
        %v1691 = vrot.slane %v1689, 4
        %v1692 = vrot.slane %v218, 5
        %v1693 = vsel %vm1658, %v1691, %v1692
        %v1694 = vrot.slane %v219, 5
        %v1695 = vrot.slane %v1694, 4
        %v1696 = vrot.slane %v220, 5
        %v1697 = vsel %vm1658, %v1695, %v1696
        %v1698 = vrot.slane %v1696, 4
        %v1699 = vrot.slane %v221, 5
        %v1700 = vsel %vm1658, %v1698, %v1699
        %v1701 = vrot.slane %v222, 5
        %v1702 = vrot.slane %v1701, 4
        %v1703 = vrot.slane %v223, 5
        %v1704 = vsel %vm1658, %v1702, %v1703
        %v1705 = vrot.slane %v1703, 4
        %v1706 = vrot.slane %v224, 5
        %v1707 = vsel %vm1658, %v1705, %v1706
        %v1708 = vrot.slane %v225, 5
        %v1709 = vrot.slane %v1708, 4
        %v1710 = vrot.slane %v226, 5
        %v1711 = vsel %vm1658, %v1709, %v1710
        %v1712 = vrot.slane %v1710, 4
        %v1713 = vrot.slane %v227, 5
        %v1714 = vsel %vm1658, %v1712, %v1713
        %v1715 = vrot.slane %v228, 5
        %v1716 = vrot.slane %v1715, 4
        %v1717 = vrot.slane %v229, 5
        %v1718 = vsel %vm1658, %v1716, %v1717
        %v1719 = vrot.slane %v1717, 4
        %v1720 = vrot.slane %v230, 5
        %v1721 = vsel %vm1658, %v1719, %v1720
        %v1722 = vrot.slane %v231, 5
        %v1723 = vrot.slane %v1722, 4
        %v1724 = vrot.slane %v232, 5
        %v1725 = vsel %vm1658, %v1723, %v1724
        %v1726 = vrot.slane %v1724, 4
        %v1727 = vrot.slane %v233, 5
        %v1728 = vsel %vm1658, %v1726, %v1727
        %v1729 = vrot.slane %v234, 5
        %v1730 = vrot.slane %v1729, 4
        %v1731 = vrot.slane %v235, 5
        %v1732 = vsel %vm1658, %v1730, %v1731
        %v1733 = vrot.slane %v1731, 4
        %v1734 = vrot.slane %v236, 5
        %v1735 = vsel %vm1658, %v1733, %v1734
        %v1736 = vrot.slane %v237, 5
        %v1737 = vrot.slane %v1736, 4
        %v1738 = vrot.slane %v238, 5
        %v1739 = vsel %vm1658, %v1737, %v1738
        %v1740 = vrot.slane %v1738, 4
        %v1741 = vrot.slane %v239, 5
        %v1742 = vsel %vm1658, %v1740, %v1741
        %v1743 = vrot.slane %v240, 5
        %v1744 = vrot.slane %v1743, 4
        %v1745 = vrot.slane %v241, 5
        %v1746 = vsel %vm1658, %v1744, %v1745
        %v1747 = vrot.slane %v1745, 4
        %v1748 = vrot.slane %v242, 5
        %v1749 = vsel %vm1658, %v1747, %v1748
        %v1750 = vrot.slane %v243, 5
        %v1751 = vrot.slane %v1750, 4
        %v1752 = vrot.slane %v244, 5
        %v1753 = vsel %vm1658, %v1751, %v1752
        %v1754 = vrot.slane %v1752, 4
        %v1755 = vrot.slane %v245, 5
        %v1756 = vsel %vm1658, %v1754, %v1755
        %v1757 = vrot.slane %v246, 5
        %v1758 = vrot.slane %v1757, 4
        %v1759 = vrot.slane %v247, 5
        %v1760 = vsel %vm1658, %v1758, %v1759
        %v1761 = vrot.slane %v1759, 4
        %v1762 = vrot.slane %v248, 5
        %v1763 = vsel %vm1658, %v1761, %v1762
        %v1764 = vrot.slane %v249, 5
        %v1765 = vrot.slane %v1764, 4
        %v1766 = vrot.slane %v250, 5
        %v1767 = vsel %vm1658, %v1765, %v1766
        %v1768 = vrot.slane %v1766, 4
        %v1769 = vrot.slane %v251, 5
        %v1770 = vsel %vm1658, %v1768, %v1769
        %v1771 = vrot.slane %v252, 5
        %v1772 = vrot.slane %v1771, 4
        %v1773 = vrot.slane %v253, 5
        %v1774 = vsel %vm1658, %v1772, %v1773
        %v1775 = vrot.slane %v1773, 4
        %v1776 = vrot.slane %v254, 5
        %v1777 = vsel %vm1658, %v1775, %v1776
        %v1778 = vrot.slane %v255, 5
        %v1779 = vrot.slane %v1778, 4
        %v1780 = vrot.slane %v256, 5
        %v1781 = vsel %vm1658, %v1779, %v1780
        %v1782 = vrot.slane %v1780, 4
        %v1783 = vrot.slane %v257, 5
        %v1784 = vsel %vm1658, %v1782, %v1783
        %s1785 = scalar_lea.vmem [#allocation2], 8
        %v1786 = vld [vmem:[%s1785] sm:$0xf]
        %v1787 = vunpack.c.l.b16 %v1662
        %v1788 = vunpack.c.l.b16 %v1665
        %v1789 = vunpack.c.l.b16 %v1669
        %v1790 = vunpack.c.l.b16 %v1672
        %v1791 = vunpack.c.l.b16 %v1676
        %v1792 = vunpack.c.l.b16 %v1679
        %v1793 = vunpack.c.l.b16 %v1683
        %v1794 = vunpack.c.l.b16 %v1686
        %v1795 = vunpack.c.l.b16 %v1690
        %v1796 = vunpack.c.l.b16 %v1693
        %v1797 = vunpack.c.l.b16 %v1697
        %v1798 = vunpack.c.l.b16 %v1700
        %v1799 = vunpack.c.l.b16 %v1704
        %v1800 = vunpack.c.l.b16 %v1707
        %v1801 = vunpack.c.l.b16 %v1711
        %v1802 = vunpack.c.l.b16 %v1714
        %v1803 = vunpack.c.l.b16 %v1718
        %v1804 = vunpack.c.l.b16 %v1721
        %v1805 = vunpack.c.l.b16 %v1725
        %v1806 = vunpack.c.l.b16 %v1728
        %v1807 = vunpack.c.l.b16 %v1732
        %v1808 = vunpack.c.l.b16 %v1735
        %v1809 = vunpack.c.l.b16 %v1739
        %v1810 = vunpack.c.l.b16 %v1742
        %v1811 = vunpack.c.l.b16 %v1746
        %v1812 = vunpack.c.l.b16 %v1749
        %v1813 = vunpack.c.l.b16 %v1753
        %v1814 = vunpack.c.l.b16 %v1756
        %v1815 = vunpack.c.l.b16 %v1760
        %v1816 = vunpack.c.l.b16 %v1763
        %v1817 = vunpack.c.l.b16 %v1767
        %v1818 = vunpack.c.l.b16 %v1770
        %v1819 = vpack.c.b16 %v1788, %v1787
        %v1820 = vpack.c.b16 %v1790, %v1789
        %v1821 = vpack.c.b16 %v1792, %v1791
        %v1822 = vpack.c.b16 %v1794, %v1793
        %v1823 = vpack.c.b16 %v1796, %v1795
        %v1824 = vpack.c.b16 %v1798, %v1797
        %v1825 = vpack.c.b16 %v1800, %v1799
        %v1826 = vpack.c.b16 %v1802, %v1801
        %v1827 = vpack.c.b16 %v1804, %v1803
        %v1828 = vpack.c.b16 %v1806, %v1805
        %v1829 = vpack.c.b16 %v1808, %v1807
        %v1830 = vpack.c.b16 %v1810, %v1809
        %v1831 = vpack.c.b16 %v1812, %v1811
        %v1832 = vpack.c.b16 %v1814, %v1813
        %v1833 = vpack.c.b16 %v1816, %v1815
        %v1834 = vpack.c.b16 %v1818, %v1817
        %v1836 = vsel %vm341, %v1819, 0
        %v1839 = vsel %vm341, %v1820, 0
        %v1842 = vsel %vm341, %v1821, 0
        %v1845 = vsel %vm341, %v1822, 0
        %v1848 = vsel %vm341, %v1823, 0
        %v1851 = vsel %vm341, %v1824, 0
        %v1854 = vsel %vm341, %v1825, 0
        %v1857 = vsel %vm341, %v1826, 0
        %v1860 = vsel %vm341, %v1827, 0
        %v1863 = vsel %vm341, %v1828, 0
        %v1866 = vsel %vm341, %v1829, 0
        %v1869 = vsel %vm341, %v1830, 0
        %v1872 = vsel %vm341, %v1831, 0
        %v1875 = vsel %vm341, %v1832, 0
        %v1878 = vsel %vm341, %v1833, 0
        %v1881 = vsel %vm341, %v1834, 0
        %v1884 = vsel %vm390, %v1786, 0
        %1886 = vmatpush.bf16.msra.mxu0 0
        %1887 = vmatpush.bf16.msra.mxu0 0
        %1888 = vmatpush.bf16.msra.mxu0 0
        %1889 = vmatpush.bf16.msra.mxu0 0
        %1890 = vmatpush.bf16.msra.mxu0 0
        %1891 = vmatpush.bf16.msra.mxu0 0
        %1892 = vmatpush.bf16.msra.mxu0 0
        %1893 = vmatpush.bf16.msra.mxu0 %v1884
        %1894 = vmatmul.bf16.gmra.mxu0 %v1836
        %v1895 = vpop.f32.mrf.mxu0
        %v1896 = vadd.f32 0.0, %v1895
        %v1897 = vpop.f32.mrf.mxu0
        %v1898 = vadd.f32 0.0, %v1897
        %1899 = vmatmul.bf16.gmra.mxu0 %v1839
        %v1900 = vpop.f32.mrf.mxu0
        %v1901 = vadd.f32 0.0, %v1900
        %v1902 = vpop.f32.mrf.mxu0
        %v1903 = vadd.f32 0.0, %v1902
        %1904 = vmatmul.bf16.gmra.mxu0 %v1842
        %v1905 = vpop.f32.mrf.mxu0
        %v1906 = vadd.f32 0.0, %v1905
        %v1907 = vpop.f32.mrf.mxu0
        %v1908 = vadd.f32 0.0, %v1907
        %1909 = vmatmul.bf16.gmra.mxu0 %v1845
        %v1910 = vpop.f32.mrf.mxu0
        %v1911 = vadd.f32 0.0, %v1910
        %v1912 = vpop.f32.mrf.mxu0
        %v1913 = vadd.f32 0.0, %v1912
        %1914 = vmatmul.bf16.gmra.mxu0 %v1848
        %v1915 = vpop.f32.mrf.mxu0
        %v1916 = vadd.f32 0.0, %v1915
        %v1917 = vpop.f32.mrf.mxu0
        %v1918 = vadd.f32 0.0, %v1917
        %1919 = vmatmul.bf16.gmra.mxu0 %v1851
        %v1920 = vpop.f32.mrf.mxu0
        %v1921 = vadd.f32 0.0, %v1920
        %v1922 = vpop.f32.mrf.mxu0
        %v1923 = vadd.f32 0.0, %v1922
        %1924 = vmatmul.bf16.gmra.mxu0 %v1854
        %v1925 = vpop.f32.mrf.mxu0
        %v1926 = vadd.f32 0.0, %v1925
        %v1927 = vpop.f32.mrf.mxu0
        %v1928 = vadd.f32 0.0, %v1927
        %1929 = vmatmul.bf16.gmra.mxu0 %v1857
        %v1930 = vpop.f32.mrf.mxu0
        %v1931 = vadd.f32 0.0, %v1930
        %v1932 = vpop.f32.mrf.mxu0
        %v1933 = vadd.f32 0.0, %v1932
        %1934 = vmatmul.bf16.gmra.mxu0 %v1860
        %v1935 = vpop.f32.mrf.mxu0
        %v1936 = vadd.f32 0.0, %v1935
        %v1937 = vpop.f32.mrf.mxu0
        %v1938 = vadd.f32 0.0, %v1937
        %1939 = vmatmul.bf16.gmra.mxu0 %v1863
        %v1940 = vpop.f32.mrf.mxu0
        %v1941 = vadd.f32 0.0, %v1940
        %v1942 = vpop.f32.mrf.mxu0
        %v1943 = vadd.f32 0.0, %v1942
        %1944 = vmatmul.bf16.gmra.mxu0 %v1866
        %v1945 = vpop.f32.mrf.mxu0
        %v1946 = vadd.f32 0.0, %v1945
        %v1947 = vpop.f32.mrf.mxu0
        %v1948 = vadd.f32 0.0, %v1947
        %1949 = vmatmul.bf16.gmra.mxu0 %v1869
        %v1950 = vpop.f32.mrf.mxu0
        %v1951 = vadd.f32 0.0, %v1950
        %v1952 = vpop.f32.mrf.mxu0
        %v1953 = vadd.f32 0.0, %v1952
        %1954 = vmatmul.bf16.gmra.mxu0 %v1872
        %v1955 = vpop.f32.mrf.mxu0
        %v1956 = vadd.f32 0.0, %v1955
        %v1957 = vpop.f32.mrf.mxu0
        %v1958 = vadd.f32 0.0, %v1957
        %1959 = vmatmul.bf16.gmra.mxu0 %v1875
        %v1960 = vpop.f32.mrf.mxu0
        %v1961 = vadd.f32 0.0, %v1960
        %v1962 = vpop.f32.mrf.mxu0
        %v1963 = vadd.f32 0.0, %v1962
        %1964 = vmatmul.bf16.gmra.mxu0 %v1878
        %v1965 = vpop.f32.mrf.mxu0
        %v1966 = vadd.f32 0.0, %v1965
        %v1967 = vpop.f32.mrf.mxu0
        %v1968 = vadd.f32 0.0, %v1967
        %1969 = vmatmul.bf16.gmra.mxu0 %v1881
        %v1970 = vpop.f32.mrf.mxu0
        %v1971 = vadd.f32 0.0, %v1970
        %v1972 = vpop.f32.mrf.mxu0
        %v1973 = vadd.f32 0.0, %v1972
        %1974 = vdwg.mxu0
        %v1975 = vadd.f32 %v1606, %v1896
        %v1976 = vadd.f32 %v1607, %v1898
        %v1977 = vadd.f32 %v1608, %v1901
        %v1978 = vadd.f32 %v1609, %v1903
        %v1979 = vadd.f32 %v1610, %v1906
        %v1980 = vadd.f32 %v1611, %v1908
        %v1981 = vadd.f32 %v1612, %v1911
        %v1982 = vadd.f32 %v1613, %v1913
        %v1983 = vadd.f32 %v1614, %v1916
        %v1984 = vadd.f32 %v1615, %v1918
        %v1985 = vadd.f32 %v1616, %v1921
        %v1986 = vadd.f32 %v1617, %v1923
        %v1987 = vadd.f32 %v1618, %v1926
        %v1988 = vadd.f32 %v1619, %v1928
        %v1989 = vadd.f32 %v1620, %v1931
        %v1990 = vadd.f32 %v1621, %v1933
        %v1991 = vadd.f32 %v1622, %v1936
        %v1992 = vadd.f32 %v1623, %v1938
        %v1993 = vadd.f32 %v1624, %v1941
        %v1994 = vadd.f32 %v1625, %v1943
        %v1995 = vadd.f32 %v1626, %v1946
        %v1996 = vadd.f32 %v1627, %v1948
        %v1997 = vadd.f32 %v1628, %v1951
        %v1998 = vadd.f32 %v1629, %v1953
        %v1999 = vadd.f32 %v1630, %v1956
        %v2000 = vadd.f32 %v1631, %v1958
        %v2001 = vadd.f32 %v1632, %v1961
        %v2002 = vadd.f32 %v1633, %v1963
        %v2003 = vadd.f32 %v1634, %v1966
        %v2004 = vadd.f32 %v1635, %v1968
        %v2005 = vadd.f32 %v1636, %v1971
        %v2006 = vadd.f32 %v1637, %v1973
        %s2007 = scalar_lea.vmem [#allocation2], 20
        %v2008 = vld [vmem:[%s2007] sm:$0xf]
        %v2009 = vunpack.c.l.b16 %v1774
        %v2010 = vunpack.c.l.b16 %v1777
        %v2011 = vpack.c.b16 %v2010, %v2009
        %v2013 = vsel %vm341, %v2011, 0
        %v2016 = vsel %vm390, %v2008, 0
        %2018 = vmatpush.bf16.msra.mxu0 0
        %2019 = vmatpush.bf16.msra.mxu0 0
        %2020 = vmatpush.bf16.msra.mxu0 0
        %2021 = vmatpush.bf16.msra.mxu0 0
        %2022 = vmatpush.bf16.msra.mxu0 0
        %2023 = vmatpush.bf16.msra.mxu0 0
        %2024 = vmatpush.bf16.msra.mxu0 0
        %2025 = vmatpush.bf16.msra.mxu0 %v2016
        %2026 = vmatmul.bf16.gmra.mxu0 %v1839
        %v2027 = vpop.f32.mrf.mxu0
        %v2028 = vadd.f32 0.0, %v2027
        %v2029 = vpop.f32.mrf.mxu0
        %v2030 = vadd.f32 0.0, %v2029
        %2031 = vmatmul.bf16.gmra.mxu0 %v1842
        %v2032 = vpop.f32.mrf.mxu0
        %v2033 = vadd.f32 0.0, %v2032
        %v2034 = vpop.f32.mrf.mxu0
        %v2035 = vadd.f32 0.0, %v2034
        %2036 = vmatmul.bf16.gmra.mxu0 %v1845
        %v2037 = vpop.f32.mrf.mxu0
        %v2038 = vadd.f32 0.0, %v2037
        %v2039 = vpop.f32.mrf.mxu0
        %v2040 = vadd.f32 0.0, %v2039
        %2041 = vmatmul.bf16.gmra.mxu0 %v1848
        %v2042 = vpop.f32.mrf.mxu0
        %v2043 = vadd.f32 0.0, %v2042
        %v2044 = vpop.f32.mrf.mxu0
        %v2045 = vadd.f32 0.0, %v2044
        %2046 = vmatmul.bf16.gmra.mxu0 %v1851
        %v2047 = vpop.f32.mrf.mxu0
        %v2048 = vadd.f32 0.0, %v2047
        %v2049 = vpop.f32.mrf.mxu0
        %v2050 = vadd.f32 0.0, %v2049
        %2051 = vmatmul.bf16.gmra.mxu0 %v1854
        %v2052 = vpop.f32.mrf.mxu0
        %v2053 = vadd.f32 0.0, %v2052
        %v2054 = vpop.f32.mrf.mxu0
        %v2055 = vadd.f32 0.0, %v2054
        %2056 = vmatmul.bf16.gmra.mxu0 %v1857
        %v2057 = vpop.f32.mrf.mxu0
        %v2058 = vadd.f32 0.0, %v2057
        %v2059 = vpop.f32.mrf.mxu0
        %v2060 = vadd.f32 0.0, %v2059
        %2061 = vmatmul.bf16.gmra.mxu0 %v1860
        %v2062 = vpop.f32.mrf.mxu0
        %v2063 = vadd.f32 0.0, %v2062
        %v2064 = vpop.f32.mrf.mxu0
        %v2065 = vadd.f32 0.0, %v2064
        %2066 = vmatmul.bf16.gmra.mxu0 %v1863
        %v2067 = vpop.f32.mrf.mxu0
        %v2068 = vadd.f32 0.0, %v2067
        %v2069 = vpop.f32.mrf.mxu0
        %v2070 = vadd.f32 0.0, %v2069
        %2071 = vmatmul.bf16.gmra.mxu0 %v1866
        %v2072 = vpop.f32.mrf.mxu0
        %v2073 = vadd.f32 0.0, %v2072
        %v2074 = vpop.f32.mrf.mxu0
        %v2075 = vadd.f32 0.0, %v2074
        %2076 = vmatmul.bf16.gmra.mxu0 %v1869
        %v2077 = vpop.f32.mrf.mxu0
        %v2078 = vadd.f32 0.0, %v2077
        %v2079 = vpop.f32.mrf.mxu0
        %v2080 = vadd.f32 0.0, %v2079
        %2081 = vmatmul.bf16.gmra.mxu0 %v1872
        %v2082 = vpop.f32.mrf.mxu0
        %v2083 = vadd.f32 0.0, %v2082
        %v2084 = vpop.f32.mrf.mxu0
        %v2085 = vadd.f32 0.0, %v2084
        %2086 = vmatmul.bf16.gmra.mxu0 %v1875
        %v2087 = vpop.f32.mrf.mxu0
        %v2088 = vadd.f32 0.0, %v2087
        %v2089 = vpop.f32.mrf.mxu0
        %v2090 = vadd.f32 0.0, %v2089
        %2091 = vmatmul.bf16.gmra.mxu0 %v1878
        %v2092 = vpop.f32.mrf.mxu0
        %v2093 = vadd.f32 0.0, %v2092
        %v2094 = vpop.f32.mrf.mxu0
        %v2095 = vadd.f32 0.0, %v2094
        %2096 = vmatmul.bf16.gmra.mxu0 %v1881
        %v2097 = vpop.f32.mrf.mxu0
        %v2098 = vadd.f32 0.0, %v2097
        %v2099 = vpop.f32.mrf.mxu0
        %v2100 = vadd.f32 0.0, %v2099
        %2101 = vmatmul.bf16.gmra.mxu0 %v2013
        %v2102 = vpop.f32.mrf.mxu0
        %v2103 = vadd.f32 0.0, %v2102
        %v2104 = vpop.f32.mrf.mxu0
        %v2105 = vadd.f32 0.0, %v2104
        %2106 = vdwg.mxu0
        %v2107 = vadd.f32 %v1975, %v2028
        %v2108 = vadd.f32 %v1976, %v2030
        %v2109 = vadd.f32 %v1977, %v2033
        %v2110 = vadd.f32 %v1978, %v2035
        %v2111 = vadd.f32 %v1979, %v2038
        %v2112 = vadd.f32 %v1980, %v2040
        %v2113 = vadd.f32 %v1981, %v2043
        %v2114 = vadd.f32 %v1982, %v2045
        %v2115 = vadd.f32 %v1983, %v2048
        %v2116 = vadd.f32 %v1984, %v2050
        %v2117 = vadd.f32 %v1985, %v2053
        %v2118 = vadd.f32 %v1986, %v2055
        %v2119 = vadd.f32 %v1987, %v2058
        %v2120 = vadd.f32 %v1988, %v2060
        %v2121 = vadd.f32 %v1989, %v2063
        %v2122 = vadd.f32 %v1990, %v2065
        %v2123 = vadd.f32 %v1991, %v2068
        %v2124 = vadd.f32 %v1992, %v2070
        %v2125 = vadd.f32 %v1993, %v2073
        %v2126 = vadd.f32 %v1994, %v2075
        %v2127 = vadd.f32 %v1995, %v2078
        %v2128 = vadd.f32 %v1996, %v2080
        %v2129 = vadd.f32 %v1997, %v2083
        %v2130 = vadd.f32 %v1998, %v2085
        %v2131 = vadd.f32 %v1999, %v2088
        %v2132 = vadd.f32 %v2000, %v2090
        %v2133 = vadd.f32 %v2001, %v2093
        %v2134 = vadd.f32 %v2002, %v2095
        %v2135 = vadd.f32 %v2003, %v2098
        %v2136 = vadd.f32 %v2004, %v2100
        %v2137 = vadd.f32 %v2005, %v2103
        %v2138 = vadd.f32 %v2006, %v2105
        %s2139 = scalar_lea.vmem [#allocation2], 32
        %v2140 = vld [vmem:[%s2139] sm:$0xf]
        %v2141 = vunpack.c.l.b16 %v1781
        %v2142 = vunpack.c.l.b16 %v1784
        %v2143 = vpack.c.b16 %v2142, %v2141
        %v2145 = vsel %vm341, %v2143, 0
        %v2148 = vsel %vm390, %v2140, 0
        %2150 = vmatpush.bf16.msra.mxu0 0
        %2151 = vmatpush.bf16.msra.mxu0 0
        %2152 = vmatpush.bf16.msra.mxu0 0
        %2153 = vmatpush.bf16.msra.mxu0 0
        %2154 = vmatpush.bf16.msra.mxu0 0
        %2155 = vmatpush.bf16.msra.mxu0 0
        %2156 = vmatpush.bf16.msra.mxu0 0
        %2157 = vmatpush.bf16.msra.mxu0 %v2148
        %2158 = vmatmul.bf16.gmra.mxu0 %v1842
        %v2159 = vpop.f32.mrf.mxu0
        %v2160 = vadd.f32 0.0, %v2159
        %v2161 = vpop.f32.mrf.mxu0
        %v2162 = vadd.f32 0.0, %v2161
        %2163 = vmatmul.bf16.gmra.mxu0 %v1845
        %v2164 = vpop.f32.mrf.mxu0
        %v2165 = vadd.f32 0.0, %v2164
        %v2166 = vpop.f32.mrf.mxu0
        %v2167 = vadd.f32 0.0, %v2166
        %2168 = vmatmul.bf16.gmra.mxu0 %v1848
        %v2169 = vpop.f32.mrf.mxu0
        %v2170 = vadd.f32 0.0, %v2169
        %v2171 = vpop.f32.mrf.mxu0
        %v2172 = vadd.f32 0.0, %v2171
        %2173 = vmatmul.bf16.gmra.mxu0 %v1851
        %v2174 = vpop.f32.mrf.mxu0
        %v2175 = vadd.f32 0.0, %v2174
        %v2176 = vpop.f32.mrf.mxu0
        %v2177 = vadd.f32 0.0, %v2176
        %2178 = vmatmul.bf16.gmra.mxu0 %v1854
        %v2179 = vpop.f32.mrf.mxu0
        %v2180 = vadd.f32 0.0, %v2179
        %v2181 = vpop.f32.mrf.mxu0
        %v2182 = vadd.f32 0.0, %v2181
        %2183 = vmatmul.bf16.gmra.mxu0 %v1857
        %v2184 = vpop.f32.mrf.mxu0
        %v2185 = vadd.f32 0.0, %v2184
        %v2186 = vpop.f32.mrf.mxu0
        %v2187 = vadd.f32 0.0, %v2186
        %2188 = vmatmul.bf16.gmra.mxu0 %v1860
        %v2189 = vpop.f32.mrf.mxu0
        %v2190 = vadd.f32 0.0, %v2189
        %v2191 = vpop.f32.mrf.mxu0
        %v2192 = vadd.f32 0.0, %v2191
        %2193 = vmatmul.bf16.gmra.mxu0 %v1863
        %v2194 = vpop.f32.mrf.mxu0
        %v2195 = vadd.f32 0.0, %v2194
        %v2196 = vpop.f32.mrf.mxu0
        %v2197 = vadd.f32 0.0, %v2196
        %2198 = vmatmul.bf16.gmra.mxu0 %v1866
        %v2199 = vpop.f32.mrf.mxu0
        %v2200 = vadd.f32 0.0, %v2199
        %v2201 = vpop.f32.mrf.mxu0
        %v2202 = vadd.f32 0.0, %v2201
        %2203 = vmatmul.bf16.gmra.mxu0 %v1869
        %v2204 = vpop.f32.mrf.mxu0
        %v2205 = vadd.f32 0.0, %v2204
        %v2206 = vpop.f32.mrf.mxu0
        %v2207 = vadd.f32 0.0, %v2206
        %2208 = vmatmul.bf16.gmra.mxu0 %v1872
        %v2209 = vpop.f32.mrf.mxu0
        %v2210 = vadd.f32 0.0, %v2209
        %v2211 = vpop.f32.mrf.mxu0
        %v2212 = vadd.f32 0.0, %v2211
        %2213 = vmatmul.bf16.gmra.mxu0 %v1875
        %v2214 = vpop.f32.mrf.mxu0
        %v2215 = vadd.f32 0.0, %v2214
        %v2216 = vpop.f32.mrf.mxu0
        %v2217 = vadd.f32 0.0, %v2216
        %2218 = vmatmul.bf16.gmra.mxu0 %v1878
        %v2219 = vpop.f32.mrf.mxu0
        %v2220 = vadd.f32 0.0, %v2219
        %v2221 = vpop.f32.mrf.mxu0
        %v2222 = vadd.f32 0.0, %v2221
        %2223 = vmatmul.bf16.gmra.mxu0 %v1881
        %v2224 = vpop.f32.mrf.mxu0
        %v2225 = vadd.f32 0.0, %v2224
        %v2226 = vpop.f32.mrf.mxu0
        %v2227 = vadd.f32 0.0, %v2226
        %2228 = vmatmul.bf16.gmra.mxu0 %v2013
        %v2229 = vpop.f32.mrf.mxu0
        %v2230 = vadd.f32 0.0, %v2229
        %v2231 = vpop.f32.mrf.mxu0
        %v2232 = vadd.f32 0.0, %v2231
        %2233 = vmatmul.bf16.gmra.mxu0 %v2145
        %v2234 = vpop.f32.mrf.mxu0
        %v2235 = vadd.f32 0.0, %v2234
        %v2236 = vpop.f32.mrf.mxu0
        %v2237 = vadd.f32 0.0, %v2236
        %2238 = vdwg.mxu0
        %v2239 = vadd.f32 %v2107, %v2160
        %v2240 = vadd.f32 %v2108, %v2162
        %v2241 = vadd.f32 %v2109, %v2165
        %v2242 = vadd.f32 %v2110, %v2167
        %v2243 = vadd.f32 %v2111, %v2170
        %v2244 = vadd.f32 %v2112, %v2172
        %v2245 = vadd.f32 %v2113, %v2175
        %v2246 = vadd.f32 %v2114, %v2177
        %v2247 = vadd.f32 %v2115, %v2180
        %v2248 = vadd.f32 %v2116, %v2182
        %v2249 = vadd.f32 %v2117, %v2185
        %v2250 = vadd.f32 %v2118, %v2187
        %v2251 = vadd.f32 %v2119, %v2190
        %v2252 = vadd.f32 %v2120, %v2192
        %v2253 = vadd.f32 %v2121, %v2195
        %v2254 = vadd.f32 %v2122, %v2197
        %v2255 = vadd.f32 %v2123, %v2200
        %v2256 = vadd.f32 %v2124, %v2202
        %v2257 = vadd.f32 %v2125, %v2205
        %v2258 = vadd.f32 %v2126, %v2207
        %v2259 = vadd.f32 %v2127, %v2210
        %v2260 = vadd.f32 %v2128, %v2212
        %v2261 = vadd.f32 %v2129, %v2215
        %v2262 = vadd.f32 %v2130, %v2217
        %v2263 = vadd.f32 %v2131, %v2220
        %v2264 = vadd.f32 %v2132, %v2222
        %v2265 = vadd.f32 %v2133, %v2225
        %v2266 = vadd.f32 %v2134, %v2227
        %v2267 = vadd.f32 %v2135, %v2230
        %v2268 = vadd.f32 %v2136, %v2232
        %v2269 = vadd.f32 %v2137, %v2235
        %v2270 = vadd.f32 %v2138, %v2237
        %v2271 = vld [vmem:[#allocation4] sm:$0x1]
        %v2273 = vperm.slane %v2271, 0
        %v2275 = vadd.f32 %v2239, %v2273
        %v2276 = vadd.f32 %v2240, %v2273
        %v2277 = vadd.f32 %v2241, %v2273
        %v2278 = vadd.f32 %v2242, %v2273
        %v2279 = vadd.f32 %v2243, %v2273
        %v2280 = vadd.f32 %v2244, %v2273
        %v2281 = vadd.f32 %v2245, %v2273
        %v2282 = vadd.f32 %v2246, %v2273
        %v2283 = vadd.f32 %v2247, %v2273
        %v2284 = vadd.f32 %v2248, %v2273
        %v2285 = vadd.f32 %v2249, %v2273
        %v2286 = vadd.f32 %v2250, %v2273
        %v2287 = vadd.f32 %v2251, %v2273
        %v2288 = vadd.f32 %v2252, %v2273
        %v2289 = vadd.f32 %v2253, %v2273
        %v2290 = vadd.f32 %v2254, %v2273
        %v2291 = vadd.f32 %v2255, %v2273
        %v2292 = vadd.f32 %v2256, %v2273
        %v2293 = vadd.f32 %v2257, %v2273
        %v2294 = vadd.f32 %v2258, %v2273
        %v2295 = vadd.f32 %v2259, %v2273
        %v2296 = vadd.f32 %v2260, %v2273
        %v2297 = vadd.f32 %v2261, %v2273
        %v2298 = vadd.f32 %v2262, %v2273
        %v2299 = vadd.f32 %v2263, %v2273
        %v2300 = vadd.f32 %v2264, %v2273
        %v2301 = vadd.f32 %v2265, %v2273
        %v2302 = vadd.f32 %v2266, %v2273
        %v2303 = vadd.f32 %v2267, %v2273
        %v2304 = vadd.f32 %v2268, %v2273
        %v2305 = vadd.f32 %v2269, %v2273
        %v2306 = vadd.f32 %v2270, %v2273
        %v2307 = vmax.f32 %v2275, 0.0
        %v2308 = vmax.f32 %v2276, 0.0
        %v2309 = vmax.f32 %v2277, 0.0
        %v2310 = vmax.f32 %v2278, 0.0
        %v2311 = vmax.f32 %v2279, 0.0
        %v2312 = vmax.f32 %v2280, 0.0
        %v2313 = vmax.f32 %v2281, 0.0
        %v2314 = vmax.f32 %v2282, 0.0
        %v2315 = vmax.f32 %v2283, 0.0
        %v2316 = vmax.f32 %v2284, 0.0
        %v2317 = vmax.f32 %v2285, 0.0
        %v2318 = vmax.f32 %v2286, 0.0
        %v2319 = vmax.f32 %v2287, 0.0
        %v2320 = vmax.f32 %v2288, 0.0
        %v2321 = vmax.f32 %v2289, 0.0
        %v2322 = vmax.f32 %v2290, 0.0
        %v2323 = vmax.f32 %v2291, 0.0
        %v2324 = vmax.f32 %v2292, 0.0
        %v2325 = vmax.f32 %v2293, 0.0
        %v2326 = vmax.f32 %v2294, 0.0
        %v2327 = vmax.f32 %v2295, 0.0
        %v2328 = vmax.f32 %v2296, 0.0
        %v2329 = vmax.f32 %v2297, 0.0
        %v2330 = vmax.f32 %v2298, 0.0
        %v2331 = vmax.f32 %v2299, 0.0
        %v2332 = vmax.f32 %v2300, 0.0
        %v2333 = vmax.f32 %v2301, 0.0
        %v2334 = vmax.f32 %v2302, 0.0
        %v2335 = vmax.f32 %v2303, 0.0
        %v2336 = vmax.f32 %v2304, 0.0
        %v2337 = vmax.f32 %v2305, 0.0
        %v2338 = vmax.f32 %v2306, 0.0
        %v2339 = vpack.c.bf16 %v2307, %v2307
        %v2340 = vpack.c.bf16 %v2308, %v2308
        %v2341 = vpack.c.bf16 %v2309, %v2309
        %v2342 = vpack.c.bf16 %v2310, %v2310
        %v2343 = vpack.c.bf16 %v2311, %v2311
        %v2344 = vpack.c.bf16 %v2312, %v2312
        %v2345 = vpack.c.bf16 %v2313, %v2313
        %v2346 = vpack.c.bf16 %v2314, %v2314
        %v2347 = vpack.c.bf16 %v2315, %v2315
        %v2348 = vpack.c.bf16 %v2316, %v2316
        %v2349 = vpack.c.bf16 %v2317, %v2317
        %v2350 = vpack.c.bf16 %v2318, %v2318
        %v2351 = vpack.c.bf16 %v2319, %v2319
        %v2352 = vpack.c.bf16 %v2320, %v2320
        %v2353 = vpack.c.bf16 %v2321, %v2321
        %v2354 = vpack.c.bf16 %v2322, %v2322
        %v2355 = vpack.c.bf16 %v2323, %v2323
        %v2356 = vpack.c.bf16 %v2324, %v2324
        %v2357 = vpack.c.bf16 %v2325, %v2325
        %v2358 = vpack.c.bf16 %v2326, %v2326
        %v2359 = vpack.c.bf16 %v2327, %v2327
        %v2360 = vpack.c.bf16 %v2328, %v2328
        %v2361 = vpack.c.bf16 %v2329, %v2329
        %v2362 = vpack.c.bf16 %v2330, %v2330
        %v2363 = vpack.c.bf16 %v2331, %v2331
        %v2364 = vpack.c.bf16 %v2332, %v2332
        %v2365 = vpack.c.bf16 %v2333, %v2333
        %v2366 = vpack.c.bf16 %v2334, %v2334
        %v2367 = vpack.c.bf16 %v2335, %v2335
        %v2368 = vpack.c.bf16 %v2336, %v2336
        %v2369 = vpack.c.bf16 %v2337, %v2337
        %v2370 = vpack.c.bf16 %v2338, %v2338
        %v2371 = vunpack.c.l.bf16 %v2339
        %v2372 = vunpack.c.l.bf16 %v2340
        %v2373 = vunpack.c.l.bf16 %v2343
        %v2374 = vunpack.c.l.bf16 %v2344
        %v2375 = vunpack.c.l.bf16 %v2347
        %v2376 = vunpack.c.l.bf16 %v2348
        %v2377 = vunpack.c.l.bf16 %v2351
        %v2378 = vunpack.c.l.bf16 %v2352
        %v2379 = vunpack.c.l.bf16 %v2355
        %v2380 = vunpack.c.l.bf16 %v2356
        %v2381 = vunpack.c.l.bf16 %v2359
        %v2382 = vunpack.c.l.bf16 %v2360
        %v2383 = vunpack.c.l.bf16 %v2363
        %v2384 = vunpack.c.l.bf16 %v2364
        %v2385 = vunpack.c.l.bf16 %v2367
        %v2386 = vunpack.c.l.bf16 %v2368
        %v2387 = vunpack.c.l.bf16 %v2341
        %v2388 = vunpack.c.l.bf16 %v2342
        %v2389 = vunpack.c.l.bf16 %v2345
        %v2390 = vunpack.c.l.bf16 %v2346
        %v2391 = vunpack.c.l.bf16 %v2349
        %v2392 = vunpack.c.l.bf16 %v2350
        %v2393 = vunpack.c.l.bf16 %v2353
        %v2394 = vunpack.c.l.bf16 %v2354
        %v2395 = vunpack.c.l.bf16 %v2357
        %v2396 = vunpack.c.l.bf16 %v2358
        %v2397 = vunpack.c.l.bf16 %v2361
        %v2398 = vunpack.c.l.bf16 %v2362
        %v2399 = vunpack.c.l.bf16 %v2365
        %v2400 = vunpack.c.l.bf16 %v2366
        %v2401 = vunpack.c.l.bf16 %v2369
        %v2402 = vunpack.c.l.bf16 %v2370
        %v2403 = vmax.f32 %v2371, %v2387
        %v2404 = vmax.f32 %v2372, %v2388
        %v2405 = vmax.f32 %v2373, %v2389
        %v2406 = vmax.f32 %v2374, %v2390
        %v2407 = vmax.f32 %v2375, %v2391
        %v2408 = vmax.f32 %v2376, %v2392
        %v2409 = vmax.f32 %v2377, %v2393
        %v2410 = vmax.f32 %v2378, %v2394
        %v2411 = vmax.f32 %v2379, %v2395
        %v2412 = vmax.f32 %v2380, %v2396
        %v2413 = vmax.f32 %v2381, %v2397
        %v2414 = vmax.f32 %v2382, %v2398
        %v2415 = vmax.f32 %v2383, %v2399
        %v2416 = vmax.f32 %v2384, %v2400
        %v2417 = vmax.f32 %v2385, %v2401
        %v2418 = vmax.f32 %v2386, %v2402
        %v2419 = vpack.c.bf16 %v2403, %v2403
        %v2420 = vpack.c.bf16 %v2404, %v2404
        %v2421 = vpack.c.bf16 %v2405, %v2405
        %v2422 = vpack.c.bf16 %v2406, %v2406
        %v2423 = vpack.c.bf16 %v2407, %v2407
        %v2424 = vpack.c.bf16 %v2408, %v2408
        %v2425 = vpack.c.bf16 %v2409, %v2409
        %v2426 = vpack.c.bf16 %v2410, %v2410
        %v2427 = vpack.c.bf16 %v2411, %v2411
        %v2428 = vpack.c.bf16 %v2412, %v2412
        %v2429 = vpack.c.bf16 %v2413, %v2413
        %v2430 = vpack.c.bf16 %v2414, %v2414
        %v2431 = vpack.c.bf16 %v2415, %v2415
        %v2432 = vpack.c.bf16 %v2416, %v2416
        %v2433 = vpack.c.bf16 %v2417, %v2417
        %v2434 = vpack.c.bf16 %v2418, %v2418
        %v2451 = vrot.slane %v2419, 3
        %v2452 = vrot.slane %v2420, 3
        %v2453 = vrot.slane %v2421, 3
        %v2454 = vrot.slane %v2422, 3
        %v2455 = vrot.slane %v2423, 3
        %v2456 = vrot.slane %v2424, 3
        %v2457 = vrot.slane %v2425, 3
        %v2458 = vrot.slane %v2426, 3
        %v2459 = vrot.slane %v2427, 3
        %v2460 = vrot.slane %v2428, 3
        %v2461 = vrot.slane %v2429, 3
        %v2462 = vrot.slane %v2430, 3
        %v2463 = vrot.slane %v2431, 3
        %v2464 = vrot.slane %v2432, 3
        %v2465 = vrot.slane %v2433, 3
        %v2466 = vrot.slane %v2434, 3
        %vm2467 = vcmask 1040384
        %v2470 = vsel %vm2467, %v2419, %v2451
        %vm2471 = vcmask 1041409
        %v2472 = vsel %vm2471, %v2419, %v2451
        %v2474 = vrot.slane %v2472, 1
        %vm2475 = vcmask 1042434
        %v2476 = vsel %vm2475, %v2419, %v2451
        %v2478 = vrot.slane %v2476, 2
        %vm2479 = vcmask 1043459
        %v2480 = vsel %vm2479, %v2419, %v2451
        %v2482 = vrot.slane %v2480, 3
        %v2485 = vsel %vm2467, %v2420, %v2452
        %v2486 = vsel %vm2471, %v2420, %v2452
        %v2488 = vrot.slane %v2486, 1
        %v2489 = vsel %vm2475, %v2420, %v2452
        %v2491 = vrot.slane %v2489, 2
        %v2492 = vsel %vm2479, %v2420, %v2452
        %v2494 = vrot.slane %v2492, 3
        %v2497 = vsel %vm2467, %v2421, %v2453
        %v2498 = vsel %vm2471, %v2421, %v2453
        %v2500 = vrot.slane %v2498, 1
        %v2501 = vsel %vm2475, %v2421, %v2453
        %v2503 = vrot.slane %v2501, 2
        %v2504 = vsel %vm2479, %v2421, %v2453
        %v2506 = vrot.slane %v2504, 3
        %v2509 = vsel %vm2467, %v2422, %v2454
        %v2510 = vsel %vm2471, %v2422, %v2454
        %v2512 = vrot.slane %v2510, 1
        %v2513 = vsel %vm2475, %v2422, %v2454
        %v2515 = vrot.slane %v2513, 2
        %v2516 = vsel %vm2479, %v2422, %v2454
        %v2518 = vrot.slane %v2516, 3
        %v2521 = vsel %vm2467, %v2423, %v2455
        %v2522 = vsel %vm2471, %v2423, %v2455
        %v2524 = vrot.slane %v2522, 1
        %v2525 = vsel %vm2475, %v2423, %v2455
        %v2527 = vrot.slane %v2525, 2
        %v2528 = vsel %vm2479, %v2423, %v2455
        %v2530 = vrot.slane %v2528, 3
        %v2533 = vsel %vm2467, %v2424, %v2456
        %v2534 = vsel %vm2471, %v2424, %v2456
        %v2536 = vrot.slane %v2534, 1
        %v2537 = vsel %vm2475, %v2424, %v2456
        %v2539 = vrot.slane %v2537, 2
        %v2540 = vsel %vm2479, %v2424, %v2456
        %v2542 = vrot.slane %v2540, 3
        %v2545 = vsel %vm2467, %v2425, %v2457
        %v2546 = vsel %vm2471, %v2425, %v2457
        %v2548 = vrot.slane %v2546, 1
        %v2549 = vsel %vm2475, %v2425, %v2457
        %v2551 = vrot.slane %v2549, 2
        %v2552 = vsel %vm2479, %v2425, %v2457
        %v2554 = vrot.slane %v2552, 3
        %v2557 = vsel %vm2467, %v2426, %v2458
        %v2558 = vsel %vm2471, %v2426, %v2458
        %v2560 = vrot.slane %v2558, 1
        %v2561 = vsel %vm2475, %v2426, %v2458
        %v2563 = vrot.slane %v2561, 2
        %v2564 = vsel %vm2479, %v2426, %v2458
        %v2566 = vrot.slane %v2564, 3
        %v2569 = vsel %vm2467, %v2427, %v2459
        %v2570 = vsel %vm2471, %v2427, %v2459
        %v2572 = vrot.slane %v2570, 1
        %v2573 = vsel %vm2475, %v2427, %v2459
        %v2575 = vrot.slane %v2573, 2
        %v2576 = vsel %vm2479, %v2427, %v2459
        %v2578 = vrot.slane %v2576, 3
        %v2581 = vsel %vm2467, %v2428, %v2460
        %v2582 = vsel %vm2471, %v2428, %v2460
        %v2584 = vrot.slane %v2582, 1
        %v2585 = vsel %vm2475, %v2428, %v2460
        %v2587 = vrot.slane %v2585, 2
        %v2588 = vsel %vm2479, %v2428, %v2460
        %v2590 = vrot.slane %v2588, 3
        %v2593 = vsel %vm2467, %v2429, %v2461
        %v2594 = vsel %vm2471, %v2429, %v2461
        %v2596 = vrot.slane %v2594, 1
        %v2597 = vsel %vm2475, %v2429, %v2461
        %v2599 = vrot.slane %v2597, 2
        %v2600 = vsel %vm2479, %v2429, %v2461
        %v2602 = vrot.slane %v2600, 3
        %v2605 = vsel %vm2467, %v2430, %v2462
        %v2606 = vsel %vm2471, %v2430, %v2462
        %v2608 = vrot.slane %v2606, 1
        %v2609 = vsel %vm2475, %v2430, %v2462
        %v2611 = vrot.slane %v2609, 2
        %v2612 = vsel %vm2479, %v2430, %v2462
        %v2614 = vrot.slane %v2612, 3
        %v2617 = vsel %vm2467, %v2431, %v2463
        %v2618 = vsel %vm2471, %v2431, %v2463
        %v2620 = vrot.slane %v2618, 1
        %v2621 = vsel %vm2475, %v2431, %v2463
        %v2623 = vrot.slane %v2621, 2
        %v2624 = vsel %vm2479, %v2431, %v2463
        %v2626 = vrot.slane %v2624, 3
        %v2629 = vsel %vm2467, %v2432, %v2464
        %v2630 = vsel %vm2471, %v2432, %v2464
        %v2632 = vrot.slane %v2630, 1
        %v2633 = vsel %vm2475, %v2432, %v2464
        %v2635 = vrot.slane %v2633, 2
        %v2636 = vsel %vm2479, %v2432, %v2464
        %v2638 = vrot.slane %v2636, 3
        %v2641 = vsel %vm2467, %v2433, %v2465
        %v2642 = vsel %vm2471, %v2433, %v2465
        %v2644 = vrot.slane %v2642, 1
        %v2645 = vsel %vm2475, %v2433, %v2465
        %v2647 = vrot.slane %v2645, 2
        %v2648 = vsel %vm2479, %v2433, %v2465
        %v2650 = vrot.slane %v2648, 3
        %v2653 = vsel %vm2467, %v2434, %v2466
        %v2654 = vsel %vm2471, %v2434, %v2466
        %v2656 = vrot.slane %v2654, 1
        %v2657 = vsel %vm2475, %v2434, %v2466
        %v2659 = vrot.slane %v2657, 2
        %v2660 = vsel %vm2479, %v2434, %v2466
        %v2662 = vrot.slane %v2660, 3
        %v2727 = vunpack.c.l.bf16 %v2470
        %v2728 = vunpack.c.l.bf16 %v2474
        %v2729 = vunpack.c.l.bf16 %v2478
        %v2730 = vunpack.c.l.bf16 %v2482
        %v2731 = vunpack.c.l.bf16 %v2485
        %v2732 = vunpack.c.l.bf16 %v2488
        %v2733 = vunpack.c.l.bf16 %v2491
        %v2734 = vunpack.c.l.bf16 %v2494
        %v2735 = vunpack.c.l.bf16 %v2497
        %v2736 = vunpack.c.l.bf16 %v2500
        %v2737 = vunpack.c.l.bf16 %v2503
        %v2738 = vunpack.c.l.bf16 %v2506
        %v2739 = vunpack.c.l.bf16 %v2509
        %v2740 = vunpack.c.l.bf16 %v2512
        %v2741 = vunpack.c.l.bf16 %v2515
        %v2742 = vunpack.c.l.bf16 %v2518
        %v2743 = vunpack.c.l.bf16 %v2521
        %v2744 = vunpack.c.l.bf16 %v2524
        %v2745 = vunpack.c.l.bf16 %v2527
        %v2746 = vunpack.c.l.bf16 %v2530
        %v2747 = vunpack.c.l.bf16 %v2533
        %v2748 = vunpack.c.l.bf16 %v2536
        %v2749 = vunpack.c.l.bf16 %v2539
        %v2750 = vunpack.c.l.bf16 %v2542
        %v2751 = vunpack.c.l.bf16 %v2545
        %v2752 = vunpack.c.l.bf16 %v2548
        %v2753 = vunpack.c.l.bf16 %v2551
        %v2754 = vunpack.c.l.bf16 %v2554
        %v2755 = vunpack.c.l.bf16 %v2557
        %v2756 = vunpack.c.l.bf16 %v2560
        %v2757 = vunpack.c.l.bf16 %v2563
        %v2758 = vunpack.c.l.bf16 %v2566
        %v2759 = vunpack.c.l.bf16 %v2569
        %v2760 = vunpack.c.l.bf16 %v2572
        %v2761 = vunpack.c.l.bf16 %v2575
        %v2762 = vunpack.c.l.bf16 %v2578
        %v2763 = vunpack.c.l.bf16 %v2581
        %v2764 = vunpack.c.l.bf16 %v2584
        %v2765 = vunpack.c.l.bf16 %v2587
        %v2766 = vunpack.c.l.bf16 %v2590
        %v2767 = vunpack.c.l.bf16 %v2593
        %v2768 = vunpack.c.l.bf16 %v2596
        %v2769 = vunpack.c.l.bf16 %v2599
        %v2770 = vunpack.c.l.bf16 %v2602
        %v2771 = vunpack.c.l.bf16 %v2605
        %v2772 = vunpack.c.l.bf16 %v2608
        %v2773 = vunpack.c.l.bf16 %v2611
        %v2774 = vunpack.c.l.bf16 %v2614
        %v2775 = vunpack.c.l.bf16 %v2617
        %v2776 = vunpack.c.l.bf16 %v2620
        %v2777 = vunpack.c.l.bf16 %v2623
        %v2778 = vunpack.c.l.bf16 %v2626
        %v2779 = vunpack.c.l.bf16 %v2629
        %v2780 = vunpack.c.l.bf16 %v2632
        %v2781 = vunpack.c.l.bf16 %v2635
        %v2782 = vunpack.c.l.bf16 %v2638
        %v2783 = vunpack.c.l.bf16 %v2641
        %v2784 = vunpack.c.l.bf16 %v2644
        %v2785 = vunpack.c.l.bf16 %v2647
        %v2786 = vunpack.c.l.bf16 %v2650
        %v2787 = vunpack.c.l.bf16 %v2653
        %v2788 = vunpack.c.l.bf16 %v2656
        %v2789 = vunpack.c.l.bf16 %v2659
        %v2790 = vunpack.c.l.bf16 %v2662
        %v2855 = vrot.slane %v2727, 7
        %v2856 = vrot.slane %v2855, 2
        %v2857 = vrot.slane %v2728, 7
        %v2858 = vrot.slane %v2857, 2
        %v2859 = vrot.slane %v2729, 7
        %v2860 = vrot.slane %v2859, 2
        %v2861 = vrot.slane %v2730, 7
        %v2862 = vrot.slane %v2861, 2
        %v2863 = vrot.slane %v2731, 7
        %v2864 = vrot.slane %v2863, 2
        %v2865 = vrot.slane %v2732, 7
        %v2866 = vrot.slane %v2865, 2
        %v2867 = vrot.slane %v2733, 7
        %v2868 = vrot.slane %v2867, 2
        %v2869 = vrot.slane %v2734, 7
        %v2870 = vrot.slane %v2869, 2
        %v2871 = vrot.slane %v2735, 7
        %v2872 = vrot.slane %v2871, 2
        %v2873 = vrot.slane %v2736, 7
        %v2874 = vrot.slane %v2873, 2
        %v2875 = vrot.slane %v2737, 7
        %v2876 = vrot.slane %v2875, 2
        %v2877 = vrot.slane %v2738, 7
        %v2878 = vrot.slane %v2877, 2
        %v2879 = vrot.slane %v2739, 7
        %v2880 = vrot.slane %v2879, 2
        %v2881 = vrot.slane %v2740, 7
        %v2882 = vrot.slane %v2881, 2
        %v2883 = vrot.slane %v2741, 7
        %v2884 = vrot.slane %v2883, 2
        %v2885 = vrot.slane %v2742, 7
        %v2886 = vrot.slane %v2885, 2
        %v2887 = vrot.slane %v2743, 7
        %v2888 = vrot.slane %v2887, 2
        %v2889 = vrot.slane %v2744, 7
        %v2890 = vrot.slane %v2889, 2
        %v2891 = vrot.slane %v2745, 7
        %v2892 = vrot.slane %v2891, 2
        %v2893 = vrot.slane %v2746, 7
        %v2894 = vrot.slane %v2893, 2
        %v2895 = vrot.slane %v2747, 7
        %v2896 = vrot.slane %v2895, 2
        %v2897 = vrot.slane %v2748, 7
        %v2898 = vrot.slane %v2897, 2
        %v2899 = vrot.slane %v2749, 7
        %v2900 = vrot.slane %v2899, 2
        %v2901 = vrot.slane %v2750, 7
        %v2902 = vrot.slane %v2901, 2
        %v2903 = vrot.slane %v2751, 7
        %v2904 = vrot.slane %v2903, 2
        %v2905 = vrot.slane %v2752, 7
        %v2906 = vrot.slane %v2905, 2
        %v2907 = vrot.slane %v2753, 7
        %v2908 = vrot.slane %v2907, 2
        %v2909 = vrot.slane %v2754, 7
        %v2910 = vrot.slane %v2909, 2
        %v2911 = vrot.slane %v2755, 7
        %v2912 = vrot.slane %v2911, 2
        %v2913 = vrot.slane %v2756, 7
        %v2914 = vrot.slane %v2913, 2
        %v2915 = vrot.slane %v2757, 7
        %v2916 = vrot.slane %v2915, 2
        %v2917 = vrot.slane %v2758, 7
        %v2918 = vrot.slane %v2917, 2
        %v2919 = vrot.slane %v2759, 7
        %v2920 = vrot.slane %v2919, 2
        %v2921 = vrot.slane %v2760, 7
        %v2922 = vrot.slane %v2921, 2
        %v2923 = vrot.slane %v2761, 7
        %v2924 = vrot.slane %v2923, 2
        %v2925 = vrot.slane %v2762, 7
        %v2926 = vrot.slane %v2925, 2
        %v2927 = vrot.slane %v2763, 7
        %v2928 = vrot.slane %v2927, 2
        %v2929 = vrot.slane %v2764, 7
        %v2930 = vrot.slane %v2929, 2
        %v2931 = vrot.slane %v2765, 7
        %v2932 = vrot.slane %v2931, 2
        %v2933 = vrot.slane %v2766, 7
        %v2934 = vrot.slane %v2933, 2
        %v2935 = vrot.slane %v2767, 7
        %v2936 = vrot.slane %v2935, 2
        %v2937 = vrot.slane %v2768, 7
        %v2938 = vrot.slane %v2937, 2
        %v2939 = vrot.slane %v2769, 7
        %v2940 = vrot.slane %v2939, 2
        %v2941 = vrot.slane %v2770, 7
        %v2942 = vrot.slane %v2941, 2
        %v2943 = vrot.slane %v2771, 7
        %v2944 = vrot.slane %v2943, 2
        %v2945 = vrot.slane %v2772, 7
        %v2946 = vrot.slane %v2945, 2
        %v2947 = vrot.slane %v2773, 7
        %v2948 = vrot.slane %v2947, 2
        %v2949 = vrot.slane %v2774, 7
        %v2950 = vrot.slane %v2949, 2
        %v2951 = vrot.slane %v2775, 7
        %v2952 = vrot.slane %v2951, 2
        %v2953 = vrot.slane %v2776, 7
        %v2954 = vrot.slane %v2953, 2
        %v2955 = vrot.slane %v2777, 7
        %v2956 = vrot.slane %v2955, 2
        %v2957 = vrot.slane %v2778, 7
        %v2958 = vrot.slane %v2957, 2
        %v2959 = vrot.slane %v2779, 7
        %v2960 = vrot.slane %v2959, 2
        %v2961 = vrot.slane %v2780, 7
        %v2962 = vrot.slane %v2961, 2
        %v2963 = vrot.slane %v2781, 7
        %v2964 = vrot.slane %v2963, 2
        %v2965 = vrot.slane %v2782, 7
        %v2966 = vrot.slane %v2965, 2
        %v2967 = vrot.slane %v2783, 7
        %v2968 = vrot.slane %v2967, 2
        %v2969 = vrot.slane %v2784, 7
        %v2970 = vrot.slane %v2969, 2
        %v2971 = vrot.slane %v2785, 7
        %v2972 = vrot.slane %v2971, 2
        %v2973 = vrot.slane %v2786, 7
        %v2974 = vrot.slane %v2973, 2
        %v2975 = vrot.slane %v2787, 7
        %v2976 = vrot.slane %v2975, 2
        %v2977 = vrot.slane %v2788, 7
        %v2978 = vrot.slane %v2977, 2
        %v2979 = vrot.slane %v2789, 7
        %v2980 = vrot.slane %v2979, 2
        %v2981 = vrot.slane %v2790, 7
        %v2982 = vrot.slane %v2981, 2
        %v3047 = vmax.f32 %v2727, %v2856
        %v3048 = vmax.f32 %v2728, %v2858
        %v3049 = vmax.f32 %v2729, %v2860
        %v3050 = vmax.f32 %v2730, %v2862
        %v3051 = vmax.f32 %v2731, %v2864
        %v3052 = vmax.f32 %v2732, %v2866
        %v3053 = vmax.f32 %v2733, %v2868
        %v3054 = vmax.f32 %v2734, %v2870
        %v3055 = vmax.f32 %v2735, %v2872
        %v3056 = vmax.f32 %v2736, %v2874
        %v3057 = vmax.f32 %v2737, %v2876
        %v3058 = vmax.f32 %v2738, %v2878
        %v3059 = vmax.f32 %v2739, %v2880
        %v3060 = vmax.f32 %v2740, %v2882
        %v3061 = vmax.f32 %v2741, %v2884
        %v3062 = vmax.f32 %v2742, %v2886
        %v3063 = vmax.f32 %v2743, %v2888
        %v3064 = vmax.f32 %v2744, %v2890
        %v3065 = vmax.f32 %v2745, %v2892
        %v3066 = vmax.f32 %v2746, %v2894
        %v3067 = vmax.f32 %v2747, %v2896
        %v3068 = vmax.f32 %v2748, %v2898
        %v3069 = vmax.f32 %v2749, %v2900
        %v3070 = vmax.f32 %v2750, %v2902
        %v3071 = vmax.f32 %v2751, %v2904
        %v3072 = vmax.f32 %v2752, %v2906
        %v3073 = vmax.f32 %v2753, %v2908
        %v3074 = vmax.f32 %v2754, %v2910
        %v3075 = vmax.f32 %v2755, %v2912
        %v3076 = vmax.f32 %v2756, %v2914
        %v3077 = vmax.f32 %v2757, %v2916
        %v3078 = vmax.f32 %v2758, %v2918
        %v3079 = vmax.f32 %v2759, %v2920
        %v3080 = vmax.f32 %v2760, %v2922
        %v3081 = vmax.f32 %v2761, %v2924
        %v3082 = vmax.f32 %v2762, %v2926
        %v3083 = vmax.f32 %v2763, %v2928
        %v3084 = vmax.f32 %v2764, %v2930
        %v3085 = vmax.f32 %v2765, %v2932
        %v3086 = vmax.f32 %v2766, %v2934
        %v3087 = vmax.f32 %v2767, %v2936
        %v3088 = vmax.f32 %v2768, %v2938
        %v3089 = vmax.f32 %v2769, %v2940
        %v3090 = vmax.f32 %v2770, %v2942
        %v3091 = vmax.f32 %v2771, %v2944
        %v3092 = vmax.f32 %v2772, %v2946
        %v3093 = vmax.f32 %v2773, %v2948
        %v3094 = vmax.f32 %v2774, %v2950
        %v3095 = vmax.f32 %v2775, %v2952
        %v3096 = vmax.f32 %v2776, %v2954
        %v3097 = vmax.f32 %v2777, %v2956
        %v3098 = vmax.f32 %v2778, %v2958
        %v3099 = vmax.f32 %v2779, %v2960
        %v3100 = vmax.f32 %v2780, %v2962
        %v3101 = vmax.f32 %v2781, %v2964
        %v3102 = vmax.f32 %v2782, %v2966
        %v3103 = vmax.f32 %v2783, %v2968
        %v3104 = vmax.f32 %v2784, %v2970
        %v3105 = vmax.f32 %v2785, %v2972
        %v3106 = vmax.f32 %v2786, %v2974
        %v3107 = vmax.f32 %v2787, %v2976
        %v3108 = vmax.f32 %v2788, %v2978
        %v3109 = vmax.f32 %v2789, %v2980
        %v3110 = vmax.f32 %v2790, %v2982
        %v3111 = vpack.c.bf16 %v3047, %v3047
        %v3112 = vpack.c.bf16 %v3048, %v3048
        %v3113 = vpack.c.bf16 %v3049, %v3049
        %v3114 = vpack.c.bf16 %v3050, %v3050
        %v3115 = vpack.c.bf16 %v3051, %v3051
        %v3116 = vpack.c.bf16 %v3052, %v3052
        %v3117 = vpack.c.bf16 %v3053, %v3053
        %v3118 = vpack.c.bf16 %v3054, %v3054
        %v3119 = vpack.c.bf16 %v3055, %v3055
        %v3120 = vpack.c.bf16 %v3056, %v3056
        %v3121 = vpack.c.bf16 %v3057, %v3057
        %v3122 = vpack.c.bf16 %v3058, %v3058
        %v3123 = vpack.c.bf16 %v3059, %v3059
        %v3124 = vpack.c.bf16 %v3060, %v3060
        %v3125 = vpack.c.bf16 %v3061, %v3061
        %v3126 = vpack.c.bf16 %v3062, %v3062
        %v3127 = vpack.c.bf16 %v3063, %v3063
        %v3128 = vpack.c.bf16 %v3064, %v3064
        %v3129 = vpack.c.bf16 %v3065, %v3065
        %v3130 = vpack.c.bf16 %v3066, %v3066
        %v3131 = vpack.c.bf16 %v3067, %v3067
        %v3132 = vpack.c.bf16 %v3068, %v3068
        %v3133 = vpack.c.bf16 %v3069, %v3069
        %v3134 = vpack.c.bf16 %v3070, %v3070
        %v3135 = vpack.c.bf16 %v3071, %v3071
        %v3136 = vpack.c.bf16 %v3072, %v3072
        %v3137 = vpack.c.bf16 %v3073, %v3073
        %v3138 = vpack.c.bf16 %v3074, %v3074
        %v3139 = vpack.c.bf16 %v3075, %v3075
        %v3140 = vpack.c.bf16 %v3076, %v3076
        %v3141 = vpack.c.bf16 %v3077, %v3077
        %v3142 = vpack.c.bf16 %v3078, %v3078
        %v3143 = vpack.c.bf16 %v3079, %v3079
        %v3144 = vpack.c.bf16 %v3080, %v3080
        %v3145 = vpack.c.bf16 %v3081, %v3081
        %v3146 = vpack.c.bf16 %v3082, %v3082
        %v3147 = vpack.c.bf16 %v3083, %v3083
        %v3148 = vpack.c.bf16 %v3084, %v3084
        %v3149 = vpack.c.bf16 %v3085, %v3085
        %v3150 = vpack.c.bf16 %v3086, %v3086
        %v3151 = vpack.c.bf16 %v3087, %v3087
        %v3152 = vpack.c.bf16 %v3088, %v3088
        %v3153 = vpack.c.bf16 %v3089, %v3089
        %v3154 = vpack.c.bf16 %v3090, %v3090
        %v3155 = vpack.c.bf16 %v3091, %v3091
        %v3156 = vpack.c.bf16 %v3092, %v3092
        %v3157 = vpack.c.bf16 %v3093, %v3093
        %v3158 = vpack.c.bf16 %v3094, %v3094
        %v3159 = vpack.c.bf16 %v3095, %v3095
        %v3160 = vpack.c.bf16 %v3096, %v3096
        %v3161 = vpack.c.bf16 %v3097, %v3097
        %v3162 = vpack.c.bf16 %v3098, %v3098
        %v3163 = vpack.c.bf16 %v3099, %v3099
        %v3164 = vpack.c.bf16 %v3100, %v3100
        %v3165 = vpack.c.bf16 %v3101, %v3101
        %v3166 = vpack.c.bf16 %v3102, %v3102
        %v3167 = vpack.c.bf16 %v3103, %v3103
        %v3168 = vpack.c.bf16 %v3104, %v3104
        %v3169 = vpack.c.bf16 %v3105, %v3105
        %v3170 = vpack.c.bf16 %v3106, %v3106
        %v3171 = vpack.c.bf16 %v3107, %v3107
        %v3172 = vpack.c.bf16 %v3108, %v3108
        %v3173 = vpack.c.bf16 %v3109, %v3109
        %v3174 = vpack.c.bf16 %v3110, %v3110
        %v3239 = vunpack.c.l.b16 %v3111
        %v3240 = vunpack.c.l.b16 %v3112
        %v3241 = vunpack.c.l.b16 %v3113
        %v3242 = vunpack.c.l.b16 %v3114
        %v3243 = vunpack.c.l.b16 %v3115
        %v3244 = vunpack.c.l.b16 %v3116
        %v3245 = vunpack.c.l.b16 %v3117
        %v3246 = vunpack.c.l.b16 %v3118
        %v3247 = vunpack.c.l.b16 %v3119
        %v3248 = vunpack.c.l.b16 %v3120
        %v3249 = vunpack.c.l.b16 %v3121
        %v3250 = vunpack.c.l.b16 %v3122
        %v3251 = vunpack.c.l.b16 %v3123
        %v3252 = vunpack.c.l.b16 %v3124
        %v3253 = vunpack.c.l.b16 %v3125
        %v3254 = vunpack.c.l.b16 %v3126
        %v3255 = vunpack.c.l.b16 %v3127
        %v3256 = vunpack.c.l.b16 %v3128
        %v3257 = vunpack.c.l.b16 %v3129
        %v3258 = vunpack.c.l.b16 %v3130
        %v3259 = vunpack.c.l.b16 %v3131
        %v3260 = vunpack.c.l.b16 %v3132
        %v3261 = vunpack.c.l.b16 %v3133
        %v3262 = vunpack.c.l.b16 %v3134
        %v3263 = vunpack.c.l.b16 %v3135
        %v3264 = vunpack.c.l.b16 %v3136
        %v3265 = vunpack.c.l.b16 %v3137
        %v3266 = vunpack.c.l.b16 %v3138
        %v3267 = vunpack.c.l.b16 %v3139
        %v3268 = vunpack.c.l.b16 %v3140
        %v3269 = vunpack.c.l.b16 %v3141
        %v3270 = vunpack.c.l.b16 %v3142
        %v3271 = vunpack.c.l.b16 %v3143
        %v3272 = vunpack.c.l.b16 %v3144
        %v3273 = vunpack.c.l.b16 %v3145
        %v3274 = vunpack.c.l.b16 %v3146
        %v3275 = vunpack.c.l.b16 %v3147
        %v3276 = vunpack.c.l.b16 %v3148
        %v3277 = vunpack.c.l.b16 %v3149
        %v3278 = vunpack.c.l.b16 %v3150
        %v3279 = vunpack.c.l.b16 %v3151
        %v3280 = vunpack.c.l.b16 %v3152
        %v3281 = vunpack.c.l.b16 %v3153
        %v3282 = vunpack.c.l.b16 %v3154
        %v3283 = vunpack.c.l.b16 %v3155
        %v3284 = vunpack.c.l.b16 %v3156
        %v3285 = vunpack.c.l.b16 %v3157
        %v3286 = vunpack.c.l.b16 %v3158
        %v3287 = vunpack.c.l.b16 %v3159
        %v3288 = vunpack.c.l.b16 %v3160
        %v3289 = vunpack.c.l.b16 %v3161
        %v3290 = vunpack.c.l.b16 %v3162
        %v3291 = vunpack.c.l.b16 %v3163
        %v3292 = vunpack.c.l.b16 %v3164
        %v3293 = vunpack.c.l.b16 %v3165
        %v3294 = vunpack.c.l.b16 %v3166
        %v3295 = vunpack.c.l.b16 %v3167
        %v3296 = vunpack.c.l.b16 %v3168
        %v3297 = vunpack.c.l.b16 %v3169
        %v3298 = vunpack.c.l.b16 %v3170
        %v3299 = vunpack.c.l.b16 %v3171
        %v3300 = vunpack.c.l.b16 %v3172
        %v3301 = vunpack.c.l.b16 %v3173
        %v3302 = vunpack.c.l.b16 %v3174
        %v3303 = vrot.slane %v3240, 7
        %v3304 = vsel %vm2471, %v3303, %v3239
        %v3305 = vrot.slane %v3241, 6
        %v3306 = vsel %vm2475, %v3305, %v3304
        %v3307 = vrot.slane %v3242, 5
        %v3308 = vsel %vm2479, %v3307, %v3306
        %v3309 = vrot.slane %v3243, 4
        %vm3310 = vcmask 1044484
        %v3311 = vsel %vm3310, %v3309, %v3308
        %v3312 = vrot.slane %v3244, 3
        %vm3313 = vcmask 1045509
        %v3314 = vsel %vm3313, %v3312, %v3311
        %v3315 = vrot.slane %v3245, 2
        %vm3316 = vcmask 1046534
        %v3317 = vsel %vm3316, %v3315, %v3314
        %v3318 = vrot.slane %v3246, 1
        %vm3319 = vcmask 1047559
        %v3320 = vsel %vm3319, %v3318, %v3317
        %v3321 = vrot.slane %v3248, 7
        %v3322 = vsel %vm2471, %v3321, %v3247
        %v3323 = vrot.slane %v3249, 6
        %v3324 = vsel %vm2475, %v3323, %v3322
        %v3325 = vrot.slane %v3250, 5
        %v3326 = vsel %vm2479, %v3325, %v3324
        %v3327 = vrot.slane %v3251, 4
        %v3328 = vsel %vm3310, %v3327, %v3326
        %v3329 = vrot.slane %v3252, 3
        %v3330 = vsel %vm3313, %v3329, %v3328
        %v3331 = vrot.slane %v3253, 2
        %v3332 = vsel %vm3316, %v3331, %v3330
        %v3333 = vrot.slane %v3254, 1
        %v3334 = vsel %vm3319, %v3333, %v3332
        %v3335 = vrot.slane %v3256, 7
        %v3336 = vsel %vm2471, %v3335, %v3255
        %v3337 = vrot.slane %v3257, 6
        %v3338 = vsel %vm2475, %v3337, %v3336
        %v3339 = vrot.slane %v3258, 5
        %v3340 = vsel %vm2479, %v3339, %v3338
        %v3341 = vrot.slane %v3259, 4
        %v3342 = vsel %vm3310, %v3341, %v3340
        %v3343 = vrot.slane %v3260, 3
        %v3344 = vsel %vm3313, %v3343, %v3342
        %v3345 = vrot.slane %v3261, 2
        %v3346 = vsel %vm3316, %v3345, %v3344
        %v3347 = vrot.slane %v3262, 1
        %v3348 = vsel %vm3319, %v3347, %v3346
        %v3349 = vrot.slane %v3264, 7
        %v3350 = vsel %vm2471, %v3349, %v3263
        %v3351 = vrot.slane %v3265, 6
        %v3352 = vsel %vm2475, %v3351, %v3350
        %v3353 = vrot.slane %v3266, 5
        %v3354 = vsel %vm2479, %v3353, %v3352
        %v3355 = vrot.slane %v3267, 4
        %v3356 = vsel %vm3310, %v3355, %v3354
        %v3357 = vrot.slane %v3268, 3
        %v3358 = vsel %vm3313, %v3357, %v3356
        %v3359 = vrot.slane %v3269, 2
        %v3360 = vsel %vm3316, %v3359, %v3358
        %v3361 = vrot.slane %v3270, 1
        %v3362 = vsel %vm3319, %v3361, %v3360
        %v3363 = vrot.slane %v3272, 7
        %v3364 = vsel %vm2471, %v3363, %v3271
        %v3365 = vrot.slane %v3273, 6
        %v3366 = vsel %vm2475, %v3365, %v3364
        %v3367 = vrot.slane %v3274, 5
        %v3368 = vsel %vm2479, %v3367, %v3366
        %v3369 = vrot.slane %v3275, 4
        %v3370 = vsel %vm3310, %v3369, %v3368
        %v3371 = vrot.slane %v3276, 3
        %v3372 = vsel %vm3313, %v3371, %v3370
        %v3373 = vrot.slane %v3277, 2
        %v3374 = vsel %vm3316, %v3373, %v3372
        %v3375 = vrot.slane %v3278, 1
        %v3376 = vsel %vm3319, %v3375, %v3374
        %v3377 = vrot.slane %v3280, 7
        %v3378 = vsel %vm2471, %v3377, %v3279
        %v3379 = vrot.slane %v3281, 6
        %v3380 = vsel %vm2475, %v3379, %v3378
        %v3381 = vrot.slane %v3282, 5
        %v3382 = vsel %vm2479, %v3381, %v3380
        %v3383 = vrot.slane %v3283, 4
        %v3384 = vsel %vm3310, %v3383, %v3382
        %v3385 = vrot.slane %v3284, 3
        %v3386 = vsel %vm3313, %v3385, %v3384
        %v3387 = vrot.slane %v3285, 2
        %v3388 = vsel %vm3316, %v3387, %v3386
        %v3389 = vrot.slane %v3286, 1
        %v3390 = vsel %vm3319, %v3389, %v3388
        %v3391 = vrot.slane %v3288, 7
        %v3392 = vsel %vm2471, %v3391, %v3287
        %v3393 = vrot.slane %v3289, 6
        %v3394 = vsel %vm2475, %v3393, %v3392
        %v3395 = vrot.slane %v3290, 5
        %v3396 = vsel %vm2479, %v3395, %v3394
        %v3397 = vrot.slane %v3291, 4
        %v3398 = vsel %vm3310, %v3397, %v3396
        %v3399 = vrot.slane %v3292, 3
        %v3400 = vsel %vm3313, %v3399, %v3398
        %v3401 = vrot.slane %v3293, 2
        %v3402 = vsel %vm3316, %v3401, %v3400
        %v3403 = vrot.slane %v3294, 1
        %v3404 = vsel %vm3319, %v3403, %v3402
        %v3405 = vrot.slane %v3296, 7
        %v3406 = vsel %vm2471, %v3405, %v3295
        %v3407 = vrot.slane %v3297, 6
        %v3408 = vsel %vm2475, %v3407, %v3406
        %v3409 = vrot.slane %v3298, 5
        %v3410 = vsel %vm2479, %v3409, %v3408
        %v3411 = vrot.slane %v3299, 4
        %v3412 = vsel %vm3310, %v3411, %v3410
        %v3413 = vrot.slane %v3300, 3
        %v3414 = vsel %vm3313, %v3413, %v3412
        %v3415 = vrot.slane %v3301, 2
        %v3416 = vsel %vm3316, %v3415, %v3414
        %v3417 = vrot.slane %v3302, 1
        %v3418 = vsel %vm3319, %v3417, %v3416
        %v3419 = vpack.c.b16 %v3320, %v3320
        %v3420 = vpack.c.b16 %v3334, %v3334
        %v3421 = vpack.c.b16 %v3348, %v3348
        %v3422 = vpack.c.b16 %v3362, %v3362
        %v3423 = vpack.c.b16 %v3376, %v3376
        %v3424 = vpack.c.b16 %v3390, %v3390
        %v3425 = vpack.c.b16 %v3404, %v3404
        %v3426 = vpack.c.b16 %v3418, %v3418
        %vm3435 = vcmask 519168
        %3436 = vst.msk [vmem:[%s202] sm:$0xf] %vm3435, %v3419
        %3437 = vst.msk [vmem:[%s202 + $0x4] sm:$0xf] %vm3435, %v3420
        %3438 = vst.msk [vmem:[%s202 + $0x8] sm:$0xf] %vm3435, %v3421
        %3439 = vst.msk [vmem:[%s202 + $0xc] sm:$0xf] %vm3435, %v3422
        %3440 = vst.msk [vmem:[%s202 + $0x10] sm:$0xf] %vm3435, %v3423
        %3441 = vst.msk [vmem:[%s202 + $0x14] sm:$0xf] %vm3435, %v3424
        %3442 = vst.msk [vmem:[%s202 + $0x18] sm:$0xf] %vm3435, %v3425
        %3443 = vst.msk [vmem:[%s202 + $0x1c] sm:$0xf] %vm3435, %v3426
        %p3444 = scmp.lt.s32.totalorder %s16, 1
        %s3445 = scalar_select %p3444, %s16, 1
        %s3446 = smul.addr %s3445, 8
        %s3447 = smul.addr %s3446, 4
        %s3448 = scalar_lea.vmem %s3, %s3447
        // Predicated region
        $region41: #{teacher_net14_forward.4} parent=31 // pred_check
          %p3449 = pneg %p102
        $region42: #{teacher_net14_forward.4} parent=31 // pred_check_branch
          %3451 = sbr.rel (%p3449) target = $region44
        $region43: #{teacher_net14_forward.4} parent=31 // pred_region
          _
        $region44: #{teacher_net14_forward.4} parent=31 // pred_fallthru
          _
      $region32: #{teacher_net14_forward.4} parent=5 // pred_fallthru
        _
      %p3452 = scmp.le.s32.totalorder 2, %s11
      // Predicated region
      $region45: #{teacher_net14_forward.4} parent=5 // pred_check
        %p3453 = pneg %p3452
      $region46: #{teacher_net14_forward.4} parent=5 // pred_check_branch
        %3455 = sbr.rel (%p3453) target = $region48
      $region47: #{teacher_net14_forward.4} parent=5 // pred_region
        %s3456 = ssub.s32 %s11, 2
        // Predicated region
        $region49: #{teacher_net14_forward.4} parent=47 // pred_check
          %p3457 = pneg %p108
        $region50: #{teacher_net14_forward.4} parent=47 // pred_check_branch
          %3459 = sbr.rel (%p3457) target = $region52
        $region51: #{teacher_net14_forward.4} parent=47 // pred_region
          %p3460 = scmp.lt.s32.totalorder %s17, 1
          %s3461 = scalar_select %p3460, %s17, 1
          %s3462 = smul.addr %s3461, 8
          %s3463 = smul.addr %s3462, 4
          %s3464 = scalar_lea.vmem %s3, %s3463
        $region52: #{teacher_net14_forward.4} parent=47 // pred_fallthru
          _
      $region48: #{teacher_net14_forward.4} parent=5 // pred_fallthru
        _
    $region6: #{teacher_net14_forward.4} parent=1 // loop_footer
      %s15 = sadd.s32 1, %s11
    $region7: #{teacher_net14_forward.4} parent=1 // loop_footer_branch
      %10 = sbr.rel target = $region3
    $region8: #{teacher_net14_forward.4} parent=1 // loop_exit
      _
    %3465 = vsyncpa [#allocation3], 1
    %s3466 = scalar_lea.sflag [#allocation3], 1
    %3467 = vsyncpa %s3466, 1
    %3468 = vsyncpa [#allocation5], 1

</llo_original>
